<compile_context>
chip_gen: v7x
topology: tpu7x:2x2x1
jax: 0.10.0
libtpu: 0.0.40
codegen_flags: <defaults>
</compile_context>

<pallas_src>
import functools

import jax
import jax.numpy as jnp
from jax.experimental import pallas as pl
from jax.experimental.pallas import tpu as pltpu


def _round_up(x, m):
    return ((x + m - 1) // m) * m


def _vmem_limit_bytes():
    """Generation-aware scoped-VMEM budget: 3/4 of per-core VMEM capacity,
    capped at 96 MiB (v5e/v6e: 128 MiB -> 96 MiB, v7x: 64 MiB -> 48 MiB)."""
    cap = 64 * 1024 * 1024  # conservative fallback, safe on every generation
    try:
        info = pltpu.get_tpu_info()
        cap = int(getattr(info, "vmem_capacity_bytes", cap) or cap)
    except Exception:
        pass
    return min(cap * 3 // 4, 96 * 1024 * 1024)


def _mxu_precision(mm_dtype):
    if jnp.dtype(mm_dtype) == jnp.dtype(jnp.float32):
        return jax.lax.Precision.HIGHEST      # exact-parity path
    return None                               # bf16 MXU operands, f32 accumulate


def _normalize_rows(x):
    # torch.nn.functional.normalize(x, p=2, dim=1, eps=1e-12):
    #   x / clamp(||x||_2 per row, min=1e-12)
    sumsq = jnp.sum(x * x, axis=-1, keepdims=True)            # (rows, 1) f32
    denom = jnp.maximum(jnp.sqrt(sumsq), 1e-12)
    return x * pl.reciprocal(denom, approx=False)


# ----------------------------------------------------------------------------
# Fused single-pass kernel (small problems: x stays resident in VMEM).
# ----------------------------------------------------------------------------
def _fused_kernel(x_ref, w_ref, o_ref, *, mm_dtype):
    prec = _mxu_precision(mm_dtype)
    x = x_ref[...].astype(jnp.float32)                        # (N, F_pad)
    norm = _normalize_rows(x)
    # G = norm^T @ x : contract the node axis of both operands directly with
    # dot_general (lowers to a transposed-LHS MXU matmul; no materialized
    # transpose of the tall tile through the XLU).
    g = jax.lax.dot_general(
        norm.astype(mm_dtype), x.astype(mm_dtype),
        dimension_numbers=(((0,), (0,)), ((), ())),
        precision=prec, preferred_element_type=jnp.float32)
    gw = jnp.dot(g, w_ref[...], precision=jax.lax.Precision.HIGHEST,
                 preferred_element_type=jnp.float32)          # tiny (F,F)@(F,F)
    o_ref[...] = jnp.dot(norm.astype(mm_dtype), gw.astype(mm_dtype),
                         precision=prec,
                         preferred_element_type=jnp.float32).astype(o_ref.dtype)


# ----------------------------------------------------------------------------
# Two-phase streaming kernels (large problems).
# ----------------------------------------------------------------------------
def _gram_kernel(x_ref, g_ref, *, tile, n_rows, n_inner, mm_dtype):
    """Phase 1: per-split partial Gram  G_s = sum_tiles norm_tile^T @ x_tile."""
    s = pl.program_id(0)          # TensorCore split (size 2, "parallel")
    i = pl.program_id(1)          # node-tile index within the split ("arbitrary")
    tile_idx = s * n_inner + i
    row0 = tile_idx * tile
    row_ids = row0 + jax.lax.broadcasted_iota(jnp.int32, (tile, 1), 0)
    valid = row_ids < n_rows      # masks the ragged last tile and the clamped
                                  # (fully out-of-range) tiles of the split

    x = jnp.where(valid, x_ref[...].astype(jnp.float32), 0.0)
    norm = _normalize_rows(x)     # zero rows stay exactly zero

    prec = _mxu_precision(mm_dtype)
    contrib = jax.lax.dot_general(
        norm.astype(mm_dtype), x.astype(mm_dtype),
        dimension_numbers=(((0,), (0,)), ((), ())),
        precision=prec, preferred_element_type=jnp.float32)   # (F_pad, F_pad)

    # The output block index depends only on the "parallel" axis, so g_ref is
    # resident across the inner reduction axis: init at i==0, accumulate after.
    @pl.when(i == 0)
    def _init():
        g_ref[...] = contrib

    @pl.when(i > 0)
    def _acc():
        g_ref[...] += contrib


def _rows_kernel(x_ref, gw_ref, o_ref, *, tile, n_rows, mm_dtype):
    """Phase 2: out_tile = normalize(x_tile) @ GW   (independent node tiles)."""
    i = pl.program_id(0)
    row_ids = i * tile + jax.lax.broadcasted_iota(jnp.int32, (tile, 1), 0)
    valid = row_ids < n_rows
    x = jnp.where(valid, x_ref[...].astype(jnp.float32), 0.0)
    norm = _normalize_rows(x)
    prec = _mxu_precision(mm_dtype)
    o_ref[...] = jnp.dot(norm.astype(mm_dtype), gw_ref[...],
                         precision=prec,
                         preferred_element_type=jnp.float32).astype(o_ref.dtype)
    # Rows >= n_rows are garbage-in/zero-out and their writes fall outside the
    # output array, so the pipeline drops them.


# ----------------------------------------------------------------------------
# Wrapper
# ----------------------------------------------------------------------------
def graph_convolution(x, w, *, tile_n=None, mm_dtype=jnp.bfloat16, fused=None):
    """GraphConvolution forward: ((normalize(x) @ normalize(x).T) @ x) @ w.

    x: (N, F), w: (F, F)  ->  (N, F) in x.dtype.
    tile_n:   node-tile rows for the streaming path (None = auto VMEM-budgeted).
    mm_dtype: MXU operand dtype for the big matmuls (bfloat16 = throughput path
              with f32 accumulation and bf16 HBM streaming of x;
              float32 = exact-parity path).
    fused:    None = auto (fuse when everything fits VMEM), or force True/False.
    """
    N, F = x.shape
    assert w.shape == (F, F)
    out_dtype = x.dtype

    F_pad = _round_up(F, 128)                                 # lane-dense features
    stream_dtype = (jnp.bfloat16 if jnp.dtype(mm_dtype) == jnp.dtype(jnp.bfloat16)
                    else jnp.float32)
    stream_bytes = jnp.dtype(stream_dtype).itemsize
    vmem_limit = _vmem_limit_bytes()

    # Only the (small) feature axis is padded; cast + pad fuse into one XLA op
    # and both are no-ops on the aligned f32-parity path.
    x_s = x
    if x_s.dtype != stream_dtype:
        x_s = x_s.astype(stream_dtype)
    if F_pad != F:
        x_s = jnp.pad(x_s, ((0, 0), (0, F_pad - F)))
    w_p = w.astype(jnp.float32)
    if F_pad != F:
        w_p = jnp.pad(w_p, ((0, F_pad - F), (0, F_pad - F)))

    # ---------------- fused single-pass path (small problems) ----------------
    fused_bytes = (N * F_pad * (stream_bytes + 8)   # x stream + norm f32 + out f32
                   + 3 * F_pad * F_pad * 4)         # W, G, GW
    if fused is None:
        fused = fused_bytes <= vmem_limit // 3

    if fused:
        out_p = pl.pallas_call(
            functools.partial(_fused_kernel, mm_dtype=mm_dtype),
            out_shape=jax.ShapeDtypeStruct((N, F_pad), out_dtype),
            grid=(1,),
            in_specs=[pl.BlockSpec((N, F_pad), lambda i: (0, 0)),
                      pl.BlockSpec((F_pad, F_pad), lambda i: (0, 0))],
            out_specs=pl.BlockSpec((N, F_pad), lambda i: (0, 0)),
            compiler_params=pltpu.CompilerParams(
                dimension_semantics=("arbitrary",),
                vmem_limit_bytes=vmem_limit),
        )(x_s, w_p)
        return out_p[:, :F]

    # ---------------- two-phase streaming path (large problems) --------------
    # Auto tile: largest multiple of 8 such that the double-buffered x stream,
    # the double-buffered f32 output tile and the resident (F,F) blocks stay
    # under ~half the VMEM limit (then capped at 2048 rows).
    if tile_n is None:
        resident = 8 * F_pad * F_pad                  # double-buffered f32 (F,F)
        per_row = 2 * F_pad * (stream_bytes + 4)      # x in (2 bufs) + out (2 bufs)
        tile = (vmem_limit // 2 - resident) // per_row
        tile = min(tile, 2048)
    else:
        tile = tile_n
    tile = max(8, min(tile, _round_up(N, 8)))
    tile = (tile // 8) * 8

    grid_n = pl.cdiv(N, tile)
    n_split = 2                                       # one split per TC on v7x
    n_inner = pl.cdiv(grid_n, n_split)

    def x_map_p1(s, i):
        # Clamp so splits whose range runs past the last real tile just re-read
        # a valid block; its rows are then fully masked inside the kernel.
        return (jnp.minimum(s * n_inner + i, grid_n - 1), 0)

    # Phase 1: partial Gram matrices, one per TensorCore split.
    g_parts = pl.pallas_call(
        functools.partial(_gram_kernel, tile=tile, n_rows=N,
                          n_inner=n_inner, mm_dtype=mm_dtype),
        out_shape=jax.ShapeDtypeStruct((n_split, F_pad, F_pad), jnp.float32),
        grid_spec=pltpu.PrefetchScalarGridSpec(
            num_scalar_prefetch=0,
            grid=(n_split, n_inner),
            in_specs=[pl.BlockSpec((tile, F_pad), x_map_p1)],
            out_specs=pl.BlockSpec((None, F_pad, F_pad), lambda s, i: (s, 0, 0)),
        ),
        compiler_params=pltpu.CompilerParams(
            dimension_semantics=("parallel", "arbitrary"),
            vmem_limit_bytes=vmem_limit),
    )(x_s)

    # Tiny (F,F) combine + weight multiply as a plain XLA op; keep it f32.
    g = jnp.sum(g_parts, axis=0)
    gw = jnp.dot(g, w_p, precision=jax.lax.Precision.HIGHEST,
                 preferred_element_type=jnp.float32).astype(mm_dtype)

    # Phase 2: out = norm @ GW, independent row tiles (megacore-parallel).
    out_p = pl.pallas_call(
        functools.partial(_rows_kernel, tile=tile, n_rows=N, mm_dtype=mm_dtype),
        out_shape=jax.ShapeDtypeStruct((N, F_pad), out_dtype),
        grid_spec=pltpu.PrefetchScalarGridSpec(
            num_scalar_prefetch=0,
            grid=(grid_n,),
            in_specs=[pl.BlockSpec((tile, F_pad), lambda i: (i, 0)),
                      pl.BlockSpec((F_pad, F_pad), lambda i: (0, 0))],
            out_specs=pl.BlockSpec((tile, F_pad), lambda i: (i, 0)),
        ),
        compiler_params=pltpu.CompilerParams(
            dimension_semantics=("parallel",),
            vmem_limit_bytes=vmem_limit),
    )(x_s, gw)

    return out_p[:, :F]


# ----------------------------------------------------------------------------
# Reference + tests
# ----------------------------------------------------------------------------
def _reference(x, w):
    """Plain-JAX replica of the PyTorch forward (full f32 precision)."""
    hi = jax.lax.Precision.HIGHEST
    row_norm = jnp.sqrt(jnp.sum(x * x, axis=-1, keepdims=True))
    norm = x / jnp.maximum(row_norm, 1e-12)
    adj = jnp.dot(norm, norm.T, precision=hi)
    ax = jnp.dot(adj, x, precision=hi)
    return jnp.dot(ax, w, precision=hi)


def _rel_err(a, b):
    return float(jnp.linalg.norm(a.astype(jnp.float32) - b) / jnp.linalg.norm(b))


if __name__ == "__main__":
    key = jax.random.PRNGKey(0)
    k1, k2, k3, k4, k5, k6 = jax.random.split(key, 6)

    # Case 1: N=512, F=128 — auto-selects the fused single-pass path.
    N, F = 512, 128
    x = jax.random.normal(k1, (N, F), dtype=jnp.float32)
    # set_w(n): kaiming_normal_(w, a=0, mode='fan_in') -> std = sqrt(2 / F)
    w = (2.0 / F) ** 0.5 * jax.random.normal(k2, (F, F), dtype=jnp.float32)
    ref = _reference(x, w)

    out_f32 = jax.block_until_ready(graph_convolution(x, w, mm_dtype=jnp.float32))
    assert out_f32.shape == (N, F)
    assert _rel_err(out_f32, ref) < 1e-4, "fused f32 path mismatch"

    out_bf16 = jax.block_until_ready(graph_convolution(x, w, mm_dtype=jnp.bfloat16))
    assert out_bf16.shape == (N, F)
    assert _rel_err(out_bf16, ref) < 2e-2, "fused bf16 path mismatch"

    # Case 2: unaligned features (N=200, F=96) exercises the F-padding path.
    N2, F2 = 200, 96
    x2 = jax.random.normal(k3, (N2, F2), dtype=jnp.float32)
    w2 = (2.0 / F2) ** 0.5 * jax.random.normal(k4, (F2, F2), dtype=jnp.float32)
    out2 = jax.block_until_ready(graph_convolution(x2, w2, mm_dtype=jnp.float32))
    assert out2.shape == (N2, F2)
    assert _rel_err(out2, _reference(x2, w2)) < 1e-4, "padded-F path mismatch"

    # Case 3: force the two-phase streaming path with a small tile so the
    # ragged last node tile and the (clamped, fully-masked) empty tile of the
    # 2-way TensorCore split are both exercised.
    N3, F3 = 520, 96
    x3 = jax.random.normal(k5, (N3, F3), dtype=jnp.float32)
    w3 = (2.0 / F3) ** 0.5 * jax.random.normal(k6, (F3, F3), dtype=jnp.float32)
    ref3 = _reference(x3, w3)
    out3 = jax.block_until_ready(
        graph_convolution(x3, w3, mm_dtype=jnp.float32, tile_n=128, fused=False))
    assert out3.shape == (N3, F3)
    assert _rel_err(out3, ref3) < 1e-4, "two-phase f32 path mismatch"
    out3b = jax.block_until_ready(
        graph_convolution(x3, w3, mm_dtype=jnp.bfloat16, tile_n=128, fused=False))
    assert _rel_err(out3b, ref3) < 2e-2, "two-phase bf16 path mismatch"

    print("KERNEL_OK")
</pallas_src>

<mosaic_0001>
module attributes {stable_mosaic.version = 11 : i64} {
  func.func @_fused_kernel(%arg0: i32, %arg1: memref<512x128xf32, #tpu.memory_space<vmem>>, %arg2: memref<128x128xf32, #tpu.memory_space<vmem>>, %arg3: memref<512x128xf32, #tpu.memory_space<vmem>>) attributes {dimension_semantics = [#tpu.dimension_semantics<arbitrary>], iteration_bounds = array<i64: 1>, scalar_prefetch = 0 : i64, scratch_operands = 0 : i64, tpu.core_type = #tpu.core_type<tc>, window_params = [{pipeline_mode = #tpu.pipeline_mode<synchronous>, transform_indices = @transform_0, window_bounds = array<i64: 512, 128>}, {pipeline_mode = #tpu.pipeline_mode<synchronous>, transform_indices = @transform_1, window_bounds = array<i64: 128, 128>}, {pipeline_mode = #tpu.pipeline_mode<synchronous>, transform_indices = @transform_2, window_bounds = array<i64: 512, 128>}]} {
    %c0 = arith.constant 0 : index
    %c0_0 = arith.constant 0 : index
    %0 = vector.load %arg1[%c0, %c0_0] : memref<512x128xf32, #tpu.memory_space<vmem>>, vector<512x128xf32>
    %1 = arith.mulf %0, %0 : vector<512x128xf32>
    %cst = arith.constant dense<0.000000e+00> : vector<512xf32>
    %2 = vector.multi_reduction <add>, %1, %cst [1] : vector<512x128xf32> to vector<512xf32>
    %3 = vector.shape_cast %2 : vector<512xf32> to vector<512x1xf32>
    %4 = math.sqrt %3 : vector<512x1xf32>
    %cst_1 = arith.constant 9.99999996E-13 : f32
    %5 = vector.broadcast %cst_1 : f32 to vector<512x1xf32>
    %6 = arith.maximumf %4, %5 : vector<512x1xf32>
    %7 = tpu.reciprocal %6 : vector<512x1xf32> -> vector<512x1xf32>
    %8 = vector.broadcast %7 : vector<512x1xf32> to vector<512x128xf32>
    %9 = arith.mulf %0, %8 : vector<512x128xf32>
    %cst_2 = arith.constant dense<0.000000e+00> : vector<128x128xf32>
    %10 = tpu.matmul %9, %0, %cst_2 {dimension_numbers = #tpu.dot_dimension_numbers<[0], [0], [1], [1], [0, 1, 1, 1], [], []>, precision = #tpu.contract_precision<fp32>} : vector<512x128xf32>, vector<512x128xf32>, vector<128x128xf32> -> vector<128x128xf32>
    %c0_3 = arith.constant 0 : index
    %c0_4 = arith.constant 0 : index
    %11 = vector.load %arg2[%c0_3, %c0_4] : memref<128x128xf32, #tpu.memory_space<vmem>>, vector<128x128xf32>
    %cst_5 = arith.constant dense<0.000000e+00> : vector<128x128xf32>
    %12 = tpu.matmul %10, %11, %cst_5 {dimension_numbers = #tpu.dot_dimension_numbers<[1], [0], [0], [1], [0, 0, 1, 1], [], []>, precision = #tpu.contract_precision<fp32>} : vector<128x128xf32>, vector<128x128xf32>, vector<128x128xf32> -> vector<128x128xf32>
    %cst_6 = arith.constant dense<0.000000e+00> : vector<512x128xf32>
    %13 = tpu.matmul %9, %12, %cst_6 {dimension_numbers = #tpu.dot_dimension_numbers<[1], [0], [0], [1], [0, 0, 1, 1], [], []>, precision = #tpu.contract_precision<fp32>} : vector<512x128xf32>, vector<128x128xf32>, vector<512x128xf32> -> vector<512x128xf32>
    %c0_7 = arith.constant 0 : index
    %c0_8 = arith.constant 0 : index
    %14 = vector.load %arg3[%c0_7, %c0_8] : memref<512x128xf32, #tpu.memory_space<vmem>>, vector<512x128xf32>
    tpu.vector_store %arg3[%c0_7, %c0_8], %13 {strides = array<i32>} : memref<512x128xf32, #tpu.memory_space<vmem>>, vector<512x128xf32>,
    return
  }
  func.func @transform_0(%arg0: i32) -> (i32, i32) {
    %c0_i32 = arith.constant 0 : i32
    %c0_i32_0 = arith.constant 0 : i32
    %c0_i32_1 = arith.constant 0 : i32
    return %c0_i32, %c0_i32_0 : i32, i32
  }
  func.func @transform_1(%arg0: i32) -> (i32, i32) {
    %c0_i32 = arith.constant 0 : i32
    %c0_i32_0 = arith.constant 0 : i32
    %c0_i32_1 = arith.constant 0 : i32
    return %c0_i32, %c0_i32_0 : i32, i32
  }
  func.func @transform_2(%arg0: i32) -> (i32, i32) {
    %c0_i32 = arith.constant 0 : i32
    %c0_i32_0 = arith.constant 0 : i32
    %c0_i32_1 = arith.constant 0 : i32
    return %c0_i32, %c0_i32_0 : i32, i32
  }
}

</mosaic_0001>

<llo_original>
// kernel: tpu_custom_call.1
$region0: #{tpu_custom_call.1}
  #allocation0 [shape = 'u32[]', space=smem, size = 0x4, offset = 0x4, fixed_abs, tag = 'smem constant byte address 0x4 - core index']
  #allocation1 [shape = 'u32[144,128]{1,0:T(1,128)}', space=vmem, size = 0x12000, scoped, tag = 'internal scratch']
  %s0 = inlined_call_operand.hbm [shape: f32[512,128], index: 0, kind: input, shape index: {}]
  %s1 = inlined_call_operand.hbm [shape: f32[128,128], index: 1, kind: input, shape index: {}]
  %s2 = inlined_call_operand.hbm [shape: f32[512,128], index: 2, kind: output, shape index: {}]
  %s3 = sld [smem:[#allocation0]]
  $region26: #{tpu_custom_call.1} parent=0
    _
  %s5 = ssub.s32 1, %s3
  %s6 = scalar_select 0, %s5, %s3
  $region1: #{tpu_custom_call.1} parent=0
    #allocation2 [shape = 'u8[262144]{0}', space=vmem, size = 0x40000, scoped, tag = 'input window, operand 0, single buffered']
    #allocation3 [shape = 's32[1]{0}', space=sflag, size = 0x4, scoped, tag = 'scoped memory for tpu_custom_call.1']
    #allocation4 [shape = 's32[1]{0}', space=sflag, size = 0x4, scoped, tag = 'scoped memory for tpu_custom_call.1']
    #allocation5 [shape = 'u8[65536]{0}', space=vmem, size = 0x10000, scoped, tag = 'input window, operand 1, single buffered']
    #allocation6 [shape = 's32[1]{0}', space=sflag, size = 0x4, scoped, tag = 'scoped memory for tpu_custom_call.1']
    #allocation7 [shape = 'u8[262144]{0}', space=vmem, size = 0x40000, scoped, tag = 'output window, operand 0, single buffered']
    %7 = vsyncpa [#allocation3], 0
    %8 = vsyncpa [#allocation6], 0
    %9 = vsyncpa [#allocation4], 0
    // Predicated region
    $region2: #{tpu_custom_call.1} parent=1 // pred_check
      _
    $region3: #{tpu_custom_call.1} parent=1 // pred_check_branch
      %11 = sbr.rel (0) target = $region5
    $region4: #{tpu_custom_call.1} parent=1 // pred_region
      %s13 = ssub.s32 8192, 8192
      %14 = vsyncadd [#allocation3], %s13
      %s15 = sshll.u32 [#allocation2], 4
      %s16 = int_to_ptr.vmem [resolvable:$true] %s15
      %21 = dma.hbm_to_vmem [thread:$0]  %s0, 8192, %s16, [#allocation3], 128, 128, 8
    $region5: #{tpu_custom_call.1} parent=1 // pred_fallthru
      _
    // Predicated region
    $region6: #{tpu_custom_call.1} parent=1 // pred_check
      _
    $region7: #{tpu_custom_call.1} parent=1 // pred_check_branch
      %23 = sbr.rel (0) target = $region9
    $region8: #{tpu_custom_call.1} parent=1 // pred_region
      %s25 = ssub.s32 2048, 2048
      %26 = vsyncadd [#allocation6], %s25
      %s27 = sshll.u32 [#allocation5], 4
      %s28 = int_to_ptr.vmem [resolvable:$true] %s27
      %33 = dma.hbm_to_vmem [thread:$0]  %s1, 2048, %s28, [#allocation6], 128, 128, 8
    $region9: #{tpu_custom_call.1} parent=1 // pred_fallthru
      _
    // Predicated region
    $region10: #{tpu_custom_call.1} parent=1 // pred_check
      _
    $region11: #{tpu_custom_call.1} parent=1 // pred_check_branch
      %35 = sbr.rel (0) target = $region13
    $region12: #{tpu_custom_call.1} parent=1 // pred_region
      %36 = dma.done [#allocation3], 8192
    $region13: #{tpu_custom_call.1} parent=1 // pred_fallthru
      _
    // Predicated region
    $region14: #{tpu_custom_call.1} parent=1 // pred_check
      _
    $region15: #{tpu_custom_call.1} parent=1 // pred_check_branch
      %38 = sbr.rel (0) target = $region17
    $region16: #{tpu_custom_call.1} parent=1 // pred_region
      %39 = dma.done [#allocation6], 2048
    $region17: #{tpu_custom_call.1} parent=1 // pred_fallthru
      _
    %v40 = vld [vmem:[#allocation2] sm:$0xff]
    %v41 = vld [vmem:[#allocation2 + $0x8] sm:$0xff]
    %v42 = vld [vmem:[#allocation2 + $0x10] sm:$0xff]
    %v43 = vld [vmem:[#allocation2 + $0x18] sm:$0xff]
    %v44 = vld [vmem:[#allocation2 + $0x20] sm:$0xff]
    %v45 = vld [vmem:[#allocation2 + $0x28] sm:$0xff]
    %v46 = vld [vmem:[#allocation2 + $0x30] sm:$0xff]
    %v47 = vld [vmem:[#allocation2 + $0x38] sm:$0xff]
    %v48 = vld [vmem:[#allocation2 + $0x40] sm:$0xff]
    %v49 = vld [vmem:[#allocation2 + $0x48] sm:$0xff]
    %v50 = vld [vmem:[#allocation2 + $0x50] sm:$0xff]
    %v51 = vld [vmem:[#allocation2 + $0x58] sm:$0xff]
    %v52 = vld [vmem:[#allocation2 + $0x60] sm:$0xff]
    %v53 = vld [vmem:[#allocation2 + $0x68] sm:$0xff]
    %v54 = vld [vmem:[#allocation2 + $0x70] sm:$0xff]
    %v55 = vld [vmem:[#allocation2 + $0x78] sm:$0xff]
    %v56 = vld [vmem:[#allocation2 + $0x80] sm:$0xff]
    %v57 = vld [vmem:[#allocation2 + $0x88] sm:$0xff]
    %v58 = vld [vmem:[#allocation2 + $0x90] sm:$0xff]
    %v59 = vld [vmem:[#allocation2 + $0x98] sm:$0xff]
    %v60 = vld [vmem:[#allocation2 + $0xa0] sm:$0xff]
    %v61 = vld [vmem:[#allocation2 + $0xa8] sm:$0xff]
    %v62 = vld [vmem:[#allocation2 + $0xb0] sm:$0xff]
    %v63 = vld [vmem:[#allocation2 + $0xb8] sm:$0xff]
    %v64 = vld [vmem:[#allocation2 + $0xc0] sm:$0xff]
    %v65 = vld [vmem:[#allocation2 + $0xc8] sm:$0xff]
    %v66 = vld [vmem:[#allocation2 + $0xd0] sm:$0xff]
    %v67 = vld [vmem:[#allocation2 + $0xd8] sm:$0xff]
    %v68 = vld [vmem:[#allocation2 + $0xe0] sm:$0xff]
    %v69 = vld [vmem:[#allocation2 + $0xe8] sm:$0xff]
    %v70 = vld [vmem:[#allocation2 + $0xf0] sm:$0xff]
    %v71 = vld [vmem:[#allocation2 + $0xf8] sm:$0xff]
    %v72 = vld [vmem:[#allocation2 + $0x100] sm:$0xff]
    %v73 = vld [vmem:[#allocation2 + $0x108] sm:$0xff]
    %v74 = vld [vmem:[#allocation2 + $0x110] sm:$0xff]
    %v75 = vld [vmem:[#allocation2 + $0x118] sm:$0xff]
    %v76 = vld [vmem:[#allocation2 + $0x120] sm:$0xff]
    %v77 = vld [vmem:[#allocation2 + $0x128] sm:$0xff]
    %v78 = vld [vmem:[#allocation2 + $0x130] sm:$0xff]
    %v79 = vld [vmem:[#allocation2 + $0x138] sm:$0xff]
    %v80 = vld [vmem:[#allocation2 + $0x140] sm:$0xff]
    %v81 = vld [vmem:[#allocation2 + $0x148] sm:$0xff]
    %v82 = vld [vmem:[#allocation2 + $0x150] sm:$0xff]
    %v83 = vld [vmem:[#allocation2 + $0x158] sm:$0xff]
    %v84 = vld [vmem:[#allocation2 + $0x160] sm:$0xff]
    %v85 = vld [vmem:[#allocation2 + $0x168] sm:$0xff]
    %v86 = vld [vmem:[#allocation2 + $0x170] sm:$0xff]
    %v87 = vld [vmem:[#allocation2 + $0x178] sm:$0xff]
    %v88 = vld [vmem:[#allocation2 + $0x180] sm:$0xff]
    %v89 = vld [vmem:[#allocation2 + $0x188] sm:$0xff]
    %v90 = vld [vmem:[#allocation2 + $0x190] sm:$0xff]
    %v91 = vld [vmem:[#allocation2 + $0x198] sm:$0xff]
    %v92 = vld [vmem:[#allocation2 + $0x1a0] sm:$0xff]
    %v93 = vld [vmem:[#allocation2 + $0x1a8] sm:$0xff]
    %v94 = vld [vmem:[#allocation2 + $0x1b0] sm:$0xff]
    %v95 = vld [vmem:[#allocation2 + $0x1b8] sm:$0xff]
    %v96 = vld [vmem:[#allocation2 + $0x1c0] sm:$0xff]
    %v97 = vld [vmem:[#allocation2 + $0x1c8] sm:$0xff]
    %v98 = vld [vmem:[#allocation2 + $0x1d0] sm:$0xff]
    %v99 = vld [vmem:[#allocation2 + $0x1d8] sm:$0xff]
    %v100 = vld [vmem:[#allocation2 + $0x1e0] sm:$0xff]
    %v101 = vld [vmem:[#allocation2 + $0x1e8] sm:$0xff]
    %v102 = vld [vmem:[#allocation2 + $0x1f0] sm:$0xff]
    %v103 = vld [vmem:[#allocation2 + $0x1f8] sm:$0xff]
    %v104 = vmul.f32 %v40, %v40
    %v105 = vmul.f32 %v41, %v41
    %v106 = vmul.f32 %v42, %v42
    %v107 = vmul.f32 %v43, %v43
    %v108 = vmul.f32 %v44, %v44
    %v109 = vmul.f32 %v45, %v45
    %v110 = vmul.f32 %v46, %v46
    %v111 = vmul.f32 %v47, %v47
    %v112 = vmul.f32 %v48, %v48
    %v113 = vmul.f32 %v49, %v49
    %v114 = vmul.f32 %v50, %v50
    %v115 = vmul.f32 %v51, %v51
    %v116 = vmul.f32 %v52, %v52
    %v117 = vmul.f32 %v53, %v53
    %v118 = vmul.f32 %v54, %v54
    %v119 = vmul.f32 %v55, %v55
    %v120 = vmul.f32 %v56, %v56
    %v121 = vmul.f32 %v57, %v57
    %v122 = vmul.f32 %v58, %v58
    %v123 = vmul.f32 %v59, %v59
    %v124 = vmul.f32 %v60, %v60
    %v125 = vmul.f32 %v61, %v61
    %v126 = vmul.f32 %v62, %v62
    %v127 = vmul.f32 %v63, %v63
    %v128 = vmul.f32 %v64, %v64
    %v129 = vmul.f32 %v65, %v65
    %v130 = vmul.f32 %v66, %v66
    %v131 = vmul.f32 %v67, %v67
    %v132 = vmul.f32 %v68, %v68
    %v133 = vmul.f32 %v69, %v69
    %v134 = vmul.f32 %v70, %v70
    %v135 = vmul.f32 %v71, %v71
    %v136 = vmul.f32 %v72, %v72
    %v137 = vmul.f32 %v73, %v73
    %v138 = vmul.f32 %v74, %v74
    %v139 = vmul.f32 %v75, %v75
    %v140 = vmul.f32 %v76, %v76
    %v141 = vmul.f32 %v77, %v77
    %v142 = vmul.f32 %v78, %v78
    %v143 = vmul.f32 %v79, %v79
    %v144 = vmul.f32 %v80, %v80
    %v145 = vmul.f32 %v81, %v81
    %v146 = vmul.f32 %v82, %v82
    %v147 = vmul.f32 %v83, %v83
    %v148 = vmul.f32 %v84, %v84
    %v149 = vmul.f32 %v85, %v85
    %v150 = vmul.f32 %v86, %v86
    %v151 = vmul.f32 %v87, %v87
    %v152 = vmul.f32 %v88, %v88
    %v153 = vmul.f32 %v89, %v89
    %v154 = vmul.f32 %v90, %v90
    %v155 = vmul.f32 %v91, %v91
    %v156 = vmul.f32 %v92, %v92
    %v157 = vmul.f32 %v93, %v93
    %v158 = vmul.f32 %v94, %v94
    %v159 = vmul.f32 %v95, %v95
    %v160 = vmul.f32 %v96, %v96
    %v161 = vmul.f32 %v97, %v97
    %v162 = vmul.f32 %v98, %v98
    %v163 = vmul.f32 %v99, %v99
    %v164 = vmul.f32 %v100, %v100
    %v165 = vmul.f32 %v101, %v101
    %v166 = vmul.f32 %v102, %v102
    %v167 = vmul.f32 %v103, %v103
    %168 = vadd.xlane.f32.xlu0 %v104
    %v169 = vpop.xlane.xlu0 %168
    %170 = vadd.xlane.f32.xlu0 %v105
    %v171 = vpop.xlane.xlu0 %170
    %172 = vadd.xlane.f32.xlu0 %v106
    %v173 = vpop.xlane.xlu0 %172
    %174 = vadd.xlane.f32.xlu0 %v107
    %v175 = vpop.xlane.xlu0 %174
    %176 = vadd.xlane.f32.xlu0 %v108
    %v177 = vpop.xlane.xlu0 %176
    %178 = vadd.xlane.f32.xlu0 %v109
    %v179 = vpop.xlane.xlu0 %178
    %180 = vadd.xlane.f32.xlu0 %v110
    %v181 = vpop.xlane.xlu0 %180
    %182 = vadd.xlane.f32.xlu0 %v111
    %v183 = vpop.xlane.xlu0 %182
    %184 = vadd.xlane.f32.xlu0 %v112
    %v185 = vpop.xlane.xlu0 %184
    %186 = vadd.xlane.f32.xlu0 %v113
    %v187 = vpop.xlane.xlu0 %186
    %188 = vadd.xlane.f32.xlu0 %v114
    %v189 = vpop.xlane.xlu0 %188
    %190 = vadd.xlane.f32.xlu0 %v115
    %v191 = vpop.xlane.xlu0 %190
    %192 = vadd.xlane.f32.xlu0 %v116
    %v193 = vpop.xlane.xlu0 %192
    %194 = vadd.xlane.f32.xlu0 %v117
    %v195 = vpop.xlane.xlu0 %194
    %196 = vadd.xlane.f32.xlu0 %v118
    %v197 = vpop.xlane.xlu0 %196
    %198 = vadd.xlane.f32.xlu0 %v119
    %v199 = vpop.xlane.xlu0 %198
    %200 = vadd.xlane.f32.xlu0 %v120
    %v201 = vpop.xlane.xlu0 %200
    %202 = vadd.xlane.f32.xlu0 %v121
    %v203 = vpop.xlane.xlu0 %202
    %204 = vadd.xlane.f32.xlu0 %v122
    %v205 = vpop.xlane.xlu0 %204
    %206 = vadd.xlane.f32.xlu0 %v123
    %v207 = vpop.xlane.xlu0 %206
    %208 = vadd.xlane.f32.xlu0 %v124
    %v209 = vpop.xlane.xlu0 %208
    %210 = vadd.xlane.f32.xlu0 %v125
    %v211 = vpop.xlane.xlu0 %210
    %212 = vadd.xlane.f32.xlu0 %v126
    %v213 = vpop.xlane.xlu0 %212
    %214 = vadd.xlane.f32.xlu0 %v127
    %v215 = vpop.xlane.xlu0 %214
    %216 = vadd.xlane.f32.xlu0 %v128
    %v217 = vpop.xlane.xlu0 %216
    %218 = vadd.xlane.f32.xlu0 %v129
    %v219 = vpop.xlane.xlu0 %218
    %220 = vadd.xlane.f32.xlu0 %v130
    %v221 = vpop.xlane.xlu0 %220
    %222 = vadd.xlane.f32.xlu0 %v131
    %v223 = vpop.xlane.xlu0 %222
    %224 = vadd.xlane.f32.xlu0 %v132
    %v225 = vpop.xlane.xlu0 %224
    %226 = vadd.xlane.f32.xlu0 %v133
    %v227 = vpop.xlane.xlu0 %226
    %228 = vadd.xlane.f32.xlu0 %v134
    %v229 = vpop.xlane.xlu0 %228
    %230 = vadd.xlane.f32.xlu0 %v135
    %v231 = vpop.xlane.xlu0 %230
    %232 = vadd.xlane.f32.xlu0 %v136
    %v233 = vpop.xlane.xlu0 %232
    %234 = vadd.xlane.f32.xlu0 %v137
    %v235 = vpop.xlane.xlu0 %234
    %236 = vadd.xlane.f32.xlu0 %v138
    %v237 = vpop.xlane.xlu0 %236
    %238 = vadd.xlane.f32.xlu0 %v139
    %v239 = vpop.xlane.xlu0 %238
    %240 = vadd.xlane.f32.xlu0 %v140
    %v241 = vpop.xlane.xlu0 %240
    %242 = vadd.xlane.f32.xlu0 %v141
    %v243 = vpop.xlane.xlu0 %242
    %244 = vadd.xlane.f32.xlu0 %v142
    %v245 = vpop.xlane.xlu0 %244
    %246 = vadd.xlane.f32.xlu0 %v143
    %v247 = vpop.xlane.xlu0 %246
    %248 = vadd.xlane.f32.xlu0 %v144
    %v249 = vpop.xlane.xlu0 %248
    %250 = vadd.xlane.f32.xlu0 %v145
    %v251 = vpop.xlane.xlu0 %250
    %252 = vadd.xlane.f32.xlu0 %v146
    %v253 = vpop.xlane.xlu0 %252
    %254 = vadd.xlane.f32.xlu0 %v147
    %v255 = vpop.xlane.xlu0 %254
    %256 = vadd.xlane.f32.xlu0 %v148
    %v257 = vpop.xlane.xlu0 %256
    %258 = vadd.xlane.f32.xlu0 %v149
    %v259 = vpop.xlane.xlu0 %258
    %260 = vadd.xlane.f32.xlu0 %v150
    %v261 = vpop.xlane.xlu0 %260
    %262 = vadd.xlane.f32.xlu0 %v151
    %v263 = vpop.xlane.xlu0 %262
    %264 = vadd.xlane.f32.xlu0 %v152
    %v265 = vpop.xlane.xlu0 %264
    %266 = vadd.xlane.f32.xlu0 %v153
    %v267 = vpop.xlane.xlu0 %266
    %268 = vadd.xlane.f32.xlu0 %v154
    %v269 = vpop.xlane.xlu0 %268
    %270 = vadd.xlane.f32.xlu0 %v155
    %v271 = vpop.xlane.xlu0 %270
    %272 = vadd.xlane.f32.xlu0 %v156
    %v273 = vpop.xlane.xlu0 %272
    %274 = vadd.xlane.f32.xlu0 %v157
    %v275 = vpop.xlane.xlu0 %274
    %276 = vadd.xlane.f32.xlu0 %v158
    %v277 = vpop.xlane.xlu0 %276
    %278 = vadd.xlane.f32.xlu0 %v159
    %v279 = vpop.xlane.xlu0 %278
    %280 = vadd.xlane.f32.xlu0 %v160
    %v281 = vpop.xlane.xlu0 %280
    %282 = vadd.xlane.f32.xlu0 %v161
    %v283 = vpop.xlane.xlu0 %282
    %284 = vadd.xlane.f32.xlu0 %v162
    %v285 = vpop.xlane.xlu0 %284
    %286 = vadd.xlane.f32.xlu0 %v163
    %v287 = vpop.xlane.xlu0 %286
    %288 = vadd.xlane.f32.xlu0 %v164
    %v289 = vpop.xlane.xlu0 %288
    %290 = vadd.xlane.f32.xlu0 %v165
    %v291 = vpop.xlane.xlu0 %290
    %292 = vadd.xlane.f32.xlu0 %v166
    %v293 = vpop.xlane.xlu0 %292
    %294 = vadd.xlane.f32.xlu0 %v167
    %v295 = vpop.xlane.xlu0 %294
    %v296 = vrsqrt.pop %v169
    %v297 = vmul.f32 %v169, %v296
    %vm298 = vcmp.eq.f32.partialorder %v169, inf
    %v299 = vsel %vm298, %v169, %v297
    %vm300 = vcmp.eq.f32.partialorder %v169, 0.0
    %v301 = vand.u32 %v169, 2147483648
    %v302 = vsel %vm300, %v301, %v299
    %v303 = vrsqrt.pop %v171
    %v304 = vmul.f32 %v171, %v303
    %vm305 = vcmp.eq.f32.partialorder %v171, inf
    %v306 = vsel %vm305, %v171, %v304
    %vm307 = vcmp.eq.f32.partialorder %v171, 0.0
    %v308 = vand.u32 %v171, 2147483648
    %v309 = vsel %vm307, %v308, %v306
    %v310 = vrsqrt.pop %v173
    %v311 = vmul.f32 %v173, %v310
    %vm312 = vcmp.eq.f32.partialorder %v173, inf
    %v313 = vsel %vm312, %v173, %v311
    %vm314 = vcmp.eq.f32.partialorder %v173, 0.0
    %v315 = vand.u32 %v173, 2147483648
    %v316 = vsel %vm314, %v315, %v313
    %v317 = vrsqrt.pop %v175
    %v318 = vmul.f32 %v175, %v317
    %vm319 = vcmp.eq.f32.partialorder %v175, inf
    %v320 = vsel %vm319, %v175, %v318
    %vm321 = vcmp.eq.f32.partialorder %v175, 0.0
    %v322 = vand.u32 %v175, 2147483648
    %v323 = vsel %vm321, %v322, %v320
    %v324 = vrsqrt.pop %v177
    %v325 = vmul.f32 %v177, %v324
    %vm326 = vcmp.eq.f32.partialorder %v177, inf
    %v327 = vsel %vm326, %v177, %v325
    %vm328 = vcmp.eq.f32.partialorder %v177, 0.0
    %v329 = vand.u32 %v177, 2147483648
    %v330 = vsel %vm328, %v329, %v327
    %v331 = vrsqrt.pop %v179
    %v332 = vmul.f32 %v179, %v331
    %vm333 = vcmp.eq.f32.partialorder %v179, inf
    %v334 = vsel %vm333, %v179, %v332
    %vm335 = vcmp.eq.f32.partialorder %v179, 0.0
    %v336 = vand.u32 %v179, 2147483648
    %v337 = vsel %vm335, %v336, %v334
    %v338 = vrsqrt.pop %v181
    %v339 = vmul.f32 %v181, %v338
    %vm340 = vcmp.eq.f32.partialorder %v181, inf
    %v341 = vsel %vm340, %v181, %v339
    %vm342 = vcmp.eq.f32.partialorder %v181, 0.0
    %v343 = vand.u32 %v181, 2147483648
    %v344 = vsel %vm342, %v343, %v341
    %v345 = vrsqrt.pop %v183
    %v346 = vmul.f32 %v183, %v345
    %vm347 = vcmp.eq.f32.partialorder %v183, inf
    %v348 = vsel %vm347, %v183, %v346
    %vm349 = vcmp.eq.f32.partialorder %v183, 0.0
    %v350 = vand.u32 %v183, 2147483648
    %v351 = vsel %vm349, %v350, %v348
    %v352 = vrsqrt.pop %v185
    %v353 = vmul.f32 %v185, %v352
    %vm354 = vcmp.eq.f32.partialorder %v185, inf
    %v355 = vsel %vm354, %v185, %v353
    %vm356 = vcmp.eq.f32.partialorder %v185, 0.0
    %v357 = vand.u32 %v185, 2147483648
    %v358 = vsel %vm356, %v357, %v355
    %v359 = vrsqrt.pop %v187
    %v360 = vmul.f32 %v187, %v359
    %vm361 = vcmp.eq.f32.partialorder %v187, inf
    %v362 = vsel %vm361, %v187, %v360
    %vm363 = vcmp.eq.f32.partialorder %v187, 0.0
    %v364 = vand.u32 %v187, 2147483648
    %v365 = vsel %vm363, %v364, %v362
    %v366 = vrsqrt.pop %v189
    %v367 = vmul.f32 %v189, %v366
    %vm368 = vcmp.eq.f32.partialorder %v189, inf
    %v369 = vsel %vm368, %v189, %v367
    %vm370 = vcmp.eq.f32.partialorder %v189, 0.0
    %v371 = vand.u32 %v189, 2147483648
    %v372 = vsel %vm370, %v371, %v369
    %v373 = vrsqrt.pop %v191
    %v374 = vmul.f32 %v191, %v373
    %vm375 = vcmp.eq.f32.partialorder %v191, inf
    %v376 = vsel %vm375, %v191, %v374
    %vm377 = vcmp.eq.f32.partialorder %v191, 0.0
    %v378 = vand.u32 %v191, 2147483648
    %v379 = vsel %vm377, %v378, %v376
    %v380 = vrsqrt.pop %v193
    %v381 = vmul.f32 %v193, %v380
    %vm382 = vcmp.eq.f32.partialorder %v193, inf
    %v383 = vsel %vm382, %v193, %v381
    %vm384 = vcmp.eq.f32.partialorder %v193, 0.0
    %v385 = vand.u32 %v193, 2147483648
    %v386 = vsel %vm384, %v385, %v383
    %v387 = vrsqrt.pop %v195
    %v388 = vmul.f32 %v195, %v387
    %vm389 = vcmp.eq.f32.partialorder %v195, inf
    %v390 = vsel %vm389, %v195, %v388
    %vm391 = vcmp.eq.f32.partialorder %v195, 0.0
    %v392 = vand.u32 %v195, 2147483648
    %v393 = vsel %vm391, %v392, %v390
    %v394 = vrsqrt.pop %v197
    %v395 = vmul.f32 %v197, %v394
    %vm396 = vcmp.eq.f32.partialorder %v197, inf
    %v397 = vsel %vm396, %v197, %v395
    %vm398 = vcmp.eq.f32.partialorder %v197, 0.0
    %v399 = vand.u32 %v197, 2147483648
    %v400 = vsel %vm398, %v399, %v397
    %v401 = vrsqrt.pop %v199
    %v402 = vmul.f32 %v199, %v401
    %vm403 = vcmp.eq.f32.partialorder %v199, inf
    %v404 = vsel %vm403, %v199, %v402
    %vm405 = vcmp.eq.f32.partialorder %v199, 0.0
    %v406 = vand.u32 %v199, 2147483648
    %v407 = vsel %vm405, %v406, %v404
    %v408 = vrsqrt.pop %v201
    %v409 = vmul.f32 %v201, %v408
    %vm410 = vcmp.eq.f32.partialorder %v201, inf
    %v411 = vsel %vm410, %v201, %v409
    %vm412 = vcmp.eq.f32.partialorder %v201, 0.0
    %v413 = vand.u32 %v201, 2147483648
    %v414 = vsel %vm412, %v413, %v411
    %v415 = vrsqrt.pop %v203
    %v416 = vmul.f32 %v203, %v415
    %vm417 = vcmp.eq.f32.partialorder %v203, inf
    %v418 = vsel %vm417, %v203, %v416
    %vm419 = vcmp.eq.f32.partialorder %v203, 0.0
    %v420 = vand.u32 %v203, 2147483648
    %v421 = vsel %vm419, %v420, %v418
    %v422 = vrsqrt.pop %v205
    %v423 = vmul.f32 %v205, %v422
    %vm424 = vcmp.eq.f32.partialorder %v205, inf
    %v425 = vsel %vm424, %v205, %v423
    %vm426 = vcmp.eq.f32.partialorder %v205, 0.0
    %v427 = vand.u32 %v205, 2147483648
    %v428 = vsel %vm426, %v427, %v425
    %v429 = vrsqrt.pop %v207
    %v430 = vmul.f32 %v207, %v429
    %vm431 = vcmp.eq.f32.partialorder %v207, inf
    %v432 = vsel %vm431, %v207, %v430
    %vm433 = vcmp.eq.f32.partialorder %v207, 0.0
    %v434 = vand.u32 %v207, 2147483648
    %v435 = vsel %vm433, %v434, %v432
    %v436 = vrsqrt.pop %v209
    %v437 = vmul.f32 %v209, %v436
    %vm438 = vcmp.eq.f32.partialorder %v209, inf
    %v439 = vsel %vm438, %v209, %v437
    %vm440 = vcmp.eq.f32.partialorder %v209, 0.0
    %v441 = vand.u32 %v209, 2147483648
    %v442 = vsel %vm440, %v441, %v439
    %v443 = vrsqrt.pop %v211
    %v444 = vmul.f32 %v211, %v443
    %vm445 = vcmp.eq.f32.partialorder %v211, inf
    %v446 = vsel %vm445, %v211, %v444
    %vm447 = vcmp.eq.f32.partialorder %v211, 0.0
    %v448 = vand.u32 %v211, 2147483648
    %v449 = vsel %vm447, %v448, %v446
    %v450 = vrsqrt.pop %v213
    %v451 = vmul.f32 %v213, %v450
    %vm452 = vcmp.eq.f32.partialorder %v213, inf
    %v453 = vsel %vm452, %v213, %v451
    %vm454 = vcmp.eq.f32.partialorder %v213, 0.0
    %v455 = vand.u32 %v213, 2147483648
    %v456 = vsel %vm454, %v455, %v453
    %v457 = vrsqrt.pop %v215
    %v458 = vmul.f32 %v215, %v457
    %vm459 = vcmp.eq.f32.partialorder %v215, inf
    %v460 = vsel %vm459, %v215, %v458
    %vm461 = vcmp.eq.f32.partialorder %v215, 0.0
    %v462 = vand.u32 %v215, 2147483648
    %v463 = vsel %vm461, %v462, %v460
    %v464 = vrsqrt.pop %v217
    %v465 = vmul.f32 %v217, %v464
    %vm466 = vcmp.eq.f32.partialorder %v217, inf
    %v467 = vsel %vm466, %v217, %v465
    %vm468 = vcmp.eq.f32.partialorder %v217, 0.0
    %v469 = vand.u32 %v217, 2147483648
    %v470 = vsel %vm468, %v469, %v467
    %v471 = vrsqrt.pop %v219
    %v472 = vmul.f32 %v219, %v471
    %vm473 = vcmp.eq.f32.partialorder %v219, inf
    %v474 = vsel %vm473, %v219, %v472
    %vm475 = vcmp.eq.f32.partialorder %v219, 0.0
    %v476 = vand.u32 %v219, 2147483648
    %v477 = vsel %vm475, %v476, %v474
    %v478 = vrsqrt.pop %v221
    %v479 = vmul.f32 %v221, %v478
    %vm480 = vcmp.eq.f32.partialorder %v221, inf
    %v481 = vsel %vm480, %v221, %v479
    %vm482 = vcmp.eq.f32.partialorder %v221, 0.0
    %v483 = vand.u32 %v221, 2147483648
    %v484 = vsel %vm482, %v483, %v481
    %v485 = vrsqrt.pop %v223
    %v486 = vmul.f32 %v223, %v485
    %vm487 = vcmp.eq.f32.partialorder %v223, inf
    %v488 = vsel %vm487, %v223, %v486
    %vm489 = vcmp.eq.f32.partialorder %v223, 0.0
    %v490 = vand.u32 %v223, 2147483648
    %v491 = vsel %vm489, %v490, %v488
    %v492 = vrsqrt.pop %v225
    %v493 = vmul.f32 %v225, %v492
    %vm494 = vcmp.eq.f32.partialorder %v225, inf
    %v495 = vsel %vm494, %v225, %v493
    %vm496 = vcmp.eq.f32.partialorder %v225, 0.0
    %v497 = vand.u32 %v225, 2147483648
    %v498 = vsel %vm496, %v497, %v495
    %v499 = vrsqrt.pop %v227
    %v500 = vmul.f32 %v227, %v499
    %vm501 = vcmp.eq.f32.partialorder %v227, inf
    %v502 = vsel %vm501, %v227, %v500
    %vm503 = vcmp.eq.f32.partialorder %v227, 0.0
    %v504 = vand.u32 %v227, 2147483648
    %v505 = vsel %vm503, %v504, %v502
    %v506 = vrsqrt.pop %v229
    %v507 = vmul.f32 %v229, %v506
    %vm508 = vcmp.eq.f32.partialorder %v229, inf
    %v509 = vsel %vm508, %v229, %v507
    %vm510 = vcmp.eq.f32.partialorder %v229, 0.0
    %v511 = vand.u32 %v229, 2147483648
    %v512 = vsel %vm510, %v511, %v509
    %v513 = vrsqrt.pop %v231
    %v514 = vmul.f32 %v231, %v513
    %vm515 = vcmp.eq.f32.partialorder %v231, inf
    %v516 = vsel %vm515, %v231, %v514
    %vm517 = vcmp.eq.f32.partialorder %v231, 0.0
    %v518 = vand.u32 %v231, 2147483648
    %v519 = vsel %vm517, %v518, %v516
    %v520 = vrsqrt.pop %v233
    %v521 = vmul.f32 %v233, %v520
    %vm522 = vcmp.eq.f32.partialorder %v233, inf
    %v523 = vsel %vm522, %v233, %v521
    %vm524 = vcmp.eq.f32.partialorder %v233, 0.0
    %v525 = vand.u32 %v233, 2147483648
    %v526 = vsel %vm524, %v525, %v523
    %v527 = vrsqrt.pop %v235
    %v528 = vmul.f32 %v235, %v527
    %vm529 = vcmp.eq.f32.partialorder %v235, inf
    %v530 = vsel %vm529, %v235, %v528
    %vm531 = vcmp.eq.f32.partialorder %v235, 0.0
    %v532 = vand.u32 %v235, 2147483648
    %v533 = vsel %vm531, %v532, %v530
    %v534 = vrsqrt.pop %v237
    %v535 = vmul.f32 %v237, %v534
    %vm536 = vcmp.eq.f32.partialorder %v237, inf
    %v537 = vsel %vm536, %v237, %v535
    %vm538 = vcmp.eq.f32.partialorder %v237, 0.0
    %v539 = vand.u32 %v237, 2147483648
    %v540 = vsel %vm538, %v539, %v537
    %v541 = vrsqrt.pop %v239
    %v542 = vmul.f32 %v239, %v541
    %vm543 = vcmp.eq.f32.partialorder %v239, inf
    %v544 = vsel %vm543, %v239, %v542
    %vm545 = vcmp.eq.f32.partialorder %v239, 0.0
    %v546 = vand.u32 %v239, 2147483648
    %v547 = vsel %vm545, %v546, %v544
    %v548 = vrsqrt.pop %v241
    %v549 = vmul.f32 %v241, %v548
    %vm550 = vcmp.eq.f32.partialorder %v241, inf
    %v551 = vsel %vm550, %v241, %v549
    %vm552 = vcmp.eq.f32.partialorder %v241, 0.0
    %v553 = vand.u32 %v241, 2147483648
    %v554 = vsel %vm552, %v553, %v551
    %v555 = vrsqrt.pop %v243
    %v556 = vmul.f32 %v243, %v555
    %vm557 = vcmp.eq.f32.partialorder %v243, inf
    %v558 = vsel %vm557, %v243, %v556
    %vm559 = vcmp.eq.f32.partialorder %v243, 0.0
    %v560 = vand.u32 %v243, 2147483648
    %v561 = vsel %vm559, %v560, %v558
    %v562 = vrsqrt.pop %v245
    %v563 = vmul.f32 %v245, %v562
    %vm564 = vcmp.eq.f32.partialorder %v245, inf
    %v565 = vsel %vm564, %v245, %v563
    %vm566 = vcmp.eq.f32.partialorder %v245, 0.0
    %v567 = vand.u32 %v245, 2147483648
    %v568 = vsel %vm566, %v567, %v565
    %v569 = vrsqrt.pop %v247
    %v570 = vmul.f32 %v247, %v569
    %vm571 = vcmp.eq.f32.partialorder %v247, inf
    %v572 = vsel %vm571, %v247, %v570
    %vm573 = vcmp.eq.f32.partialorder %v247, 0.0
    %v574 = vand.u32 %v247, 2147483648
    %v575 = vsel %vm573, %v574, %v572
    %v576 = vrsqrt.pop %v249
    %v577 = vmul.f32 %v249, %v576
    %vm578 = vcmp.eq.f32.partialorder %v249, inf
    %v579 = vsel %vm578, %v249, %v577
    %vm580 = vcmp.eq.f32.partialorder %v249, 0.0
    %v581 = vand.u32 %v249, 2147483648
    %v582 = vsel %vm580, %v581, %v579
    %v583 = vrsqrt.pop %v251
    %v584 = vmul.f32 %v251, %v583
    %vm585 = vcmp.eq.f32.partialorder %v251, inf
    %v586 = vsel %vm585, %v251, %v584
    %vm587 = vcmp.eq.f32.partialorder %v251, 0.0
    %v588 = vand.u32 %v251, 2147483648
    %v589 = vsel %vm587, %v588, %v586
    %v590 = vrsqrt.pop %v253
    %v591 = vmul.f32 %v253, %v590
    %vm592 = vcmp.eq.f32.partialorder %v253, inf
    %v593 = vsel %vm592, %v253, %v591
    %vm594 = vcmp.eq.f32.partialorder %v253, 0.0
    %v595 = vand.u32 %v253, 2147483648
    %v596 = vsel %vm594, %v595, %v593
    %v597 = vrsqrt.pop %v255
    %v598 = vmul.f32 %v255, %v597
    %vm599 = vcmp.eq.f32.partialorder %v255, inf
    %v600 = vsel %vm599, %v255, %v598
    %vm601 = vcmp.eq.f32.partialorder %v255, 0.0
    %v602 = vand.u32 %v255, 2147483648
    %v603 = vsel %vm601, %v602, %v600
    %v604 = vrsqrt.pop %v257
    %v605 = vmul.f32 %v257, %v604
    %vm606 = vcmp.eq.f32.partialorder %v257, inf
    %v607 = vsel %vm606, %v257, %v605
    %vm608 = vcmp.eq.f32.partialorder %v257, 0.0
    %v609 = vand.u32 %v257, 2147483648
    %v610 = vsel %vm608, %v609, %v607
    %v611 = vrsqrt.pop %v259
    %v612 = vmul.f32 %v259, %v611
    %vm613 = vcmp.eq.f32.partialorder %v259, inf
    %v614 = vsel %vm613, %v259, %v612
    %vm615 = vcmp.eq.f32.partialorder %v259, 0.0
    %v616 = vand.u32 %v259, 2147483648
    %v617 = vsel %vm615, %v616, %v614
    %v618 = vrsqrt.pop %v261
    %v619 = vmul.f32 %v261, %v618
    %vm620 = vcmp.eq.f32.partialorder %v261, inf
    %v621 = vsel %vm620, %v261, %v619
    %vm622 = vcmp.eq.f32.partialorder %v261, 0.0
    %v623 = vand.u32 %v261, 2147483648
    %v624 = vsel %vm622, %v623, %v621
    %v625 = vrsqrt.pop %v263
    %v626 = vmul.f32 %v263, %v625
    %vm627 = vcmp.eq.f32.partialorder %v263, inf
    %v628 = vsel %vm627, %v263, %v626
    %vm629 = vcmp.eq.f32.partialorder %v263, 0.0
    %v630 = vand.u32 %v263, 2147483648
    %v631 = vsel %vm629, %v630, %v628
    %v632 = vrsqrt.pop %v265
    %v633 = vmul.f32 %v265, %v632
    %vm634 = vcmp.eq.f32.partialorder %v265, inf
    %v635 = vsel %vm634, %v265, %v633
    %vm636 = vcmp.eq.f32.partialorder %v265, 0.0
    %v637 = vand.u32 %v265, 2147483648
    %v638 = vsel %vm636, %v637, %v635
    %v639 = vrsqrt.pop %v267
    %v640 = vmul.f32 %v267, %v639
    %vm641 = vcmp.eq.f32.partialorder %v267, inf
    %v642 = vsel %vm641, %v267, %v640
    %vm643 = vcmp.eq.f32.partialorder %v267, 0.0
    %v644 = vand.u32 %v267, 2147483648
    %v645 = vsel %vm643, %v644, %v642
    %v646 = vrsqrt.pop %v269
    %v647 = vmul.f32 %v269, %v646
    %vm648 = vcmp.eq.f32.partialorder %v269, inf
    %v649 = vsel %vm648, %v269, %v647
    %vm650 = vcmp.eq.f32.partialorder %v269, 0.0
    %v651 = vand.u32 %v269, 2147483648
    %v652 = vsel %vm650, %v651, %v649
    %v653 = vrsqrt.pop %v271
    %v654 = vmul.f32 %v271, %v653
    %vm655 = vcmp.eq.f32.partialorder %v271, inf
    %v656 = vsel %vm655, %v271, %v654
    %vm657 = vcmp.eq.f32.partialorder %v271, 0.0
    %v658 = vand.u32 %v271, 2147483648
    %v659 = vsel %vm657, %v658, %v656
    %v660 = vrsqrt.pop %v273
    %v661 = vmul.f32 %v273, %v660
    %vm662 = vcmp.eq.f32.partialorder %v273, inf
    %v663 = vsel %vm662, %v273, %v661
    %vm664 = vcmp.eq.f32.partialorder %v273, 0.0
    %v665 = vand.u32 %v273, 2147483648
    %v666 = vsel %vm664, %v665, %v663
    %v667 = vrsqrt.pop %v275
    %v668 = vmul.f32 %v275, %v667
    %vm669 = vcmp.eq.f32.partialorder %v275, inf
    %v670 = vsel %vm669, %v275, %v668
    %vm671 = vcmp.eq.f32.partialorder %v275, 0.0
    %v672 = vand.u32 %v275, 2147483648
    %v673 = vsel %vm671, %v672, %v670
    %v674 = vrsqrt.pop %v277
    %v675 = vmul.f32 %v277, %v674
    %vm676 = vcmp.eq.f32.partialorder %v277, inf
    %v677 = vsel %vm676, %v277, %v675
    %vm678 = vcmp.eq.f32.partialorder %v277, 0.0
    %v679 = vand.u32 %v277, 2147483648
    %v680 = vsel %vm678, %v679, %v677
    %v681 = vrsqrt.pop %v279
    %v682 = vmul.f32 %v279, %v681
    %vm683 = vcmp.eq.f32.partialorder %v279, inf
    %v684 = vsel %vm683, %v279, %v682
    %vm685 = vcmp.eq.f32.partialorder %v279, 0.0
    %v686 = vand.u32 %v279, 2147483648
    %v687 = vsel %vm685, %v686, %v684
    %v688 = vrsqrt.pop %v281
    %v689 = vmul.f32 %v281, %v688
    %vm690 = vcmp.eq.f32.partialorder %v281, inf
    %v691 = vsel %vm690, %v281, %v689
    %vm692 = vcmp.eq.f32.partialorder %v281, 0.0
    %v693 = vand.u32 %v281, 2147483648
    %v694 = vsel %vm692, %v693, %v691
    %v695 = vrsqrt.pop %v283
    %v696 = vmul.f32 %v283, %v695
    %vm697 = vcmp.eq.f32.partialorder %v283, inf
    %v698 = vsel %vm697, %v283, %v696
    %vm699 = vcmp.eq.f32.partialorder %v283, 0.0
    %v700 = vand.u32 %v283, 2147483648
    %v701 = vsel %vm699, %v700, %v698
    %v702 = vrsqrt.pop %v285
    %v703 = vmul.f32 %v285, %v702
    %vm704 = vcmp.eq.f32.partialorder %v285, inf
    %v705 = vsel %vm704, %v285, %v703
    %vm706 = vcmp.eq.f32.partialorder %v285, 0.0
    %v707 = vand.u32 %v285, 2147483648
    %v708 = vsel %vm706, %v707, %v705
    %v709 = vrsqrt.pop %v287
    %v710 = vmul.f32 %v287, %v709
    %vm711 = vcmp.eq.f32.partialorder %v287, inf
    %v712 = vsel %vm711, %v287, %v710
    %vm713 = vcmp.eq.f32.partialorder %v287, 0.0
    %v714 = vand.u32 %v287, 2147483648
    %v715 = vsel %vm713, %v714, %v712
    %v716 = vrsqrt.pop %v289
    %v717 = vmul.f32 %v289, %v716
    %vm718 = vcmp.eq.f32.partialorder %v289, inf
    %v719 = vsel %vm718, %v289, %v717
    %vm720 = vcmp.eq.f32.partialorder %v289, 0.0
    %v721 = vand.u32 %v289, 2147483648
    %v722 = vsel %vm720, %v721, %v719
    %v723 = vrsqrt.pop %v291
    %v724 = vmul.f32 %v291, %v723
    %vm725 = vcmp.eq.f32.partialorder %v291, inf
    %v726 = vsel %vm725, %v291, %v724
    %vm727 = vcmp.eq.f32.partialorder %v291, 0.0
    %v728 = vand.u32 %v291, 2147483648
    %v729 = vsel %vm727, %v728, %v726
    %v730 = vrsqrt.pop %v293
    %v731 = vmul.f32 %v293, %v730
    %vm732 = vcmp.eq.f32.partialorder %v293, inf
    %v733 = vsel %vm732, %v293, %v731
    %vm734 = vcmp.eq.f32.partialorder %v293, 0.0
    %v735 = vand.u32 %v293, 2147483648
    %v736 = vsel %vm734, %v735, %v733
    %v737 = vrsqrt.pop %v295
    %v738 = vmul.f32 %v295, %v737
    %vm739 = vcmp.eq.f32.partialorder %v295, inf
    %v740 = vsel %vm739, %v295, %v738
    %vm741 = vcmp.eq.f32.partialorder %v295, 0.0
    %v742 = vand.u32 %v295, 2147483648
    %v743 = vsel %vm741, %v742, %v740
    %v744 = vmax.f32 %v302, 1e-12
    %v745 = vmax.f32 %v309, 1e-12
    %v746 = vmax.f32 %v316, 1e-12
    %v747 = vmax.f32 %v323, 1e-12
    %v748 = vmax.f32 %v330, 1e-12
    %v749 = vmax.f32 %v337, 1e-12
    %v750 = vmax.f32 %v344, 1e-12
    %v751 = vmax.f32 %v351, 1e-12
    %v752 = vmax.f32 %v358, 1e-12
    %v753 = vmax.f32 %v365, 1e-12
    %v754 = vmax.f32 %v372, 1e-12
    %v755 = vmax.f32 %v379, 1e-12
    %v756 = vmax.f32 %v386, 1e-12
    %v757 = vmax.f32 %v393, 1e-12
    %v758 = vmax.f32 %v400, 1e-12
    %v759 = vmax.f32 %v407, 1e-12
    %v760 = vmax.f32 %v414, 1e-12
    %v761 = vmax.f32 %v421, 1e-12
    %v762 = vmax.f32 %v428, 1e-12
    %v763 = vmax.f32 %v435, 1e-12
    %v764 = vmax.f32 %v442, 1e-12
    %v765 = vmax.f32 %v449, 1e-12
    %v766 = vmax.f32 %v456, 1e-12
    %v767 = vmax.f32 %v463, 1e-12
    %v768 = vmax.f32 %v470, 1e-12
    %v769 = vmax.f32 %v477, 1e-12
    %v770 = vmax.f32 %v484, 1e-12
    %v771 = vmax.f32 %v491, 1e-12
    %v772 = vmax.f32 %v498, 1e-12
    %v773 = vmax.f32 %v505, 1e-12
    %v774 = vmax.f32 %v512, 1e-12
    %v775 = vmax.f32 %v519, 1e-12
    %v776 = vmax.f32 %v526, 1e-12
    %v777 = vmax.f32 %v533, 1e-12
    %v778 = vmax.f32 %v540, 1e-12
    %v779 = vmax.f32 %v547, 1e-12
    %v780 = vmax.f32 %v554, 1e-12
    %v781 = vmax.f32 %v561, 1e-12
    %v782 = vmax.f32 %v568, 1e-12
    %v783 = vmax.f32 %v575, 1e-12
    %v784 = vmax.f32 %v582, 1e-12
    %v785 = vmax.f32 %v589, 1e-12
    %v786 = vmax.f32 %v596, 1e-12
    %v787 = vmax.f32 %v603, 1e-12
    %v788 = vmax.f32 %v610, 1e-12
    %v789 = vmax.f32 %v617, 1e-12
    %v790 = vmax.f32 %v624, 1e-12
    %v791 = vmax.f32 %v631, 1e-12
    %v792 = vmax.f32 %v638, 1e-12
    %v793 = vmax.f32 %v645, 1e-12
    %v794 = vmax.f32 %v652, 1e-12
    %v795 = vmax.f32 %v659, 1e-12
    %v796 = vmax.f32 %v666, 1e-12
    %v797 = vmax.f32 %v673, 1e-12
    %v798 = vmax.f32 %v680, 1e-12
    %v799 = vmax.f32 %v687, 1e-12
    %v800 = vmax.f32 %v694, 1e-12
    %v801 = vmax.f32 %v701, 1e-12
    %v802 = vmax.f32 %v708, 1e-12
    %v803 = vmax.f32 %v715, 1e-12
    %v804 = vmax.f32 %v722, 1e-12
    %v805 = vmax.f32 %v729, 1e-12
    %v806 = vmax.f32 %v736, 1e-12
    %v807 = vmax.f32 %v743, 1e-12
    %v808 = vrcp.pop %v744
    %v809 = vrcp.pop %v745
    %v810 = vrcp.pop %v746
    %v811 = vrcp.pop %v747
    %v812 = vrcp.pop %v748
    %v813 = vrcp.pop %v749
    %v814 = vrcp.pop %v750
    %v815 = vrcp.pop %v751
    %v816 = vrcp.pop %v752
    %v817 = vrcp.pop %v753
    %v818 = vrcp.pop %v754
    %v819 = vrcp.pop %v755
    %v820 = vrcp.pop %v756
    %v821 = vrcp.pop %v757
    %v822 = vrcp.pop %v758
    %v823 = vrcp.pop %v759
    %v824 = vrcp.pop %v760
    %v825 = vrcp.pop %v761
    %v826 = vrcp.pop %v762
    %v827 = vrcp.pop %v763
    %v828 = vrcp.pop %v764
    %v829 = vrcp.pop %v765
    %v830 = vrcp.pop %v766
    %v831 = vrcp.pop %v767
    %v832 = vrcp.pop %v768
    %v833 = vrcp.pop %v769
    %v834 = vrcp.pop %v770
    %v835 = vrcp.pop %v771
    %v836 = vrcp.pop %v772
    %v837 = vrcp.pop %v773
    %v838 = vrcp.pop %v774
    %v839 = vrcp.pop %v775
    %v840 = vrcp.pop %v776
    %v841 = vrcp.pop %v777
    %v842 = vrcp.pop %v778
    %v843 = vrcp.pop %v779
    %v844 = vrcp.pop %v780
    %v845 = vrcp.pop %v781
    %v846 = vrcp.pop %v782
    %v847 = vrcp.pop %v783
    %v848 = vrcp.pop %v784
    %v849 = vrcp.pop %v785
    %v850 = vrcp.pop %v786
    %v851 = vrcp.pop %v787
    %v852 = vrcp.pop %v788
    %v853 = vrcp.pop %v789
    %v854 = vrcp.pop %v790
    %v855 = vrcp.pop %v791
    %v856 = vrcp.pop %v792
    %v857 = vrcp.pop %v793
    %v858 = vrcp.pop %v794
    %v859 = vrcp.pop %v795
    %v860 = vrcp.pop %v796
    %v861 = vrcp.pop %v797
    %v862 = vrcp.pop %v798
    %v863 = vrcp.pop %v799
    %v864 = vrcp.pop %v800
    %v865 = vrcp.pop %v801
    %v866 = vrcp.pop %v802
    %v867 = vrcp.pop %v803
    %v868 = vrcp.pop %v804
    %v869 = vrcp.pop %v805
    %v870 = vrcp.pop %v806
    %v871 = vrcp.pop %v807
    %v872 = vmul.f32 %v40, %v808
    %v873 = vmul.f32 %v41, %v809
    %v874 = vmul.f32 %v42, %v810
    %v875 = vmul.f32 %v43, %v811
    %v876 = vmul.f32 %v44, %v812
    %v877 = vmul.f32 %v45, %v813
    %v878 = vmul.f32 %v46, %v814
    %v879 = vmul.f32 %v47, %v815
    %v880 = vmul.f32 %v48, %v816
    %v881 = vmul.f32 %v49, %v817
    %v882 = vmul.f32 %v50, %v818
    %v883 = vmul.f32 %v51, %v819
    %v884 = vmul.f32 %v52, %v820
    %v885 = vmul.f32 %v53, %v821
    %v886 = vmul.f32 %v54, %v822
    %v887 = vmul.f32 %v55, %v823
    %v888 = vmul.f32 %v56, %v824
    %v889 = vmul.f32 %v57, %v825
    %v890 = vmul.f32 %v58, %v826
    %v891 = vmul.f32 %v59, %v827
    %v892 = vmul.f32 %v60, %v828
    %v893 = vmul.f32 %v61, %v829
    %v894 = vmul.f32 %v62, %v830
    %v895 = vmul.f32 %v63, %v831
    %v896 = vmul.f32 %v64, %v832
    %v897 = vmul.f32 %v65, %v833
    %v898 = vmul.f32 %v66, %v834
    %v899 = vmul.f32 %v67, %v835
    %v900 = vmul.f32 %v68, %v836
    %v901 = vmul.f32 %v69, %v837
    %v902 = vmul.f32 %v70, %v838
    %v903 = vmul.f32 %v71, %v839
    %v904 = vmul.f32 %v72, %v840
    %v905 = vmul.f32 %v73, %v841
    %v906 = vmul.f32 %v74, %v842
    %v907 = vmul.f32 %v75, %v843
    %v908 = vmul.f32 %v76, %v844
    %v909 = vmul.f32 %v77, %v845
    %v910 = vmul.f32 %v78, %v846
    %v911 = vmul.f32 %v79, %v847
    %v912 = vmul.f32 %v80, %v848
    %v913 = vmul.f32 %v81, %v849
    %v914 = vmul.f32 %v82, %v850
    %v915 = vmul.f32 %v83, %v851
    %v916 = vmul.f32 %v84, %v852
    %v917 = vmul.f32 %v85, %v853
    %v918 = vmul.f32 %v86, %v854
    %v919 = vmul.f32 %v87, %v855
    %v920 = vmul.f32 %v88, %v856
    %v921 = vmul.f32 %v89, %v857
    %v922 = vmul.f32 %v90, %v858
    %v923 = vmul.f32 %v91, %v859
    %v924 = vmul.f32 %v92, %v860
    %v925 = vmul.f32 %v93, %v861
    %v926 = vmul.f32 %v94, %v862
    %v927 = vmul.f32 %v95, %v863
    %v928 = vmul.f32 %v96, %v864
    %v929 = vmul.f32 %v97, %v865
    %v930 = vmul.f32 %v98, %v866
    %v931 = vmul.f32 %v99, %v867
    %v932 = vmul.f32 %v100, %v868
    %v933 = vmul.f32 %v101, %v869
    %v934 = vmul.f32 %v102, %v870
    %v935 = vmul.f32 %v103, %v871
    %936 = vxpose.xlu0.b32.start [1/16] %v872, 128
    %937 = vxpose.xlu0.b32.cont [2/16] %v873, 128
    %938 = vxpose.xlu0.b32.cont [3/16] %v874, 128
    %939 = vxpose.xlu0.b32.cont [4/16] %v875, 128
    %940 = vxpose.xlu0.b32.cont [5/16] %v876, 128
    %941 = vxpose.xlu0.b32.cont [6/16] %v877, 128
    %942 = vxpose.xlu0.b32.cont [7/16] %v878, 128
    %943 = vxpose.xlu0.b32.cont [8/16] %v879, 128
    %944 = vxpose.xlu0.b32.cont [9/16] %v880, 128
    %945 = vxpose.xlu0.b32.cont [10/16] %v881, 128
    %946 = vxpose.xlu0.b32.cont [11/16] %v882, 128
    %947 = vxpose.xlu0.b32.cont [12/16] %v883, 128
    %948 = vxpose.xlu0.b32.cont [13/16] %v884, 128
    %949 = vxpose.xlu0.b32.cont [14/16] %v885, 128
    %950 = vxpose.xlu0.b32.cont [15/16] %v886, 128
    %951 = vxpose.xlu0.b32.end [16/16] %v887, 128
    %v952 = vpop.trf.xlu0
    %v953 = vpop.trf.xlu0
    %v954 = vpop.trf.xlu0
    %v955 = vpop.trf.xlu0
    %v956 = vpop.trf.xlu0
    %v957 = vpop.trf.xlu0
    %v958 = vpop.trf.xlu0
    %v959 = vpop.trf.xlu0
    %v960 = vpop.trf.xlu0
    %v961 = vpop.trf.xlu0
    %v962 = vpop.trf.xlu0
    %v963 = vpop.trf.xlu0
    %v964 = vpop.trf.xlu0
    %v965 = vpop.trf.xlu0
    %v966 = vpop.trf.xlu0
    %v967 = vpop.trf.xlu0
    %968 = vxpose.xlu0.b32.start [1/16] %v888, 128
    %969 = vxpose.xlu0.b32.cont [2/16] %v889, 128
    %970 = vxpose.xlu0.b32.cont [3/16] %v890, 128
    %971 = vxpose.xlu0.b32.cont [4/16] %v891, 128
    %972 = vxpose.xlu0.b32.cont [5/16] %v892, 128
    %973 = vxpose.xlu0.b32.cont [6/16] %v893, 128
    %974 = vxpose.xlu0.b32.cont [7/16] %v894, 128
    %975 = vxpose.xlu0.b32.cont [8/16] %v895, 128
    %976 = vxpose.xlu0.b32.cont [9/16] %v896, 128
    %977 = vxpose.xlu0.b32.cont [10/16] %v897, 128
    %978 = vxpose.xlu0.b32.cont [11/16] %v898, 128
    %979 = vxpose.xlu0.b32.cont [12/16] %v899, 128
    %980 = vxpose.xlu0.b32.cont [13/16] %v900, 128
    %981 = vxpose.xlu0.b32.cont [14/16] %v901, 128
    %982 = vxpose.xlu0.b32.cont [15/16] %v902, 128
    %983 = vxpose.xlu0.b32.end [16/16] %v903, 128
    %v984 = vpop.trf.xlu0
    %v985 = vpop.trf.xlu0
    %v986 = vpop.trf.xlu0
    %v987 = vpop.trf.xlu0
    %v988 = vpop.trf.xlu0
    %v989 = vpop.trf.xlu0
    %v990 = vpop.trf.xlu0
    %v991 = vpop.trf.xlu0
    %v992 = vpop.trf.xlu0
    %v993 = vpop.trf.xlu0
    %v994 = vpop.trf.xlu0
    %v995 = vpop.trf.xlu0
    %v996 = vpop.trf.xlu0
    %v997 = vpop.trf.xlu0
    %v998 = vpop.trf.xlu0
    %v999 = vpop.trf.xlu0
    %1000 = vxpose.xlu0.b32.start [1/16] %v904, 128
    %1001 = vxpose.xlu0.b32.cont [2/16] %v905, 128
    %1002 = vxpose.xlu0.b32.cont [3/16] %v906, 128
    %1003 = vxpose.xlu0.b32.cont [4/16] %v907, 128
    %1004 = vxpose.xlu0.b32.cont [5/16] %v908, 128
    %1005 = vxpose.xlu0.b32.cont [6/16] %v909, 128
    %1006 = vxpose.xlu0.b32.cont [7/16] %v910, 128
    %1007 = vxpose.xlu0.b32.cont [8/16] %v911, 128
    %1008 = vxpose.xlu0.b32.cont [9/16] %v912, 128
    %1009 = vxpose.xlu0.b32.cont [10/16] %v913, 128
    %1010 = vxpose.xlu0.b32.cont [11/16] %v914, 128
    %1011 = vxpose.xlu0.b32.cont [12/16] %v915, 128
    %1012 = vxpose.xlu0.b32.cont [13/16] %v916, 128
    %1013 = vxpose.xlu0.b32.cont [14/16] %v917, 128
    %1014 = vxpose.xlu0.b32.cont [15/16] %v918, 128
    %1015 = vxpose.xlu0.b32.end [16/16] %v919, 128
    %v1016 = vpop.trf.xlu0
    %v1017 = vpop.trf.xlu0
    %v1018 = vpop.trf.xlu0
    %v1019 = vpop.trf.xlu0
    %v1020 = vpop.trf.xlu0
    %v1021 = vpop.trf.xlu0
    %v1022 = vpop.trf.xlu0
    %v1023 = vpop.trf.xlu0
    %v1024 = vpop.trf.xlu0
    %v1025 = vpop.trf.xlu0
    %v1026 = vpop.trf.xlu0
    %v1027 = vpop.trf.xlu0
    %v1028 = vpop.trf.xlu0
    %v1029 = vpop.trf.xlu0
    %v1030 = vpop.trf.xlu0
    %v1031 = vpop.trf.xlu0
    %1032 = vxpose.xlu0.b32.start [1/16] %v920, 128
    %1033 = vxpose.xlu0.b32.cont [2/16] %v921, 128
    %1034 = vxpose.xlu0.b32.cont [3/16] %v922, 128
    %1035 = vxpose.xlu0.b32.cont [4/16] %v923, 128
    %1036 = vxpose.xlu0.b32.cont [5/16] %v924, 128
    %1037 = vxpose.xlu0.b32.cont [6/16] %v925, 128
    %1038 = vxpose.xlu0.b32.cont [7/16] %v926, 128
    %1039 = vxpose.xlu0.b32.cont [8/16] %v927, 128
    %1040 = vxpose.xlu0.b32.cont [9/16] %v928, 128
    %1041 = vxpose.xlu0.b32.cont [10/16] %v929, 128
    %1042 = vxpose.xlu0.b32.cont [11/16] %v930, 128
    %1043 = vxpose.xlu0.b32.cont [12/16] %v931, 128
    %1044 = vxpose.xlu0.b32.cont [13/16] %v932, 128
    %1045 = vxpose.xlu0.b32.cont [14/16] %v933, 128
    %1046 = vxpose.xlu0.b32.cont [15/16] %v934, 128
    %1047 = vxpose.xlu0.b32.end [16/16] %v935, 128
    %v1048 = vpop.trf.xlu0
    %v1049 = vpop.trf.xlu0
    %v1050 = vpop.trf.xlu0
    %v1051 = vpop.trf.xlu0
    %v1052 = vpop.trf.xlu0
    %v1053 = vpop.trf.xlu0
    %v1054 = vpop.trf.xlu0
    %v1055 = vpop.trf.xlu0
    %v1056 = vpop.trf.xlu0
    %v1057 = vpop.trf.xlu0
    %v1058 = vpop.trf.xlu0
    %v1059 = vpop.trf.xlu0
    %v1060 = vpop.trf.xlu0
    %v1061 = vpop.trf.xlu0
    %v1062 = vpop.trf.xlu0
    %v1063 = vpop.trf.xlu0
    %1064 = vmatprep.subr.mxu0 0.0
    %v1065 = vand.u32 %v40, 4294901760
    %1066 = vmatpush1.msra.mxu0 %v1065
    %1067 = vmatprep.subr.mxu0 0.0
    %v1068 = vand.u32 %v41, 4294901760
    %1069 = vmatpush1.msra.mxu0 %v1068
    %1070 = vmatprep.subr.mxu0 0.0
    %v1071 = vand.u32 %v42, 4294901760
    %1072 = vmatpush1.msra.mxu0 %v1071
    %1073 = vmatprep.subr.mxu0 0.0
    %v1074 = vand.u32 %v43, 4294901760
    %1075 = vmatpush1.msra.mxu0 %v1074
    %1076 = vmatprep.subr.mxu0 0.0
    %v1077 = vand.u32 %v44, 4294901760
    %1078 = vmatpush1.msra.mxu0 %v1077
    %1079 = vmatprep.subr.mxu0 0.0
    %v1080 = vand.u32 %v45, 4294901760
    %1081 = vmatpush1.msra.mxu0 %v1080
    %1082 = vmatprep.subr.mxu0 0.0
    %v1083 = vand.u32 %v46, 4294901760
    %1084 = vmatpush1.msra.mxu0 %v1083
    %1085 = vmatprep.subr.mxu0 0.0
    %v1086 = vand.u32 %v47, 4294901760
    %1087 = vmatpush1.msra.mxu0 %v1086
    %1088 = vmatprep.subr.mxu0 0.0
    %v1089 = vand.u32 %v48, 4294901760
    %1090 = vmatpush1.msra.mxu0 %v1089
    %1091 = vmatprep.subr.mxu0 0.0
    %v1092 = vand.u32 %v49, 4294901760
    %1093 = vmatpush1.msra.mxu0 %v1092
    %1094 = vmatprep.subr.mxu0 0.0
    %v1095 = vand.u32 %v50, 4294901760
    %1096 = vmatpush1.msra.mxu0 %v1095
    %1097 = vmatprep.subr.mxu0 0.0
    %v1098 = vand.u32 %v51, 4294901760
    %1099 = vmatpush1.msra.mxu0 %v1098
    %1100 = vmatprep.subr.mxu0 0.0
    %v1101 = vand.u32 %v52, 4294901760
    %1102 = vmatpush1.msra.mxu0 %v1101
    %1103 = vmatprep.subr.mxu0 0.0
    %v1104 = vand.u32 %v53, 4294901760
    %1105 = vmatpush1.msra.mxu0 %v1104
    %1106 = vmatprep.subr.mxu0 0.0
    %v1107 = vand.u32 %v54, 4294901760
    %1108 = vmatpush1.msra.mxu0 %v1107
    %1109 = vmatprep.subr.mxu0 0.0
    %v1110 = vand.u32 %v55, 4294901760
    %1111 = vmatpush1.msra.mxu0 %v1110
    %1112 = vmatprep.subr.mxu0 0.0
    %v1113 = vand.u32 %v56, 4294901760
    %1114 = vmatpush1.msra.mxu0 %v1113
    %1115 = vmatprep.subr.mxu0 0.0
    %v1116 = vand.u32 %v57, 4294901760
    %1117 = vmatpush1.msra.mxu0 %v1116
    %1118 = vmatprep.subr.mxu0 0.0
    %v1119 = vand.u32 %v58, 4294901760
    %1120 = vmatpush1.msra.mxu0 %v1119
    %1121 = vmatprep.subr.mxu0 0.0
    %v1122 = vand.u32 %v59, 4294901760
    %1123 = vmatpush1.msra.mxu0 %v1122
    %1124 = vmatprep.subr.mxu0 0.0
    %v1125 = vand.u32 %v60, 4294901760
    %1126 = vmatpush1.msra.mxu0 %v1125
    %1127 = vmatprep.subr.mxu0 0.0
    %v1128 = vand.u32 %v61, 4294901760
    %1129 = vmatpush1.msra.mxu0 %v1128
    %1130 = vmatprep.subr.mxu0 0.0
    %v1131 = vand.u32 %v62, 4294901760
    %1132 = vmatpush1.msra.mxu0 %v1131
    %1133 = vmatprep.subr.mxu0 0.0
    %v1134 = vand.u32 %v63, 4294901760
    %1135 = vmatpush1.msra.mxu0 %v1134
    %1136 = vmatprep.subr.mxu0 0.0
    %v1137 = vand.u32 %v64, 4294901760
    %1138 = vmatpush1.msra.mxu0 %v1137
    %1139 = vmatprep.subr.mxu0 0.0
    %v1140 = vand.u32 %v65, 4294901760
    %1141 = vmatpush1.msra.mxu0 %v1140
    %1142 = vmatprep.subr.mxu0 0.0
    %v1143 = vand.u32 %v66, 4294901760
    %1144 = vmatpush1.msra.mxu0 %v1143
    %1145 = vmatprep.subr.mxu0 0.0
    %v1146 = vand.u32 %v67, 4294901760
    %1147 = vmatpush1.msra.mxu0 %v1146
    %1148 = vmatprep.subr.mxu0 0.0
    %v1149 = vand.u32 %v68, 4294901760
    %1150 = vmatpush1.msra.mxu0 %v1149
    %1151 = vmatprep.subr.mxu0 0.0
    %v1152 = vand.u32 %v69, 4294901760
    %1153 = vmatpush1.msra.mxu0 %v1152
    %1154 = vmatprep.subr.mxu0 0.0
    %v1155 = vand.u32 %v70, 4294901760
    %1156 = vmatpush1.msra.mxu0 %v1155
    %1157 = vmatprep.subr.mxu0 0.0
    %v1158 = vand.u32 %v71, 4294901760
    %1159 = vmatpush1.msra.mxu0 %v1158
    %v1160 = vand.u32 %v984, 4294901760
    %v1161 = vsub.f32 %v984, %v1160
    %v1162 = vand.u32 %v1161, 4294901760
    %v1163 = vsub.f32 %v1161, %v1162
    %v1164 = vand.u32 %v1163, 4294901760
    %1165 = vmatprep.mubr.f32.mxu0 %v1164
    %v1166 = vand.u32 %v952, 4294901760
    %v1167 = vsub.f32 %v952, %v1166
    %v1168 = vand.u32 %v1167, 4294901760
    %v1169 = vsub.f32 %v1167, %v1168
    %v1170 = vand.u32 %v1169, 4294901760
    %1171 = vmatmul.mubr.f32.gmra.mrb[0].mxu0 %v1170
    %v1172 = vpop.f32.mrb[0].mxu0
    %v1173 = vadd.f32 0.0, %v1172
    %v1174 = vpop.f32.mrb[0].mxu0
    %v1175 = vand.u32 %v985, 4294901760
    %v1176 = vsub.f32 %v985, %v1175
    %v1177 = vand.u32 %v1176, 4294901760
    %v1178 = vsub.f32 %v1176, %v1177
    %v1179 = vand.u32 %v1178, 4294901760
    %1180 = vmatprep.mubr.f32.mxu0 %v1179
    %v1181 = vand.u32 %v953, 4294901760
    %v1182 = vsub.f32 %v953, %v1181
    %v1183 = vand.u32 %v1182, 4294901760
    %v1184 = vsub.f32 %v1182, %v1183
    %v1185 = vand.u32 %v1184, 4294901760
    %1186 = vmatmul.mubr.f32.gmra.mrb[0].mxu0 %v1185
    %v1187 = vpop.f32.mrb[0].mxu0
    %v1188 = vadd.f32 0.0, %v1187
    %v1189 = vpop.f32.mrb[0].mxu0
    %v1190 = vand.u32 %v986, 4294901760
    %v1191 = vsub.f32 %v986, %v1190
    %v1192 = vand.u32 %v1191, 4294901760
    %v1193 = vsub.f32 %v1191, %v1192
    %v1194 = vand.u32 %v1193, 4294901760
    %1195 = vmatprep.mubr.f32.mxu0 %v1194
    %v1196 = vand.u32 %v954, 4294901760
    %v1197 = vsub.f32 %v954, %v1196
    %v1198 = vand.u32 %v1197, 4294901760
    %v1199 = vsub.f32 %v1197, %v1198
    %v1200 = vand.u32 %v1199, 4294901760
    %1201 = vmatmul.mubr.f32.gmra.mrb[0].mxu0 %v1200
    %v1202 = vpop.f32.mrb[0].mxu0
    %v1203 = vadd.f32 0.0, %v1202
    %v1204 = vpop.f32.mrb[0].mxu0
    %v1205 = vand.u32 %v987, 4294901760
    %v1206 = vsub.f32 %v987, %v1205
    %v1207 = vand.u32 %v1206, 4294901760
    %v1208 = vsub.f32 %v1206, %v1207
    %v1209 = vand.u32 %v1208, 4294901760
    %1210 = vmatprep.mubr.f32.mxu0 %v1209
    %v1211 = vand.u32 %v955, 4294901760
    %v1212 = vsub.f32 %v955, %v1211
    %v1213 = vand.u32 %v1212, 4294901760
    %v1214 = vsub.f32 %v1212, %v1213
    %v1215 = vand.u32 %v1214, 4294901760
    %1216 = vmatmul.mubr.f32.gmra.mrb[0].mxu0 %v1215
    %v1217 = vpop.f32.mrb[0].mxu0
    %v1218 = vadd.f32 0.0, %v1217
    %v1219 = vpop.f32.mrb[0].mxu0
    %v1220 = vand.u32 %v988, 4294901760
    %v1221 = vsub.f32 %v988, %v1220
    %v1222 = vand.u32 %v1221, 4294901760
    %v1223 = vsub.f32 %v1221, %v1222
    %v1224 = vand.u32 %v1223, 4294901760
    %1225 = vmatprep.mubr.f32.mxu0 %v1224
    %v1226 = vand.u32 %v956, 4294901760
    %v1227 = vsub.f32 %v956, %v1226
    %v1228 = vand.u32 %v1227, 4294901760
    %v1229 = vsub.f32 %v1227, %v1228
    %v1230 = vand.u32 %v1229, 4294901760
    %1231 = vmatmul.mubr.f32.gmra.mrb[0].mxu0 %v1230
    %v1232 = vpop.f32.mrb[0].mxu0
    %v1233 = vadd.f32 0.0, %v1232
    %v1234 = vpop.f32.mrb[0].mxu0
    %v1235 = vand.u32 %v989, 4294901760
    %v1236 = vsub.f32 %v989, %v1235
    %v1237 = vand.u32 %v1236, 4294901760
    %v1238 = vsub.f32 %v1236, %v1237
    %v1239 = vand.u32 %v1238, 4294901760
    %1240 = vmatprep.mubr.f32.mxu0 %v1239
    %v1241 = vand.u32 %v957, 4294901760
    %v1242 = vsub.f32 %v957, %v1241
    %v1243 = vand.u32 %v1242, 4294901760
    %v1244 = vsub.f32 %v1242, %v1243
    %v1245 = vand.u32 %v1244, 4294901760
    %1246 = vmatmul.mubr.f32.gmra.mrb[0].mxu0 %v1245
    %v1247 = vpop.f32.mrb[0].mxu0
    %v1248 = vadd.f32 0.0, %v1247
    %v1249 = vpop.f32.mrb[0].mxu0
    %v1250 = vand.u32 %v990, 4294901760
    %v1251 = vsub.f32 %v990, %v1250
    %v1252 = vand.u32 %v1251, 4294901760
    %v1253 = vsub.f32 %v1251, %v1252
    %v1254 = vand.u32 %v1253, 4294901760
    %1255 = vmatprep.mubr.f32.mxu0 %v1254
    %v1256 = vand.u32 %v958, 4294901760
    %v1257 = vsub.f32 %v958, %v1256
    %v1258 = vand.u32 %v1257, 4294901760
    %v1259 = vsub.f32 %v1257, %v1258
    %v1260 = vand.u32 %v1259, 4294901760
    %1261 = vmatmul.mubr.f32.gmra.mrb[0].mxu0 %v1260
    %v1262 = vpop.f32.mrb[0].mxu0
    %v1263 = vadd.f32 0.0, %v1262
    %v1264 = vpop.f32.mrb[0].mxu0
    %v1265 = vand.u32 %v991, 4294901760
    %v1266 = vsub.f32 %v991, %v1265
    %v1267 = vand.u32 %v1266, 4294901760
    %v1268 = vsub.f32 %v1266, %v1267
    %v1269 = vand.u32 %v1268, 4294901760
    %1270 = vmatprep.mubr.f32.mxu0 %v1269
    %v1271 = vand.u32 %v959, 4294901760
    %v1272 = vsub.f32 %v959, %v1271
    %v1273 = vand.u32 %v1272, 4294901760
    %v1274 = vsub.f32 %v1272, %v1273
    %v1275 = vand.u32 %v1274, 4294901760
    %1276 = vmatmul.mubr.f32.gmra.mrb[0].mxu0 %v1275
    %v1277 = vpop.f32.mrb[0].mxu0
    %v1278 = vadd.f32 0.0, %v1277
    %v1279 = vpop.f32.mrb[0].mxu0
    %v1280 = vand.u32 %v992, 4294901760
    %v1281 = vsub.f32 %v992, %v1280
    %v1282 = vand.u32 %v1281, 4294901760
    %v1283 = vsub.f32 %v1281, %v1282
    %v1284 = vand.u32 %v1283, 4294901760
    %1285 = vmatprep.mubr.f32.mxu0 %v1284
    %v1286 = vand.u32 %v960, 4294901760
    %v1287 = vsub.f32 %v960, %v1286
    %v1288 = vand.u32 %v1287, 4294901760
    %v1289 = vsub.f32 %v1287, %v1288
    %v1290 = vand.u32 %v1289, 4294901760
    %1291 = vmatmul.mubr.f32.gmra.mrb[0].mxu0 %v1290
    %v1292 = vpop.f32.mrb[0].mxu0
    %v1293 = vadd.f32 0.0, %v1292
    %v1294 = vpop.f32.mrb[0].mxu0
    %v1295 = vand.u32 %v993, 4294901760
    %v1296 = vsub.f32 %v993, %v1295
    %v1297 = vand.u32 %v1296, 4294901760
    %v1298 = vsub.f32 %v1296, %v1297
    %v1299 = vand.u32 %v1298, 4294901760
    %1300 = vmatprep.mubr.f32.mxu0 %v1299
    %v1301 = vand.u32 %v961, 4294901760
    %v1302 = vsub.f32 %v961, %v1301
    %v1303 = vand.u32 %v1302, 4294901760
    %v1304 = vsub.f32 %v1302, %v1303
    %v1305 = vand.u32 %v1304, 4294901760
    %1306 = vmatmul.mubr.f32.gmra.mrb[0].mxu0 %v1305
    %v1307 = vpop.f32.mrb[0].mxu0
    %v1308 = vadd.f32 0.0, %v1307
    %v1309 = vpop.f32.mrb[0].mxu0
    %v1310 = vand.u32 %v994, 4294901760
    %v1311 = vsub.f32 %v994, %v1310
    %v1312 = vand.u32 %v1311, 4294901760
    %v1313 = vsub.f32 %v1311, %v1312
    %v1314 = vand.u32 %v1313, 4294901760
    %1315 = vmatprep.mubr.f32.mxu0 %v1314
    %v1316 = vand.u32 %v962, 4294901760
    %v1317 = vsub.f32 %v962, %v1316
    %v1318 = vand.u32 %v1317, 4294901760
    %v1319 = vsub.f32 %v1317, %v1318
    %v1320 = vand.u32 %v1319, 4294901760
    %1321 = vmatmul.mubr.f32.gmra.mrb[0].mxu0 %v1320
    %v1322 = vpop.f32.mrb[0].mxu0
    %v1323 = vadd.f32 0.0, %v1322
    %v1324 = vpop.f32.mrb[0].mxu0
    %v1325 = vand.u32 %v995, 4294901760
    %v1326 = vsub.f32 %v995, %v1325
    %v1327 = vand.u32 %v1326, 4294901760
    %v1328 = vsub.f32 %v1326, %v1327
    %v1329 = vand.u32 %v1328, 4294901760
    %1330 = vmatprep.mubr.f32.mxu0 %v1329
    %v1331 = vand.u32 %v963, 4294901760
    %v1332 = vsub.f32 %v963, %v1331
    %v1333 = vand.u32 %v1332, 4294901760
    %v1334 = vsub.f32 %v1332, %v1333
    %v1335 = vand.u32 %v1334, 4294901760
    %1336 = vmatmul.mubr.f32.gmra.mrb[0].mxu0 %v1335
    %v1337 = vpop.f32.mrb[0].mxu0
    %v1338 = vadd.f32 0.0, %v1337
    %v1339 = vpop.f32.mrb[0].mxu0
    %v1340 = vand.u32 %v996, 4294901760
    %v1341 = vsub.f32 %v996, %v1340
    %v1342 = vand.u32 %v1341, 4294901760
    %v1343 = vsub.f32 %v1341, %v1342
    %v1344 = vand.u32 %v1343, 4294901760
    %1345 = vmatprep.mubr.f32.mxu0 %v1344
    %v1346 = vand.u32 %v964, 4294901760
    %v1347 = vsub.f32 %v964, %v1346
    %v1348 = vand.u32 %v1347, 4294901760
    %v1349 = vsub.f32 %v1347, %v1348
    %v1350 = vand.u32 %v1349, 4294901760
    %1351 = vmatmul.mubr.f32.gmra.mrb[0].mxu0 %v1350
    %v1352 = vpop.f32.mrb[0].mxu0
    %v1353 = vadd.f32 0.0, %v1352
    %v1354 = vpop.f32.mrb[0].mxu0
    %v1355 = vand.u32 %v997, 4294901760
    %v1356 = vsub.f32 %v997, %v1355
    %v1357 = vand.u32 %v1356, 4294901760
    %v1358 = vsub.f32 %v1356, %v1357
    %v1359 = vand.u32 %v1358, 4294901760
    %1360 = vmatprep.mubr.f32.mxu0 %v1359
    %v1361 = vand.u32 %v965, 4294901760
    %v1362 = vsub.f32 %v965, %v1361
    %v1363 = vand.u32 %v1362, 4294901760
    %v1364 = vsub.f32 %v1362, %v1363
    %v1365 = vand.u32 %v1364, 4294901760
    %1366 = vmatmul.mubr.f32.gmra.mrb[0].mxu0 %v1365
    %v1367 = vpop.f32.mrb[0].mxu0
    %v1368 = vadd.f32 0.0, %v1367
    %v1369 = vpop.f32.mrb[0].mxu0
    %v1370 = vand.u32 %v998, 4294901760
    %v1371 = vsub.f32 %v998, %v1370
    %v1372 = vand.u32 %v1371, 4294901760
    %v1373 = vsub.f32 %v1371, %v1372
    %v1374 = vand.u32 %v1373, 4294901760
    %1375 = vmatprep.mubr.f32.mxu0 %v1374
    %v1376 = vand.u32 %v966, 4294901760
    %v1377 = vsub.f32 %v966, %v1376
    %v1378 = vand.u32 %v1377, 4294901760
    %v1379 = vsub.f32 %v1377, %v1378
    %v1380 = vand.u32 %v1379, 4294901760
    %1381 = vmatmul.mubr.f32.gmra.mrb[0].mxu0 %v1380
    %v1382 = vpop.f32.mrb[0].mxu0
    %v1383 = vadd.f32 0.0, %v1382
    %v1384 = vpop.f32.mrb[0].mxu0
    %v1385 = vand.u32 %v999, 4294901760
    %v1386 = vsub.f32 %v999, %v1385
    %v1387 = vand.u32 %v1386, 4294901760
    %v1388 = vsub.f32 %v1386, %v1387
    %v1389 = vand.u32 %v1388, 4294901760
    %1390 = vmatprep.mubr.f32.mxu0 %v1389
    %v1391 = vand.u32 %v967, 4294901760
    %v1392 = vsub.f32 %v967, %v1391
    %v1393 = vand.u32 %v1392, 4294901760
    %v1394 = vsub.f32 %v1392, %v1393
    %v1395 = vand.u32 %v1394, 4294901760
    %1396 = vmatmul.mubr.f32.gmra.mrb[0].mxu0 %v1395
    %v1397 = vpop.f32.mrb[0].mxu0
    %v1398 = vadd.f32 0.0, %v1397
    %v1399 = vpop.f32.mrb[0].mxu0
    %1400 = vdwg.mxu0
    %1401 = vmatprep.subr.mxu0 0.0
    %v1402 = vand.u32 %v40, 4294901760
    %v1403 = vsub.f32 %v40, %v1402
    %v1404 = vand.u32 %v1403, 4294901760
    %v1405 = vsub.f32 %v1403, %v1404
    %v1406 = vand.u32 %v1405, 4294901760
    %1407 = vmatpush1.msra.mxu0 %v1406
    %1408 = vmatprep.subr.mxu0 0.0
    %v1409 = vand.u32 %v41, 4294901760
    %v1410 = vsub.f32 %v41, %v1409
    %v1411 = vand.u32 %v1410, 4294901760
    %v1412 = vsub.f32 %v1410, %v1411
    %v1413 = vand.u32 %v1412, 4294901760
    %1414 = vmatpush1.msra.mxu0 %v1413
    %1415 = vmatprep.subr.mxu0 0.0
    %v1416 = vand.u32 %v42, 4294901760
    %v1417 = vsub.f32 %v42, %v1416
    %v1418 = vand.u32 %v1417, 4294901760
    %v1419 = vsub.f32 %v1417, %v1418
    %v1420 = vand.u32 %v1419, 4294901760
    %1421 = vmatpush1.msra.mxu0 %v1420
    %1422 = vmatprep.subr.mxu0 0.0
    %v1423 = vand.u32 %v43, 4294901760
    %v1424 = vsub.f32 %v43, %v1423
    %v1425 = vand.u32 %v1424, 4294901760
    %v1426 = vsub.f32 %v1424, %v1425
    %v1427 = vand.u32 %v1426, 4294901760
    %1428 = vmatpush1.msra.mxu0 %v1427
    %1429 = vmatprep.subr.mxu0 0.0
    %v1430 = vand.u32 %v44, 4294901760
    %v1431 = vsub.f32 %v44, %v1430
    %v1432 = vand.u32 %v1431, 4294901760
    %v1433 = vsub.f32 %v1431, %v1432
    %v1434 = vand.u32 %v1433, 4294901760
    %1435 = vmatpush1.msra.mxu0 %v1434
    %1436 = vmatprep.subr.mxu0 0.0
    %v1437 = vand.u32 %v45, 4294901760
    %v1438 = vsub.f32 %v45, %v1437
    %v1439 = vand.u32 %v1438, 4294901760
    %v1440 = vsub.f32 %v1438, %v1439
    %v1441 = vand.u32 %v1440, 4294901760
    %1442 = vmatpush1.msra.mxu0 %v1441
    %1443 = vmatprep.subr.mxu0 0.0
    %v1444 = vand.u32 %v46, 4294901760
    %v1445 = vsub.f32 %v46, %v1444
    %v1446 = vand.u32 %v1445, 4294901760
    %v1447 = vsub.f32 %v1445, %v1446
    %v1448 = vand.u32 %v1447, 4294901760
    %1449 = vmatpush1.msra.mxu0 %v1448
    %1450 = vmatprep.subr.mxu0 0.0
    %v1451 = vand.u32 %v47, 4294901760
    %v1452 = vsub.f32 %v47, %v1451
    %v1453 = vand.u32 %v1452, 4294901760
    %v1454 = vsub.f32 %v1452, %v1453
    %v1455 = vand.u32 %v1454, 4294901760
    %1456 = vmatpush1.msra.mxu0 %v1455
    %1457 = vmatprep.subr.mxu0 0.0
    %v1458 = vand.u32 %v48, 4294901760
    %v1459 = vsub.f32 %v48, %v1458
    %v1460 = vand.u32 %v1459, 4294901760
    %v1461 = vsub.f32 %v1459, %v1460
    %v1462 = vand.u32 %v1461, 4294901760
    %1463 = vmatpush1.msra.mxu0 %v1462
    %1464 = vmatprep.subr.mxu0 0.0
    %v1465 = vand.u32 %v49, 4294901760
    %v1466 = vsub.f32 %v49, %v1465
    %v1467 = vand.u32 %v1466, 4294901760
    %v1468 = vsub.f32 %v1466, %v1467
    %v1469 = vand.u32 %v1468, 4294901760
    %1470 = vmatpush1.msra.mxu0 %v1469
    %1471 = vmatprep.subr.mxu0 0.0
    %v1472 = vand.u32 %v50, 4294901760
    %v1473 = vsub.f32 %v50, %v1472
    %v1474 = vand.u32 %v1473, 4294901760
    %v1475 = vsub.f32 %v1473, %v1474
    %v1476 = vand.u32 %v1475, 4294901760
    %1477 = vmatpush1.msra.mxu0 %v1476
    %1478 = vmatprep.subr.mxu0 0.0
    %v1479 = vand.u32 %v51, 4294901760
    %v1480 = vsub.f32 %v51, %v1479
    %v1481 = vand.u32 %v1480, 4294901760
    %v1482 = vsub.f32 %v1480, %v1481
    %v1483 = vand.u32 %v1482, 4294901760
    %1484 = vmatpush1.msra.mxu0 %v1483
    %1485 = vmatprep.subr.mxu0 0.0
    %v1486 = vand.u32 %v52, 4294901760
    %v1487 = vsub.f32 %v52, %v1486
    %v1488 = vand.u32 %v1487, 4294901760
    %v1489 = vsub.f32 %v1487, %v1488
    %v1490 = vand.u32 %v1489, 4294901760
    %1491 = vmatpush1.msra.mxu0 %v1490
    %1492 = vmatprep.subr.mxu0 0.0
    %v1493 = vand.u32 %v53, 4294901760
    %v1494 = vsub.f32 %v53, %v1493
    %v1495 = vand.u32 %v1494, 4294901760
    %v1496 = vsub.f32 %v1494, %v1495
    %v1497 = vand.u32 %v1496, 4294901760
    %1498 = vmatpush1.msra.mxu0 %v1497
    %1499 = vmatprep.subr.mxu0 0.0
    %v1500 = vand.u32 %v54, 4294901760
    %v1501 = vsub.f32 %v54, %v1500
    %v1502 = vand.u32 %v1501, 4294901760
    %v1503 = vsub.f32 %v1501, %v1502
    %v1504 = vand.u32 %v1503, 4294901760
    %1505 = vmatpush1.msra.mxu0 %v1504
    %1506 = vmatprep.subr.mxu0 0.0
    %v1507 = vand.u32 %v55, 4294901760
    %v1508 = vsub.f32 %v55, %v1507
    %v1509 = vand.u32 %v1508, 4294901760
    %v1510 = vsub.f32 %v1508, %v1509
    %v1511 = vand.u32 %v1510, 4294901760
    %1512 = vmatpush1.msra.mxu0 %v1511
    %1513 = vmatprep.subr.mxu0 0.0
    %v1514 = vand.u32 %v56, 4294901760
    %v1515 = vsub.f32 %v56, %v1514
    %v1516 = vand.u32 %v1515, 4294901760
    %v1517 = vsub.f32 %v1515, %v1516
    %v1518 = vand.u32 %v1517, 4294901760
    %1519 = vmatpush1.msra.mxu0 %v1518
    %1520 = vmatprep.subr.mxu0 0.0
    %v1521 = vand.u32 %v57, 4294901760
    %v1522 = vsub.f32 %v57, %v1521
    %v1523 = vand.u32 %v1522, 4294901760
    %v1524 = vsub.f32 %v1522, %v1523
    %v1525 = vand.u32 %v1524, 4294901760
    %1526 = vmatpush1.msra.mxu0 %v1525
    %1527 = vmatprep.subr.mxu0 0.0
    %v1528 = vand.u32 %v58, 4294901760
    %v1529 = vsub.f32 %v58, %v1528
    %v1530 = vand.u32 %v1529, 4294901760
    %v1531 = vsub.f32 %v1529, %v1530
    %v1532 = vand.u32 %v1531, 4294901760
    %1533 = vmatpush1.msra.mxu0 %v1532
    %1534 = vmatprep.subr.mxu0 0.0
    %v1535 = vand.u32 %v59, 4294901760
    %v1536 = vsub.f32 %v59, %v1535
    %v1537 = vand.u32 %v1536, 4294901760
    %v1538 = vsub.f32 %v1536, %v1537
    %v1539 = vand.u32 %v1538, 4294901760
    %1540 = vmatpush1.msra.mxu0 %v1539
    %1541 = vmatprep.subr.mxu0 0.0
    %v1542 = vand.u32 %v60, 4294901760
    %v1543 = vsub.f32 %v60, %v1542
    %v1544 = vand.u32 %v1543, 4294901760
    %v1545 = vsub.f32 %v1543, %v1544
    %v1546 = vand.u32 %v1545, 4294901760
    %1547 = vmatpush1.msra.mxu0 %v1546
    %1548 = vmatprep.subr.mxu0 0.0
    %v1549 = vand.u32 %v61, 4294901760
    %v1550 = vsub.f32 %v61, %v1549
    %v1551 = vand.u32 %v1550, 4294901760
    %v1552 = vsub.f32 %v1550, %v1551
    %v1553 = vand.u32 %v1552, 4294901760
    %1554 = vmatpush1.msra.mxu0 %v1553
    %1555 = vmatprep.subr.mxu0 0.0
    %v1556 = vand.u32 %v62, 4294901760
    %v1557 = vsub.f32 %v62, %v1556
    %v1558 = vand.u32 %v1557, 4294901760
    %v1559 = vsub.f32 %v1557, %v1558
    %v1560 = vand.u32 %v1559, 4294901760
    %1561 = vmatpush1.msra.mxu0 %v1560
    %1562 = vmatprep.subr.mxu0 0.0
    %v1563 = vand.u32 %v63, 4294901760
    %v1564 = vsub.f32 %v63, %v1563
    %v1565 = vand.u32 %v1564, 4294901760
    %v1566 = vsub.f32 %v1564, %v1565
    %v1567 = vand.u32 %v1566, 4294901760
    %1568 = vmatpush1.msra.mxu0 %v1567
    %1569 = vmatprep.subr.mxu0 0.0
    %v1570 = vand.u32 %v64, 4294901760
    %v1571 = vsub.f32 %v64, %v1570
    %v1572 = vand.u32 %v1571, 4294901760
    %v1573 = vsub.f32 %v1571, %v1572
    %v1574 = vand.u32 %v1573, 4294901760
    %1575 = vmatpush1.msra.mxu0 %v1574
    %1576 = vmatprep.subr.mxu0 0.0
    %v1577 = vand.u32 %v65, 4294901760
    %v1578 = vsub.f32 %v65, %v1577
    %v1579 = vand.u32 %v1578, 4294901760
    %v1580 = vsub.f32 %v1578, %v1579
    %v1581 = vand.u32 %v1580, 4294901760
    %1582 = vmatpush1.msra.mxu0 %v1581
    %1583 = vmatprep.subr.mxu0 0.0
    %v1584 = vand.u32 %v66, 4294901760
    %v1585 = vsub.f32 %v66, %v1584
    %v1586 = vand.u32 %v1585, 4294901760
    %v1587 = vsub.f32 %v1585, %v1586
    %v1588 = vand.u32 %v1587, 4294901760
    %1589 = vmatpush1.msra.mxu0 %v1588
    %1590 = vmatprep.subr.mxu0 0.0
    %v1591 = vand.u32 %v67, 4294901760
    %v1592 = vsub.f32 %v67, %v1591
    %v1593 = vand.u32 %v1592, 4294901760
    %v1594 = vsub.f32 %v1592, %v1593
    %v1595 = vand.u32 %v1594, 4294901760
    %1596 = vmatpush1.msra.mxu0 %v1595
    %1597 = vmatprep.subr.mxu0 0.0
    %v1598 = vand.u32 %v68, 4294901760
    %v1599 = vsub.f32 %v68, %v1598
    %v1600 = vand.u32 %v1599, 4294901760
    %v1601 = vsub.f32 %v1599, %v1600
    %v1602 = vand.u32 %v1601, 4294901760
    %1603 = vmatpush1.msra.mxu0 %v1602
    %1604 = vmatprep.subr.mxu0 0.0
    %v1605 = vand.u32 %v69, 4294901760
    %v1606 = vsub.f32 %v69, %v1605
    %v1607 = vand.u32 %v1606, 4294901760
    %v1608 = vsub.f32 %v1606, %v1607
    %v1609 = vand.u32 %v1608, 4294901760
    %1610 = vmatpush1.msra.mxu0 %v1609
    %1611 = vmatprep.subr.mxu0 0.0
    %v1612 = vand.u32 %v70, 4294901760
    %v1613 = vsub.f32 %v70, %v1612
    %v1614 = vand.u32 %v1613, 4294901760
    %v1615 = vsub.f32 %v1613, %v1614
    %v1616 = vand.u32 %v1615, 4294901760
    %1617 = vmatpush1.msra.mxu0 %v1616
    %1618 = vmatprep.subr.mxu0 0.0
    %v1619 = vand.u32 %v71, 4294901760
    %v1620 = vsub.f32 %v71, %v1619
    %v1621 = vand.u32 %v1620, 4294901760
    %v1622 = vsub.f32 %v1620, %v1621
    %v1623 = vand.u32 %v1622, 4294901760
    %1624 = vmatpush1.msra.mxu0 %v1623
    %v1625 = vand.u32 %v984, 4294901760
    %1626 = vmatprep.mubr.f32.mxu0 %v1625
    %v1627 = vand.u32 %v952, 4294901760
    %1628 = vmatmul.mubr.f32.gmra.mrb[0].mxu0 %v1627
    %v1629 = vpop.f32.mrb[0].mxu0
    %v1630 = vadd.f32 %v1173, %v1629
    %v1631 = vpop.f32.mrb[0].mxu0
    %v1632 = vand.u32 %v985, 4294901760
    %1633 = vmatprep.mubr.f32.mxu0 %v1632
    %v1634 = vand.u32 %v953, 4294901760
    %1635 = vmatmul.mubr.f32.gmra.mrb[0].mxu0 %v1634
    %v1636 = vpop.f32.mrb[0].mxu0
    %v1637 = vadd.f32 %v1188, %v1636
    %v1638 = vpop.f32.mrb[0].mxu0
    %v1639 = vand.u32 %v986, 4294901760
    %1640 = vmatprep.mubr.f32.mxu0 %v1639
    %v1641 = vand.u32 %v954, 4294901760
    %1642 = vmatmul.mubr.f32.gmra.mrb[0].mxu0 %v1641
    %v1643 = vpop.f32.mrb[0].mxu0
    %v1644 = vadd.f32 %v1203, %v1643
    %v1645 = vpop.f32.mrb[0].mxu0
    %v1646 = vand.u32 %v987, 4294901760
    %1647 = vmatprep.mubr.f32.mxu0 %v1646
    %v1648 = vand.u32 %v955, 4294901760
    %1649 = vmatmul.mubr.f32.gmra.mrb[0].mxu0 %v1648
    %v1650 = vpop.f32.mrb[0].mxu0
    %v1651 = vadd.f32 %v1218, %v1650
    %v1652 = vpop.f32.mrb[0].mxu0
    %v1653 = vand.u32 %v988, 4294901760
    %1654 = vmatprep.mubr.f32.mxu0 %v1653
    %v1655 = vand.u32 %v956, 4294901760
    %1656 = vmatmul.mubr.f32.gmra.mrb[0].mxu0 %v1655
    %v1657 = vpop.f32.mrb[0].mxu0
    %v1658 = vadd.f32 %v1233, %v1657
    %v1659 = vpop.f32.mrb[0].mxu0
    %v1660 = vand.u32 %v989, 4294901760
    %1661 = vmatprep.mubr.f32.mxu0 %v1660
    %v1662 = vand.u32 %v957, 4294901760
    %1663 = vmatmul.mubr.f32.gmra.mrb[0].mxu0 %v1662
    %v1664 = vpop.f32.mrb[0].mxu0
    %v1665 = vadd.f32 %v1248, %v1664
    %v1666 = vpop.f32.mrb[0].mxu0
    %v1667 = vand.u32 %v990, 4294901760
    %1668 = vmatprep.mubr.f32.mxu0 %v1667
    %v1669 = vand.u32 %v958, 4294901760
    %1670 = vmatmul.mubr.f32.gmra.mrb[0].mxu0 %v1669
    %v1671 = vpop.f32.mrb[0].mxu0
    %v1672 = vadd.f32 %v1263, %v1671
    %v1673 = vpop.f32.mrb[0].mxu0
    %v1674 = vand.u32 %v991, 4294901760
    %1675 = vmatprep.mubr.f32.mxu0 %v1674
    %v1676 = vand.u32 %v959, 4294901760
    %1677 = vmatmul.mubr.f32.gmra.mrb[0].mxu0 %v1676
    %v1678 = vpop.f32.mrb[0].mxu0
    %v1679 = vadd.f32 %v1278, %v1678
    %v1680 = vpop.f32.mrb[0].mxu0
    %v1681 = vand.u32 %v992, 4294901760
    %1682 = vmatprep.mubr.f32.mxu0 %v1681
    %v1683 = vand.u32 %v960, 4294901760
    %1684 = vmatmul.mubr.f32.gmra.mrb[0].mxu0 %v1683
    %v1685 = vpop.f32.mrb[0].mxu0
    %v1686 = vadd.f32 %v1293, %v1685
    %v1687 = vpop.f32.mrb[0].mxu0
    %v1688 = vand.u32 %v993, 4294901760
    %1689 = vmatprep.mubr.f32.mxu0 %v1688
    %v1690 = vand.u32 %v961, 4294901760
    %1691 = vmatmul.mubr.f32.gmra.mrb[0].mxu0 %v1690
    %v1692 = vpop.f32.mrb[0].mxu0
    %v1693 = vadd.f32 %v1308, %v1692
    %v1694 = vpop.f32.mrb[0].mxu0
    %v1695 = vand.u32 %v994, 4294901760
    %1696 = vmatprep.mubr.f32.mxu0 %v1695
    %v1697 = vand.u32 %v962, 4294901760
    %1698 = vmatmul.mubr.f32.gmra.mrb[0].mxu0 %v1697
    %v1699 = vpop.f32.mrb[0].mxu0
    %v1700 = vadd.f32 %v1323, %v1699
    %v1701 = vpop.f32.mrb[0].mxu0
    %v1702 = vand.u32 %v995, 4294901760
    %1703 = vmatprep.mubr.f32.mxu0 %v1702
    %v1704 = vand.u32 %v963, 4294901760
    %1705 = vmatmul.mubr.f32.gmra.mrb[0].mxu0 %v1704
    %v1706 = vpop.f32.mrb[0].mxu0
    %v1707 = vadd.f32 %v1338, %v1706
    %v1708 = vpop.f32.mrb[0].mxu0
    %v1709 = vand.u32 %v996, 4294901760
    %1710 = vmatprep.mubr.f32.mxu0 %v1709
    %v1711 = vand.u32 %v964, 4294901760
    %1712 = vmatmul.mubr.f32.gmra.mrb[0].mxu0 %v1711
    %v1713 = vpop.f32.mrb[0].mxu0
    %v1714 = vadd.f32 %v1353, %v1713
    %v1715 = vpop.f32.mrb[0].mxu0
    %v1716 = vand.u32 %v997, 4294901760
    %1717 = vmatprep.mubr.f32.mxu0 %v1716
    %v1718 = vand.u32 %v965, 4294901760
    %1719 = vmatmul.mubr.f32.gmra.mrb[0].mxu0 %v1718
    %v1720 = vpop.f32.mrb[0].mxu0
    %v1721 = vadd.f32 %v1368, %v1720
    %v1722 = vpop.f32.mrb[0].mxu0
    %v1723 = vand.u32 %v998, 4294901760
    %1724 = vmatprep.mubr.f32.mxu0 %v1723
    %v1725 = vand.u32 %v966, 4294901760
    %1726 = vmatmul.mubr.f32.gmra.mrb[0].mxu0 %v1725
    %v1727 = vpop.f32.mrb[0].mxu0
    %v1728 = vadd.f32 %v1383, %v1727
    %v1729 = vpop.f32.mrb[0].mxu0
    %v1730 = vand.u32 %v999, 4294901760
    %1731 = vmatprep.mubr.f32.mxu0 %v1730
    %v1732 = vand.u32 %v967, 4294901760
    %1733 = vmatmul.mubr.f32.gmra.mrb[0].mxu0 %v1732
    %v1734 = vpop.f32.mrb[0].mxu0
    %v1735 = vadd.f32 %v1398, %v1734
    %v1736 = vpop.f32.mrb[0].mxu0
    %1737 = vdwg.mxu0
    %1738 = vmatprep.subr.mxu0 0.0
    %v1739 = vand.u32 %v40, 4294901760
    %v1740 = vsub.f32 %v40, %v1739
    %1741 = vmatpush1.msra.mxu0 %v1740
    %1742 = vmatprep.subr.mxu0 0.0
    %v1743 = vand.u32 %v41, 4294901760
    %v1744 = vsub.f32 %v41, %v1743
    %1745 = vmatpush1.msra.mxu0 %v1744
    %1746 = vmatprep.subr.mxu0 0.0
    %v1747 = vand.u32 %v42, 4294901760
    %v1748 = vsub.f32 %v42, %v1747
    %1749 = vmatpush1.msra.mxu0 %v1748
    %1750 = vmatprep.subr.mxu0 0.0
    %v1751 = vand.u32 %v43, 4294901760
    %v1752 = vsub.f32 %v43, %v1751
    %1753 = vmatpush1.msra.mxu0 %v1752
    %1754 = vmatprep.subr.mxu0 0.0
    %v1755 = vand.u32 %v44, 4294901760
    %v1756 = vsub.f32 %v44, %v1755
    %1757 = vmatpush1.msra.mxu0 %v1756
    %1758 = vmatprep.subr.mxu0 0.0
    %v1759 = vand.u32 %v45, 4294901760
    %v1760 = vsub.f32 %v45, %v1759
    %1761 = vmatpush1.msra.mxu0 %v1760
    %1762 = vmatprep.subr.mxu0 0.0
    %v1763 = vand.u32 %v46, 4294901760
    %v1764 = vsub.f32 %v46, %v1763
    %1765 = vmatpush1.msra.mxu0 %v1764
    %1766 = vmatprep.subr.mxu0 0.0
    %v1767 = vand.u32 %v47, 4294901760
    %v1768 = vsub.f32 %v47, %v1767
    %1769 = vmatpush1.msra.mxu0 %v1768
    %1770 = vmatprep.subr.mxu0 0.0
    %v1771 = vand.u32 %v48, 4294901760
    %v1772 = vsub.f32 %v48, %v1771
    %1773 = vmatpush1.msra.mxu0 %v1772
    %1774 = vmatprep.subr.mxu0 0.0
    %v1775 = vand.u32 %v49, 4294901760
    %v1776 = vsub.f32 %v49, %v1775
    %1777 = vmatpush1.msra.mxu0 %v1776
    %1778 = vmatprep.subr.mxu0 0.0
    %v1779 = vand.u32 %v50, 4294901760
    %v1780 = vsub.f32 %v50, %v1779
    %1781 = vmatpush1.msra.mxu0 %v1780
    %1782 = vmatprep.subr.mxu0 0.0
    %v1783 = vand.u32 %v51, 4294901760
    %v1784 = vsub.f32 %v51, %v1783
    %1785 = vmatpush1.msra.mxu0 %v1784
    %1786 = vmatprep.subr.mxu0 0.0
    %v1787 = vand.u32 %v52, 4294901760
    %v1788 = vsub.f32 %v52, %v1787
    %1789 = vmatpush1.msra.mxu0 %v1788
    %1790 = vmatprep.subr.mxu0 0.0
    %v1791 = vand.u32 %v53, 4294901760
    %v1792 = vsub.f32 %v53, %v1791
    %1793 = vmatpush1.msra.mxu0 %v1792
    %1794 = vmatprep.subr.mxu0 0.0
    %v1795 = vand.u32 %v54, 4294901760
    %v1796 = vsub.f32 %v54, %v1795
    %1797 = vmatpush1.msra.mxu0 %v1796
    %1798 = vmatprep.subr.mxu0 0.0
    %v1799 = vand.u32 %v55, 4294901760
    %v1800 = vsub.f32 %v55, %v1799
    %1801 = vmatpush1.msra.mxu0 %v1800
    %1802 = vmatprep.subr.mxu0 0.0
    %v1803 = vand.u32 %v56, 4294901760
    %v1804 = vsub.f32 %v56, %v1803
    %1805 = vmatpush1.msra.mxu0 %v1804
    %1806 = vmatprep.subr.mxu0 0.0
    %v1807 = vand.u32 %v57, 4294901760
    %v1808 = vsub.f32 %v57, %v1807
    %1809 = vmatpush1.msra.mxu0 %v1808
    %1810 = vmatprep.subr.mxu0 0.0
    %v1811 = vand.u32 %v58, 4294901760
    %v1812 = vsub.f32 %v58, %v1811
    %1813 = vmatpush1.msra.mxu0 %v1812
    %1814 = vmatprep.subr.mxu0 0.0
    %v1815 = vand.u32 %v59, 4294901760
    %v1816 = vsub.f32 %v59, %v1815
    %1817 = vmatpush1.msra.mxu0 %v1816
    %1818 = vmatprep.subr.mxu0 0.0
    %v1819 = vand.u32 %v60, 4294901760
    %v1820 = vsub.f32 %v60, %v1819
    %1821 = vmatpush1.msra.mxu0 %v1820
    %1822 = vmatprep.subr.mxu0 0.0
    %v1823 = vand.u32 %v61, 4294901760
    %v1824 = vsub.f32 %v61, %v1823
    %1825 = vmatpush1.msra.mxu0 %v1824
    %1826 = vmatprep.subr.mxu0 0.0
    %v1827 = vand.u32 %v62, 4294901760
    %v1828 = vsub.f32 %v62, %v1827
    %1829 = vmatpush1.msra.mxu0 %v1828
    %1830 = vmatprep.subr.mxu0 0.0
    %v1831 = vand.u32 %v63, 4294901760
    %v1832 = vsub.f32 %v63, %v1831
    %1833 = vmatpush1.msra.mxu0 %v1832
    %1834 = vmatprep.subr.mxu0 0.0
    %v1835 = vand.u32 %v64, 4294901760
    %v1836 = vsub.f32 %v64, %v1835
    %1837 = vmatpush1.msra.mxu0 %v1836
    %1838 = vmatprep.subr.mxu0 0.0
    %v1839 = vand.u32 %v65, 4294901760
    %v1840 = vsub.f32 %v65, %v1839
    %1841 = vmatpush1.msra.mxu0 %v1840
    %1842 = vmatprep.subr.mxu0 0.0
    %v1843 = vand.u32 %v66, 4294901760
    %v1844 = vsub.f32 %v66, %v1843
    %1845 = vmatpush1.msra.mxu0 %v1844
    %1846 = vmatprep.subr.mxu0 0.0
    %v1847 = vand.u32 %v67, 4294901760
    %v1848 = vsub.f32 %v67, %v1847
    %1849 = vmatpush1.msra.mxu0 %v1848
    %1850 = vmatprep.subr.mxu0 0.0
    %v1851 = vand.u32 %v68, 4294901760
    %v1852 = vsub.f32 %v68, %v1851
    %1853 = vmatpush1.msra.mxu0 %v1852
    %1854 = vmatprep.subr.mxu0 0.0
    %v1855 = vand.u32 %v69, 4294901760
    %v1856 = vsub.f32 %v69, %v1855
    %1857 = vmatpush1.msra.mxu0 %v1856
    %1858 = vmatprep.subr.mxu0 0.0
    %v1859 = vand.u32 %v70, 4294901760
    %v1860 = vsub.f32 %v70, %v1859
    %1861 = vmatpush1.msra.mxu0 %v1860
    %1862 = vmatprep.subr.mxu0 0.0
    %v1863 = vand.u32 %v71, 4294901760
    %v1864 = vsub.f32 %v71, %v1863
    %1865 = vmatpush1.msra.mxu0 %v1864
    %v1866 = vand.u32 %v984, 4294901760
    %v1867 = vsub.f32 %v984, %v1866
    %1868 = vmatprep.mubr.f32.mxu0 %v1867
    %v1869 = vand.u32 %v952, 4294901760
    %v1870 = vsub.f32 %v952, %v1869
    %1871 = vmatmul.mubr.f32.gmra.mrb[0].mxu0 %v1870
    %v1872 = vpop.f32.mrb[0].mxu0
    %v1873 = vadd.f32 %v1630, %v1872
    %v1874 = vpop.f32.mrb[0].mxu0
    %v1875 = vand.u32 %v985, 4294901760
    %v1876 = vsub.f32 %v985, %v1875
    %1877 = vmatprep.mubr.f32.mxu0 %v1876
    %v1878 = vand.u32 %v953, 4294901760
    %v1879 = vsub.f32 %v953, %v1878
    %1880 = vmatmul.mubr.f32.gmra.mrb[0].mxu0 %v1879
    %v1881 = vpop.f32.mrb[0].mxu0
    %v1882 = vadd.f32 %v1637, %v1881
    %v1883 = vpop.f32.mrb[0].mxu0
    %v1884 = vand.u32 %v986, 4294901760
    %v1885 = vsub.f32 %v986, %v1884
    %1886 = vmatprep.mubr.f32.mxu0 %v1885
    %v1887 = vand.u32 %v954, 4294901760
    %v1888 = vsub.f32 %v954, %v1887
    %1889 = vmatmul.mubr.f32.gmra.mrb[0].mxu0 %v1888
    %v1890 = vpop.f32.mrb[0].mxu0
    %v1891 = vadd.f32 %v1644, %v1890
    %v1892 = vpop.f32.mrb[0].mxu0
    %v1893 = vand.u32 %v987, 4294901760
    %v1894 = vsub.f32 %v987, %v1893
    %1895 = vmatprep.mubr.f32.mxu0 %v1894
    %v1896 = vand.u32 %v955, 4294901760
    %v1897 = vsub.f32 %v955, %v1896
    %1898 = vmatmul.mubr.f32.gmra.mrb[0].mxu0 %v1897
    %v1899 = vpop.f32.mrb[0].mxu0
    %v1900 = vadd.f32 %v1651, %v1899
    %v1901 = vpop.f32.mrb[0].mxu0
    %v1902 = vand.u32 %v988, 4294901760
    %v1903 = vsub.f32 %v988, %v1902
    %1904 = vmatprep.mubr.f32.mxu0 %v1903
    %v1905 = vand.u32 %v956, 4294901760
    %v1906 = vsub.f32 %v956, %v1905
    %1907 = vmatmul.mubr.f32.gmra.mrb[0].mxu0 %v1906
    %v1908 = vpop.f32.mrb[0].mxu0
    %v1909 = vadd.f32 %v1658, %v1908
    %v1910 = vpop.f32.mrb[0].mxu0
    %v1911 = vand.u32 %v989, 4294901760
    %v1912 = vsub.f32 %v989, %v1911
    %1913 = vmatprep.mubr.f32.mxu0 %v1912
    %v1914 = vand.u32 %v957, 4294901760
    %v1915 = vsub.f32 %v957, %v1914
    %1916 = vmatmul.mubr.f32.gmra.mrb[0].mxu0 %v1915
    %v1917 = vpop.f32.mrb[0].mxu0
    %v1918 = vadd.f32 %v1665, %v1917
    %v1919 = vpop.f32.mrb[0].mxu0
    %v1920 = vand.u32 %v990, 4294901760
    %v1921 = vsub.f32 %v990, %v1920
    %1922 = vmatprep.mubr.f32.mxu0 %v1921
    %v1923 = vand.u32 %v958, 4294901760
    %v1924 = vsub.f32 %v958, %v1923
    %1925 = vmatmul.mubr.f32.gmra.mrb[0].mxu0 %v1924
    %v1926 = vpop.f32.mrb[0].mxu0
    %v1927 = vadd.f32 %v1672, %v1926
    %v1928 = vpop.f32.mrb[0].mxu0
    %v1929 = vand.u32 %v991, 4294901760
    %v1930 = vsub.f32 %v991, %v1929
    %1931 = vmatprep.mubr.f32.mxu0 %v1930
    %v1932 = vand.u32 %v959, 4294901760
    %v1933 = vsub.f32 %v959, %v1932
    %1934 = vmatmul.mubr.f32.gmra.mrb[0].mxu0 %v1933
    %v1935 = vpop.f32.mrb[0].mxu0
    %v1936 = vadd.f32 %v1679, %v1935
    %v1937 = vpop.f32.mrb[0].mxu0
    %v1938 = vand.u32 %v992, 4294901760
    %v1939 = vsub.f32 %v992, %v1938
    %1940 = vmatprep.mubr.f32.mxu0 %v1939
    %v1941 = vand.u32 %v960, 4294901760
    %v1942 = vsub.f32 %v960, %v1941
    %1943 = vmatmul.mubr.f32.gmra.mrb[0].mxu0 %v1942
    %v1944 = vpop.f32.mrb[0].mxu0
    %v1945 = vadd.f32 %v1686, %v1944
    %v1946 = vpop.f32.mrb[0].mxu0
    %v1947 = vand.u32 %v993, 4294901760
    %v1948 = vsub.f32 %v993, %v1947
    %1949 = vmatprep.mubr.f32.mxu0 %v1948
    %v1950 = vand.u32 %v961, 4294901760
    %v1951 = vsub.f32 %v961, %v1950
    %1952 = vmatmul.mubr.f32.gmra.mrb[0].mxu0 %v1951
    %v1953 = vpop.f32.mrb[0].mxu0
    %v1954 = vadd.f32 %v1693, %v1953
    %v1955 = vpop.f32.mrb[0].mxu0
    %v1956 = vand.u32 %v994, 4294901760
    %v1957 = vsub.f32 %v994, %v1956
    %1958 = vmatprep.mubr.f32.mxu0 %v1957
    %v1959 = vand.u32 %v962, 4294901760
    %v1960 = vsub.f32 %v962, %v1959
    %1961 = vmatmul.mubr.f32.gmra.mrb[0].mxu0 %v1960
    %v1962 = vpop.f32.mrb[0].mxu0
    %v1963 = vadd.f32 %v1700, %v1962
    %v1964 = vpop.f32.mrb[0].mxu0
    %v1965 = vand.u32 %v995, 4294901760
    %v1966 = vsub.f32 %v995, %v1965
    %1967 = vmatprep.mubr.f32.mxu0 %v1966
    %v1968 = vand.u32 %v963, 4294901760
    %v1969 = vsub.f32 %v963, %v1968
    %1970 = vmatmul.mubr.f32.gmra.mrb[0].mxu0 %v1969
    %v1971 = vpop.f32.mrb[0].mxu0
    %v1972 = vadd.f32 %v1707, %v1971
    %v1973 = vpop.f32.mrb[0].mxu0
    %v1974 = vand.u32 %v996, 4294901760
    %v1975 = vsub.f32 %v996, %v1974
    %1976 = vmatprep.mubr.f32.mxu0 %v1975
    %v1977 = vand.u32 %v964, 4294901760
    %v1978 = vsub.f32 %v964, %v1977
    %1979 = vmatmul.mubr.f32.gmra.mrb[0].mxu0 %v1978
    %v1980 = vpop.f32.mrb[0].mxu0
    %v1981 = vadd.f32 %v1714, %v1980
    %v1982 = vpop.f32.mrb[0].mxu0
    %v1983 = vand.u32 %v997, 4294901760
    %v1984 = vsub.f32 %v997, %v1983
    %1985 = vmatprep.mubr.f32.mxu0 %v1984
    %v1986 = vand.u32 %v965, 4294901760
    %v1987 = vsub.f32 %v965, %v1986
    %1988 = vmatmul.mubr.f32.gmra.mrb[0].mxu0 %v1987
    %v1989 = vpop.f32.mrb[0].mxu0
    %v1990 = vadd.f32 %v1721, %v1989
    %v1991 = vpop.f32.mrb[0].mxu0
    %v1992 = vand.u32 %v998, 4294901760
    %v1993 = vsub.f32 %v998, %v1992
    %1994 = vmatprep.mubr.f32.mxu0 %v1993
    %v1995 = vand.u32 %v966, 4294901760
    %v1996 = vsub.f32 %v966, %v1995
    %1997 = vmatmul.mubr.f32.gmra.mrb[0].mxu0 %v1996
    %v1998 = vpop.f32.mrb[0].mxu0
    %v1999 = vadd.f32 %v1728, %v1998
    %v2000 = vpop.f32.mrb[0].mxu0
    %v2001 = vand.u32 %v999, 4294901760
    %v2002 = vsub.f32 %v999, %v2001
    %2003 = vmatprep.mubr.f32.mxu0 %v2002
    %v2004 = vand.u32 %v967, 4294901760
    %v2005 = vsub.f32 %v967, %v2004
    %2006 = vmatmul.mubr.f32.gmra.mrb[0].mxu0 %v2005
    %v2007 = vpop.f32.mrb[0].mxu0
    %v2008 = vadd.f32 %v1735, %v2007
    %v2009 = vpop.f32.mrb[0].mxu0
    %2010 = vdwg.mxu0
    %2011 = vmatprep.subr.mxu0 0.0
    %v2012 = vand.u32 %v40, 4294901760
    %2013 = vmatpush1.msra.mxu0 %v2012
    %2014 = vmatprep.subr.mxu0 0.0
    %v2015 = vand.u32 %v41, 4294901760
    %2016 = vmatpush1.msra.mxu0 %v2015
    %2017 = vmatprep.subr.mxu0 0.0
    %v2018 = vand.u32 %v42, 4294901760
    %2019 = vmatpush1.msra.mxu0 %v2018
    %2020 = vmatprep.subr.mxu0 0.0
    %v2021 = vand.u32 %v43, 4294901760
    %2022 = vmatpush1.msra.mxu0 %v2021
    %2023 = vmatprep.subr.mxu0 0.0
    %v2024 = vand.u32 %v44, 4294901760
    %2025 = vmatpush1.msra.mxu0 %v2024
    %2026 = vmatprep.subr.mxu0 0.0
    %v2027 = vand.u32 %v45, 4294901760
    %2028 = vmatpush1.msra.mxu0 %v2027
    %2029 = vmatprep.subr.mxu0 0.0
    %v2030 = vand.u32 %v46, 4294901760
    %2031 = vmatpush1.msra.mxu0 %v2030
    %2032 = vmatprep.subr.mxu0 0.0
    %v2033 = vand.u32 %v47, 4294901760
    %2034 = vmatpush1.msra.mxu0 %v2033
    %2035 = vmatprep.subr.mxu0 0.0
    %v2036 = vand.u32 %v48, 4294901760
    %2037 = vmatpush1.msra.mxu0 %v2036
    %2038 = vmatprep.subr.mxu0 0.0
    %v2039 = vand.u32 %v49, 4294901760
    %2040 = vmatpush1.msra.mxu0 %v2039
    %2041 = vmatprep.subr.mxu0 0.0
    %v2042 = vand.u32 %v50, 4294901760
    %2043 = vmatpush1.msra.mxu0 %v2042
    %2044 = vmatprep.subr.mxu0 0.0
    %v2045 = vand.u32 %v51, 4294901760
    %2046 = vmatpush1.msra.mxu0 %v2045
    %2047 = vmatprep.subr.mxu0 0.0
    %v2048 = vand.u32 %v52, 4294901760
    %2049 = vmatpush1.msra.mxu0 %v2048
    %2050 = vmatprep.subr.mxu0 0.0
    %v2051 = vand.u32 %v53, 4294901760
    %2052 = vmatpush1.msra.mxu0 %v2051
    %2053 = vmatprep.subr.mxu0 0.0
    %v2054 = vand.u32 %v54, 4294901760
    %2055 = vmatpush1.msra.mxu0 %v2054
    %2056 = vmatprep.subr.mxu0 0.0
    %v2057 = vand.u32 %v55, 4294901760
    %2058 = vmatpush1.msra.mxu0 %v2057
    %2059 = vmatprep.subr.mxu0 0.0
    %v2060 = vand.u32 %v56, 4294901760
    %2061 = vmatpush1.msra.mxu0 %v2060
    %2062 = vmatprep.subr.mxu0 0.0
    %v2063 = vand.u32 %v57, 4294901760
    %2064 = vmatpush1.msra.mxu0 %v2063
    %2065 = vmatprep.subr.mxu0 0.0
    %v2066 = vand.u32 %v58, 4294901760
    %2067 = vmatpush1.msra.mxu0 %v2066
    %2068 = vmatprep.subr.mxu0 0.0
    %v2069 = vand.u32 %v59, 4294901760
    %2070 = vmatpush1.msra.mxu0 %v2069
    %2071 = vmatprep.subr.mxu0 0.0
    %v2072 = vand.u32 %v60, 4294901760
    %2073 = vmatpush1.msra.mxu0 %v2072
    %2074 = vmatprep.subr.mxu0 0.0
    %v2075 = vand.u32 %v61, 4294901760
    %2076 = vmatpush1.msra.mxu0 %v2075
    %2077 = vmatprep.subr.mxu0 0.0
    %v2078 = vand.u32 %v62, 4294901760
    %2079 = vmatpush1.msra.mxu0 %v2078
    %2080 = vmatprep.subr.mxu0 0.0
    %v2081 = vand.u32 %v63, 4294901760
    %2082 = vmatpush1.msra.mxu0 %v2081
    %2083 = vmatprep.subr.mxu0 0.0
    %v2084 = vand.u32 %v64, 4294901760
    %2085 = vmatpush1.msra.mxu0 %v2084
    %2086 = vmatprep.subr.mxu0 0.0
    %v2087 = vand.u32 %v65, 4294901760
    %2088 = vmatpush1.msra.mxu0 %v2087
    %2089 = vmatprep.subr.mxu0 0.0
    %v2090 = vand.u32 %v66, 4294901760
    %2091 = vmatpush1.msra.mxu0 %v2090
    %2092 = vmatprep.subr.mxu0 0.0
    %v2093 = vand.u32 %v67, 4294901760
    %2094 = vmatpush1.msra.mxu0 %v2093
    %2095 = vmatprep.subr.mxu0 0.0
    %v2096 = vand.u32 %v68, 4294901760
    %2097 = vmatpush1.msra.mxu0 %v2096
    %2098 = vmatprep.subr.mxu0 0.0
    %v2099 = vand.u32 %v69, 4294901760
    %2100 = vmatpush1.msra.mxu0 %v2099
    %2101 = vmatprep.subr.mxu0 0.0
    %v2102 = vand.u32 %v70, 4294901760
    %2103 = vmatpush1.msra.mxu0 %v2102
    %2104 = vmatprep.subr.mxu0 0.0
    %v2105 = vand.u32 %v71, 4294901760
    %2106 = vmatpush1.msra.mxu0 %v2105
    %v2107 = vand.u32 %v984, 4294901760
    %v2108 = vsub.f32 %v984, %v2107
    %v2109 = vand.u32 %v2108, 4294901760
    %2110 = vmatprep.mubr.f32.mxu0 %v2109
    %v2111 = vand.u32 %v952, 4294901760
    %v2112 = vsub.f32 %v952, %v2111
    %v2113 = vand.u32 %v2112, 4294901760
    %2114 = vmatmul.mubr.f32.gmra.mrb[0].mxu0 %v2113
    %v2115 = vpop.f32.mrb[0].mxu0
    %v2116 = vadd.f32 %v1873, %v2115
    %v2117 = vpop.f32.mrb[0].mxu0
    %v2118 = vand.u32 %v985, 4294901760
    %v2119 = vsub.f32 %v985, %v2118
    %v2120 = vand.u32 %v2119, 4294901760
    %2121 = vmatprep.mubr.f32.mxu0 %v2120
    %v2122 = vand.u32 %v953, 4294901760
    %v2123 = vsub.f32 %v953, %v2122
    %v2124 = vand.u32 %v2123, 4294901760
    %2125 = vmatmul.mubr.f32.gmra.mrb[0].mxu0 %v2124
    %v2126 = vpop.f32.mrb[0].mxu0
    %v2127 = vadd.f32 %v1882, %v2126
    %v2128 = vpop.f32.mrb[0].mxu0
    %v2129 = vand.u32 %v986, 4294901760
    %v2130 = vsub.f32 %v986, %v2129
    %v2131 = vand.u32 %v2130, 4294901760
    %2132 = vmatprep.mubr.f32.mxu0 %v2131
    %v2133 = vand.u32 %v954, 4294901760
    %v2134 = vsub.f32 %v954, %v2133
    %v2135 = vand.u32 %v2134, 4294901760
    %2136 = vmatmul.mubr.f32.gmra.mrb[0].mxu0 %v2135
    %v2137 = vpop.f32.mrb[0].mxu0
    %v2138 = vadd.f32 %v1891, %v2137
    %v2139 = vpop.f32.mrb[0].mxu0
    %v2140 = vand.u32 %v987, 4294901760
    %v2141 = vsub.f32 %v987, %v2140
    %v2142 = vand.u32 %v2141, 4294901760
    %2143 = vmatprep.mubr.f32.mxu0 %v2142
    %v2144 = vand.u32 %v955, 4294901760
    %v2145 = vsub.f32 %v955, %v2144
    %v2146 = vand.u32 %v2145, 4294901760
    %2147 = vmatmul.mubr.f32.gmra.mrb[0].mxu0 %v2146
    %v2148 = vpop.f32.mrb[0].mxu0
    %v2149 = vadd.f32 %v1900, %v2148
    %v2150 = vpop.f32.mrb[0].mxu0
    %v2151 = vand.u32 %v988, 4294901760
    %v2152 = vsub.f32 %v988, %v2151
    %v2153 = vand.u32 %v2152, 4294901760
    %2154 = vmatprep.mubr.f32.mxu0 %v2153
    %v2155 = vand.u32 %v956, 4294901760
    %v2156 = vsub.f32 %v956, %v2155
    %v2157 = vand.u32 %v2156, 4294901760
    %2158 = vmatmul.mubr.f32.gmra.mrb[0].mxu0 %v2157
    %v2159 = vpop.f32.mrb[0].mxu0
    %v2160 = vadd.f32 %v1909, %v2159
    %v2161 = vpop.f32.mrb[0].mxu0
    %v2162 = vand.u32 %v989, 4294901760
    %v2163 = vsub.f32 %v989, %v2162
    %v2164 = vand.u32 %v2163, 4294901760
    %2165 = vmatprep.mubr.f32.mxu0 %v2164
    %v2166 = vand.u32 %v957, 4294901760
    %v2167 = vsub.f32 %v957, %v2166
    %v2168 = vand.u32 %v2167, 4294901760
    %2169 = vmatmul.mubr.f32.gmra.mrb[0].mxu0 %v2168
    %v2170 = vpop.f32.mrb[0].mxu0
    %v2171 = vadd.f32 %v1918, %v2170
    %v2172 = vpop.f32.mrb[0].mxu0
    %v2173 = vand.u32 %v990, 4294901760
    %v2174 = vsub.f32 %v990, %v2173
    %v2175 = vand.u32 %v2174, 4294901760
    %2176 = vmatprep.mubr.f32.mxu0 %v2175
    %v2177 = vand.u32 %v958, 4294901760
    %v2178 = vsub.f32 %v958, %v2177
    %v2179 = vand.u32 %v2178, 4294901760
    %2180 = vmatmul.mubr.f32.gmra.mrb[0].mxu0 %v2179
    %v2181 = vpop.f32.mrb[0].mxu0
    %v2182 = vadd.f32 %v1927, %v2181
    %v2183 = vpop.f32.mrb[0].mxu0
    %v2184 = vand.u32 %v991, 4294901760
    %v2185 = vsub.f32 %v991, %v2184
    %v2186 = vand.u32 %v2185, 4294901760
    %2187 = vmatprep.mubr.f32.mxu0 %v2186
    %v2188 = vand.u32 %v959, 4294901760
    %v2189 = vsub.f32 %v959, %v2188
    %v2190 = vand.u32 %v2189, 4294901760
    %2191 = vmatmul.mubr.f32.gmra.mrb[0].mxu0 %v2190
    %v2192 = vpop.f32.mrb[0].mxu0
    %v2193 = vadd.f32 %v1936, %v2192
    %v2194 = vpop.f32.mrb[0].mxu0
    %v2195 = vand.u32 %v992, 4294901760
    %v2196 = vsub.f32 %v992, %v2195
    %v2197 = vand.u32 %v2196, 4294901760
    %2198 = vmatprep.mubr.f32.mxu0 %v2197
    %v2199 = vand.u32 %v960, 4294901760
    %v2200 = vsub.f32 %v960, %v2199
    %v2201 = vand.u32 %v2200, 4294901760
    %2202 = vmatmul.mubr.f32.gmra.mrb[0].mxu0 %v2201
    %v2203 = vpop.f32.mrb[0].mxu0
    %v2204 = vadd.f32 %v1945, %v2203
    %v2205 = vpop.f32.mrb[0].mxu0
    %v2206 = vand.u32 %v993, 4294901760
    %v2207 = vsub.f32 %v993, %v2206
    %v2208 = vand.u32 %v2207, 4294901760
    %2209 = vmatprep.mubr.f32.mxu0 %v2208
    %v2210 = vand.u32 %v961, 4294901760
    %v2211 = vsub.f32 %v961, %v2210
    %v2212 = vand.u32 %v2211, 4294901760
    %2213 = vmatmul.mubr.f32.gmra.mrb[0].mxu0 %v2212
    %v2214 = vpop.f32.mrb[0].mxu0
    %v2215 = vadd.f32 %v1954, %v2214
    %v2216 = vpop.f32.mrb[0].mxu0
    %v2217 = vand.u32 %v994, 4294901760
    %v2218 = vsub.f32 %v994, %v2217
    %v2219 = vand.u32 %v2218, 4294901760
    %2220 = vmatprep.mubr.f32.mxu0 %v2219
    %v2221 = vand.u32 %v962, 4294901760
    %v2222 = vsub.f32 %v962, %v2221
    %v2223 = vand.u32 %v2222, 4294901760
    %2224 = vmatmul.mubr.f32.gmra.mrb[0].mxu0 %v2223
    %v2225 = vpop.f32.mrb[0].mxu0
    %v2226 = vadd.f32 %v1963, %v2225
    %v2227 = vpop.f32.mrb[0].mxu0
    %v2228 = vand.u32 %v995, 4294901760
    %v2229 = vsub.f32 %v995, %v2228
    %v2230 = vand.u32 %v2229, 4294901760
    %2231 = vmatprep.mubr.f32.mxu0 %v2230
    %v2232 = vand.u32 %v963, 4294901760
    %v2233 = vsub.f32 %v963, %v2232
    %v2234 = vand.u32 %v2233, 4294901760
    %2235 = vmatmul.mubr.f32.gmra.mrb[0].mxu0 %v2234
    %v2236 = vpop.f32.mrb[0].mxu0
    %v2237 = vadd.f32 %v1972, %v2236
    %v2238 = vpop.f32.mrb[0].mxu0
    %v2239 = vand.u32 %v996, 4294901760
    %v2240 = vsub.f32 %v996, %v2239
    %v2241 = vand.u32 %v2240, 4294901760
    %2242 = vmatprep.mubr.f32.mxu0 %v2241
    %v2243 = vand.u32 %v964, 4294901760
    %v2244 = vsub.f32 %v964, %v2243
    %v2245 = vand.u32 %v2244, 4294901760
    %2246 = vmatmul.mubr.f32.gmra.mrb[0].mxu0 %v2245
    %v2247 = vpop.f32.mrb[0].mxu0
    %v2248 = vadd.f32 %v1981, %v2247
    %v2249 = vpop.f32.mrb[0].mxu0
    %v2250 = vand.u32 %v997, 4294901760
    %v2251 = vsub.f32 %v997, %v2250
    %v2252 = vand.u32 %v2251, 4294901760
    %2253 = vmatprep.mubr.f32.mxu0 %v2252
    %v2254 = vand.u32 %v965, 4294901760
    %v2255 = vsub.f32 %v965, %v2254
    %v2256 = vand.u32 %v2255, 4294901760
    %2257 = vmatmul.mubr.f32.gmra.mrb[0].mxu0 %v2256
    %v2258 = vpop.f32.mrb[0].mxu0
    %v2259 = vadd.f32 %v1990, %v2258
    %v2260 = vpop.f32.mrb[0].mxu0
    %v2261 = vand.u32 %v998, 4294901760
    %v2262 = vsub.f32 %v998, %v2261
    %v2263 = vand.u32 %v2262, 4294901760
    %2264 = vmatprep.mubr.f32.mxu0 %v2263
    %v2265 = vand.u32 %v966, 4294901760
    %v2266 = vsub.f32 %v966, %v2265
    %v2267 = vand.u32 %v2266, 4294901760
    %2268 = vmatmul.mubr.f32.gmra.mrb[0].mxu0 %v2267
    %v2269 = vpop.f32.mrb[0].mxu0
    %v2270 = vadd.f32 %v1999, %v2269
    %v2271 = vpop.f32.mrb[0].mxu0
    %v2272 = vand.u32 %v999, 4294901760
    %v2273 = vsub.f32 %v999, %v2272
    %v2274 = vand.u32 %v2273, 4294901760
    %2275 = vmatprep.mubr.f32.mxu0 %v2274
    %v2276 = vand.u32 %v967, 4294901760
    %v2277 = vsub.f32 %v967, %v2276
    %v2278 = vand.u32 %v2277, 4294901760
    %2279 = vmatmul.mubr.f32.gmra.mrb[0].mxu0 %v2278
    %v2280 = vpop.f32.mrb[0].mxu0
    %v2281 = vadd.f32 %v2008, %v2280
    %v2282 = vpop.f32.mrb[0].mxu0
    %2283 = vdwg.mxu0
    %2284 = vmatprep.subr.mxu0 0.0
    %v2285 = vand.u32 %v40, 4294901760
    %v2286 = vsub.f32 %v40, %v2285
    %v2287 = vand.u32 %v2286, 4294901760
    %2288 = vmatpush1.msra.mxu0 %v2287
    %2289 = vmatprep.subr.mxu0 0.0
    %v2290 = vand.u32 %v41, 4294901760
    %v2291 = vsub.f32 %v41, %v2290
    %v2292 = vand.u32 %v2291, 4294901760
    %2293 = vmatpush1.msra.mxu0 %v2292
    %2294 = vmatprep.subr.mxu0 0.0
    %v2295 = vand.u32 %v42, 4294901760
    %v2296 = vsub.f32 %v42, %v2295
    %v2297 = vand.u32 %v2296, 4294901760
    %2298 = vmatpush1.msra.mxu0 %v2297
    %2299 = vmatprep.subr.mxu0 0.0
    %v2300 = vand.u32 %v43, 4294901760
    %v2301 = vsub.f32 %v43, %v2300
    %v2302 = vand.u32 %v2301, 4294901760
    %2303 = vmatpush1.msra.mxu0 %v2302
    %2304 = vmatprep.subr.mxu0 0.0
    %v2305 = vand.u32 %v44, 4294901760
    %v2306 = vsub.f32 %v44, %v2305
    %v2307 = vand.u32 %v2306, 4294901760
    %2308 = vmatpush1.msra.mxu0 %v2307
    %2309 = vmatprep.subr.mxu0 0.0
    %v2310 = vand.u32 %v45, 4294901760
    %v2311 = vsub.f32 %v45, %v2310
    %v2312 = vand.u32 %v2311, 4294901760
    %2313 = vmatpush1.msra.mxu0 %v2312
    %2314 = vmatprep.subr.mxu0 0.0
    %v2315 = vand.u32 %v46, 4294901760
    %v2316 = vsub.f32 %v46, %v2315
    %v2317 = vand.u32 %v2316, 4294901760
    %2318 = vmatpush1.msra.mxu0 %v2317
    %2319 = vmatprep.subr.mxu0 0.0
    %v2320 = vand.u32 %v47, 4294901760
    %v2321 = vsub.f32 %v47, %v2320
    %v2322 = vand.u32 %v2321, 4294901760
    %2323 = vmatpush1.msra.mxu0 %v2322
    %2324 = vmatprep.subr.mxu0 0.0
    %v2325 = vand.u32 %v48, 4294901760
    %v2326 = vsub.f32 %v48, %v2325
    %v2327 = vand.u32 %v2326, 4294901760
    %2328 = vmatpush1.msra.mxu0 %v2327
    %2329 = vmatprep.subr.mxu0 0.0
    %v2330 = vand.u32 %v49, 4294901760
    %v2331 = vsub.f32 %v49, %v2330
    %v2332 = vand.u32 %v2331, 4294901760
    %2333 = vmatpush1.msra.mxu0 %v2332
    %2334 = vmatprep.subr.mxu0 0.0
    %v2335 = vand.u32 %v50, 4294901760
    %v2336 = vsub.f32 %v50, %v2335
    %v2337 = vand.u32 %v2336, 4294901760
    %2338 = vmatpush1.msra.mxu0 %v2337
    %2339 = vmatprep.subr.mxu0 0.0
    %v2340 = vand.u32 %v51, 4294901760
    %v2341 = vsub.f32 %v51, %v2340
    %v2342 = vand.u32 %v2341, 4294901760
    %2343 = vmatpush1.msra.mxu0 %v2342
    %2344 = vmatprep.subr.mxu0 0.0
    %v2345 = vand.u32 %v52, 4294901760
    %v2346 = vsub.f32 %v52, %v2345
    %v2347 = vand.u32 %v2346, 4294901760
    %2348 = vmatpush1.msra.mxu0 %v2347
    %2349 = vmatprep.subr.mxu0 0.0
    %v2350 = vand.u32 %v53, 4294901760
    %v2351 = vsub.f32 %v53, %v2350
    %v2352 = vand.u32 %v2351, 4294901760
    %2353 = vmatpush1.msra.mxu0 %v2352
    %2354 = vmatprep.subr.mxu0 0.0
    %v2355 = vand.u32 %v54, 4294901760
    %v2356 = vsub.f32 %v54, %v2355
    %v2357 = vand.u32 %v2356, 4294901760
    %2358 = vmatpush1.msra.mxu0 %v2357
    %2359 = vmatprep.subr.mxu0 0.0
    %v2360 = vand.u32 %v55, 4294901760
    %v2361 = vsub.f32 %v55, %v2360
    %v2362 = vand.u32 %v2361, 4294901760
    %2363 = vmatpush1.msra.mxu0 %v2362
    %2364 = vmatprep.subr.mxu0 0.0
    %v2365 = vand.u32 %v56, 4294901760
    %v2366 = vsub.f32 %v56, %v2365
    %v2367 = vand.u32 %v2366, 4294901760
    %2368 = vmatpush1.msra.mxu0 %v2367
    %2369 = vmatprep.subr.mxu0 0.0
    %v2370 = vand.u32 %v57, 4294901760
    %v2371 = vsub.f32 %v57, %v2370
    %v2372 = vand.u32 %v2371, 4294901760
    %2373 = vmatpush1.msra.mxu0 %v2372
    %2374 = vmatprep.subr.mxu0 0.0
    %v2375 = vand.u32 %v58, 4294901760
    %v2376 = vsub.f32 %v58, %v2375
    %v2377 = vand.u32 %v2376, 4294901760
    %2378 = vmatpush1.msra.mxu0 %v2377
    %2379 = vmatprep.subr.mxu0 0.0
    %v2380 = vand.u32 %v59, 4294901760
    %v2381 = vsub.f32 %v59, %v2380
    %v2382 = vand.u32 %v2381, 4294901760
    %2383 = vmatpush1.msra.mxu0 %v2382
    %2384 = vmatprep.subr.mxu0 0.0
    %v2385 = vand.u32 %v60, 4294901760
    %v2386 = vsub.f32 %v60, %v2385
    %v2387 = vand.u32 %v2386, 4294901760
    %2388 = vmatpush1.msra.mxu0 %v2387
    %2389 = vmatprep.subr.mxu0 0.0
    %v2390 = vand.u32 %v61, 4294901760
    %v2391 = vsub.f32 %v61, %v2390
    %v2392 = vand.u32 %v2391, 4294901760
    %2393 = vmatpush1.msra.mxu0 %v2392
    %2394 = vmatprep.subr.mxu0 0.0
    %v2395 = vand.u32 %v62, 4294901760
    %v2396 = vsub.f32 %v62, %v2395
    %v2397 = vand.u32 %v2396, 4294901760
    %2398 = vmatpush1.msra.mxu0 %v2397
    %2399 = vmatprep.subr.mxu0 0.0
    %v2400 = vand.u32 %v63, 4294901760
    %v2401 = vsub.f32 %v63, %v2400
    %v2402 = vand.u32 %v2401, 4294901760
    %2403 = vmatpush1.msra.mxu0 %v2402
    %2404 = vmatprep.subr.mxu0 0.0
    %v2405 = vand.u32 %v64, 4294901760
    %v2406 = vsub.f32 %v64, %v2405
    %v2407 = vand.u32 %v2406, 4294901760
    %2408 = vmatpush1.msra.mxu0 %v2407
    %2409 = vmatprep.subr.mxu0 0.0
    %v2410 = vand.u32 %v65, 4294901760
    %v2411 = vsub.f32 %v65, %v2410
    %v2412 = vand.u32 %v2411, 4294901760
    %2413 = vmatpush1.msra.mxu0 %v2412
    %2414 = vmatprep.subr.mxu0 0.0
    %v2415 = vand.u32 %v66, 4294901760
    %v2416 = vsub.f32 %v66, %v2415
    %v2417 = vand.u32 %v2416, 4294901760
    %2418 = vmatpush1.msra.mxu0 %v2417
    %2419 = vmatprep.subr.mxu0 0.0
    %v2420 = vand.u32 %v67, 4294901760
    %v2421 = vsub.f32 %v67, %v2420
    %v2422 = vand.u32 %v2421, 4294901760
    %2423 = vmatpush1.msra.mxu0 %v2422
    %2424 = vmatprep.subr.mxu0 0.0
    %v2425 = vand.u32 %v68, 4294901760
    %v2426 = vsub.f32 %v68, %v2425
    %v2427 = vand.u32 %v2426, 4294901760
    %2428 = vmatpush1.msra.mxu0 %v2427
    %2429 = vmatprep.subr.mxu0 0.0
    %v2430 = vand.u32 %v69, 4294901760
    %v2431 = vsub.f32 %v69, %v2430
    %v2432 = vand.u32 %v2431, 4294901760
    %2433 = vmatpush1.msra.mxu0 %v2432
    %2434 = vmatprep.subr.mxu0 0.0
    %v2435 = vand.u32 %v70, 4294901760
    %v2436 = vsub.f32 %v70, %v2435
    %v2437 = vand.u32 %v2436, 4294901760
    %2438 = vmatpush1.msra.mxu0 %v2437
    %2439 = vmatprep.subr.mxu0 0.0
    %v2440 = vand.u32 %v71, 4294901760
    %v2441 = vsub.f32 %v71, %v2440
    %v2442 = vand.u32 %v2441, 4294901760
    %2443 = vmatpush1.msra.mxu0 %v2442
    %v2444 = vand.u32 %v984, 4294901760
    %2445 = vmatprep.mubr.f32.mxu0 %v2444
    %v2446 = vand.u32 %v952, 4294901760
    %2447 = vmatmul.mubr.f32.gmra.mrb[0].mxu0 %v2446
    %v2448 = vpop.f32.mrb[0].mxu0
    %v2449 = vadd.f32 %v2116, %v2448
    %v2450 = vpop.f32.mrb[0].mxu0
    %v2451 = vand.u32 %v985, 4294901760
    %2452 = vmatprep.mubr.f32.mxu0 %v2451
    %v2453 = vand.u32 %v953, 4294901760
    %2454 = vmatmul.mubr.f32.gmra.mrb[0].mxu0 %v2453
    %v2455 = vpop.f32.mrb[0].mxu0
    %v2456 = vadd.f32 %v2127, %v2455
    %v2457 = vpop.f32.mrb[0].mxu0
    %v2458 = vand.u32 %v986, 4294901760
    %2459 = vmatprep.mubr.f32.mxu0 %v2458
    %v2460 = vand.u32 %v954, 4294901760
    %2461 = vmatmul.mubr.f32.gmra.mrb[0].mxu0 %v2460
    %v2462 = vpop.f32.mrb[0].mxu0
    %v2463 = vadd.f32 %v2138, %v2462
    %v2464 = vpop.f32.mrb[0].mxu0
    %v2465 = vand.u32 %v987, 4294901760
    %2466 = vmatprep.mubr.f32.mxu0 %v2465
    %v2467 = vand.u32 %v955, 4294901760
    %2468 = vmatmul.mubr.f32.gmra.mrb[0].mxu0 %v2467
    %v2469 = vpop.f32.mrb[0].mxu0
    %v2470 = vadd.f32 %v2149, %v2469
    %v2471 = vpop.f32.mrb[0].mxu0
    %v2472 = vand.u32 %v988, 4294901760
    %2473 = vmatprep.mubr.f32.mxu0 %v2472
    %v2474 = vand.u32 %v956, 4294901760
    %2475 = vmatmul.mubr.f32.gmra.mrb[0].mxu0 %v2474
    %v2476 = vpop.f32.mrb[0].mxu0
    %v2477 = vadd.f32 %v2160, %v2476
    %v2478 = vpop.f32.mrb[0].mxu0
    %v2479 = vand.u32 %v989, 4294901760
    %2480 = vmatprep.mubr.f32.mxu0 %v2479
    %v2481 = vand.u32 %v957, 4294901760
    %2482 = vmatmul.mubr.f32.gmra.mrb[0].mxu0 %v2481
    %v2483 = vpop.f32.mrb[0].mxu0
    %v2484 = vadd.f32 %v2171, %v2483
    %v2485 = vpop.f32.mrb[0].mxu0
    %v2486 = vand.u32 %v990, 4294901760
    %2487 = vmatprep.mubr.f32.mxu0 %v2486
    %v2488 = vand.u32 %v958, 4294901760
    %2489 = vmatmul.mubr.f32.gmra.mrb[0].mxu0 %v2488
    %v2490 = vpop.f32.mrb[0].mxu0
    %v2491 = vadd.f32 %v2182, %v2490
    %v2492 = vpop.f32.mrb[0].mxu0
    %v2493 = vand.u32 %v991, 4294901760
    %2494 = vmatprep.mubr.f32.mxu0 %v2493
    %v2495 = vand.u32 %v959, 4294901760
    %2496 = vmatmul.mubr.f32.gmra.mrb[0].mxu0 %v2495
    %v2497 = vpop.f32.mrb[0].mxu0
    %v2498 = vadd.f32 %v2193, %v2497
    %v2499 = vpop.f32.mrb[0].mxu0
    %v2500 = vand.u32 %v992, 4294901760
    %2501 = vmatprep.mubr.f32.mxu0 %v2500
    %v2502 = vand.u32 %v960, 4294901760
    %2503 = vmatmul.mubr.f32.gmra.mrb[0].mxu0 %v2502
    %v2504 = vpop.f32.mrb[0].mxu0
    %v2505 = vadd.f32 %v2204, %v2504
    %v2506 = vpop.f32.mrb[0].mxu0
    %v2507 = vand.u32 %v993, 4294901760
    %2508 = vmatprep.mubr.f32.mxu0 %v2507
    %v2509 = vand.u32 %v961, 4294901760
    %2510 = vmatmul.mubr.f32.gmra.mrb[0].mxu0 %v2509
    %v2511 = vpop.f32.mrb[0].mxu0
    %v2512 = vadd.f32 %v2215, %v2511
    %v2513 = vpop.f32.mrb[0].mxu0
    %v2514 = vand.u32 %v994, 4294901760
    %2515 = vmatprep.mubr.f32.mxu0 %v2514
    %v2516 = vand.u32 %v962, 4294901760
    %2517 = vmatmul.mubr.f32.gmra.mrb[0].mxu0 %v2516
    %v2518 = vpop.f32.mrb[0].mxu0
    %v2519 = vadd.f32 %v2226, %v2518
    %v2520 = vpop.f32.mrb[0].mxu0
    %v2521 = vand.u32 %v995, 4294901760
    %2522 = vmatprep.mubr.f32.mxu0 %v2521
    %v2523 = vand.u32 %v963, 4294901760
    %2524 = vmatmul.mubr.f32.gmra.mrb[0].mxu0 %v2523
    %v2525 = vpop.f32.mrb[0].mxu0
    %v2526 = vadd.f32 %v2237, %v2525
    %v2527 = vpop.f32.mrb[0].mxu0
    %v2528 = vand.u32 %v996, 4294901760
    %2529 = vmatprep.mubr.f32.mxu0 %v2528
    %v2530 = vand.u32 %v964, 4294901760
    %2531 = vmatmul.mubr.f32.gmra.mrb[0].mxu0 %v2530
    %v2532 = vpop.f32.mrb[0].mxu0
    %v2533 = vadd.f32 %v2248, %v2532
    %v2534 = vpop.f32.mrb[0].mxu0
    %v2535 = vand.u32 %v997, 4294901760
    %2536 = vmatprep.mubr.f32.mxu0 %v2535
    %v2537 = vand.u32 %v965, 4294901760
    %2538 = vmatmul.mubr.f32.gmra.mrb[0].mxu0 %v2537
    %v2539 = vpop.f32.mrb[0].mxu0
    %v2540 = vadd.f32 %v2259, %v2539
    %v2541 = vpop.f32.mrb[0].mxu0
    %v2542 = vand.u32 %v998, 4294901760
    %2543 = vmatprep.mubr.f32.mxu0 %v2542
    %v2544 = vand.u32 %v966, 4294901760
    %2545 = vmatmul.mubr.f32.gmra.mrb[0].mxu0 %v2544
    %v2546 = vpop.f32.mrb[0].mxu0
    %v2547 = vadd.f32 %v2270, %v2546
    %v2548 = vpop.f32.mrb[0].mxu0
    %v2549 = vand.u32 %v999, 4294901760
    %2550 = vmatprep.mubr.f32.mxu0 %v2549
    %v2551 = vand.u32 %v967, 4294901760
    %2552 = vmatmul.mubr.f32.gmra.mrb[0].mxu0 %v2551
    %v2553 = vpop.f32.mrb[0].mxu0
    %v2554 = vadd.f32 %v2281, %v2553
    %v2555 = vpop.f32.mrb[0].mxu0
    %2556 = vdwg.mxu0
    %2557 = vmatprep.subr.mxu0 0.0
    %v2558 = vand.u32 %v40, 4294901760
    %2559 = vmatpush1.msra.mxu0 %v2558
    %2560 = vmatprep.subr.mxu0 0.0
    %v2561 = vand.u32 %v41, 4294901760
    %2562 = vmatpush1.msra.mxu0 %v2561
    %2563 = vmatprep.subr.mxu0 0.0
    %v2564 = vand.u32 %v42, 4294901760
    %2565 = vmatpush1.msra.mxu0 %v2564
    %2566 = vmatprep.subr.mxu0 0.0
    %v2567 = vand.u32 %v43, 4294901760
    %2568 = vmatpush1.msra.mxu0 %v2567
    %2569 = vmatprep.subr.mxu0 0.0
    %v2570 = vand.u32 %v44, 4294901760
    %2571 = vmatpush1.msra.mxu0 %v2570
    %2572 = vmatprep.subr.mxu0 0.0
    %v2573 = vand.u32 %v45, 4294901760
    %2574 = vmatpush1.msra.mxu0 %v2573
    %2575 = vmatprep.subr.mxu0 0.0
    %v2576 = vand.u32 %v46, 4294901760
    %2577 = vmatpush1.msra.mxu0 %v2576
    %2578 = vmatprep.subr.mxu0 0.0
    %v2579 = vand.u32 %v47, 4294901760
    %2580 = vmatpush1.msra.mxu0 %v2579
    %2581 = vmatprep.subr.mxu0 0.0
    %v2582 = vand.u32 %v48, 4294901760
    %2583 = vmatpush1.msra.mxu0 %v2582
    %2584 = vmatprep.subr.mxu0 0.0
    %v2585 = vand.u32 %v49, 4294901760
    %2586 = vmatpush1.msra.mxu0 %v2585
    %2587 = vmatprep.subr.mxu0 0.0
    %v2588 = vand.u32 %v50, 4294901760
    %2589 = vmatpush1.msra.mxu0 %v2588
    %2590 = vmatprep.subr.mxu0 0.0
    %v2591 = vand.u32 %v51, 4294901760
    %2592 = vmatpush1.msra.mxu0 %v2591
    %2593 = vmatprep.subr.mxu0 0.0
    %v2594 = vand.u32 %v52, 4294901760
    %2595 = vmatpush1.msra.mxu0 %v2594
    %2596 = vmatprep.subr.mxu0 0.0
    %v2597 = vand.u32 %v53, 4294901760
    %2598 = vmatpush1.msra.mxu0 %v2597
    %2599 = vmatprep.subr.mxu0 0.0
    %v2600 = vand.u32 %v54, 4294901760
    %2601 = vmatpush1.msra.mxu0 %v2600
    %2602 = vmatprep.subr.mxu0 0.0
    %v2603 = vand.u32 %v55, 4294901760
    %2604 = vmatpush1.msra.mxu0 %v2603
    %2605 = vmatprep.subr.mxu0 0.0
    %v2606 = vand.u32 %v56, 4294901760
    %2607 = vmatpush1.msra.mxu0 %v2606
    %2608 = vmatprep.subr.mxu0 0.0
    %v2609 = vand.u32 %v57, 4294901760
    %2610 = vmatpush1.msra.mxu0 %v2609
    %2611 = vmatprep.subr.mxu0 0.0
    %v2612 = vand.u32 %v58, 4294901760
    %2613 = vmatpush1.msra.mxu0 %v2612
    %2614 = vmatprep.subr.mxu0 0.0
    %v2615 = vand.u32 %v59, 4294901760
    %2616 = vmatpush1.msra.mxu0 %v2615
    %2617 = vmatprep.subr.mxu0 0.0
    %v2618 = vand.u32 %v60, 4294901760
    %2619 = vmatpush1.msra.mxu0 %v2618
    %2620 = vmatprep.subr.mxu0 0.0
    %v2621 = vand.u32 %v61, 4294901760
    %2622 = vmatpush1.msra.mxu0 %v2621
    %2623 = vmatprep.subr.mxu0 0.0
    %v2624 = vand.u32 %v62, 4294901760
    %2625 = vmatpush1.msra.mxu0 %v2624
    %2626 = vmatprep.subr.mxu0 0.0
    %v2627 = vand.u32 %v63, 4294901760
    %2628 = vmatpush1.msra.mxu0 %v2627
    %2629 = vmatprep.subr.mxu0 0.0
    %v2630 = vand.u32 %v64, 4294901760
    %2631 = vmatpush1.msra.mxu0 %v2630
    %2632 = vmatprep.subr.mxu0 0.0
    %v2633 = vand.u32 %v65, 4294901760
    %2634 = vmatpush1.msra.mxu0 %v2633
    %2635 = vmatprep.subr.mxu0 0.0
    %v2636 = vand.u32 %v66, 4294901760
    %2637 = vmatpush1.msra.mxu0 %v2636
    %2638 = vmatprep.subr.mxu0 0.0
    %v2639 = vand.u32 %v67, 4294901760
    %2640 = vmatpush1.msra.mxu0 %v2639
    %2641 = vmatprep.subr.mxu0 0.0
    %v2642 = vand.u32 %v68, 4294901760
    %2643 = vmatpush1.msra.mxu0 %v2642
    %2644 = vmatprep.subr.mxu0 0.0
    %v2645 = vand.u32 %v69, 4294901760
    %2646 = vmatpush1.msra.mxu0 %v2645
    %2647 = vmatprep.subr.mxu0 0.0
    %v2648 = vand.u32 %v70, 4294901760
    %2649 = vmatpush1.msra.mxu0 %v2648
    %2650 = vmatprep.subr.mxu0 0.0
    %v2651 = vand.u32 %v71, 4294901760
    %2652 = vmatpush1.msra.mxu0 %v2651
    %v2653 = vand.u32 %v984, 4294901760
    %2654 = vmatprep.mubr.f32.mxu0 %v2653
    %v2655 = vand.u32 %v952, 4294901760
    %2656 = vmatmul.mubr.f32.gmra.mrb[0].mxu0 %v2655
    %v2657 = vpop.f32.mrb[0].mxu0
    %v2658 = vadd.f32 %v2449, %v2657
    %v2659 = vpop.f32.mrb[0].mxu0
    %v2660 = vand.u32 %v985, 4294901760
    %2661 = vmatprep.mubr.f32.mxu0 %v2660
    %v2662 = vand.u32 %v953, 4294901760
    %2663 = vmatmul.mubr.f32.gmra.mrb[0].mxu0 %v2662
    %v2664 = vpop.f32.mrb[0].mxu0
    %v2665 = vadd.f32 %v2456, %v2664
    %v2666 = vpop.f32.mrb[0].mxu0
    %v2667 = vand.u32 %v986, 4294901760
    %2668 = vmatprep.mubr.f32.mxu0 %v2667
    %v2669 = vand.u32 %v954, 4294901760
    %2670 = vmatmul.mubr.f32.gmra.mrb[0].mxu0 %v2669
    %v2671 = vpop.f32.mrb[0].mxu0
    %v2672 = vadd.f32 %v2463, %v2671
    %v2673 = vpop.f32.mrb[0].mxu0
    %v2674 = vand.u32 %v987, 4294901760
    %2675 = vmatprep.mubr.f32.mxu0 %v2674
    %v2676 = vand.u32 %v955, 4294901760
    %2677 = vmatmul.mubr.f32.gmra.mrb[0].mxu0 %v2676
    %v2678 = vpop.f32.mrb[0].mxu0
    %v2679 = vadd.f32 %v2470, %v2678
    %v2680 = vpop.f32.mrb[0].mxu0
    %v2681 = vand.u32 %v988, 4294901760
    %2682 = vmatprep.mubr.f32.mxu0 %v2681
    %v2683 = vand.u32 %v956, 4294901760
    %2684 = vmatmul.mubr.f32.gmra.mrb[0].mxu0 %v2683
    %v2685 = vpop.f32.mrb[0].mxu0
    %v2686 = vadd.f32 %v2477, %v2685
    %v2687 = vpop.f32.mrb[0].mxu0
    %v2688 = vand.u32 %v989, 4294901760
    %2689 = vmatprep.mubr.f32.mxu0 %v2688
    %v2690 = vand.u32 %v957, 4294901760
    %2691 = vmatmul.mubr.f32.gmra.mrb[0].mxu0 %v2690
    %v2692 = vpop.f32.mrb[0].mxu0
    %v2693 = vadd.f32 %v2484, %v2692
    %v2694 = vpop.f32.mrb[0].mxu0
    %v2695 = vand.u32 %v990, 4294901760
    %2696 = vmatprep.mubr.f32.mxu0 %v2695
    %v2697 = vand.u32 %v958, 4294901760
    %2698 = vmatmul.mubr.f32.gmra.mrb[0].mxu0 %v2697
    %v2699 = vpop.f32.mrb[0].mxu0
    %v2700 = vadd.f32 %v2491, %v2699
    %v2701 = vpop.f32.mrb[0].mxu0
    %v2702 = vand.u32 %v991, 4294901760
    %2703 = vmatprep.mubr.f32.mxu0 %v2702
    %v2704 = vand.u32 %v959, 4294901760
    %2705 = vmatmul.mubr.f32.gmra.mrb[0].mxu0 %v2704
    %v2706 = vpop.f32.mrb[0].mxu0
    %v2707 = vadd.f32 %v2498, %v2706
    %v2708 = vpop.f32.mrb[0].mxu0
    %v2709 = vand.u32 %v992, 4294901760
    %2710 = vmatprep.mubr.f32.mxu0 %v2709
    %v2711 = vand.u32 %v960, 4294901760
    %2712 = vmatmul.mubr.f32.gmra.mrb[0].mxu0 %v2711
    %v2713 = vpop.f32.mrb[0].mxu0
    %v2714 = vadd.f32 %v2505, %v2713
    %v2715 = vpop.f32.mrb[0].mxu0
    %v2716 = vand.u32 %v993, 4294901760
    %2717 = vmatprep.mubr.f32.mxu0 %v2716
    %v2718 = vand.u32 %v961, 4294901760
    %2719 = vmatmul.mubr.f32.gmra.mrb[0].mxu0 %v2718
    %v2720 = vpop.f32.mrb[0].mxu0
    %v2721 = vadd.f32 %v2512, %v2720
    %v2722 = vpop.f32.mrb[0].mxu0
    %v2723 = vand.u32 %v994, 4294901760
    %2724 = vmatprep.mubr.f32.mxu0 %v2723
    %v2725 = vand.u32 %v962, 4294901760
    %2726 = vmatmul.mubr.f32.gmra.mrb[0].mxu0 %v2725
    %v2727 = vpop.f32.mrb[0].mxu0
    %v2728 = vadd.f32 %v2519, %v2727
    %v2729 = vpop.f32.mrb[0].mxu0
    %v2730 = vand.u32 %v995, 4294901760
    %2731 = vmatprep.mubr.f32.mxu0 %v2730
    %v2732 = vand.u32 %v963, 4294901760
    %2733 = vmatmul.mubr.f32.gmra.mrb[0].mxu0 %v2732
    %v2734 = vpop.f32.mrb[0].mxu0
    %v2735 = vadd.f32 %v2526, %v2734
    %v2736 = vpop.f32.mrb[0].mxu0
    %v2737 = vand.u32 %v996, 4294901760
    %2738 = vmatprep.mubr.f32.mxu0 %v2737
    %v2739 = vand.u32 %v964, 4294901760
    %2740 = vmatmul.mubr.f32.gmra.mrb[0].mxu0 %v2739
    %v2741 = vpop.f32.mrb[0].mxu0
    %v2742 = vadd.f32 %v2533, %v2741
    %v2743 = vpop.f32.mrb[0].mxu0
    %v2744 = vand.u32 %v997, 4294901760
    %2745 = vmatprep.mubr.f32.mxu0 %v2744
    %v2746 = vand.u32 %v965, 4294901760
    %2747 = vmatmul.mubr.f32.gmra.mrb[0].mxu0 %v2746
    %v2748 = vpop.f32.mrb[0].mxu0
    %v2749 = vadd.f32 %v2540, %v2748
    %v2750 = vpop.f32.mrb[0].mxu0
    %v2751 = vand.u32 %v998, 4294901760
    %2752 = vmatprep.mubr.f32.mxu0 %v2751
    %v2753 = vand.u32 %v966, 4294901760
    %2754 = vmatmul.mubr.f32.gmra.mrb[0].mxu0 %v2753
    %v2755 = vpop.f32.mrb[0].mxu0
    %v2756 = vadd.f32 %v2547, %v2755
    %v2757 = vpop.f32.mrb[0].mxu0
    %v2758 = vand.u32 %v999, 4294901760
    %2759 = vmatprep.mubr.f32.mxu0 %v2758
    %v2760 = vand.u32 %v967, 4294901760
    %2761 = vmatmul.mubr.f32.gmra.mrb[0].mxu0 %v2760
    %v2762 = vpop.f32.mrb[0].mxu0
    %v2763 = vadd.f32 %v2554, %v2762
    %v2764 = vpop.f32.mrb[0].mxu0
    %2765 = vdwg.mxu0
    %2766 = vmatprep.subr.mxu0 0.0
    %v2767 = vand.u32 %v72, 4294901760
    %2768 = vmatpush1.msra.mxu0 %v2767
    %2769 = vmatprep.subr.mxu0 0.0
    %v2770 = vand.u32 %v73, 4294901760
    %2771 = vmatpush1.msra.mxu0 %v2770
    %2772 = vmatprep.subr.mxu0 0.0
    %v2773 = vand.u32 %v74, 4294901760
    %2774 = vmatpush1.msra.mxu0 %v2773
    %2775 = vmatprep.subr.mxu0 0.0
    %v2776 = vand.u32 %v75, 4294901760
    %2777 = vmatpush1.msra.mxu0 %v2776
    %2778 = vmatprep.subr.mxu0 0.0
    %v2779 = vand.u32 %v76, 4294901760
    %2780 = vmatpush1.msra.mxu0 %v2779
    %2781 = vmatprep.subr.mxu0 0.0
    %v2782 = vand.u32 %v77, 4294901760
    %2783 = vmatpush1.msra.mxu0 %v2782
    %2784 = vmatprep.subr.mxu0 0.0
    %v2785 = vand.u32 %v78, 4294901760
    %2786 = vmatpush1.msra.mxu0 %v2785
    %2787 = vmatprep.subr.mxu0 0.0
    %v2788 = vand.u32 %v79, 4294901760
    %2789 = vmatpush1.msra.mxu0 %v2788
    %2790 = vmatprep.subr.mxu0 0.0
    %v2791 = vand.u32 %v80, 4294901760
    %2792 = vmatpush1.msra.mxu0 %v2791
    %2793 = vmatprep.subr.mxu0 0.0
    %v2794 = vand.u32 %v81, 4294901760
    %2795 = vmatpush1.msra.mxu0 %v2794
    %2796 = vmatprep.subr.mxu0 0.0
    %v2797 = vand.u32 %v82, 4294901760
    %2798 = vmatpush1.msra.mxu0 %v2797
    %2799 = vmatprep.subr.mxu0 0.0
    %v2800 = vand.u32 %v83, 4294901760
    %2801 = vmatpush1.msra.mxu0 %v2800
    %2802 = vmatprep.subr.mxu0 0.0
    %v2803 = vand.u32 %v84, 4294901760
    %2804 = vmatpush1.msra.mxu0 %v2803
    %2805 = vmatprep.subr.mxu0 0.0
    %v2806 = vand.u32 %v85, 4294901760
    %2807 = vmatpush1.msra.mxu0 %v2806
    %2808 = vmatprep.subr.mxu0 0.0
    %v2809 = vand.u32 %v86, 4294901760
    %2810 = vmatpush1.msra.mxu0 %v2809
    %2811 = vmatprep.subr.mxu0 0.0
    %v2812 = vand.u32 %v87, 4294901760
    %2813 = vmatpush1.msra.mxu0 %v2812
    %2814 = vmatprep.subr.mxu0 0.0
    %v2815 = vand.u32 %v88, 4294901760
    %2816 = vmatpush1.msra.mxu0 %v2815
    %2817 = vmatprep.subr.mxu0 0.0
    %v2818 = vand.u32 %v89, 4294901760
    %2819 = vmatpush1.msra.mxu0 %v2818
    %2820 = vmatprep.subr.mxu0 0.0
    %v2821 = vand.u32 %v90, 4294901760
    %2822 = vmatpush1.msra.mxu0 %v2821
    %2823 = vmatprep.subr.mxu0 0.0
    %v2824 = vand.u32 %v91, 4294901760
    %2825 = vmatpush1.msra.mxu0 %v2824
    %2826 = vmatprep.subr.mxu0 0.0
    %v2827 = vand.u32 %v92, 4294901760
    %2828 = vmatpush1.msra.mxu0 %v2827
    %2829 = vmatprep.subr.mxu0 0.0
    %v2830 = vand.u32 %v93, 4294901760
    %2831 = vmatpush1.msra.mxu0 %v2830
    %2832 = vmatprep.subr.mxu0 0.0
    %v2833 = vand.u32 %v94, 4294901760
    %2834 = vmatpush1.msra.mxu0 %v2833
    %2835 = vmatprep.subr.mxu0 0.0
    %v2836 = vand.u32 %v95, 4294901760
    %2837 = vmatpush1.msra.mxu0 %v2836
    %2838 = vmatprep.subr.mxu0 0.0
    %v2839 = vand.u32 %v96, 4294901760
    %2840 = vmatpush1.msra.mxu0 %v2839
    %2841 = vmatprep.subr.mxu0 0.0
    %v2842 = vand.u32 %v97, 4294901760
    %2843 = vmatpush1.msra.mxu0 %v2842
    %2844 = vmatprep.subr.mxu0 0.0
    %v2845 = vand.u32 %v98, 4294901760
    %2846 = vmatpush1.msra.mxu0 %v2845
    %2847 = vmatprep.subr.mxu0 0.0
    %v2848 = vand.u32 %v99, 4294901760
    %2849 = vmatpush1.msra.mxu0 %v2848
    %2850 = vmatprep.subr.mxu0 0.0
    %v2851 = vand.u32 %v100, 4294901760
    %2852 = vmatpush1.msra.mxu0 %v2851
    %2853 = vmatprep.subr.mxu0 0.0
    %v2854 = vand.u32 %v101, 4294901760
    %2855 = vmatpush1.msra.mxu0 %v2854
    %2856 = vmatprep.subr.mxu0 0.0
    %v2857 = vand.u32 %v102, 4294901760
    %2858 = vmatpush1.msra.mxu0 %v2857
    %2859 = vmatprep.subr.mxu0 0.0
    %v2860 = vand.u32 %v103, 4294901760
    %2861 = vmatpush1.msra.mxu0 %v2860
    %v2862 = vand.u32 %v1048, 4294901760
    %v2863 = vsub.f32 %v1048, %v2862
    %v2864 = vand.u32 %v2863, 4294901760
    %v2865 = vsub.f32 %v2863, %v2864
    %v2866 = vand.u32 %v2865, 4294901760
    %2867 = vmatprep.mubr.f32.mxu0 %v2866
    %v2868 = vand.u32 %v1016, 4294901760
    %v2869 = vsub.f32 %v1016, %v2868
    %v2870 = vand.u32 %v2869, 4294901760
    %v2871 = vsub.f32 %v2869, %v2870
    %v2872 = vand.u32 %v2871, 4294901760
    %2873 = vmatmul.mubr.f32.gmra.mrb[0].mxu0 %v2872
    %v2874 = vpop.f32.mrb[0].mxu0
    %v2875 = vadd.f32 %v2658, %v2874
    %v2876 = vpop.f32.mrb[0].mxu0
    %v2877 = vand.u32 %v1049, 4294901760
    %v2878 = vsub.f32 %v1049, %v2877
    %v2879 = vand.u32 %v2878, 4294901760
    %v2880 = vsub.f32 %v2878, %v2879
    %v2881 = vand.u32 %v2880, 4294901760
    %2882 = vmatprep.mubr.f32.mxu0 %v2881
    %v2883 = vand.u32 %v1017, 4294901760
    %v2884 = vsub.f32 %v1017, %v2883
    %v2885 = vand.u32 %v2884, 4294901760
    %v2886 = vsub.f32 %v2884, %v2885
    %v2887 = vand.u32 %v2886, 4294901760
    %2888 = vmatmul.mubr.f32.gmra.mrb[0].mxu0 %v2887
    %v2889 = vpop.f32.mrb[0].mxu0
    %v2890 = vadd.f32 %v2665, %v2889
    %v2891 = vpop.f32.mrb[0].mxu0
    %v2892 = vand.u32 %v1050, 4294901760
    %v2893 = vsub.f32 %v1050, %v2892
    %v2894 = vand.u32 %v2893, 4294901760
    %v2895 = vsub.f32 %v2893, %v2894
    %v2896 = vand.u32 %v2895, 4294901760
    %2897 = vmatprep.mubr.f32.mxu0 %v2896
    %v2898 = vand.u32 %v1018, 4294901760
    %v2899 = vsub.f32 %v1018, %v2898
    %v2900 = vand.u32 %v2899, 4294901760
    %v2901 = vsub.f32 %v2899, %v2900
    %v2902 = vand.u32 %v2901, 4294901760
    %2903 = vmatmul.mubr.f32.gmra.mrb[0].mxu0 %v2902
    %v2904 = vpop.f32.mrb[0].mxu0
    %v2905 = vadd.f32 %v2672, %v2904
    %v2906 = vpop.f32.mrb[0].mxu0
    %v2907 = vand.u32 %v1051, 4294901760
    %v2908 = vsub.f32 %v1051, %v2907
    %v2909 = vand.u32 %v2908, 4294901760
    %v2910 = vsub.f32 %v2908, %v2909
    %v2911 = vand.u32 %v2910, 4294901760
    %2912 = vmatprep.mubr.f32.mxu0 %v2911
    %v2913 = vand.u32 %v1019, 4294901760
    %v2914 = vsub.f32 %v1019, %v2913
    %v2915 = vand.u32 %v2914, 4294901760
    %v2916 = vsub.f32 %v2914, %v2915
    %v2917 = vand.u32 %v2916, 4294901760
    %2918 = vmatmul.mubr.f32.gmra.mrb[0].mxu0 %v2917
    %v2919 = vpop.f32.mrb[0].mxu0
    %v2920 = vadd.f32 %v2679, %v2919
    %v2921 = vpop.f32.mrb[0].mxu0
    %v2922 = vand.u32 %v1052, 4294901760
    %v2923 = vsub.f32 %v1052, %v2922
    %v2924 = vand.u32 %v2923, 4294901760
    %v2925 = vsub.f32 %v2923, %v2924
    %v2926 = vand.u32 %v2925, 4294901760
    %2927 = vmatprep.mubr.f32.mxu0 %v2926
    %v2928 = vand.u32 %v1020, 4294901760
    %v2929 = vsub.f32 %v1020, %v2928
    %v2930 = vand.u32 %v2929, 4294901760
    %v2931 = vsub.f32 %v2929, %v2930
    %v2932 = vand.u32 %v2931, 4294901760
    %2933 = vmatmul.mubr.f32.gmra.mrb[0].mxu0 %v2932
    %v2934 = vpop.f32.mrb[0].mxu0
    %v2935 = vadd.f32 %v2686, %v2934
    %v2936 = vpop.f32.mrb[0].mxu0
    %v2937 = vand.u32 %v1053, 4294901760
    %v2938 = vsub.f32 %v1053, %v2937
    %v2939 = vand.u32 %v2938, 4294901760
    %v2940 = vsub.f32 %v2938, %v2939
    %v2941 = vand.u32 %v2940, 4294901760
    %2942 = vmatprep.mubr.f32.mxu0 %v2941
    %v2943 = vand.u32 %v1021, 4294901760
    %v2944 = vsub.f32 %v1021, %v2943
    %v2945 = vand.u32 %v2944, 4294901760
    %v2946 = vsub.f32 %v2944, %v2945
    %v2947 = vand.u32 %v2946, 4294901760
    %2948 = vmatmul.mubr.f32.gmra.mrb[0].mxu0 %v2947
    %v2949 = vpop.f32.mrb[0].mxu0
    %v2950 = vadd.f32 %v2693, %v2949
    %v2951 = vpop.f32.mrb[0].mxu0
    %v2952 = vand.u32 %v1054, 4294901760
    %v2953 = vsub.f32 %v1054, %v2952
    %v2954 = vand.u32 %v2953, 4294901760
    %v2955 = vsub.f32 %v2953, %v2954
    %v2956 = vand.u32 %v2955, 4294901760
    %2957 = vmatprep.mubr.f32.mxu0 %v2956
    %v2958 = vand.u32 %v1022, 4294901760
    %v2959 = vsub.f32 %v1022, %v2958
    %v2960 = vand.u32 %v2959, 4294901760
    %v2961 = vsub.f32 %v2959, %v2960
    %v2962 = vand.u32 %v2961, 4294901760
    %2963 = vmatmul.mubr.f32.gmra.mrb[0].mxu0 %v2962
    %v2964 = vpop.f32.mrb[0].mxu0
    %v2965 = vadd.f32 %v2700, %v2964
    %v2966 = vpop.f32.mrb[0].mxu0
    %v2967 = vand.u32 %v1055, 4294901760
    %v2968 = vsub.f32 %v1055, %v2967
    %v2969 = vand.u32 %v2968, 4294901760
    %v2970 = vsub.f32 %v2968, %v2969
    %v2971 = vand.u32 %v2970, 4294901760
    %2972 = vmatprep.mubr.f32.mxu0 %v2971
    %v2973 = vand.u32 %v1023, 4294901760
    %v2974 = vsub.f32 %v1023, %v2973
    %v2975 = vand.u32 %v2974, 4294901760
    %v2976 = vsub.f32 %v2974, %v2975
    %v2977 = vand.u32 %v2976, 4294901760
    %2978 = vmatmul.mubr.f32.gmra.mrb[0].mxu0 %v2977
    %v2979 = vpop.f32.mrb[0].mxu0
    %v2980 = vadd.f32 %v2707, %v2979
    %v2981 = vpop.f32.mrb[0].mxu0
    %v2982 = vand.u32 %v1056, 4294901760
    %v2983 = vsub.f32 %v1056, %v2982
    %v2984 = vand.u32 %v2983, 4294901760
    %v2985 = vsub.f32 %v2983, %v2984
    %v2986 = vand.u32 %v2985, 4294901760
    %2987 = vmatprep.mubr.f32.mxu0 %v2986
    %v2988 = vand.u32 %v1024, 4294901760
    %v2989 = vsub.f32 %v1024, %v2988
    %v2990 = vand.u32 %v2989, 4294901760
    %v2991 = vsub.f32 %v2989, %v2990
    %v2992 = vand.u32 %v2991, 4294901760
    %2993 = vmatmul.mubr.f32.gmra.mrb[0].mxu0 %v2992
    %v2994 = vpop.f32.mrb[0].mxu0
    %v2995 = vadd.f32 %v2714, %v2994
    %v2996 = vpop.f32.mrb[0].mxu0
    %v2997 = vand.u32 %v1057, 4294901760
    %v2998 = vsub.f32 %v1057, %v2997
    %v2999 = vand.u32 %v2998, 4294901760
    %v3000 = vsub.f32 %v2998, %v2999
    %v3001 = vand.u32 %v3000, 4294901760
    %3002 = vmatprep.mubr.f32.mxu0 %v3001
    %v3003 = vand.u32 %v1025, 4294901760
    %v3004 = vsub.f32 %v1025, %v3003
    %v3005 = vand.u32 %v3004, 4294901760
    %v3006 = vsub.f32 %v3004, %v3005
    %v3007 = vand.u32 %v3006, 4294901760
    %3008 = vmatmul.mubr.f32.gmra.mrb[0].mxu0 %v3007
    %v3009 = vpop.f32.mrb[0].mxu0
    %v3010 = vadd.f32 %v2721, %v3009
    %v3011 = vpop.f32.mrb[0].mxu0
    %v3012 = vand.u32 %v1058, 4294901760
    %v3013 = vsub.f32 %v1058, %v3012
    %v3014 = vand.u32 %v3013, 4294901760
    %v3015 = vsub.f32 %v3013, %v3014
    %v3016 = vand.u32 %v3015, 4294901760
    %3017 = vmatprep.mubr.f32.mxu0 %v3016
    %v3018 = vand.u32 %v1026, 4294901760
    %v3019 = vsub.f32 %v1026, %v3018
    %v3020 = vand.u32 %v3019, 4294901760
    %v3021 = vsub.f32 %v3019, %v3020
    %v3022 = vand.u32 %v3021, 4294901760
    %3023 = vmatmul.mubr.f32.gmra.mrb[0].mxu0 %v3022
    %v3024 = vpop.f32.mrb[0].mxu0
    %v3025 = vadd.f32 %v2728, %v3024
    %v3026 = vpop.f32.mrb[0].mxu0
    %v3027 = vand.u32 %v1059, 4294901760
    %v3028 = vsub.f32 %v1059, %v3027
    %v3029 = vand.u32 %v3028, 4294901760
    %v3030 = vsub.f32 %v3028, %v3029
    %v3031 = vand.u32 %v3030, 4294901760
    %3032 = vmatprep.mubr.f32.mxu0 %v3031
    %v3033 = vand.u32 %v1027, 4294901760
    %v3034 = vsub.f32 %v1027, %v3033
    %v3035 = vand.u32 %v3034, 4294901760
    %v3036 = vsub.f32 %v3034, %v3035
    %v3037 = vand.u32 %v3036, 4294901760
    %3038 = vmatmul.mubr.f32.gmra.mrb[0].mxu0 %v3037
    %v3039 = vpop.f32.mrb[0].mxu0
    %v3040 = vadd.f32 %v2735, %v3039
    %v3041 = vpop.f32.mrb[0].mxu0
    %v3042 = vand.u32 %v1060, 4294901760
    %v3043 = vsub.f32 %v1060, %v3042
    %v3044 = vand.u32 %v3043, 4294901760
    %v3045 = vsub.f32 %v3043, %v3044
    %v3046 = vand.u32 %v3045, 4294901760
    %3047 = vmatprep.mubr.f32.mxu0 %v3046
    %v3048 = vand.u32 %v1028, 4294901760
    %v3049 = vsub.f32 %v1028, %v3048
    %v3050 = vand.u32 %v3049, 4294901760
    %v3051 = vsub.f32 %v3049, %v3050
    %v3052 = vand.u32 %v3051, 4294901760
    %3053 = vmatmul.mubr.f32.gmra.mrb[0].mxu0 %v3052
    %v3054 = vpop.f32.mrb[0].mxu0
    %v3055 = vadd.f32 %v2742, %v3054
    %v3056 = vpop.f32.mrb[0].mxu0
    %v3057 = vand.u32 %v1061, 4294901760
    %v3058 = vsub.f32 %v1061, %v3057
    %v3059 = vand.u32 %v3058, 4294901760
    %v3060 = vsub.f32 %v3058, %v3059
    %v3061 = vand.u32 %v3060, 4294901760
    %3062 = vmatprep.mubr.f32.mxu0 %v3061
    %v3063 = vand.u32 %v1029, 4294901760
    %v3064 = vsub.f32 %v1029, %v3063
    %v3065 = vand.u32 %v3064, 4294901760
    %v3066 = vsub.f32 %v3064, %v3065
    %v3067 = vand.u32 %v3066, 4294901760
    %3068 = vmatmul.mubr.f32.gmra.mrb[0].mxu0 %v3067
    %v3069 = vpop.f32.mrb[0].mxu0
    %v3070 = vadd.f32 %v2749, %v3069
    %v3071 = vpop.f32.mrb[0].mxu0
    %v3072 = vand.u32 %v1062, 4294901760
    %v3073 = vsub.f32 %v1062, %v3072
    %v3074 = vand.u32 %v3073, 4294901760
    %v3075 = vsub.f32 %v3073, %v3074
    %v3076 = vand.u32 %v3075, 4294901760
    %3077 = vmatprep.mubr.f32.mxu0 %v3076
    %v3078 = vand.u32 %v1030, 4294901760
    %v3079 = vsub.f32 %v1030, %v3078
    %v3080 = vand.u32 %v3079, 4294901760
    %v3081 = vsub.f32 %v3079, %v3080
    %v3082 = vand.u32 %v3081, 4294901760
    %3083 = vmatmul.mubr.f32.gmra.mrb[0].mxu0 %v3082
    %v3084 = vpop.f32.mrb[0].mxu0
    %v3085 = vadd.f32 %v2756, %v3084
    %v3086 = vpop.f32.mrb[0].mxu0
    %v3087 = vand.u32 %v1063, 4294901760
    %v3088 = vsub.f32 %v1063, %v3087
    %v3089 = vand.u32 %v3088, 4294901760
    %v3090 = vsub.f32 %v3088, %v3089
    %v3091 = vand.u32 %v3090, 4294901760
    %3092 = vmatprep.mubr.f32.mxu0 %v3091
    %v3093 = vand.u32 %v1031, 4294901760
    %v3094 = vsub.f32 %v1031, %v3093
    %v3095 = vand.u32 %v3094, 4294901760
    %v3096 = vsub.f32 %v3094, %v3095
    %v3097 = vand.u32 %v3096, 4294901760
    %3098 = vmatmul.mubr.f32.gmra.mrb[0].mxu0 %v3097
    %v3099 = vpop.f32.mrb[0].mxu0
    %v3100 = vadd.f32 %v2763, %v3099
    %v3101 = vpop.f32.mrb[0].mxu0
    %3102 = vdwg.mxu0
    %3103 = vmatprep.subr.mxu0 0.0
    %v3104 = vand.u32 %v72, 4294901760
    %v3105 = vsub.f32 %v72, %v3104
    %v3106 = vand.u32 %v3105, 4294901760
    %v3107 = vsub.f32 %v3105, %v3106
    %v3108 = vand.u32 %v3107, 4294901760
    %3109 = vmatpush1.msra.mxu0 %v3108
    %3110 = vmatprep.subr.mxu0 0.0
    %v3111 = vand.u32 %v73, 4294901760
    %v3112 = vsub.f32 %v73, %v3111
    %v3113 = vand.u32 %v3112, 4294901760
    %v3114 = vsub.f32 %v3112, %v3113
    %v3115 = vand.u32 %v3114, 4294901760
    %3116 = vmatpush1.msra.mxu0 %v3115
    %3117 = vmatprep.subr.mxu0 0.0
    %v3118 = vand.u32 %v74, 4294901760
    %v3119 = vsub.f32 %v74, %v3118
    %v3120 = vand.u32 %v3119, 4294901760
    %v3121 = vsub.f32 %v3119, %v3120
    %v3122 = vand.u32 %v3121, 4294901760
    %3123 = vmatpush1.msra.mxu0 %v3122
    %3124 = vmatprep.subr.mxu0 0.0
    %v3125 = vand.u32 %v75, 4294901760
    %v3126 = vsub.f32 %v75, %v3125
    %v3127 = vand.u32 %v3126, 4294901760
    %v3128 = vsub.f32 %v3126, %v3127
    %v3129 = vand.u32 %v3128, 4294901760
    %3130 = vmatpush1.msra.mxu0 %v3129
    %3131 = vmatprep.subr.mxu0 0.0
    %v3132 = vand.u32 %v76, 4294901760
    %v3133 = vsub.f32 %v76, %v3132
    %v3134 = vand.u32 %v3133, 4294901760
    %v3135 = vsub.f32 %v3133, %v3134
    %v3136 = vand.u32 %v3135, 4294901760
    %3137 = vmatpush1.msra.mxu0 %v3136
    %3138 = vmatprep.subr.mxu0 0.0
    %v3139 = vand.u32 %v77, 4294901760
    %v3140 = vsub.f32 %v77, %v3139
    %v3141 = vand.u32 %v3140, 4294901760
    %v3142 = vsub.f32 %v3140, %v3141
    %v3143 = vand.u32 %v3142, 4294901760
    %3144 = vmatpush1.msra.mxu0 %v3143
    %3145 = vmatprep.subr.mxu0 0.0
    %v3146 = vand.u32 %v78, 4294901760
    %v3147 = vsub.f32 %v78, %v3146
    %v3148 = vand.u32 %v3147, 4294901760
    %v3149 = vsub.f32 %v3147, %v3148
    %v3150 = vand.u32 %v3149, 4294901760
    %3151 = vmatpush1.msra.mxu0 %v3150
    %3152 = vmatprep.subr.mxu0 0.0
    %v3153 = vand.u32 %v79, 4294901760
    %v3154 = vsub.f32 %v79, %v3153
    %v3155 = vand.u32 %v3154, 4294901760
    %v3156 = vsub.f32 %v3154, %v3155
    %v3157 = vand.u32 %v3156, 4294901760
    %3158 = vmatpush1.msra.mxu0 %v3157
    %3159 = vmatprep.subr.mxu0 0.0
    %v3160 = vand.u32 %v80, 4294901760
    %v3161 = vsub.f32 %v80, %v3160
    %v3162 = vand.u32 %v3161, 4294901760
    %v3163 = vsub.f32 %v3161, %v3162
    %v3164 = vand.u32 %v3163, 4294901760
    %3165 = vmatpush1.msra.mxu0 %v3164
    %3166 = vmatprep.subr.mxu0 0.0
    %v3167 = vand.u32 %v81, 4294901760
    %v3168 = vsub.f32 %v81, %v3167
    %v3169 = vand.u32 %v3168, 4294901760
    %v3170 = vsub.f32 %v3168, %v3169
    %v3171 = vand.u32 %v3170, 4294901760
    %3172 = vmatpush1.msra.mxu0 %v3171
    %3173 = vmatprep.subr.mxu0 0.0
    %v3174 = vand.u32 %v82, 4294901760
    %v3175 = vsub.f32 %v82, %v3174
    %v3176 = vand.u32 %v3175, 4294901760
    %v3177 = vsub.f32 %v3175, %v3176
    %v3178 = vand.u32 %v3177, 4294901760
    %3179 = vmatpush1.msra.mxu0 %v3178
    %3180 = vmatprep.subr.mxu0 0.0
    %v3181 = vand.u32 %v83, 4294901760
    %v3182 = vsub.f32 %v83, %v3181
    %v3183 = vand.u32 %v3182, 4294901760
    %v3184 = vsub.f32 %v3182, %v3183
    %v3185 = vand.u32 %v3184, 4294901760
    %3186 = vmatpush1.msra.mxu0 %v3185
    %3187 = vmatprep.subr.mxu0 0.0
    %v3188 = vand.u32 %v84, 4294901760
    %v3189 = vsub.f32 %v84, %v3188
    %v3190 = vand.u32 %v3189, 4294901760
    %v3191 = vsub.f32 %v3189, %v3190
    %v3192 = vand.u32 %v3191, 4294901760
    %3193 = vmatpush1.msra.mxu0 %v3192
    %3194 = vmatprep.subr.mxu0 0.0
    %v3195 = vand.u32 %v85, 4294901760
    %v3196 = vsub.f32 %v85, %v3195
    %v3197 = vand.u32 %v3196, 4294901760
    %v3198 = vsub.f32 %v3196, %v3197
    %v3199 = vand.u32 %v3198, 4294901760
    %3200 = vmatpush1.msra.mxu0 %v3199
    %3201 = vmatprep.subr.mxu0 0.0
    %v3202 = vand.u32 %v86, 4294901760
    %v3203 = vsub.f32 %v86, %v3202
    %v3204 = vand.u32 %v3203, 4294901760
    %v3205 = vsub.f32 %v3203, %v3204
    %v3206 = vand.u32 %v3205, 4294901760
    %3207 = vmatpush1.msra.mxu0 %v3206
    %3208 = vmatprep.subr.mxu0 0.0
    %v3209 = vand.u32 %v87, 4294901760
    %v3210 = vsub.f32 %v87, %v3209
    %v3211 = vand.u32 %v3210, 4294901760
    %v3212 = vsub.f32 %v3210, %v3211
    %v3213 = vand.u32 %v3212, 4294901760
    %3214 = vmatpush1.msra.mxu0 %v3213
    %3215 = vmatprep.subr.mxu0 0.0
    %v3216 = vand.u32 %v88, 4294901760
    %v3217 = vsub.f32 %v88, %v3216
    %v3218 = vand.u32 %v3217, 4294901760
    %v3219 = vsub.f32 %v3217, %v3218
    %v3220 = vand.u32 %v3219, 4294901760
    %3221 = vmatpush1.msra.mxu0 %v3220
    %3222 = vmatprep.subr.mxu0 0.0
    %v3223 = vand.u32 %v89, 4294901760
    %v3224 = vsub.f32 %v89, %v3223
    %v3225 = vand.u32 %v3224, 4294901760
    %v3226 = vsub.f32 %v3224, %v3225
    %v3227 = vand.u32 %v3226, 4294901760
    %3228 = vmatpush1.msra.mxu0 %v3227
    %3229 = vmatprep.subr.mxu0 0.0
    %v3230 = vand.u32 %v90, 4294901760
    %v3231 = vsub.f32 %v90, %v3230
    %v3232 = vand.u32 %v3231, 4294901760
    %v3233 = vsub.f32 %v3231, %v3232
    %v3234 = vand.u32 %v3233, 4294901760
    %3235 = vmatpush1.msra.mxu0 %v3234
    %3236 = vmatprep.subr.mxu0 0.0
    %v3237 = vand.u32 %v91, 4294901760
    %v3238 = vsub.f32 %v91, %v3237
    %v3239 = vand.u32 %v3238, 4294901760
    %v3240 = vsub.f32 %v3238, %v3239
    %v3241 = vand.u32 %v3240, 4294901760
    %3242 = vmatpush1.msra.mxu0 %v3241
    %3243 = vmatprep.subr.mxu0 0.0
    %v3244 = vand.u32 %v92, 4294901760
    %v3245 = vsub.f32 %v92, %v3244
    %v3246 = vand.u32 %v3245, 4294901760
    %v3247 = vsub.f32 %v3245, %v3246
    %v3248 = vand.u32 %v3247, 4294901760
    %3249 = vmatpush1.msra.mxu0 %v3248
    %3250 = vmatprep.subr.mxu0 0.0
    %v3251 = vand.u32 %v93, 4294901760
    %v3252 = vsub.f32 %v93, %v3251
    %v3253 = vand.u32 %v3252, 4294901760
    %v3254 = vsub.f32 %v3252, %v3253
    %v3255 = vand.u32 %v3254, 4294901760
    %3256 = vmatpush1.msra.mxu0 %v3255
    %3257 = vmatprep.subr.mxu0 0.0
    %v3258 = vand.u32 %v94, 4294901760
    %v3259 = vsub.f32 %v94, %v3258
    %v3260 = vand.u32 %v3259, 4294901760
    %v3261 = vsub.f32 %v3259, %v3260
    %v3262 = vand.u32 %v3261, 4294901760
    %3263 = vmatpush1.msra.mxu0 %v3262
    %3264 = vmatprep.subr.mxu0 0.0
    %v3265 = vand.u32 %v95, 4294901760
    %v3266 = vsub.f32 %v95, %v3265
    %v3267 = vand.u32 %v3266, 4294901760
    %v3268 = vsub.f32 %v3266, %v3267
    %v3269 = vand.u32 %v3268, 4294901760
    %3270 = vmatpush1.msra.mxu0 %v3269
    %3271 = vmatprep.subr.mxu0 0.0
    %v3272 = vand.u32 %v96, 4294901760
    %v3273 = vsub.f32 %v96, %v3272
    %v3274 = vand.u32 %v3273, 4294901760
    %v3275 = vsub.f32 %v3273, %v3274
    %v3276 = vand.u32 %v3275, 4294901760
    %3277 = vmatpush1.msra.mxu0 %v3276
    %3278 = vmatprep.subr.mxu0 0.0
    %v3279 = vand.u32 %v97, 4294901760
    %v3280 = vsub.f32 %v97, %v3279
    %v3281 = vand.u32 %v3280, 4294901760
    %v3282 = vsub.f32 %v3280, %v3281
    %v3283 = vand.u32 %v3282, 4294901760
    %3284 = vmatpush1.msra.mxu0 %v3283
    %3285 = vmatprep.subr.mxu0 0.0
    %v3286 = vand.u32 %v98, 4294901760
    %v3287 = vsub.f32 %v98, %v3286
    %v3288 = vand.u32 %v3287, 4294901760
    %v3289 = vsub.f32 %v3287, %v3288
    %v3290 = vand.u32 %v3289, 4294901760
    %3291 = vmatpush1.msra.mxu0 %v3290
    %3292 = vmatprep.subr.mxu0 0.0
    %v3293 = vand.u32 %v99, 4294901760
    %v3294 = vsub.f32 %v99, %v3293
    %v3295 = vand.u32 %v3294, 4294901760
    %v3296 = vsub.f32 %v3294, %v3295
    %v3297 = vand.u32 %v3296, 4294901760
    %3298 = vmatpush1.msra.mxu0 %v3297
    %3299 = vmatprep.subr.mxu0 0.0
    %v3300 = vand.u32 %v100, 4294901760
    %v3301 = vsub.f32 %v100, %v3300
    %v3302 = vand.u32 %v3301, 4294901760
    %v3303 = vsub.f32 %v3301, %v3302
    %v3304 = vand.u32 %v3303, 4294901760
    %3305 = vmatpush1.msra.mxu0 %v3304
    %3306 = vmatprep.subr.mxu0 0.0
    %v3307 = vand.u32 %v101, 4294901760
    %v3308 = vsub.f32 %v101, %v3307
    %v3309 = vand.u32 %v3308, 4294901760
    %v3310 = vsub.f32 %v3308, %v3309
    %v3311 = vand.u32 %v3310, 4294901760
    %3312 = vmatpush1.msra.mxu0 %v3311
    %3313 = vmatprep.subr.mxu0 0.0
    %v3314 = vand.u32 %v102, 4294901760
    %v3315 = vsub.f32 %v102, %v3314
    %v3316 = vand.u32 %v3315, 4294901760
    %v3317 = vsub.f32 %v3315, %v3316
    %v3318 = vand.u32 %v3317, 4294901760
    %3319 = vmatpush1.msra.mxu0 %v3318
    %3320 = vmatprep.subr.mxu0 0.0
    %v3321 = vand.u32 %v103, 4294901760
    %v3322 = vsub.f32 %v103, %v3321
    %v3323 = vand.u32 %v3322, 4294901760
    %v3324 = vsub.f32 %v3322, %v3323
    %v3325 = vand.u32 %v3324, 4294901760
    %3326 = vmatpush1.msra.mxu0 %v3325
    %v3327 = vand.u32 %v1048, 4294901760
    %3328 = vmatprep.mubr.f32.mxu0 %v3327
    %v3329 = vand.u32 %v1016, 4294901760
    %3330 = vmatmul.mubr.f32.gmra.mrb[0].mxu0 %v3329
    %v3331 = vpop.f32.mrb[0].mxu0
    %v3332 = vadd.f32 %v2875, %v3331
    %v3333 = vpop.f32.mrb[0].mxu0
    %v3334 = vand.u32 %v1049, 4294901760
    %3335 = vmatprep.mubr.f32.mxu0 %v3334
    %v3336 = vand.u32 %v1017, 4294901760
    %3337 = vmatmul.mubr.f32.gmra.mrb[0].mxu0 %v3336
    %v3338 = vpop.f32.mrb[0].mxu0
    %v3339 = vadd.f32 %v2890, %v3338
    %v3340 = vpop.f32.mrb[0].mxu0
    %v3341 = vand.u32 %v1050, 4294901760
    %3342 = vmatprep.mubr.f32.mxu0 %v3341
    %v3343 = vand.u32 %v1018, 4294901760
    %3344 = vmatmul.mubr.f32.gmra.mrb[0].mxu0 %v3343
    %v3345 = vpop.f32.mrb[0].mxu0
    %v3346 = vadd.f32 %v2905, %v3345
    %v3347 = vpop.f32.mrb[0].mxu0
    %v3348 = vand.u32 %v1051, 4294901760
    %3349 = vmatprep.mubr.f32.mxu0 %v3348
    %v3350 = vand.u32 %v1019, 4294901760
    %3351 = vmatmul.mubr.f32.gmra.mrb[0].mxu0 %v3350
    %v3352 = vpop.f32.mrb[0].mxu0
    %v3353 = vadd.f32 %v2920, %v3352
    %v3354 = vpop.f32.mrb[0].mxu0
    %v3355 = vand.u32 %v1052, 4294901760
    %3356 = vmatprep.mubr.f32.mxu0 %v3355
    %v3357 = vand.u32 %v1020, 4294901760
    %3358 = vmatmul.mubr.f32.gmra.mrb[0].mxu0 %v3357
    %v3359 = vpop.f32.mrb[0].mxu0
    %v3360 = vadd.f32 %v2935, %v3359
    %v3361 = vpop.f32.mrb[0].mxu0
    %v3362 = vand.u32 %v1053, 4294901760
    %3363 = vmatprep.mubr.f32.mxu0 %v3362
    %v3364 = vand.u32 %v1021, 4294901760
    %3365 = vmatmul.mubr.f32.gmra.mrb[0].mxu0 %v3364
    %v3366 = vpop.f32.mrb[0].mxu0
    %v3367 = vadd.f32 %v2950, %v3366
    %v3368 = vpop.f32.mrb[0].mxu0
    %v3369 = vand.u32 %v1054, 4294901760
    %3370 = vmatprep.mubr.f32.mxu0 %v3369
    %v3371 = vand.u32 %v1022, 4294901760
    %3372 = vmatmul.mubr.f32.gmra.mrb[0].mxu0 %v3371
    %v3373 = vpop.f32.mrb[0].mxu0
    %v3374 = vadd.f32 %v2965, %v3373
    %v3375 = vpop.f32.mrb[0].mxu0
    %v3376 = vand.u32 %v1055, 4294901760
    %3377 = vmatprep.mubr.f32.mxu0 %v3376
    %v3378 = vand.u32 %v1023, 4294901760
    %3379 = vmatmul.mubr.f32.gmra.mrb[0].mxu0 %v3378
    %v3380 = vpop.f32.mrb[0].mxu0
    %v3381 = vadd.f32 %v2980, %v3380
    %v3382 = vpop.f32.mrb[0].mxu0
    %v3383 = vand.u32 %v1056, 4294901760
    %3384 = vmatprep.mubr.f32.mxu0 %v3383
    %v3385 = vand.u32 %v1024, 4294901760
    %3386 = vmatmul.mubr.f32.gmra.mrb[0].mxu0 %v3385
    %v3387 = vpop.f32.mrb[0].mxu0
    %v3388 = vadd.f32 %v2995, %v3387
    %v3389 = vpop.f32.mrb[0].mxu0
    %v3390 = vand.u32 %v1057, 4294901760
    %3391 = vmatprep.mubr.f32.mxu0 %v3390
    %v3392 = vand.u32 %v1025, 4294901760
    %3393 = vmatmul.mubr.f32.gmra.mrb[0].mxu0 %v3392
    %v3394 = vpop.f32.mrb[0].mxu0
    %v3395 = vadd.f32 %v3010, %v3394
    %v3396 = vpop.f32.mrb[0].mxu0
    %v3397 = vand.u32 %v1058, 4294901760
    %3398 = vmatprep.mubr.f32.mxu0 %v3397
    %v3399 = vand.u32 %v1026, 4294901760
    %3400 = vmatmul.mubr.f32.gmra.mrb[0].mxu0 %v3399
    %v3401 = vpop.f32.mrb[0].mxu0
    %v3402 = vadd.f32 %v3025, %v3401
    %v3403 = vpop.f32.mrb[0].mxu0
    %v3404 = vand.u32 %v1059, 4294901760
    %3405 = vmatprep.mubr.f32.mxu0 %v3404
    %v3406 = vand.u32 %v1027, 4294901760
    %3407 = vmatmul.mubr.f32.gmra.mrb[0].mxu0 %v3406
    %v3408 = vpop.f32.mrb[0].mxu0
    %v3409 = vadd.f32 %v3040, %v3408
    %v3410 = vpop.f32.mrb[0].mxu0
    %v3411 = vand.u32 %v1060, 4294901760
    %3412 = vmatprep.mubr.f32.mxu0 %v3411
    %v3413 = vand.u32 %v1028, 4294901760
    %3414 = vmatmul.mubr.f32.gmra.mrb[0].mxu0 %v3413
    %v3415 = vpop.f32.mrb[0].mxu0
    %v3416 = vadd.f32 %v3055, %v3415
    %v3417 = vpop.f32.mrb[0].mxu0
    %v3418 = vand.u32 %v1061, 4294901760
    %3419 = vmatprep.mubr.f32.mxu0 %v3418
    %v3420 = vand.u32 %v1029, 4294901760
    %3421 = vmatmul.mubr.f32.gmra.mrb[0].mxu0 %v3420
    %v3422 = vpop.f32.mrb[0].mxu0
    %v3423 = vadd.f32 %v3070, %v3422
    %v3424 = vpop.f32.mrb[0].mxu0
    %v3425 = vand.u32 %v1062, 4294901760
    %3426 = vmatprep.mubr.f32.mxu0 %v3425
    %v3427 = vand.u32 %v1030, 4294901760
    %3428 = vmatmul.mubr.f32.gmra.mrb[0].mxu0 %v3427
    %v3429 = vpop.f32.mrb[0].mxu0
    %v3430 = vadd.f32 %v3085, %v3429
    %v3431 = vpop.f32.mrb[0].mxu0
    %v3432 = vand.u32 %v1063, 4294901760
    %3433 = vmatprep.mubr.f32.mxu0 %v3432
    %v3434 = vand.u32 %v1031, 4294901760
    %3435 = vmatmul.mubr.f32.gmra.mrb[0].mxu0 %v3434
    %v3436 = vpop.f32.mrb[0].mxu0
    %v3437 = vadd.f32 %v3100, %v3436
    %v3438 = vpop.f32.mrb[0].mxu0
    %3439 = vdwg.mxu0
    %3440 = vmatprep.subr.mxu0 0.0
    %v3441 = vand.u32 %v72, 4294901760
    %v3442 = vsub.f32 %v72, %v3441
    %3443 = vmatpush1.msra.mxu0 %v3442
    %3444 = vmatprep.subr.mxu0 0.0
    %v3445 = vand.u32 %v73, 4294901760
    %v3446 = vsub.f32 %v73, %v3445
    %3447 = vmatpush1.msra.mxu0 %v3446
    %3448 = vmatprep.subr.mxu0 0.0
    %v3449 = vand.u32 %v74, 4294901760
    %v3450 = vsub.f32 %v74, %v3449
    %3451 = vmatpush1.msra.mxu0 %v3450
    %3452 = vmatprep.subr.mxu0 0.0
    %v3453 = vand.u32 %v75, 4294901760
    %v3454 = vsub.f32 %v75, %v3453
    %3455 = vmatpush1.msra.mxu0 %v3454
    %3456 = vmatprep.subr.mxu0 0.0
    %v3457 = vand.u32 %v76, 4294901760
    %v3458 = vsub.f32 %v76, %v3457
    %3459 = vmatpush1.msra.mxu0 %v3458
    %3460 = vmatprep.subr.mxu0 0.0
    %v3461 = vand.u32 %v77, 4294901760
    %v3462 = vsub.f32 %v77, %v3461
    %3463 = vmatpush1.msra.mxu0 %v3462
    %3464 = vmatprep.subr.mxu0 0.0
    %v3465 = vand.u32 %v78, 4294901760
    %v3466 = vsub.f32 %v78, %v3465
    %3467 = vmatpush1.msra.mxu0 %v3466
    %3468 = vmatprep.subr.mxu0 0.0
    %v3469 = vand.u32 %v79, 4294901760
    %v3470 = vsub.f32 %v79, %v3469
    %3471 = vmatpush1.msra.mxu0 %v3470
    %3472 = vmatprep.subr.mxu0 0.0
    %v3473 = vand.u32 %v80, 4294901760
    %v3474 = vsub.f32 %v80, %v3473
    %3475 = vmatpush1.msra.mxu0 %v3474
    %3476 = vmatprep.subr.mxu0 0.0
    %v3477 = vand.u32 %v81, 4294901760
    %v3478 = vsub.f32 %v81, %v3477
    %3479 = vmatpush1.msra.mxu0 %v3478
    %3480 = vmatprep.subr.mxu0 0.0
    %v3481 = vand.u32 %v82, 4294901760
    %v3482 = vsub.f32 %v82, %v3481
    %3483 = vmatpush1.msra.mxu0 %v3482
    %3484 = vmatprep.subr.mxu0 0.0
    %v3485 = vand.u32 %v83, 4294901760
    %v3486 = vsub.f32 %v83, %v3485
    %3487 = vmatpush1.msra.mxu0 %v3486
    %3488 = vmatprep.subr.mxu0 0.0
    %v3489 = vand.u32 %v84, 4294901760
    %v3490 = vsub.f32 %v84, %v3489
    %3491 = vmatpush1.msra.mxu0 %v3490
    %3492 = vmatprep.subr.mxu0 0.0
    %v3493 = vand.u32 %v85, 4294901760
    %v3494 = vsub.f32 %v85, %v3493
    %3495 = vmatpush1.msra.mxu0 %v3494
    %3496 = vmatprep.subr.mxu0 0.0
    %v3497 = vand.u32 %v86, 4294901760
    %v3498 = vsub.f32 %v86, %v3497
    %3499 = vmatpush1.msra.mxu0 %v3498
    %3500 = vmatprep.subr.mxu0 0.0
    %v3501 = vand.u32 %v87, 4294901760
    %v3502 = vsub.f32 %v87, %v3501
    %3503 = vmatpush1.msra.mxu0 %v3502
    %3504 = vmatprep.subr.mxu0 0.0
    %v3505 = vand.u32 %v88, 4294901760
    %v3506 = vsub.f32 %v88, %v3505
    %3507 = vmatpush1.msra.mxu0 %v3506
    %3508 = vmatprep.subr.mxu0 0.0
    %v3509 = vand.u32 %v89, 4294901760
    %v3510 = vsub.f32 %v89, %v3509
    %3511 = vmatpush1.msra.mxu0 %v3510
    %3512 = vmatprep.subr.mxu0 0.0
    %v3513 = vand.u32 %v90, 4294901760
    %v3514 = vsub.f32 %v90, %v3513
    %3515 = vmatpush1.msra.mxu0 %v3514
    %3516 = vmatprep.subr.mxu0 0.0
    %v3517 = vand.u32 %v91, 4294901760
    %v3518 = vsub.f32 %v91, %v3517
    %3519 = vmatpush1.msra.mxu0 %v3518
    %3520 = vmatprep.subr.mxu0 0.0
    %v3521 = vand.u32 %v92, 4294901760
    %v3522 = vsub.f32 %v92, %v3521
    %3523 = vmatpush1.msra.mxu0 %v3522
    %3524 = vmatprep.subr.mxu0 0.0
    %v3525 = vand.u32 %v93, 4294901760
    %v3526 = vsub.f32 %v93, %v3525
    %3527 = vmatpush1.msra.mxu0 %v3526
    %3528 = vmatprep.subr.mxu0 0.0
    %v3529 = vand.u32 %v94, 4294901760
    %v3530 = vsub.f32 %v94, %v3529
    %3531 = vmatpush1.msra.mxu0 %v3530
    %3532 = vmatprep.subr.mxu0 0.0
    %v3533 = vand.u32 %v95, 4294901760
    %v3534 = vsub.f32 %v95, %v3533
    %3535 = vmatpush1.msra.mxu0 %v3534
    %3536 = vmatprep.subr.mxu0 0.0
    %v3537 = vand.u32 %v96, 4294901760
    %v3538 = vsub.f32 %v96, %v3537
    %3539 = vmatpush1.msra.mxu0 %v3538
    %3540 = vmatprep.subr.mxu0 0.0
    %v3541 = vand.u32 %v97, 4294901760
    %v3542 = vsub.f32 %v97, %v3541
    %3543 = vmatpush1.msra.mxu0 %v3542
    %3544 = vmatprep.subr.mxu0 0.0
    %v3545 = vand.u32 %v98, 4294901760
    %v3546 = vsub.f32 %v98, %v3545
    %3547 = vmatpush1.msra.mxu0 %v3546
    %3548 = vmatprep.subr.mxu0 0.0
    %v3549 = vand.u32 %v99, 4294901760
    %v3550 = vsub.f32 %v99, %v3549
    %3551 = vmatpush1.msra.mxu0 %v3550
    %3552 = vmatprep.subr.mxu0 0.0
    %v3553 = vand.u32 %v100, 4294901760
    %v3554 = vsub.f32 %v100, %v3553
    %3555 = vmatpush1.msra.mxu0 %v3554
    %3556 = vmatprep.subr.mxu0 0.0
    %v3557 = vand.u32 %v101, 4294901760
    %v3558 = vsub.f32 %v101, %v3557
    %3559 = vmatpush1.msra.mxu0 %v3558
    %3560 = vmatprep.subr.mxu0 0.0
    %v3561 = vand.u32 %v102, 4294901760
    %v3562 = vsub.f32 %v102, %v3561
    %3563 = vmatpush1.msra.mxu0 %v3562
    %3564 = vmatprep.subr.mxu0 0.0
    %v3565 = vand.u32 %v103, 4294901760
    %v3566 = vsub.f32 %v103, %v3565
    %3567 = vmatpush1.msra.mxu0 %v3566
    %v3568 = vand.u32 %v1048, 4294901760
    %v3569 = vsub.f32 %v1048, %v3568
    %3570 = vmatprep.mubr.f32.mxu0 %v3569
    %v3571 = vand.u32 %v1016, 4294901760
    %v3572 = vsub.f32 %v1016, %v3571
    %3573 = vmatmul.mubr.f32.gmra.mrb[0].mxu0 %v3572
    %v3574 = vpop.f32.mrb[0].mxu0
    %v3575 = vadd.f32 %v3332, %v3574
    %v3576 = vpop.f32.mrb[0].mxu0
    %v3577 = vand.u32 %v1049, 4294901760
    %v3578 = vsub.f32 %v1049, %v3577
    %3579 = vmatprep.mubr.f32.mxu0 %v3578
    %v3580 = vand.u32 %v1017, 4294901760
    %v3581 = vsub.f32 %v1017, %v3580
    %3582 = vmatmul.mubr.f32.gmra.mrb[0].mxu0 %v3581
    %v3583 = vpop.f32.mrb[0].mxu0
    %v3584 = vadd.f32 %v3339, %v3583
    %v3585 = vpop.f32.mrb[0].mxu0
    %v3586 = vand.u32 %v1050, 4294901760
    %v3587 = vsub.f32 %v1050, %v3586
    %3588 = vmatprep.mubr.f32.mxu0 %v3587
    %v3589 = vand.u32 %v1018, 4294901760
    %v3590 = vsub.f32 %v1018, %v3589
    %3591 = vmatmul.mubr.f32.gmra.mrb[0].mxu0 %v3590
    %v3592 = vpop.f32.mrb[0].mxu0
    %v3593 = vadd.f32 %v3346, %v3592
    %v3594 = vpop.f32.mrb[0].mxu0
    %v3595 = vand.u32 %v1051, 4294901760
    %v3596 = vsub.f32 %v1051, %v3595
    %3597 = vmatprep.mubr.f32.mxu0 %v3596
    %v3598 = vand.u32 %v1019, 4294901760
    %v3599 = vsub.f32 %v1019, %v3598
    %3600 = vmatmul.mubr.f32.gmra.mrb[0].mxu0 %v3599
    %v3601 = vpop.f32.mrb[0].mxu0
    %v3602 = vadd.f32 %v3353, %v3601
    %v3603 = vpop.f32.mrb[0].mxu0
    %v3604 = vand.u32 %v1052, 4294901760
    %v3605 = vsub.f32 %v1052, %v3604
    %3606 = vmatprep.mubr.f32.mxu0 %v3605
    %v3607 = vand.u32 %v1020, 4294901760
    %v3608 = vsub.f32 %v1020, %v3607
    %3609 = vmatmul.mubr.f32.gmra.mrb[0].mxu0 %v3608
    %v3610 = vpop.f32.mrb[0].mxu0
    %v3611 = vadd.f32 %v3360, %v3610
    %v3612 = vpop.f32.mrb[0].mxu0
    %v3613 = vand.u32 %v1053, 4294901760
    %v3614 = vsub.f32 %v1053, %v3613
    %3615 = vmatprep.mubr.f32.mxu0 %v3614
    %v3616 = vand.u32 %v1021, 4294901760
    %v3617 = vsub.f32 %v1021, %v3616
    %3618 = vmatmul.mubr.f32.gmra.mrb[0].mxu0 %v3617
    %v3619 = vpop.f32.mrb[0].mxu0
    %v3620 = vadd.f32 %v3367, %v3619
    %v3621 = vpop.f32.mrb[0].mxu0
    %v3622 = vand.u32 %v1054, 4294901760
    %v3623 = vsub.f32 %v1054, %v3622
    %3624 = vmatprep.mubr.f32.mxu0 %v3623
    %v3625 = vand.u32 %v1022, 4294901760
    %v3626 = vsub.f32 %v1022, %v3625
    %3627 = vmatmul.mubr.f32.gmra.mrb[0].mxu0 %v3626
    %v3628 = vpop.f32.mrb[0].mxu0
    %v3629 = vadd.f32 %v3374, %v3628
    %v3630 = vpop.f32.mrb[0].mxu0
    %v3631 = vand.u32 %v1055, 4294901760
    %v3632 = vsub.f32 %v1055, %v3631
    %3633 = vmatprep.mubr.f32.mxu0 %v3632
    %v3634 = vand.u32 %v1023, 4294901760
    %v3635 = vsub.f32 %v1023, %v3634
    %3636 = vmatmul.mubr.f32.gmra.mrb[0].mxu0 %v3635
    %v3637 = vpop.f32.mrb[0].mxu0
    %v3638 = vadd.f32 %v3381, %v3637
    %v3639 = vpop.f32.mrb[0].mxu0
    %v3640 = vand.u32 %v1056, 4294901760
    %v3641 = vsub.f32 %v1056, %v3640
    %3642 = vmatprep.mubr.f32.mxu0 %v3641
    %v3643 = vand.u32 %v1024, 4294901760
    %v3644 = vsub.f32 %v1024, %v3643
    %3645 = vmatmul.mubr.f32.gmra.mrb[0].mxu0 %v3644
    %v3646 = vpop.f32.mrb[0].mxu0
    %v3647 = vadd.f32 %v3388, %v3646
    %v3648 = vpop.f32.mrb[0].mxu0
    %v3649 = vand.u32 %v1057, 4294901760
    %v3650 = vsub.f32 %v1057, %v3649
    %3651 = vmatprep.mubr.f32.mxu0 %v3650
    %v3652 = vand.u32 %v1025, 4294901760
    %v3653 = vsub.f32 %v1025, %v3652
    %3654 = vmatmul.mubr.f32.gmra.mrb[0].mxu0 %v3653
    %v3655 = vpop.f32.mrb[0].mxu0
    %v3656 = vadd.f32 %v3395, %v3655
    %v3657 = vpop.f32.mrb[0].mxu0
    %v3658 = vand.u32 %v1058, 4294901760
    %v3659 = vsub.f32 %v1058, %v3658
    %3660 = vmatprep.mubr.f32.mxu0 %v3659
    %v3661 = vand.u32 %v1026, 4294901760
    %v3662 = vsub.f32 %v1026, %v3661
    %3663 = vmatmul.mubr.f32.gmra.mrb[0].mxu0 %v3662
    %v3664 = vpop.f32.mrb[0].mxu0
    %v3665 = vadd.f32 %v3402, %v3664
    %v3666 = vpop.f32.mrb[0].mxu0
    %v3667 = vand.u32 %v1059, 4294901760
    %v3668 = vsub.f32 %v1059, %v3667
    %3669 = vmatprep.mubr.f32.mxu0 %v3668
    %v3670 = vand.u32 %v1027, 4294901760
    %v3671 = vsub.f32 %v1027, %v3670
    %3672 = vmatmul.mubr.f32.gmra.mrb[0].mxu0 %v3671
    %v3673 = vpop.f32.mrb[0].mxu0
    %v3674 = vadd.f32 %v3409, %v3673
    %v3675 = vpop.f32.mrb[0].mxu0
    %v3676 = vand.u32 %v1060, 4294901760
    %v3677 = vsub.f32 %v1060, %v3676
    %3678 = vmatprep.mubr.f32.mxu0 %v3677
    %v3679 = vand.u32 %v1028, 4294901760
    %v3680 = vsub.f32 %v1028, %v3679
    %3681 = vmatmul.mubr.f32.gmra.mrb[0].mxu0 %v3680
    %v3682 = vpop.f32.mrb[0].mxu0
    %v3683 = vadd.f32 %v3416, %v3682
    %v3684 = vpop.f32.mrb[0].mxu0
    %v3685 = vand.u32 %v1061, 4294901760
    %v3686 = vsub.f32 %v1061, %v3685
    %3687 = vmatprep.mubr.f32.mxu0 %v3686
    %v3688 = vand.u32 %v1029, 4294901760
    %v3689 = vsub.f32 %v1029, %v3688
    %3690 = vmatmul.mubr.f32.gmra.mrb[0].mxu0 %v3689
    %v3691 = vpop.f32.mrb[0].mxu0
    %v3692 = vadd.f32 %v3423, %v3691
    %v3693 = vpop.f32.mrb[0].mxu0
    %v3694 = vand.u32 %v1062, 4294901760
    %v3695 = vsub.f32 %v1062, %v3694
    %3696 = vmatprep.mubr.f32.mxu0 %v3695
    %v3697 = vand.u32 %v1030, 4294901760
    %v3698 = vsub.f32 %v1030, %v3697
    %3699 = vmatmul.mubr.f32.gmra.mrb[0].mxu0 %v3698
    %v3700 = vpop.f32.mrb[0].mxu0
    %v3701 = vadd.f32 %v3430, %v3700
    %v3702 = vpop.f32.mrb[0].mxu0
    %v3703 = vand.u32 %v1063, 4294901760
    %v3704 = vsub.f32 %v1063, %v3703
    %3705 = vmatprep.mubr.f32.mxu0 %v3704
    %v3706 = vand.u32 %v1031, 4294901760
    %v3707 = vsub.f32 %v1031, %v3706
    %3708 = vmatmul.mubr.f32.gmra.mrb[0].mxu0 %v3707
    %v3709 = vpop.f32.mrb[0].mxu0
    %v3710 = vadd.f32 %v3437, %v3709
    %v3711 = vpop.f32.mrb[0].mxu0
    %3712 = vdwg.mxu0
    %3713 = vmatprep.subr.mxu0 0.0
    %v3714 = vand.u32 %v72, 4294901760
    %3715 = vmatpush1.msra.mxu0 %v3714
    %3716 = vmatprep.subr.mxu0 0.0
    %v3717 = vand.u32 %v73, 4294901760
    %3718 = vmatpush1.msra.mxu0 %v3717
    %3719 = vmatprep.subr.mxu0 0.0
    %v3720 = vand.u32 %v74, 4294901760
    %3721 = vmatpush1.msra.mxu0 %v3720
    %3722 = vmatprep.subr.mxu0 0.0
    %v3723 = vand.u32 %v75, 4294901760
    %3724 = vmatpush1.msra.mxu0 %v3723
    %3725 = vmatprep.subr.mxu0 0.0
    %v3726 = vand.u32 %v76, 4294901760
    %3727 = vmatpush1.msra.mxu0 %v3726
    %3728 = vmatprep.subr.mxu0 0.0
    %v3729 = vand.u32 %v77, 4294901760
    %3730 = vmatpush1.msra.mxu0 %v3729
    %3731 = vmatprep.subr.mxu0 0.0
    %v3732 = vand.u32 %v78, 4294901760
    %3733 = vmatpush1.msra.mxu0 %v3732
    %3734 = vmatprep.subr.mxu0 0.0
    %v3735 = vand.u32 %v79, 4294901760
    %3736 = vmatpush1.msra.mxu0 %v3735
    %3737 = vmatprep.subr.mxu0 0.0
    %v3738 = vand.u32 %v80, 4294901760
    %3739 = vmatpush1.msra.mxu0 %v3738
    %3740 = vmatprep.subr.mxu0 0.0
    %v3741 = vand.u32 %v81, 4294901760
    %3742 = vmatpush1.msra.mxu0 %v3741
    %3743 = vmatprep.subr.mxu0 0.0
    %v3744 = vand.u32 %v82, 4294901760
    %3745 = vmatpush1.msra.mxu0 %v3744
    %3746 = vmatprep.subr.mxu0 0.0
    %v3747 = vand.u32 %v83, 4294901760
    %3748 = vmatpush1.msra.mxu0 %v3747
    %3749 = vmatprep.subr.mxu0 0.0
    %v3750 = vand.u32 %v84, 4294901760
    %3751 = vmatpush1.msra.mxu0 %v3750
    %3752 = vmatprep.subr.mxu0 0.0
    %v3753 = vand.u32 %v85, 4294901760
    %3754 = vmatpush1.msra.mxu0 %v3753
    %3755 = vmatprep.subr.mxu0 0.0
    %v3756 = vand.u32 %v86, 4294901760
    %3757 = vmatpush1.msra.mxu0 %v3756
    %3758 = vmatprep.subr.mxu0 0.0
    %v3759 = vand.u32 %v87, 4294901760
    %3760 = vmatpush1.msra.mxu0 %v3759
    %3761 = vmatprep.subr.mxu0 0.0
    %v3762 = vand.u32 %v88, 4294901760
    %3763 = vmatpush1.msra.mxu0 %v3762
    %3764 = vmatprep.subr.mxu0 0.0
    %v3765 = vand.u32 %v89, 4294901760
    %3766 = vmatpush1.msra.mxu0 %v3765
    %3767 = vmatprep.subr.mxu0 0.0
    %v3768 = vand.u32 %v90, 4294901760
    %3769 = vmatpush1.msra.mxu0 %v3768
    %3770 = vmatprep.subr.mxu0 0.0
    %v3771 = vand.u32 %v91, 4294901760
    %3772 = vmatpush1.msra.mxu0 %v3771
    %3773 = vmatprep.subr.mxu0 0.0
    %v3774 = vand.u32 %v92, 4294901760
    %3775 = vmatpush1.msra.mxu0 %v3774
    %3776 = vmatprep.subr.mxu0 0.0
    %v3777 = vand.u32 %v93, 4294901760
    %3778 = vmatpush1.msra.mxu0 %v3777
    %3779 = vmatprep.subr.mxu0 0.0
    %v3780 = vand.u32 %v94, 4294901760
    %3781 = vmatpush1.msra.mxu0 %v3780
    %3782 = vmatprep.subr.mxu0 0.0
    %v3783 = vand.u32 %v95, 4294901760
    %3784 = vmatpush1.msra.mxu0 %v3783
    %3785 = vmatprep.subr.mxu0 0.0
    %v3786 = vand.u32 %v96, 4294901760
    %3787 = vmatpush1.msra.mxu0 %v3786
    %3788 = vmatprep.subr.mxu0 0.0
    %v3789 = vand.u32 %v97, 4294901760
    %3790 = vmatpush1.msra.mxu0 %v3789
    %3791 = vmatprep.subr.mxu0 0.0
    %v3792 = vand.u32 %v98, 4294901760
    %3793 = vmatpush1.msra.mxu0 %v3792
    %3794 = vmatprep.subr.mxu0 0.0
    %v3795 = vand.u32 %v99, 4294901760
    %3796 = vmatpush1.msra.mxu0 %v3795
    %3797 = vmatprep.subr.mxu0 0.0
    %v3798 = vand.u32 %v100, 4294901760
    %3799 = vmatpush1.msra.mxu0 %v3798
    %3800 = vmatprep.subr.mxu0 0.0
    %v3801 = vand.u32 %v101, 4294901760
    %3802 = vmatpush1.msra.mxu0 %v3801
    %3803 = vmatprep.subr.mxu0 0.0
    %v3804 = vand.u32 %v102, 4294901760
    %3805 = vmatpush1.msra.mxu0 %v3804
    %3806 = vmatprep.subr.mxu0 0.0
    %v3807 = vand.u32 %v103, 4294901760
    %3808 = vmatpush1.msra.mxu0 %v3807
    %v3809 = vand.u32 %v1048, 4294901760
    %v3810 = vsub.f32 %v1048, %v3809
    %v3811 = vand.u32 %v3810, 4294901760
    %3812 = vmatprep.mubr.f32.mxu0 %v3811
    %v3813 = vand.u32 %v1016, 4294901760
    %v3814 = vsub.f32 %v1016, %v3813
    %v3815 = vand.u32 %v3814, 4294901760
    %3816 = vmatmul.mubr.f32.gmra.mrb[0].mxu0 %v3815
    %v3817 = vpop.f32.mrb[0].mxu0
    %v3818 = vadd.f32 %v3575, %v3817
    %v3819 = vpop.f32.mrb[0].mxu0
    %v3820 = vand.u32 %v1049, 4294901760
    %v3821 = vsub.f32 %v1049, %v3820
    %v3822 = vand.u32 %v3821, 4294901760
    %3823 = vmatprep.mubr.f32.mxu0 %v3822
    %v3824 = vand.u32 %v1017, 4294901760
    %v3825 = vsub.f32 %v1017, %v3824
    %v3826 = vand.u32 %v3825, 4294901760
    %3827 = vmatmul.mubr.f32.gmra.mrb[0].mxu0 %v3826
    %v3828 = vpop.f32.mrb[0].mxu0
    %v3829 = vadd.f32 %v3584, %v3828
    %v3830 = vpop.f32.mrb[0].mxu0
    %v3831 = vand.u32 %v1050, 4294901760
    %v3832 = vsub.f32 %v1050, %v3831
    %v3833 = vand.u32 %v3832, 4294901760
    %3834 = vmatprep.mubr.f32.mxu0 %v3833
    %v3835 = vand.u32 %v1018, 4294901760
    %v3836 = vsub.f32 %v1018, %v3835
    %v3837 = vand.u32 %v3836, 4294901760
    %3838 = vmatmul.mubr.f32.gmra.mrb[0].mxu0 %v3837
    %v3839 = vpop.f32.mrb[0].mxu0
    %v3840 = vadd.f32 %v3593, %v3839
    %v3841 = vpop.f32.mrb[0].mxu0
    %v3842 = vand.u32 %v1051, 4294901760
    %v3843 = vsub.f32 %v1051, %v3842
    %v3844 = vand.u32 %v3843, 4294901760
    %3845 = vmatprep.mubr.f32.mxu0 %v3844
    %v3846 = vand.u32 %v1019, 4294901760
    %v3847 = vsub.f32 %v1019, %v3846
    %v3848 = vand.u32 %v3847, 4294901760
    %3849 = vmatmul.mubr.f32.gmra.mrb[0].mxu0 %v3848
    %v3850 = vpop.f32.mrb[0].mxu0
    %v3851 = vadd.f32 %v3602, %v3850
    %v3852 = vpop.f32.mrb[0].mxu0
    %v3853 = vand.u32 %v1052, 4294901760
    %v3854 = vsub.f32 %v1052, %v3853
    %v3855 = vand.u32 %v3854, 4294901760
    %3856 = vmatprep.mubr.f32.mxu0 %v3855
    %v3857 = vand.u32 %v1020, 4294901760
    %v3858 = vsub.f32 %v1020, %v3857
    %v3859 = vand.u32 %v3858, 4294901760
    %3860 = vmatmul.mubr.f32.gmra.mrb[0].mxu0 %v3859
    %v3861 = vpop.f32.mrb[0].mxu0
    %v3862 = vadd.f32 %v3611, %v3861
    %v3863 = vpop.f32.mrb[0].mxu0
    %v3864 = vand.u32 %v1053, 4294901760
    %v3865 = vsub.f32 %v1053, %v3864
    %v3866 = vand.u32 %v3865, 4294901760
    %3867 = vmatprep.mubr.f32.mxu0 %v3866
    %v3868 = vand.u32 %v1021, 4294901760
    %v3869 = vsub.f32 %v1021, %v3868
    %v3870 = vand.u32 %v3869, 4294901760
    %3871 = vmatmul.mubr.f32.gmra.mrb[0].mxu0 %v3870
    %v3872 = vpop.f32.mrb[0].mxu0
    %v3873 = vadd.f32 %v3620, %v3872
    %v3874 = vpop.f32.mrb[0].mxu0
    %v3875 = vand.u32 %v1054, 4294901760
    %v3876 = vsub.f32 %v1054, %v3875
    %v3877 = vand.u32 %v3876, 4294901760
    %3878 = vmatprep.mubr.f32.mxu0 %v3877
    %v3879 = vand.u32 %v1022, 4294901760
    %v3880 = vsub.f32 %v1022, %v3879
    %v3881 = vand.u32 %v3880, 4294901760
    %3882 = vmatmul.mubr.f32.gmra.mrb[0].mxu0 %v3881
    %v3883 = vpop.f32.mrb[0].mxu0
    %v3884 = vadd.f32 %v3629, %v3883
    %v3885 = vpop.f32.mrb[0].mxu0
    %v3886 = vand.u32 %v1055, 4294901760
    %v3887 = vsub.f32 %v1055, %v3886
    %v3888 = vand.u32 %v3887, 4294901760
    %3889 = vmatprep.mubr.f32.mxu0 %v3888
    %v3890 = vand.u32 %v1023, 4294901760
    %v3891 = vsub.f32 %v1023, %v3890
    %v3892 = vand.u32 %v3891, 4294901760
    %3893 = vmatmul.mubr.f32.gmra.mrb[0].mxu0 %v3892
    %v3894 = vpop.f32.mrb[0].mxu0
    %v3895 = vadd.f32 %v3638, %v3894
    %v3896 = vpop.f32.mrb[0].mxu0
    %v3897 = vand.u32 %v1056, 4294901760
    %v3898 = vsub.f32 %v1056, %v3897
    %v3899 = vand.u32 %v3898, 4294901760
    %3900 = vmatprep.mubr.f32.mxu0 %v3899
    %v3901 = vand.u32 %v1024, 4294901760
    %v3902 = vsub.f32 %v1024, %v3901
    %v3903 = vand.u32 %v3902, 4294901760
    %3904 = vmatmul.mubr.f32.gmra.mrb[0].mxu0 %v3903
    %v3905 = vpop.f32.mrb[0].mxu0
    %v3906 = vadd.f32 %v3647, %v3905
    %v3907 = vpop.f32.mrb[0].mxu0
    %v3908 = vand.u32 %v1057, 4294901760
    %v3909 = vsub.f32 %v1057, %v3908
    %v3910 = vand.u32 %v3909, 4294901760
    %3911 = vmatprep.mubr.f32.mxu0 %v3910
    %v3912 = vand.u32 %v1025, 4294901760
    %v3913 = vsub.f32 %v1025, %v3912
    %v3914 = vand.u32 %v3913, 4294901760
    %3915 = vmatmul.mubr.f32.gmra.mrb[0].mxu0 %v3914
    %v3916 = vpop.f32.mrb[0].mxu0
    %v3917 = vadd.f32 %v3656, %v3916
    %v3918 = vpop.f32.mrb[0].mxu0
    %v3919 = vand.u32 %v1058, 4294901760
    %v3920 = vsub.f32 %v1058, %v3919
    %v3921 = vand.u32 %v3920, 4294901760
    %3922 = vmatprep.mubr.f32.mxu0 %v3921
    %v3923 = vand.u32 %v1026, 4294901760
    %v3924 = vsub.f32 %v1026, %v3923
    %v3925 = vand.u32 %v3924, 4294901760
    %3926 = vmatmul.mubr.f32.gmra.mrb[0].mxu0 %v3925
    %v3927 = vpop.f32.mrb[0].mxu0
    %v3928 = vadd.f32 %v3665, %v3927
    %v3929 = vpop.f32.mrb[0].mxu0
    %v3930 = vand.u32 %v1059, 4294901760
    %v3931 = vsub.f32 %v1059, %v3930
    %v3932 = vand.u32 %v3931, 4294901760
    %3933 = vmatprep.mubr.f32.mxu0 %v3932
    %v3934 = vand.u32 %v1027, 4294901760
    %v3935 = vsub.f32 %v1027, %v3934
    %v3936 = vand.u32 %v3935, 4294901760
    %3937 = vmatmul.mubr.f32.gmra.mrb[0].mxu0 %v3936
    %v3938 = vpop.f32.mrb[0].mxu0
    %v3939 = vadd.f32 %v3674, %v3938
    %v3940 = vpop.f32.mrb[0].mxu0
    %v3941 = vand.u32 %v1060, 4294901760
    %v3942 = vsub.f32 %v1060, %v3941
    %v3943 = vand.u32 %v3942, 4294901760
    %3944 = vmatprep.mubr.f32.mxu0 %v3943
    %v3945 = vand.u32 %v1028, 4294901760
    %v3946 = vsub.f32 %v1028, %v3945
    %v3947 = vand.u32 %v3946, 4294901760
    %3948 = vmatmul.mubr.f32.gmra.mrb[0].mxu0 %v3947
    %v3949 = vpop.f32.mrb[0].mxu0
    %v3950 = vadd.f32 %v3683, %v3949
    %v3951 = vpop.f32.mrb[0].mxu0
    %v3952 = vand.u32 %v1061, 4294901760
    %v3953 = vsub.f32 %v1061, %v3952
    %v3954 = vand.u32 %v3953, 4294901760
    %3955 = vmatprep.mubr.f32.mxu0 %v3954
    %v3956 = vand.u32 %v1029, 4294901760
    %v3957 = vsub.f32 %v1029, %v3956
    %v3958 = vand.u32 %v3957, 4294901760
    %3959 = vmatmul.mubr.f32.gmra.mrb[0].mxu0 %v3958
    %v3960 = vpop.f32.mrb[0].mxu0
    %v3961 = vadd.f32 %v3692, %v3960
    %v3962 = vpop.f32.mrb[0].mxu0
    %v3963 = vand.u32 %v1062, 4294901760
    %v3964 = vsub.f32 %v1062, %v3963
    %v3965 = vand.u32 %v3964, 4294901760
    %3966 = vmatprep.mubr.f32.mxu0 %v3965
    %v3967 = vand.u32 %v1030, 4294901760
    %v3968 = vsub.f32 %v1030, %v3967
    %v3969 = vand.u32 %v3968, 4294901760
    %3970 = vmatmul.mubr.f32.gmra.mrb[0].mxu0 %v3969
    %v3971 = vpop.f32.mrb[0].mxu0
    %v3972 = vadd.f32 %v3701, %v3971
    %v3973 = vpop.f32.mrb[0].mxu0
    %v3974 = vand.u32 %v1063, 4294901760
    %v3975 = vsub.f32 %v1063, %v3974
    %v3976 = vand.u32 %v3975, 4294901760
    %3977 = vmatprep.mubr.f32.mxu0 %v3976
    %v3978 = vand.u32 %v1031, 4294901760
    %v3979 = vsub.f32 %v1031, %v3978
    %v3980 = vand.u32 %v3979, 4294901760
    %3981 = vmatmul.mubr.f32.gmra.mrb[0].mxu0 %v3980
    %v3982 = vpop.f32.mrb[0].mxu0
    %v3983 = vadd.f32 %v3710, %v3982
    %v3984 = vpop.f32.mrb[0].mxu0
    %3985 = vdwg.mxu0
    %3986 = vmatprep.subr.mxu0 0.0
    %v3987 = vand.u32 %v72, 4294901760
    %v3988 = vsub.f32 %v72, %v3987
    %v3989 = vand.u32 %v3988, 4294901760
    %3990 = vmatpush1.msra.mxu0 %v3989
    %3991 = vmatprep.subr.mxu0 0.0
    %v3992 = vand.u32 %v73, 4294901760
    %v3993 = vsub.f32 %v73, %v3992
    %v3994 = vand.u32 %v3993, 4294901760
    %3995 = vmatpush1.msra.mxu0 %v3994
    %3996 = vmatprep.subr.mxu0 0.0
    %v3997 = vand.u32 %v74, 4294901760
    %v3998 = vsub.f32 %v74, %v3997
    %v3999 = vand.u32 %v3998, 4294901760
    %4000 = vmatpush1.msra.mxu0 %v3999
    %4001 = vmatprep.subr.mxu0 0.0
    %v4002 = vand.u32 %v75, 4294901760
    %v4003 = vsub.f32 %v75, %v4002
    %v4004 = vand.u32 %v4003, 4294901760
    %4005 = vmatpush1.msra.mxu0 %v4004
    %4006 = vmatprep.subr.mxu0 0.0
    %v4007 = vand.u32 %v76, 4294901760
    %v4008 = vsub.f32 %v76, %v4007
    %v4009 = vand.u32 %v4008, 4294901760
    %4010 = vmatpush1.msra.mxu0 %v4009
    %4011 = vmatprep.subr.mxu0 0.0
    %v4012 = vand.u32 %v77, 4294901760
    %v4013 = vsub.f32 %v77, %v4012
    %v4014 = vand.u32 %v4013, 4294901760
    %4015 = vmatpush1.msra.mxu0 %v4014
    %4016 = vmatprep.subr.mxu0 0.0
    %v4017 = vand.u32 %v78, 4294901760
    %v4018 = vsub.f32 %v78, %v4017
    %v4019 = vand.u32 %v4018, 4294901760
    %4020 = vmatpush1.msra.mxu0 %v4019
    %4021 = vmatprep.subr.mxu0 0.0
    %v4022 = vand.u32 %v79, 4294901760
    %v4023 = vsub.f32 %v79, %v4022
    %v4024 = vand.u32 %v4023, 4294901760
    %4025 = vmatpush1.msra.mxu0 %v4024
    %4026 = vmatprep.subr.mxu0 0.0
    %v4027 = vand.u32 %v80, 4294901760
    %v4028 = vsub.f32 %v80, %v4027
    %v4029 = vand.u32 %v4028, 4294901760
    %4030 = vmatpush1.msra.mxu0 %v4029
    %4031 = vmatprep.subr.mxu0 0.0
    %v4032 = vand.u32 %v81, 4294901760
    %v4033 = vsub.f32 %v81, %v4032
    %v4034 = vand.u32 %v4033, 4294901760
    %4035 = vmatpush1.msra.mxu0 %v4034
    %4036 = vmatprep.subr.mxu0 0.0
    %v4037 = vand.u32 %v82, 4294901760
    %v4038 = vsub.f32 %v82, %v4037
    %v4039 = vand.u32 %v4038, 4294901760
    %4040 = vmatpush1.msra.mxu0 %v4039
    %4041 = vmatprep.subr.mxu0 0.0
    %v4042 = vand.u32 %v83, 4294901760
    %v4043 = vsub.f32 %v83, %v4042
    %v4044 = vand.u32 %v4043, 4294901760
    %4045 = vmatpush1.msra.mxu0 %v4044
    %4046 = vmatprep.subr.mxu0 0.0
    %v4047 = vand.u32 %v84, 4294901760
    %v4048 = vsub.f32 %v84, %v4047
    %v4049 = vand.u32 %v4048, 4294901760
    %4050 = vmatpush1.msra.mxu0 %v4049
    %4051 = vmatprep.subr.mxu0 0.0
    %v4052 = vand.u32 %v85, 4294901760
    %v4053 = vsub.f32 %v85, %v4052
    %v4054 = vand.u32 %v4053, 4294901760
    %4055 = vmatpush1.msra.mxu0 %v4054
    %4056 = vmatprep.subr.mxu0 0.0
    %v4057 = vand.u32 %v86, 4294901760
    %v4058 = vsub.f32 %v86, %v4057
    %v4059 = vand.u32 %v4058, 4294901760
    %4060 = vmatpush1.msra.mxu0 %v4059
    %4061 = vmatprep.subr.mxu0 0.0
    %v4062 = vand.u32 %v87, 4294901760
    %v4063 = vsub.f32 %v87, %v4062
    %v4064 = vand.u32 %v4063, 4294901760
    %4065 = vmatpush1.msra.mxu0 %v4064
    %4066 = vmatprep.subr.mxu0 0.0
    %v4067 = vand.u32 %v88, 4294901760
    %v4068 = vsub.f32 %v88, %v4067
    %v4069 = vand.u32 %v4068, 4294901760
    %4070 = vmatpush1.msra.mxu0 %v4069
    %4071 = vmatprep.subr.mxu0 0.0
    %v4072 = vand.u32 %v89, 4294901760
    %v4073 = vsub.f32 %v89, %v4072
    %v4074 = vand.u32 %v4073, 4294901760
    %4075 = vmatpush1.msra.mxu0 %v4074
    %4076 = vmatprep.subr.mxu0 0.0
    %v4077 = vand.u32 %v90, 4294901760
    %v4078 = vsub.f32 %v90, %v4077
    %v4079 = vand.u32 %v4078, 4294901760
    %4080 = vmatpush1.msra.mxu0 %v4079
    %4081 = vmatprep.subr.mxu0 0.0
    %v4082 = vand.u32 %v91, 4294901760
    %v4083 = vsub.f32 %v91, %v4082
    %v4084 = vand.u32 %v4083, 4294901760
    %4085 = vmatpush1.msra.mxu0 %v4084
    %4086 = vmatprep.subr.mxu0 0.0
    %v4087 = vand.u32 %v92, 4294901760
    %v4088 = vsub.f32 %v92, %v4087
    %v4089 = vand.u32 %v4088, 4294901760
    %4090 = vmatpush1.msra.mxu0 %v4089
    %4091 = vmatprep.subr.mxu0 0.0
    %v4092 = vand.u32 %v93, 4294901760
    %v4093 = vsub.f32 %v93, %v4092
    %v4094 = vand.u32 %v4093, 4294901760
    %4095 = vmatpush1.msra.mxu0 %v4094
    %4096 = vmatprep.subr.mxu0 0.0
    %v4097 = vand.u32 %v94, 4294901760
    %v4098 = vsub.f32 %v94, %v4097
    %v4099 = vand.u32 %v4098, 4294901760
    %4100 = vmatpush1.msra.mxu0 %v4099
    %4101 = vmatprep.subr.mxu0 0.0
    %v4102 = vand.u32 %v95, 4294901760
    %v4103 = vsub.f32 %v95, %v4102
    %v4104 = vand.u32 %v4103, 4294901760
    %4105 = vmatpush1.msra.mxu0 %v4104
    %4106 = vmatprep.subr.mxu0 0.0
    %v4107 = vand.u32 %v96, 4294901760
    %v4108 = vsub.f32 %v96, %v4107
    %v4109 = vand.u32 %v4108, 4294901760
    %4110 = vmatpush1.msra.mxu0 %v4109
    %4111 = vmatprep.subr.mxu0 0.0
    %v4112 = vand.u32 %v97, 4294901760
    %v4113 = vsub.f32 %v97, %v4112
    %v4114 = vand.u32 %v4113, 4294901760
    %4115 = vmatpush1.msra.mxu0 %v4114
    %4116 = vmatprep.subr.mxu0 0.0
    %v4117 = vand.u32 %v98, 4294901760
    %v4118 = vsub.f32 %v98, %v4117
    %v4119 = vand.u32 %v4118, 4294901760
    %4120 = vmatpush1.msra.mxu0 %v4119
    %4121 = vmatprep.subr.mxu0 0.0
    %v4122 = vand.u32 %v99, 4294901760
    %v4123 = vsub.f32 %v99, %v4122
    %v4124 = vand.u32 %v4123, 4294901760
    %4125 = vmatpush1.msra.mxu0 %v4124
    %4126 = vmatprep.subr.mxu0 0.0
    %v4127 = vand.u32 %v100, 4294901760
    %v4128 = vsub.f32 %v100, %v4127
    %v4129 = vand.u32 %v4128, 4294901760
    %4130 = vmatpush1.msra.mxu0 %v4129
    %4131 = vmatprep.subr.mxu0 0.0
    %v4132 = vand.u32 %v101, 4294901760
    %v4133 = vsub.f32 %v101, %v4132
    %v4134 = vand.u32 %v4133, 4294901760
    %4135 = vmatpush1.msra.mxu0 %v4134
    %4136 = vmatprep.subr.mxu0 0.0
    %v4137 = vand.u32 %v102, 4294901760
    %v4138 = vsub.f32 %v102, %v4137
    %v4139 = vand.u32 %v4138, 4294901760
    %4140 = vmatpush1.msra.mxu0 %v4139
    %4141 = vmatprep.subr.mxu0 0.0
    %v4142 = vand.u32 %v103, 4294901760
    %v4143 = vsub.f32 %v103, %v4142
    %v4144 = vand.u32 %v4143, 4294901760
    %4145 = vmatpush1.msra.mxu0 %v4144
    %v4146 = vand.u32 %v1048, 4294901760
    %4147 = vmatprep.mubr.f32.mxu0 %v4146
    %v4148 = vand.u32 %v1016, 4294901760
    %4149 = vmatmul.mubr.f32.gmra.mrb[0].mxu0 %v4148
    %v4150 = vpop.f32.mrb[0].mxu0
    %v4151 = vadd.f32 %v3818, %v4150
    %v4152 = vpop.f32.mrb[0].mxu0
    %v4153 = vand.u32 %v1049, 4294901760
    %4154 = vmatprep.mubr.f32.mxu0 %v4153
    %v4155 = vand.u32 %v1017, 4294901760
    %4156 = vmatmul.mubr.f32.gmra.mrb[0].mxu0 %v4155
    %v4157 = vpop.f32.mrb[0].mxu0
    %v4158 = vadd.f32 %v3829, %v4157
    %v4159 = vpop.f32.mrb[0].mxu0
    %v4160 = vand.u32 %v1050, 4294901760
    %4161 = vmatprep.mubr.f32.mxu0 %v4160
    %v4162 = vand.u32 %v1018, 4294901760
    %4163 = vmatmul.mubr.f32.gmra.mrb[0].mxu0 %v4162
    %v4164 = vpop.f32.mrb[0].mxu0
    %v4165 = vadd.f32 %v3840, %v4164
    %v4166 = vpop.f32.mrb[0].mxu0
    %v4167 = vand.u32 %v1051, 4294901760
    %4168 = vmatprep.mubr.f32.mxu0 %v4167
    %v4169 = vand.u32 %v1019, 4294901760
    %4170 = vmatmul.mubr.f32.gmra.mrb[0].mxu0 %v4169
    %v4171 = vpop.f32.mrb[0].mxu0
    %v4172 = vadd.f32 %v3851, %v4171
    %v4173 = vpop.f32.mrb[0].mxu0
    %v4174 = vand.u32 %v1052, 4294901760
    %4175 = vmatprep.mubr.f32.mxu0 %v4174
    %v4176 = vand.u32 %v1020, 4294901760
    %4177 = vmatmul.mubr.f32.gmra.mrb[0].mxu0 %v4176
    %v4178 = vpop.f32.mrb[0].mxu0
    %v4179 = vadd.f32 %v3862, %v4178
    %v4180 = vpop.f32.mrb[0].mxu0
    %v4181 = vand.u32 %v1053, 4294901760
    %4182 = vmatprep.mubr.f32.mxu0 %v4181
    %v4183 = vand.u32 %v1021, 4294901760
    %4184 = vmatmul.mubr.f32.gmra.mrb[0].mxu0 %v4183
    %v4185 = vpop.f32.mrb[0].mxu0
    %v4186 = vadd.f32 %v3873, %v4185
    %v4187 = vpop.f32.mrb[0].mxu0
    %v4188 = vand.u32 %v1054, 4294901760
    %4189 = vmatprep.mubr.f32.mxu0 %v4188
    %v4190 = vand.u32 %v1022, 4294901760
    %4191 = vmatmul.mubr.f32.gmra.mrb[0].mxu0 %v4190
    %v4192 = vpop.f32.mrb[0].mxu0
    %v4193 = vadd.f32 %v3884, %v4192
    %v4194 = vpop.f32.mrb[0].mxu0
    %v4195 = vand.u32 %v1055, 4294901760
    %4196 = vmatprep.mubr.f32.mxu0 %v4195
    %v4197 = vand.u32 %v1023, 4294901760
    %4198 = vmatmul.mubr.f32.gmra.mrb[0].mxu0 %v4197
    %v4199 = vpop.f32.mrb[0].mxu0
    %v4200 = vadd.f32 %v3895, %v4199
    %v4201 = vpop.f32.mrb[0].mxu0
    %v4202 = vand.u32 %v1056, 4294901760
    %4203 = vmatprep.mubr.f32.mxu0 %v4202
    %v4204 = vand.u32 %v1024, 4294901760
    %4205 = vmatmul.mubr.f32.gmra.mrb[0].mxu0 %v4204
    %v4206 = vpop.f32.mrb[0].mxu0
    %v4207 = vadd.f32 %v3906, %v4206
    %v4208 = vpop.f32.mrb[0].mxu0
    %v4209 = vand.u32 %v1057, 4294901760
    %4210 = vmatprep.mubr.f32.mxu0 %v4209
    %v4211 = vand.u32 %v1025, 4294901760
    %4212 = vmatmul.mubr.f32.gmra.mrb[0].mxu0 %v4211
    %v4213 = vpop.f32.mrb[0].mxu0
    %v4214 = vadd.f32 %v3917, %v4213
    %v4215 = vpop.f32.mrb[0].mxu0
    %v4216 = vand.u32 %v1058, 4294901760
    %4217 = vmatprep.mubr.f32.mxu0 %v4216
    %v4218 = vand.u32 %v1026, 4294901760
    %4219 = vmatmul.mubr.f32.gmra.mrb[0].mxu0 %v4218
    %v4220 = vpop.f32.mrb[0].mxu0
    %v4221 = vadd.f32 %v3928, %v4220
    %v4222 = vpop.f32.mrb[0].mxu0
    %v4223 = vand.u32 %v1059, 4294901760
    %4224 = vmatprep.mubr.f32.mxu0 %v4223
    %v4225 = vand.u32 %v1027, 4294901760
    %4226 = vmatmul.mubr.f32.gmra.mrb[0].mxu0 %v4225
    %v4227 = vpop.f32.mrb[0].mxu0
    %v4228 = vadd.f32 %v3939, %v4227
    %v4229 = vpop.f32.mrb[0].mxu0
    %v4230 = vand.u32 %v1060, 4294901760
    %4231 = vmatprep.mubr.f32.mxu0 %v4230
    %v4232 = vand.u32 %v1028, 4294901760
    %4233 = vmatmul.mubr.f32.gmra.mrb[0].mxu0 %v4232
    %v4234 = vpop.f32.mrb[0].mxu0
    %v4235 = vadd.f32 %v3950, %v4234
    %v4236 = vpop.f32.mrb[0].mxu0
    %v4237 = vand.u32 %v1061, 4294901760
    %4238 = vmatprep.mubr.f32.mxu0 %v4237
    %v4239 = vand.u32 %v1029, 4294901760
    %4240 = vmatmul.mubr.f32.gmra.mrb[0].mxu0 %v4239
    %v4241 = vpop.f32.mrb[0].mxu0
    %v4242 = vadd.f32 %v3961, %v4241
    %v4243 = vpop.f32.mrb[0].mxu0
    %v4244 = vand.u32 %v1062, 4294901760
    %4245 = vmatprep.mubr.f32.mxu0 %v4244
    %v4246 = vand.u32 %v1030, 4294901760
    %4247 = vmatmul.mubr.f32.gmra.mrb[0].mxu0 %v4246
    %v4248 = vpop.f32.mrb[0].mxu0
    %v4249 = vadd.f32 %v3972, %v4248
    %v4250 = vpop.f32.mrb[0].mxu0
    %v4251 = vand.u32 %v1063, 4294901760
    %4252 = vmatprep.mubr.f32.mxu0 %v4251
    %v4253 = vand.u32 %v1031, 4294901760
    %4254 = vmatmul.mubr.f32.gmra.mrb[0].mxu0 %v4253
    %v4255 = vpop.f32.mrb[0].mxu0
    %v4256 = vadd.f32 %v3983, %v4255
    %v4257 = vpop.f32.mrb[0].mxu0
    %4258 = vdwg.mxu0
    %4259 = vmatprep.subr.mxu0 0.0
    %v4260 = vand.u32 %v72, 4294901760
    %4261 = vmatpush1.msra.mxu0 %v4260
    %4262 = vmatprep.subr.mxu0 0.0
    %v4263 = vand.u32 %v73, 4294901760
    %4264 = vmatpush1.msra.mxu0 %v4263
    %4265 = vmatprep.subr.mxu0 0.0
    %v4266 = vand.u32 %v74, 4294901760
    %4267 = vmatpush1.msra.mxu0 %v4266
    %4268 = vmatprep.subr.mxu0 0.0
    %v4269 = vand.u32 %v75, 4294901760
    %4270 = vmatpush1.msra.mxu0 %v4269
    %4271 = vmatprep.subr.mxu0 0.0
    %v4272 = vand.u32 %v76, 4294901760
    %4273 = vmatpush1.msra.mxu0 %v4272
    %4274 = vmatprep.subr.mxu0 0.0
    %v4275 = vand.u32 %v77, 4294901760
    %4276 = vmatpush1.msra.mxu0 %v4275
    %4277 = vmatprep.subr.mxu0 0.0
    %v4278 = vand.u32 %v78, 4294901760
    %4279 = vmatpush1.msra.mxu0 %v4278
    %4280 = vmatprep.subr.mxu0 0.0
    %v4281 = vand.u32 %v79, 4294901760
    %4282 = vmatpush1.msra.mxu0 %v4281
    %4283 = vmatprep.subr.mxu0 0.0
    %v4284 = vand.u32 %v80, 4294901760
    %4285 = vmatpush1.msra.mxu0 %v4284
    %4286 = vmatprep.subr.mxu0 0.0
    %v4287 = vand.u32 %v81, 4294901760
    %4288 = vmatpush1.msra.mxu0 %v4287
    %4289 = vmatprep.subr.mxu0 0.0
    %v4290 = vand.u32 %v82, 4294901760
    %4291 = vmatpush1.msra.mxu0 %v4290
    %4292 = vmatprep.subr.mxu0 0.0
    %v4293 = vand.u32 %v83, 4294901760
    %4294 = vmatpush1.msra.mxu0 %v4293
    %4295 = vmatprep.subr.mxu0 0.0
    %v4296 = vand.u32 %v84, 4294901760
    %4297 = vmatpush1.msra.mxu0 %v4296
    %4298 = vmatprep.subr.mxu0 0.0
    %v4299 = vand.u32 %v85, 4294901760
    %4300 = vmatpush1.msra.mxu0 %v4299
    %4301 = vmatprep.subr.mxu0 0.0
    %v4302 = vand.u32 %v86, 4294901760
    %4303 = vmatpush1.msra.mxu0 %v4302
    %4304 = vmatprep.subr.mxu0 0.0
    %v4305 = vand.u32 %v87, 4294901760
    %4306 = vmatpush1.msra.mxu0 %v4305
    %4307 = vmatprep.subr.mxu0 0.0
    %v4308 = vand.u32 %v88, 4294901760
    %4309 = vmatpush1.msra.mxu0 %v4308
    %4310 = vmatprep.subr.mxu0 0.0
    %v4311 = vand.u32 %v89, 4294901760
    %4312 = vmatpush1.msra.mxu0 %v4311
    %4313 = vmatprep.subr.mxu0 0.0
    %v4314 = vand.u32 %v90, 4294901760
    %4315 = vmatpush1.msra.mxu0 %v4314
    %4316 = vmatprep.subr.mxu0 0.0
    %v4317 = vand.u32 %v91, 4294901760
    %4318 = vmatpush1.msra.mxu0 %v4317
    %4319 = vmatprep.subr.mxu0 0.0
    %v4320 = vand.u32 %v92, 4294901760
    %4321 = vmatpush1.msra.mxu0 %v4320
    %4322 = vmatprep.subr.mxu0 0.0
    %v4323 = vand.u32 %v93, 4294901760
    %4324 = vmatpush1.msra.mxu0 %v4323
    %4325 = vmatprep.subr.mxu0 0.0
    %v4326 = vand.u32 %v94, 4294901760
    %4327 = vmatpush1.msra.mxu0 %v4326
    %4328 = vmatprep.subr.mxu0 0.0
    %v4329 = vand.u32 %v95, 4294901760
    %4330 = vmatpush1.msra.mxu0 %v4329
    %4331 = vmatprep.subr.mxu0 0.0
    %v4332 = vand.u32 %v96, 4294901760
    %4333 = vmatpush1.msra.mxu0 %v4332
    %4334 = vmatprep.subr.mxu0 0.0
    %v4335 = vand.u32 %v97, 4294901760
    %4336 = vmatpush1.msra.mxu0 %v4335
    %4337 = vmatprep.subr.mxu0 0.0
    %v4338 = vand.u32 %v98, 4294901760
    %4339 = vmatpush1.msra.mxu0 %v4338
    %4340 = vmatprep.subr.mxu0 0.0
    %v4341 = vand.u32 %v99, 4294901760
    %4342 = vmatpush1.msra.mxu0 %v4341
    %4343 = vmatprep.subr.mxu0 0.0
    %v4344 = vand.u32 %v100, 4294901760
    %4345 = vmatpush1.msra.mxu0 %v4344
    %4346 = vmatprep.subr.mxu0 0.0
    %v4347 = vand.u32 %v101, 4294901760
    %4348 = vmatpush1.msra.mxu0 %v4347
    %4349 = vmatprep.subr.mxu0 0.0
    %v4350 = vand.u32 %v102, 4294901760
    %4351 = vmatpush1.msra.mxu0 %v4350
    %4352 = vmatprep.subr.mxu0 0.0
    %v4353 = vand.u32 %v103, 4294901760
    %4354 = vmatpush1.msra.mxu0 %v4353
    %v4355 = vand.u32 %v1048, 4294901760
    %4356 = vmatprep.mubr.f32.mxu0 %v4355
    %v4357 = vand.u32 %v1016, 4294901760
    %4358 = vmatmul.mubr.f32.gmra.mrb[0].mxu0 %v4357
    %v4359 = vpop.f32.mrb[0].mxu0
    %v4360 = vadd.f32 %v4151, %v4359
    %v4361 = vpop.f32.mrb[0].mxu0
    %v4362 = vand.u32 %v1049, 4294901760
    %4363 = vmatprep.mubr.f32.mxu0 %v4362
    %v4364 = vand.u32 %v1017, 4294901760
    %4365 = vmatmul.mubr.f32.gmra.mrb[0].mxu0 %v4364
    %v4366 = vpop.f32.mrb[0].mxu0
    %v4367 = vadd.f32 %v4158, %v4366
    %v4368 = vpop.f32.mrb[0].mxu0
    %v4369 = vand.u32 %v1050, 4294901760
    %4370 = vmatprep.mubr.f32.mxu0 %v4369
    %v4371 = vand.u32 %v1018, 4294901760
    %4372 = vmatmul.mubr.f32.gmra.mrb[0].mxu0 %v4371
    %v4373 = vpop.f32.mrb[0].mxu0
    %v4374 = vadd.f32 %v4165, %v4373
    %v4375 = vpop.f32.mrb[0].mxu0
    %v4376 = vand.u32 %v1051, 4294901760
    %4377 = vmatprep.mubr.f32.mxu0 %v4376
    %v4378 = vand.u32 %v1019, 4294901760
    %4379 = vmatmul.mubr.f32.gmra.mrb[0].mxu0 %v4378
    %v4380 = vpop.f32.mrb[0].mxu0
    %v4381 = vadd.f32 %v4172, %v4380
    %v4382 = vpop.f32.mrb[0].mxu0
    %v4383 = vand.u32 %v1052, 4294901760
    %4384 = vmatprep.mubr.f32.mxu0 %v4383
    %v4385 = vand.u32 %v1020, 4294901760
    %4386 = vmatmul.mubr.f32.gmra.mrb[0].mxu0 %v4385
    %v4387 = vpop.f32.mrb[0].mxu0
    %v4388 = vadd.f32 %v4179, %v4387
    %v4389 = vpop.f32.mrb[0].mxu0
    %v4390 = vand.u32 %v1053, 4294901760
    %4391 = vmatprep.mubr.f32.mxu0 %v4390
    %v4392 = vand.u32 %v1021, 4294901760
    %4393 = vmatmul.mubr.f32.gmra.mrb[0].mxu0 %v4392
    %v4394 = vpop.f32.mrb[0].mxu0
    %v4395 = vadd.f32 %v4186, %v4394
    %v4396 = vpop.f32.mrb[0].mxu0
    %v4397 = vand.u32 %v1054, 4294901760
    %4398 = vmatprep.mubr.f32.mxu0 %v4397
    %v4399 = vand.u32 %v1022, 4294901760
    %4400 = vmatmul.mubr.f32.gmra.mrb[0].mxu0 %v4399
    %v4401 = vpop.f32.mrb[0].mxu0
    %v4402 = vadd.f32 %v4193, %v4401
    %v4403 = vpop.f32.mrb[0].mxu0
    %v4404 = vand.u32 %v1055, 4294901760
    %4405 = vmatprep.mubr.f32.mxu0 %v4404
    %v4406 = vand.u32 %v1023, 4294901760
    %4407 = vmatmul.mubr.f32.gmra.mrb[0].mxu0 %v4406
    %v4408 = vpop.f32.mrb[0].mxu0
    %v4409 = vadd.f32 %v4200, %v4408
    %v4410 = vpop.f32.mrb[0].mxu0
    %v4411 = vand.u32 %v1056, 4294901760
    %4412 = vmatprep.mubr.f32.mxu0 %v4411
    %v4413 = vand.u32 %v1024, 4294901760
    %4414 = vmatmul.mubr.f32.gmra.mrb[0].mxu0 %v4413
    %v4415 = vpop.f32.mrb[0].mxu0
    %v4416 = vadd.f32 %v4207, %v4415
    %v4417 = vpop.f32.mrb[0].mxu0
    %v4418 = vand.u32 %v1057, 4294901760
    %4419 = vmatprep.mubr.f32.mxu0 %v4418
    %v4420 = vand.u32 %v1025, 4294901760
    %4421 = vmatmul.mubr.f32.gmra.mrb[0].mxu0 %v4420
    %v4422 = vpop.f32.mrb[0].mxu0
    %v4423 = vadd.f32 %v4214, %v4422
    %v4424 = vpop.f32.mrb[0].mxu0
    %v4425 = vand.u32 %v1058, 4294901760
    %4426 = vmatprep.mubr.f32.mxu0 %v4425
    %v4427 = vand.u32 %v1026, 4294901760
    %4428 = vmatmul.mubr.f32.gmra.mrb[0].mxu0 %v4427
    %v4429 = vpop.f32.mrb[0].mxu0
    %v4430 = vadd.f32 %v4221, %v4429
    %v4431 = vpop.f32.mrb[0].mxu0
    %v4432 = vand.u32 %v1059, 4294901760
    %4433 = vmatprep.mubr.f32.mxu0 %v4432
    %v4434 = vand.u32 %v1027, 4294901760
    %4435 = vmatmul.mubr.f32.gmra.mrb[0].mxu0 %v4434
    %v4436 = vpop.f32.mrb[0].mxu0
    %v4437 = vadd.f32 %v4228, %v4436
    %v4438 = vpop.f32.mrb[0].mxu0
    %v4439 = vand.u32 %v1060, 4294901760
    %4440 = vmatprep.mubr.f32.mxu0 %v4439
    %v4441 = vand.u32 %v1028, 4294901760
    %4442 = vmatmul.mubr.f32.gmra.mrb[0].mxu0 %v4441
    %v4443 = vpop.f32.mrb[0].mxu0
    %v4444 = vadd.f32 %v4235, %v4443
    %v4445 = vpop.f32.mrb[0].mxu0
    %v4446 = vand.u32 %v1061, 4294901760
    %4447 = vmatprep.mubr.f32.mxu0 %v4446
    %v4448 = vand.u32 %v1029, 4294901760
    %4449 = vmatmul.mubr.f32.gmra.mrb[0].mxu0 %v4448
    %v4450 = vpop.f32.mrb[0].mxu0
    %v4451 = vadd.f32 %v4242, %v4450
    %v4452 = vpop.f32.mrb[0].mxu0
    %v4453 = vand.u32 %v1062, 4294901760
    %4454 = vmatprep.mubr.f32.mxu0 %v4453
    %v4455 = vand.u32 %v1030, 4294901760
    %4456 = vmatmul.mubr.f32.gmra.mrb[0].mxu0 %v4455
    %v4457 = vpop.f32.mrb[0].mxu0
    %v4458 = vadd.f32 %v4249, %v4457
    %v4459 = vpop.f32.mrb[0].mxu0
    %v4460 = vand.u32 %v1063, 4294901760
    %4461 = vmatprep.mubr.f32.mxu0 %v4460
    %v4462 = vand.u32 %v1031, 4294901760
    %4463 = vmatmul.mubr.f32.gmra.mrb[0].mxu0 %v4462
    %v4464 = vpop.f32.mrb[0].mxu0
    %v4465 = vadd.f32 %v4256, %v4464
    %v4466 = vpop.f32.mrb[0].mxu0
    %4467 = vdwg.mxu0
    %v4468 = vld [vmem:[#allocation5] sm:$0xff]
    %v4469 = vld [vmem:[#allocation5 + $0x8] sm:$0xff]
    %v4470 = vld [vmem:[#allocation5 + $0x10] sm:$0xff]
    %v4471 = vld [vmem:[#allocation5 + $0x18] sm:$0xff]
    %v4472 = vld [vmem:[#allocation5 + $0x20] sm:$0xff]
    %v4473 = vld [vmem:[#allocation5 + $0x28] sm:$0xff]
    %v4474 = vld [vmem:[#allocation5 + $0x30] sm:$0xff]
    %v4475 = vld [vmem:[#allocation5 + $0x38] sm:$0xff]
    %v4476 = vld [vmem:[#allocation5 + $0x40] sm:$0xff]
    %v4477 = vld [vmem:[#allocation5 + $0x48] sm:$0xff]
    %v4478 = vld [vmem:[#allocation5 + $0x50] sm:$0xff]
    %v4479 = vld [vmem:[#allocation5 + $0x58] sm:$0xff]
    %v4480 = vld [vmem:[#allocation5 + $0x60] sm:$0xff]
    %v4481 = vld [vmem:[#allocation5 + $0x68] sm:$0xff]
    %v4482 = vld [vmem:[#allocation5 + $0x70] sm:$0xff]
    %v4483 = vld [vmem:[#allocation5 + $0x78] sm:$0xff]
    %4484 = vmatprep.subr.mxu0 0.0
    %v4485 = vand.u32 %v4468, 4294901760
    %4486 = vmatpush1.msra.mxu0 %v4485
    %4487 = vmatprep.subr.mxu0 0.0
    %v4488 = vand.u32 %v4469, 4294901760
    %4489 = vmatpush1.msra.mxu0 %v4488
    %4490 = vmatprep.subr.mxu0 0.0
    %v4491 = vand.u32 %v4470, 4294901760
    %4492 = vmatpush1.msra.mxu0 %v4491
    %4493 = vmatprep.subr.mxu0 0.0
    %v4494 = vand.u32 %v4471, 4294901760
    %4495 = vmatpush1.msra.mxu0 %v4494
    %4496 = vmatprep.subr.mxu0 0.0
    %v4497 = vand.u32 %v4472, 4294901760
    %4498 = vmatpush1.msra.mxu0 %v4497
    %4499 = vmatprep.subr.mxu0 0.0
    %v4500 = vand.u32 %v4473, 4294901760
    %4501 = vmatpush1.msra.mxu0 %v4500
    %4502 = vmatprep.subr.mxu0 0.0
    %v4503 = vand.u32 %v4474, 4294901760
    %4504 = vmatpush1.msra.mxu0 %v4503
    %4505 = vmatprep.subr.mxu0 0.0
    %v4506 = vand.u32 %v4475, 4294901760
    %4507 = vmatpush1.msra.mxu0 %v4506
    %4508 = vmatprep.subr.mxu0 0.0
    %v4509 = vand.u32 %v4476, 4294901760
    %4510 = vmatpush1.msra.mxu0 %v4509
    %4511 = vmatprep.subr.mxu0 0.0
    %v4512 = vand.u32 %v4477, 4294901760
    %4513 = vmatpush1.msra.mxu0 %v4512
    %4514 = vmatprep.subr.mxu0 0.0
    %v4515 = vand.u32 %v4478, 4294901760
    %4516 = vmatpush1.msra.mxu0 %v4515
    %4517 = vmatprep.subr.mxu0 0.0
    %v4518 = vand.u32 %v4479, 4294901760
    %4519 = vmatpush1.msra.mxu0 %v4518
    %4520 = vmatprep.subr.mxu0 0.0
    %v4521 = vand.u32 %v4480, 4294901760
    %4522 = vmatpush1.msra.mxu0 %v4521
    %4523 = vmatprep.subr.mxu0 0.0
    %v4524 = vand.u32 %v4481, 4294901760
    %4525 = vmatpush1.msra.mxu0 %v4524
    %4526 = vmatprep.subr.mxu0 0.0
    %v4527 = vand.u32 %v4482, 4294901760
    %4528 = vmatpush1.msra.mxu0 %v4527
    %4529 = vmatprep.subr.mxu0 0.0
    %v4530 = vand.u32 %v4483, 4294901760
    %4531 = vmatpush1.msra.mxu0 %v4530
    %4532 = vmatprep.subr.mxu0 0.0
    %4533 = vmatpush1.msra.mxu0 0.0
    %4534 = vmatprep.subr.mxu0 0.0
    %4535 = vmatpush1.msra.mxu0 0.0
    %4536 = vmatprep.subr.mxu0 0.0
    %4537 = vmatpush1.msra.mxu0 0.0
    %4538 = vmatprep.subr.mxu0 0.0
    %4539 = vmatpush1.msra.mxu0 0.0
    %4540 = vmatprep.subr.mxu0 0.0
    %4541 = vmatpush1.msra.mxu0 0.0
    %4542 = vmatprep.subr.mxu0 0.0
    %4543 = vmatpush1.msra.mxu0 0.0
    %4544 = vmatprep.subr.mxu0 0.0
    %4545 = vmatpush1.msra.mxu0 0.0
    %4546 = vmatprep.subr.mxu0 0.0
    %4547 = vmatpush1.msra.mxu0 0.0
    %4548 = vmatprep.subr.mxu0 0.0
    %4549 = vmatpush1.msra.mxu0 0.0
    %4550 = vmatprep.subr.mxu0 0.0
    %4551 = vmatpush1.msra.mxu0 0.0
    %4552 = vmatprep.subr.mxu0 0.0
    %4553 = vmatpush1.msra.mxu0 0.0
    %4554 = vmatprep.subr.mxu0 0.0
    %4555 = vmatpush1.msra.mxu0 0.0
    %4556 = vmatprep.subr.mxu0 0.0
    %4557 = vmatpush1.msra.mxu0 0.0
    %4558 = vmatprep.subr.mxu0 0.0
    %4559 = vmatpush1.msra.mxu0 0.0
    %4560 = vmatprep.subr.mxu0 0.0
    %4561 = vmatpush1.msra.mxu0 0.0
    %4562 = vmatprep.subr.mxu0 0.0
    %4563 = vmatpush1.msra.mxu0 0.0
    %4564 = vmatprep.mubr.f32.mxu0 0.0
    %v4565 = vand.u32 %v4360, 4294901760
    %v4566 = vsub.f32 %v4360, %v4565
    %v4567 = vand.u32 %v4566, 4294901760
    %v4568 = vsub.f32 %v4566, %v4567
    %v4569 = vand.u32 %v4568, 4294901760
    %4570 = vmatmul.mubr.f32.gmra.mrb[0].mxu0 %v4569
    %v4571 = vpop.f32.mrb[0].mxu0
    %v4572 = vadd.f32 0.0, %v4571
    %v4573 = vpop.f32.mrb[0].mxu0
    %4574 = vmatprep.mubr.f32.mxu0 0.0
    %v4575 = vand.u32 %v4367, 4294901760
    %v4576 = vsub.f32 %v4367, %v4575
    %v4577 = vand.u32 %v4576, 4294901760
    %v4578 = vsub.f32 %v4576, %v4577
    %v4579 = vand.u32 %v4578, 4294901760
    %4580 = vmatmul.mubr.f32.gmra.mrb[0].mxu0 %v4579
    %v4581 = vpop.f32.mrb[0].mxu0
    %v4582 = vadd.f32 0.0, %v4581
    %v4583 = vpop.f32.mrb[0].mxu0
    %4584 = vmatprep.mubr.f32.mxu0 0.0
    %v4585 = vand.u32 %v4374, 4294901760
    %v4586 = vsub.f32 %v4374, %v4585
    %v4587 = vand.u32 %v4586, 4294901760
    %v4588 = vsub.f32 %v4586, %v4587
    %v4589 = vand.u32 %v4588, 4294901760
    %4590 = vmatmul.mubr.f32.gmra.mrb[0].mxu0 %v4589
    %v4591 = vpop.f32.mrb[0].mxu0
    %v4592 = vadd.f32 0.0, %v4591
    %v4593 = vpop.f32.mrb[0].mxu0
    %4594 = vmatprep.mubr.f32.mxu0 0.0
    %v4595 = vand.u32 %v4381, 4294901760
    %v4596 = vsub.f32 %v4381, %v4595
    %v4597 = vand.u32 %v4596, 4294901760
    %v4598 = vsub.f32 %v4596, %v4597
    %v4599 = vand.u32 %v4598, 4294901760
    %4600 = vmatmul.mubr.f32.gmra.mrb[0].mxu0 %v4599
    %v4601 = vpop.f32.mrb[0].mxu0
    %v4602 = vadd.f32 0.0, %v4601
    %v4603 = vpop.f32.mrb[0].mxu0
    %4604 = vmatprep.mubr.f32.mxu0 0.0
    %v4605 = vand.u32 %v4388, 4294901760
    %v4606 = vsub.f32 %v4388, %v4605
    %v4607 = vand.u32 %v4606, 4294901760
    %v4608 = vsub.f32 %v4606, %v4607
    %v4609 = vand.u32 %v4608, 4294901760
    %4610 = vmatmul.mubr.f32.gmra.mrb[0].mxu0 %v4609
    %v4611 = vpop.f32.mrb[0].mxu0
    %v4612 = vadd.f32 0.0, %v4611
    %v4613 = vpop.f32.mrb[0].mxu0
    %4614 = vmatprep.mubr.f32.mxu0 0.0
    %v4615 = vand.u32 %v4395, 4294901760
    %v4616 = vsub.f32 %v4395, %v4615
    %v4617 = vand.u32 %v4616, 4294901760
    %v4618 = vsub.f32 %v4616, %v4617
    %v4619 = vand.u32 %v4618, 4294901760
    %4620 = vmatmul.mubr.f32.gmra.mrb[0].mxu0 %v4619
    %v4621 = vpop.f32.mrb[0].mxu0
    %v4622 = vadd.f32 0.0, %v4621
    %v4623 = vpop.f32.mrb[0].mxu0
    %4624 = vmatprep.mubr.f32.mxu0 0.0
    %v4625 = vand.u32 %v4402, 4294901760
    %v4626 = vsub.f32 %v4402, %v4625
    %v4627 = vand.u32 %v4626, 4294901760
    %v4628 = vsub.f32 %v4626, %v4627
    %v4629 = vand.u32 %v4628, 4294901760
    %4630 = vmatmul.mubr.f32.gmra.mrb[0].mxu0 %v4629
    %v4631 = vpop.f32.mrb[0].mxu0
    %v4632 = vadd.f32 0.0, %v4631
    %v4633 = vpop.f32.mrb[0].mxu0
    %4634 = vmatprep.mubr.f32.mxu0 0.0
    %v4635 = vand.u32 %v4409, 4294901760
    %v4636 = vsub.f32 %v4409, %v4635
    %v4637 = vand.u32 %v4636, 4294901760
    %v4638 = vsub.f32 %v4636, %v4637
    %v4639 = vand.u32 %v4638, 4294901760
    %4640 = vmatmul.mubr.f32.gmra.mrb[0].mxu0 %v4639
    %v4641 = vpop.f32.mrb[0].mxu0
    %v4642 = vadd.f32 0.0, %v4641
    %v4643 = vpop.f32.mrb[0].mxu0
    %4644 = vmatprep.mubr.f32.mxu0 0.0
    %v4645 = vand.u32 %v4416, 4294901760
    %v4646 = vsub.f32 %v4416, %v4645
    %v4647 = vand.u32 %v4646, 4294901760
    %v4648 = vsub.f32 %v4646, %v4647
    %v4649 = vand.u32 %v4648, 4294901760
    %4650 = vmatmul.mubr.f32.gmra.mrb[0].mxu0 %v4649
    %v4651 = vpop.f32.mrb[0].mxu0
    %v4652 = vadd.f32 0.0, %v4651
    %v4653 = vpop.f32.mrb[0].mxu0
    %4654 = vmatprep.mubr.f32.mxu0 0.0
    %v4655 = vand.u32 %v4423, 4294901760
    %v4656 = vsub.f32 %v4423, %v4655
    %v4657 = vand.u32 %v4656, 4294901760
    %v4658 = vsub.f32 %v4656, %v4657
    %v4659 = vand.u32 %v4658, 4294901760
    %4660 = vmatmul.mubr.f32.gmra.mrb[0].mxu0 %v4659
    %v4661 = vpop.f32.mrb[0].mxu0
    %v4662 = vadd.f32 0.0, %v4661
    %v4663 = vpop.f32.mrb[0].mxu0
    %4664 = vmatprep.mubr.f32.mxu0 0.0
    %v4665 = vand.u32 %v4430, 4294901760
    %v4666 = vsub.f32 %v4430, %v4665
    %v4667 = vand.u32 %v4666, 4294901760
    %v4668 = vsub.f32 %v4666, %v4667
    %v4669 = vand.u32 %v4668, 4294901760
    %4670 = vmatmul.mubr.f32.gmra.mrb[0].mxu0 %v4669
    %v4671 = vpop.f32.mrb[0].mxu0
    %v4672 = vadd.f32 0.0, %v4671
    %v4673 = vpop.f32.mrb[0].mxu0
    %4674 = vmatprep.mubr.f32.mxu0 0.0
    %v4675 = vand.u32 %v4437, 4294901760
    %v4676 = vsub.f32 %v4437, %v4675
    %v4677 = vand.u32 %v4676, 4294901760
    %v4678 = vsub.f32 %v4676, %v4677
    %v4679 = vand.u32 %v4678, 4294901760
    %4680 = vmatmul.mubr.f32.gmra.mrb[0].mxu0 %v4679
    %v4681 = vpop.f32.mrb[0].mxu0
    %v4682 = vadd.f32 0.0, %v4681
    %v4683 = vpop.f32.mrb[0].mxu0
    %4684 = vmatprep.mubr.f32.mxu0 0.0
    %v4685 = vand.u32 %v4444, 4294901760
    %v4686 = vsub.f32 %v4444, %v4685
    %v4687 = vand.u32 %v4686, 4294901760
    %v4688 = vsub.f32 %v4686, %v4687
    %v4689 = vand.u32 %v4688, 4294901760
    %4690 = vmatmul.mubr.f32.gmra.mrb[0].mxu0 %v4689
    %v4691 = vpop.f32.mrb[0].mxu0
    %v4692 = vadd.f32 0.0, %v4691
    %v4693 = vpop.f32.mrb[0].mxu0
    %4694 = vmatprep.mubr.f32.mxu0 0.0
    %v4695 = vand.u32 %v4451, 4294901760
    %v4696 = vsub.f32 %v4451, %v4695
    %v4697 = vand.u32 %v4696, 4294901760
    %v4698 = vsub.f32 %v4696, %v4697
    %v4699 = vand.u32 %v4698, 4294901760
    %4700 = vmatmul.mubr.f32.gmra.mrb[0].mxu0 %v4699
    %v4701 = vpop.f32.mrb[0].mxu0
    %v4702 = vadd.f32 0.0, %v4701
    %v4703 = vpop.f32.mrb[0].mxu0
    %4704 = vmatprep.mubr.f32.mxu0 0.0
    %v4705 = vand.u32 %v4458, 4294901760
    %v4706 = vsub.f32 %v4458, %v4705
    %v4707 = vand.u32 %v4706, 4294901760
    %v4708 = vsub.f32 %v4706, %v4707
    %v4709 = vand.u32 %v4708, 4294901760
    %4710 = vmatmul.mubr.f32.gmra.mrb[0].mxu0 %v4709
    %v4711 = vpop.f32.mrb[0].mxu0
    %v4712 = vadd.f32 0.0, %v4711
    %v4713 = vpop.f32.mrb[0].mxu0
    %4714 = vmatprep.mubr.f32.mxu0 0.0
    %v4715 = vand.u32 %v4465, 4294901760
    %v4716 = vsub.f32 %v4465, %v4715
    %v4717 = vand.u32 %v4716, 4294901760
    %v4718 = vsub.f32 %v4716, %v4717
    %v4719 = vand.u32 %v4718, 4294901760
    %4720 = vmatmul.mubr.f32.gmra.mrb[0].mxu0 %v4719
    %v4721 = vpop.f32.mrb[0].mxu0
    %v4722 = vadd.f32 0.0, %v4721
    %v4723 = vpop.f32.mrb[0].mxu0
    %4724 = vdwg.mxu0
    %4725 = vmatprep.subr.mxu0 0.0
    %v4726 = vand.u32 %v4468, 4294901760
    %v4727 = vsub.f32 %v4468, %v4726
    %v4728 = vand.u32 %v4727, 4294901760
    %v4729 = vsub.f32 %v4727, %v4728
    %v4730 = vand.u32 %v4729, 4294901760
    %4731 = vmatpush1.msra.mxu0 %v4730
    %4732 = vmatprep.subr.mxu0 0.0
    %v4733 = vand.u32 %v4469, 4294901760
    %v4734 = vsub.f32 %v4469, %v4733
    %v4735 = vand.u32 %v4734, 4294901760
    %v4736 = vsub.f32 %v4734, %v4735
    %v4737 = vand.u32 %v4736, 4294901760
    %4738 = vmatpush1.msra.mxu0 %v4737
    %4739 = vmatprep.subr.mxu0 0.0
    %v4740 = vand.u32 %v4470, 4294901760
    %v4741 = vsub.f32 %v4470, %v4740
    %v4742 = vand.u32 %v4741, 4294901760
    %v4743 = vsub.f32 %v4741, %v4742
    %v4744 = vand.u32 %v4743, 4294901760
    %4745 = vmatpush1.msra.mxu0 %v4744
    %4746 = vmatprep.subr.mxu0 0.0
    %v4747 = vand.u32 %v4471, 4294901760
    %v4748 = vsub.f32 %v4471, %v4747
    %v4749 = vand.u32 %v4748, 4294901760
    %v4750 = vsub.f32 %v4748, %v4749
    %v4751 = vand.u32 %v4750, 4294901760
    %4752 = vmatpush1.msra.mxu0 %v4751
    %4753 = vmatprep.subr.mxu0 0.0
    %v4754 = vand.u32 %v4472, 4294901760
    %v4755 = vsub.f32 %v4472, %v4754
    %v4756 = vand.u32 %v4755, 4294901760
    %v4757 = vsub.f32 %v4755, %v4756
    %v4758 = vand.u32 %v4757, 4294901760
    %4759 = vmatpush1.msra.mxu0 %v4758
    %4760 = vmatprep.subr.mxu0 0.0
    %v4761 = vand.u32 %v4473, 4294901760
    %v4762 = vsub.f32 %v4473, %v4761
    %v4763 = vand.u32 %v4762, 4294901760
    %v4764 = vsub.f32 %v4762, %v4763
    %v4765 = vand.u32 %v4764, 4294901760
    %4766 = vmatpush1.msra.mxu0 %v4765
    %4767 = vmatprep.subr.mxu0 0.0
    %v4768 = vand.u32 %v4474, 4294901760
    %v4769 = vsub.f32 %v4474, %v4768
    %v4770 = vand.u32 %v4769, 4294901760
    %v4771 = vsub.f32 %v4769, %v4770
    %v4772 = vand.u32 %v4771, 4294901760
    %4773 = vmatpush1.msra.mxu0 %v4772
    %4774 = vmatprep.subr.mxu0 0.0
    %v4775 = vand.u32 %v4475, 4294901760
    %v4776 = vsub.f32 %v4475, %v4775
    %v4777 = vand.u32 %v4776, 4294901760
    %v4778 = vsub.f32 %v4776, %v4777
    %v4779 = vand.u32 %v4778, 4294901760
    %4780 = vmatpush1.msra.mxu0 %v4779
    %4781 = vmatprep.subr.mxu0 0.0
    %v4782 = vand.u32 %v4476, 4294901760
    %v4783 = vsub.f32 %v4476, %v4782
    %v4784 = vand.u32 %v4783, 4294901760
    %v4785 = vsub.f32 %v4783, %v4784
    %v4786 = vand.u32 %v4785, 4294901760
    %4787 = vmatpush1.msra.mxu0 %v4786
    %4788 = vmatprep.subr.mxu0 0.0
    %v4789 = vand.u32 %v4477, 4294901760
    %v4790 = vsub.f32 %v4477, %v4789
    %v4791 = vand.u32 %v4790, 4294901760
    %v4792 = vsub.f32 %v4790, %v4791
    %v4793 = vand.u32 %v4792, 4294901760
    %4794 = vmatpush1.msra.mxu0 %v4793
    %4795 = vmatprep.subr.mxu0 0.0
    %v4796 = vand.u32 %v4478, 4294901760
    %v4797 = vsub.f32 %v4478, %v4796
    %v4798 = vand.u32 %v4797, 4294901760
    %v4799 = vsub.f32 %v4797, %v4798
    %v4800 = vand.u32 %v4799, 4294901760
    %4801 = vmatpush1.msra.mxu0 %v4800
    %4802 = vmatprep.subr.mxu0 0.0
    %v4803 = vand.u32 %v4479, 4294901760
    %v4804 = vsub.f32 %v4479, %v4803
    %v4805 = vand.u32 %v4804, 4294901760
    %v4806 = vsub.f32 %v4804, %v4805
    %v4807 = vand.u32 %v4806, 4294901760
    %4808 = vmatpush1.msra.mxu0 %v4807
    %4809 = vmatprep.subr.mxu0 0.0
    %v4810 = vand.u32 %v4480, 4294901760
    %v4811 = vsub.f32 %v4480, %v4810
    %v4812 = vand.u32 %v4811, 4294901760
    %v4813 = vsub.f32 %v4811, %v4812
    %v4814 = vand.u32 %v4813, 4294901760
    %4815 = vmatpush1.msra.mxu0 %v4814
    %4816 = vmatprep.subr.mxu0 0.0
    %v4817 = vand.u32 %v4481, 4294901760
    %v4818 = vsub.f32 %v4481, %v4817
    %v4819 = vand.u32 %v4818, 4294901760
    %v4820 = vsub.f32 %v4818, %v4819
    %v4821 = vand.u32 %v4820, 4294901760
    %4822 = vmatpush1.msra.mxu0 %v4821
    %4823 = vmatprep.subr.mxu0 0.0
    %v4824 = vand.u32 %v4482, 4294901760
    %v4825 = vsub.f32 %v4482, %v4824
    %v4826 = vand.u32 %v4825, 4294901760
    %v4827 = vsub.f32 %v4825, %v4826
    %v4828 = vand.u32 %v4827, 4294901760
    %4829 = vmatpush1.msra.mxu0 %v4828
    %4830 = vmatprep.subr.mxu0 0.0
    %v4831 = vand.u32 %v4483, 4294901760
    %v4832 = vsub.f32 %v4483, %v4831
    %v4833 = vand.u32 %v4832, 4294901760
    %v4834 = vsub.f32 %v4832, %v4833
    %v4835 = vand.u32 %v4834, 4294901760
    %4836 = vmatpush1.msra.mxu0 %v4835
    %4837 = vmatprep.subr.mxu0 0.0
    %4838 = vmatpush1.msra.mxu0 0.0
    %4839 = vmatprep.subr.mxu0 0.0
    %4840 = vmatpush1.msra.mxu0 0.0
    %4841 = vmatprep.subr.mxu0 0.0
    %4842 = vmatpush1.msra.mxu0 0.0
    %4843 = vmatprep.subr.mxu0 0.0
    %4844 = vmatpush1.msra.mxu0 0.0
    %4845 = vmatprep.subr.mxu0 0.0
    %4846 = vmatpush1.msra.mxu0 0.0
    %4847 = vmatprep.subr.mxu0 0.0
    %4848 = vmatpush1.msra.mxu0 0.0
    %4849 = vmatprep.subr.mxu0 0.0
    %4850 = vmatpush1.msra.mxu0 0.0
    %4851 = vmatprep.subr.mxu0 0.0
    %4852 = vmatpush1.msra.mxu0 0.0
    %4853 = vmatprep.subr.mxu0 0.0
    %4854 = vmatpush1.msra.mxu0 0.0
    %4855 = vmatprep.subr.mxu0 0.0
    %4856 = vmatpush1.msra.mxu0 0.0
    %4857 = vmatprep.subr.mxu0 0.0
    %4858 = vmatpush1.msra.mxu0 0.0
    %4859 = vmatprep.subr.mxu0 0.0
    %4860 = vmatpush1.msra.mxu0 0.0
    %4861 = vmatprep.subr.mxu0 0.0
    %4862 = vmatpush1.msra.mxu0 0.0
    %4863 = vmatprep.subr.mxu0 0.0
    %4864 = vmatpush1.msra.mxu0 0.0
    %4865 = vmatprep.subr.mxu0 0.0
    %4866 = vmatpush1.msra.mxu0 0.0
    %4867 = vmatprep.subr.mxu0 0.0
    %4868 = vmatpush1.msra.mxu0 0.0
    %4869 = vmatprep.mubr.f32.mxu0 0.0
    %v4870 = vand.u32 %v4360, 4294901760
    %4871 = vmatmul.mubr.f32.gmra.mrb[0].mxu0 %v4870
    %v4872 = vpop.f32.mrb[0].mxu0
    %v4873 = vadd.f32 %v4572, %v4872
    %v4874 = vpop.f32.mrb[0].mxu0
    %4875 = vmatprep.mubr.f32.mxu0 0.0
    %v4876 = vand.u32 %v4367, 4294901760
    %4877 = vmatmul.mubr.f32.gmra.mrb[0].mxu0 %v4876
    %v4878 = vpop.f32.mrb[0].mxu0
    %v4879 = vadd.f32 %v4582, %v4878
    %v4880 = vpop.f32.mrb[0].mxu0
    %4881 = vmatprep.mubr.f32.mxu0 0.0
    %v4882 = vand.u32 %v4374, 4294901760
    %4883 = vmatmul.mubr.f32.gmra.mrb[0].mxu0 %v4882
    %v4884 = vpop.f32.mrb[0].mxu0
    %v4885 = vadd.f32 %v4592, %v4884
    %v4886 = vpop.f32.mrb[0].mxu0
    %4887 = vmatprep.mubr.f32.mxu0 0.0
    %v4888 = vand.u32 %v4381, 4294901760
    %4889 = vmatmul.mubr.f32.gmra.mrb[0].mxu0 %v4888
    %v4890 = vpop.f32.mrb[0].mxu0
    %v4891 = vadd.f32 %v4602, %v4890
    %v4892 = vpop.f32.mrb[0].mxu0
    %4893 = vmatprep.mubr.f32.mxu0 0.0
    %v4894 = vand.u32 %v4388, 4294901760
    %4895 = vmatmul.mubr.f32.gmra.mrb[0].mxu0 %v4894
    %v4896 = vpop.f32.mrb[0].mxu0
    %v4897 = vadd.f32 %v4612, %v4896
    %v4898 = vpop.f32.mrb[0].mxu0
    %4899 = vmatprep.mubr.f32.mxu0 0.0
    %v4900 = vand.u32 %v4395, 4294901760
    %4901 = vmatmul.mubr.f32.gmra.mrb[0].mxu0 %v4900
    %v4902 = vpop.f32.mrb[0].mxu0
    %v4903 = vadd.f32 %v4622, %v4902
    %v4904 = vpop.f32.mrb[0].mxu0
    %4905 = vmatprep.mubr.f32.mxu0 0.0
    %v4906 = vand.u32 %v4402, 4294901760
    %4907 = vmatmul.mubr.f32.gmra.mrb[0].mxu0 %v4906
    %v4908 = vpop.f32.mrb[0].mxu0
    %v4909 = vadd.f32 %v4632, %v4908
    %v4910 = vpop.f32.mrb[0].mxu0
    %4911 = vmatprep.mubr.f32.mxu0 0.0
    %v4912 = vand.u32 %v4409, 4294901760
    %4913 = vmatmul.mubr.f32.gmra.mrb[0].mxu0 %v4912
    %v4914 = vpop.f32.mrb[0].mxu0
    %v4915 = vadd.f32 %v4642, %v4914
    %v4916 = vpop.f32.mrb[0].mxu0
    %4917 = vmatprep.mubr.f32.mxu0 0.0
    %v4918 = vand.u32 %v4416, 4294901760
    %4919 = vmatmul.mubr.f32.gmra.mrb[0].mxu0 %v4918
    %v4920 = vpop.f32.mrb[0].mxu0
    %v4921 = vadd.f32 %v4652, %v4920
    %v4922 = vpop.f32.mrb[0].mxu0
    %4923 = vmatprep.mubr.f32.mxu0 0.0
    %v4924 = vand.u32 %v4423, 4294901760
    %4925 = vmatmul.mubr.f32.gmra.mrb[0].mxu0 %v4924
    %v4926 = vpop.f32.mrb[0].mxu0
    %v4927 = vadd.f32 %v4662, %v4926
    %v4928 = vpop.f32.mrb[0].mxu0
    %4929 = vmatprep.mubr.f32.mxu0 0.0
    %v4930 = vand.u32 %v4430, 4294901760
    %4931 = vmatmul.mubr.f32.gmra.mrb[0].mxu0 %v4930
    %v4932 = vpop.f32.mrb[0].mxu0
    %v4933 = vadd.f32 %v4672, %v4932
    %v4934 = vpop.f32.mrb[0].mxu0
    %4935 = vmatprep.mubr.f32.mxu0 0.0
    %v4936 = vand.u32 %v4437, 4294901760
    %4937 = vmatmul.mubr.f32.gmra.mrb[0].mxu0 %v4936
    %v4938 = vpop.f32.mrb[0].mxu0
    %v4939 = vadd.f32 %v4682, %v4938
    %v4940 = vpop.f32.mrb[0].mxu0
    %4941 = vmatprep.mubr.f32.mxu0 0.0
    %v4942 = vand.u32 %v4444, 4294901760
    %4943 = vmatmul.mubr.f32.gmra.mrb[0].mxu0 %v4942
    %v4944 = vpop.f32.mrb[0].mxu0
    %v4945 = vadd.f32 %v4692, %v4944
    %v4946 = vpop.f32.mrb[0].mxu0
    %4947 = vmatprep.mubr.f32.mxu0 0.0
    %v4948 = vand.u32 %v4451, 4294901760
    %4949 = vmatmul.mubr.f32.gmra.mrb[0].mxu0 %v4948
    %v4950 = vpop.f32.mrb[0].mxu0
    %v4951 = vadd.f32 %v4702, %v4950
    %v4952 = vpop.f32.mrb[0].mxu0
    %4953 = vmatprep.mubr.f32.mxu0 0.0
    %v4954 = vand.u32 %v4458, 4294901760
    %4955 = vmatmul.mubr.f32.gmra.mrb[0].mxu0 %v4954
    %v4956 = vpop.f32.mrb[0].mxu0
    %v4957 = vadd.f32 %v4712, %v4956
    %v4958 = vpop.f32.mrb[0].mxu0
    %4959 = vmatprep.mubr.f32.mxu0 0.0
    %v4960 = vand.u32 %v4465, 4294901760
    %4961 = vmatmul.mubr.f32.gmra.mrb[0].mxu0 %v4960
    %v4962 = vpop.f32.mrb[0].mxu0
    %v4963 = vadd.f32 %v4722, %v4962
    %v4964 = vpop.f32.mrb[0].mxu0
    %4965 = vdwg.mxu0
    %4966 = vmatprep.subr.mxu0 0.0
    %v4967 = vand.u32 %v4468, 4294901760
    %v4968 = vsub.f32 %v4468, %v4967
    %4969 = vmatpush1.msra.mxu0 %v4968
    %4970 = vmatprep.subr.mxu0 0.0
    %v4971 = vand.u32 %v4469, 4294901760
    %v4972 = vsub.f32 %v4469, %v4971
    %4973 = vmatpush1.msra.mxu0 %v4972
    %4974 = vmatprep.subr.mxu0 0.0
    %v4975 = vand.u32 %v4470, 4294901760
    %v4976 = vsub.f32 %v4470, %v4975
    %4977 = vmatpush1.msra.mxu0 %v4976
    %4978 = vmatprep.subr.mxu0 0.0
    %v4979 = vand.u32 %v4471, 4294901760
    %v4980 = vsub.f32 %v4471, %v4979
    %4981 = vmatpush1.msra.mxu0 %v4980
    %4982 = vmatprep.subr.mxu0 0.0
    %v4983 = vand.u32 %v4472, 4294901760
    %v4984 = vsub.f32 %v4472, %v4983
    %4985 = vmatpush1.msra.mxu0 %v4984
    %4986 = vmatprep.subr.mxu0 0.0
    %v4987 = vand.u32 %v4473, 4294901760
    %v4988 = vsub.f32 %v4473, %v4987
    %4989 = vmatpush1.msra.mxu0 %v4988
    %4990 = vmatprep.subr.mxu0 0.0
    %v4991 = vand.u32 %v4474, 4294901760
    %v4992 = vsub.f32 %v4474, %v4991
    %4993 = vmatpush1.msra.mxu0 %v4992
    %4994 = vmatprep.subr.mxu0 0.0
    %v4995 = vand.u32 %v4475, 4294901760
    %v4996 = vsub.f32 %v4475, %v4995
    %4997 = vmatpush1.msra.mxu0 %v4996
    %4998 = vmatprep.subr.mxu0 0.0
    %v4999 = vand.u32 %v4476, 4294901760
    %v5000 = vsub.f32 %v4476, %v4999
    %5001 = vmatpush1.msra.mxu0 %v5000
    %5002 = vmatprep.subr.mxu0 0.0
    %v5003 = vand.u32 %v4477, 4294901760
    %v5004 = vsub.f32 %v4477, %v5003
    %5005 = vmatpush1.msra.mxu0 %v5004
    %5006 = vmatprep.subr.mxu0 0.0
    %v5007 = vand.u32 %v4478, 4294901760
    %v5008 = vsub.f32 %v4478, %v5007
    %5009 = vmatpush1.msra.mxu0 %v5008
    %5010 = vmatprep.subr.mxu0 0.0
    %v5011 = vand.u32 %v4479, 4294901760
    %v5012 = vsub.f32 %v4479, %v5011
    %5013 = vmatpush1.msra.mxu0 %v5012
    %5014 = vmatprep.subr.mxu0 0.0
    %v5015 = vand.u32 %v4480, 4294901760
    %v5016 = vsub.f32 %v4480, %v5015
    %5017 = vmatpush1.msra.mxu0 %v5016
    %5018 = vmatprep.subr.mxu0 0.0
    %v5019 = vand.u32 %v4481, 4294901760
    %v5020 = vsub.f32 %v4481, %v5019
    %5021 = vmatpush1.msra.mxu0 %v5020
    %5022 = vmatprep.subr.mxu0 0.0
    %v5023 = vand.u32 %v4482, 4294901760
    %v5024 = vsub.f32 %v4482, %v5023
    %5025 = vmatpush1.msra.mxu0 %v5024
    %5026 = vmatprep.subr.mxu0 0.0
    %v5027 = vand.u32 %v4483, 4294901760
    %v5028 = vsub.f32 %v4483, %v5027
    %5029 = vmatpush1.msra.mxu0 %v5028
    %5030 = vmatprep.subr.mxu0 0.0
    %5031 = vmatpush1.msra.mxu0 0.0
    %5032 = vmatprep.subr.mxu0 0.0
    %5033 = vmatpush1.msra.mxu0 0.0
    %5034 = vmatprep.subr.mxu0 0.0
    %5035 = vmatpush1.msra.mxu0 0.0
    %5036 = vmatprep.subr.mxu0 0.0
    %5037 = vmatpush1.msra.mxu0 0.0
    %5038 = vmatprep.subr.mxu0 0.0
    %5039 = vmatpush1.msra.mxu0 0.0
    %5040 = vmatprep.subr.mxu0 0.0
    %5041 = vmatpush1.msra.mxu0 0.0
    %5042 = vmatprep.subr.mxu0 0.0
    %5043 = vmatpush1.msra.mxu0 0.0
    %5044 = vmatprep.subr.mxu0 0.0
    %5045 = vmatpush1.msra.mxu0 0.0
    %5046 = vmatprep.subr.mxu0 0.0
    %5047 = vmatpush1.msra.mxu0 0.0
    %5048 = vmatprep.subr.mxu0 0.0
    %5049 = vmatpush1.msra.mxu0 0.0
    %5050 = vmatprep.subr.mxu0 0.0
    %5051 = vmatpush1.msra.mxu0 0.0
    %5052 = vmatprep.subr.mxu0 0.0
    %5053 = vmatpush1.msra.mxu0 0.0
    %5054 = vmatprep.subr.mxu0 0.0
    %5055 = vmatpush1.msra.mxu0 0.0
    %5056 = vmatprep.subr.mxu0 0.0
    %5057 = vmatpush1.msra.mxu0 0.0
    %5058 = vmatprep.subr.mxu0 0.0
    %5059 = vmatpush1.msra.mxu0 0.0
    %5060 = vmatprep.subr.mxu0 0.0
    %5061 = vmatpush1.msra.mxu0 0.0
    %5062 = vmatprep.mubr.f32.mxu0 0.0
    %v5063 = vand.u32 %v4360, 4294901760
    %v5064 = vsub.f32 %v4360, %v5063
    %5065 = vmatmul.mubr.f32.gmra.mrb[0].mxu0 %v5064
    %v5066 = vpop.f32.mrb[0].mxu0
    %v5067 = vadd.f32 %v4873, %v5066
    %v5068 = vpop.f32.mrb[0].mxu0
    %5069 = vmatprep.mubr.f32.mxu0 0.0
    %v5070 = vand.u32 %v4367, 4294901760
    %v5071 = vsub.f32 %v4367, %v5070
    %5072 = vmatmul.mubr.f32.gmra.mrb[0].mxu0 %v5071
    %v5073 = vpop.f32.mrb[0].mxu0
    %v5074 = vadd.f32 %v4879, %v5073
    %v5075 = vpop.f32.mrb[0].mxu0
    %5076 = vmatprep.mubr.f32.mxu0 0.0
    %v5077 = vand.u32 %v4374, 4294901760
    %v5078 = vsub.f32 %v4374, %v5077
    %5079 = vmatmul.mubr.f32.gmra.mrb[0].mxu0 %v5078
    %v5080 = vpop.f32.mrb[0].mxu0
    %v5081 = vadd.f32 %v4885, %v5080
    %v5082 = vpop.f32.mrb[0].mxu0
    %5083 = vmatprep.mubr.f32.mxu0 0.0
    %v5084 = vand.u32 %v4381, 4294901760
    %v5085 = vsub.f32 %v4381, %v5084
    %5086 = vmatmul.mubr.f32.gmra.mrb[0].mxu0 %v5085
    %v5087 = vpop.f32.mrb[0].mxu0
    %v5088 = vadd.f32 %v4891, %v5087
    %v5089 = vpop.f32.mrb[0].mxu0
    %5090 = vmatprep.mubr.f32.mxu0 0.0
    %v5091 = vand.u32 %v4388, 4294901760
    %v5092 = vsub.f32 %v4388, %v5091
    %5093 = vmatmul.mubr.f32.gmra.mrb[0].mxu0 %v5092
    %v5094 = vpop.f32.mrb[0].mxu0
    %v5095 = vadd.f32 %v4897, %v5094
    %v5096 = vpop.f32.mrb[0].mxu0
    %5097 = vmatprep.mubr.f32.mxu0 0.0
    %v5098 = vand.u32 %v4395, 4294901760
    %v5099 = vsub.f32 %v4395, %v5098
    %5100 = vmatmul.mubr.f32.gmra.mrb[0].mxu0 %v5099
    %v5101 = vpop.f32.mrb[0].mxu0
    %v5102 = vadd.f32 %v4903, %v5101
    %v5103 = vpop.f32.mrb[0].mxu0
    %5104 = vmatprep.mubr.f32.mxu0 0.0
    %v5105 = vand.u32 %v4402, 4294901760
    %v5106 = vsub.f32 %v4402, %v5105
    %5107 = vmatmul.mubr.f32.gmra.mrb[0].mxu0 %v5106
    %v5108 = vpop.f32.mrb[0].mxu0
    %v5109 = vadd.f32 %v4909, %v5108
    %v5110 = vpop.f32.mrb[0].mxu0
    %5111 = vmatprep.mubr.f32.mxu0 0.0
    %v5112 = vand.u32 %v4409, 4294901760
    %v5113 = vsub.f32 %v4409, %v5112
    %5114 = vmatmul.mubr.f32.gmra.mrb[0].mxu0 %v5113
    %v5115 = vpop.f32.mrb[0].mxu0
    %v5116 = vadd.f32 %v4915, %v5115
    %v5117 = vpop.f32.mrb[0].mxu0
    %5118 = vmatprep.mubr.f32.mxu0 0.0
    %v5119 = vand.u32 %v4416, 4294901760
    %v5120 = vsub.f32 %v4416, %v5119
    %5121 = vmatmul.mubr.f32.gmra.mrb[0].mxu0 %v5120
    %v5122 = vpop.f32.mrb[0].mxu0
    %v5123 = vadd.f32 %v4921, %v5122
    %v5124 = vpop.f32.mrb[0].mxu0
    %5125 = vmatprep.mubr.f32.mxu0 0.0
    %v5126 = vand.u32 %v4423, 4294901760
    %v5127 = vsub.f32 %v4423, %v5126
    %5128 = vmatmul.mubr.f32.gmra.mrb[0].mxu0 %v5127
    %v5129 = vpop.f32.mrb[0].mxu0
    %v5130 = vadd.f32 %v4927, %v5129
    %v5131 = vpop.f32.mrb[0].mxu0
    %5132 = vmatprep.mubr.f32.mxu0 0.0
    %v5133 = vand.u32 %v4430, 4294901760
    %v5134 = vsub.f32 %v4430, %v5133
    %5135 = vmatmul.mubr.f32.gmra.mrb[0].mxu0 %v5134
    %v5136 = vpop.f32.mrb[0].mxu0
    %v5137 = vadd.f32 %v4933, %v5136
    %v5138 = vpop.f32.mrb[0].mxu0
    %5139 = vmatprep.mubr.f32.mxu0 0.0
    %v5140 = vand.u32 %v4437, 4294901760
    %v5141 = vsub.f32 %v4437, %v5140
    %5142 = vmatmul.mubr.f32.gmra.mrb[0].mxu0 %v5141
    %v5143 = vpop.f32.mrb[0].mxu0
    %v5144 = vadd.f32 %v4939, %v5143
    %v5145 = vpop.f32.mrb[0].mxu0
    %5146 = vmatprep.mubr.f32.mxu0 0.0
    %v5147 = vand.u32 %v4444, 4294901760
    %v5148 = vsub.f32 %v4444, %v5147
    %5149 = vmatmul.mubr.f32.gmra.mrb[0].mxu0 %v5148
    %v5150 = vpop.f32.mrb[0].mxu0
    %v5151 = vadd.f32 %v4945, %v5150
    %v5152 = vpop.f32.mrb[0].mxu0
    %5153 = vmatprep.mubr.f32.mxu0 0.0
    %v5154 = vand.u32 %v4451, 4294901760
    %v5155 = vsub.f32 %v4451, %v5154
    %5156 = vmatmul.mubr.f32.gmra.mrb[0].mxu0 %v5155
    %v5157 = vpop.f32.mrb[0].mxu0
    %v5158 = vadd.f32 %v4951, %v5157
    %v5159 = vpop.f32.mrb[0].mxu0
    %5160 = vmatprep.mubr.f32.mxu0 0.0
    %v5161 = vand.u32 %v4458, 4294901760
    %v5162 = vsub.f32 %v4458, %v5161
    %5163 = vmatmul.mubr.f32.gmra.mrb[0].mxu0 %v5162
    %v5164 = vpop.f32.mrb[0].mxu0
    %v5165 = vadd.f32 %v4957, %v5164
    %v5166 = vpop.f32.mrb[0].mxu0
    %5167 = vmatprep.mubr.f32.mxu0 0.0
    %v5168 = vand.u32 %v4465, 4294901760
    %v5169 = vsub.f32 %v4465, %v5168
    %5170 = vmatmul.mubr.f32.gmra.mrb[0].mxu0 %v5169
    %v5171 = vpop.f32.mrb[0].mxu0
    %v5172 = vadd.f32 %v4963, %v5171
    %v5173 = vpop.f32.mrb[0].mxu0
    %5174 = vdwg.mxu0
    %5175 = vmatprep.subr.mxu0 0.0
    %v5176 = vand.u32 %v4468, 4294901760
    %5177 = vmatpush1.msra.mxu0 %v5176
    %5178 = vmatprep.subr.mxu0 0.0
    %v5179 = vand.u32 %v4469, 4294901760
    %5180 = vmatpush1.msra.mxu0 %v5179
    %5181 = vmatprep.subr.mxu0 0.0
    %v5182 = vand.u32 %v4470, 4294901760
    %5183 = vmatpush1.msra.mxu0 %v5182
    %5184 = vmatprep.subr.mxu0 0.0
    %v5185 = vand.u32 %v4471, 4294901760
    %5186 = vmatpush1.msra.mxu0 %v5185
    %5187 = vmatprep.subr.mxu0 0.0
    %v5188 = vand.u32 %v4472, 4294901760
    %5189 = vmatpush1.msra.mxu0 %v5188
    %5190 = vmatprep.subr.mxu0 0.0
    %v5191 = vand.u32 %v4473, 4294901760
    %5192 = vmatpush1.msra.mxu0 %v5191
    %5193 = vmatprep.subr.mxu0 0.0
    %v5194 = vand.u32 %v4474, 4294901760
    %5195 = vmatpush1.msra.mxu0 %v5194
    %5196 = vmatprep.subr.mxu0 0.0
    %v5197 = vand.u32 %v4475, 4294901760
    %5198 = vmatpush1.msra.mxu0 %v5197
    %5199 = vmatprep.subr.mxu0 0.0
    %v5200 = vand.u32 %v4476, 4294901760
    %5201 = vmatpush1.msra.mxu0 %v5200
    %5202 = vmatprep.subr.mxu0 0.0
    %v5203 = vand.u32 %v4477, 4294901760
    %5204 = vmatpush1.msra.mxu0 %v5203
    %5205 = vmatprep.subr.mxu0 0.0
    %v5206 = vand.u32 %v4478, 4294901760
    %5207 = vmatpush1.msra.mxu0 %v5206
    %5208 = vmatprep.subr.mxu0 0.0
    %v5209 = vand.u32 %v4479, 4294901760
    %5210 = vmatpush1.msra.mxu0 %v5209
    %5211 = vmatprep.subr.mxu0 0.0
    %v5212 = vand.u32 %v4480, 4294901760
    %5213 = vmatpush1.msra.mxu0 %v5212
    %5214 = vmatprep.subr.mxu0 0.0
    %v5215 = vand.u32 %v4481, 4294901760
    %5216 = vmatpush1.msra.mxu0 %v5215
    %5217 = vmatprep.subr.mxu0 0.0
    %v5218 = vand.u32 %v4482, 4294901760
    %5219 = vmatpush1.msra.mxu0 %v5218
    %5220 = vmatprep.subr.mxu0 0.0
    %v5221 = vand.u32 %v4483, 4294901760
    %5222 = vmatpush1.msra.mxu0 %v5221
    %5223 = vmatprep.subr.mxu0 0.0
    %5224 = vmatpush1.msra.mxu0 0.0
    %5225 = vmatprep.subr.mxu0 0.0
    %5226 = vmatpush1.msra.mxu0 0.0
    %5227 = vmatprep.subr.mxu0 0.0
    %5228 = vmatpush1.msra.mxu0 0.0
    %5229 = vmatprep.subr.mxu0 0.0
    %5230 = vmatpush1.msra.mxu0 0.0
    %5231 = vmatprep.subr.mxu0 0.0
    %5232 = vmatpush1.msra.mxu0 0.0
    %5233 = vmatprep.subr.mxu0 0.0
    %5234 = vmatpush1.msra.mxu0 0.0
    %5235 = vmatprep.subr.mxu0 0.0
    %5236 = vmatpush1.msra.mxu0 0.0
    %5237 = vmatprep.subr.mxu0 0.0
    %5238 = vmatpush1.msra.mxu0 0.0
    %5239 = vmatprep.subr.mxu0 0.0
    %5240 = vmatpush1.msra.mxu0 0.0
    %5241 = vmatprep.subr.mxu0 0.0
    %5242 = vmatpush1.msra.mxu0 0.0
    %5243 = vmatprep.subr.mxu0 0.0
    %5244 = vmatpush1.msra.mxu0 0.0
    %5245 = vmatprep.subr.mxu0 0.0
    %5246 = vmatpush1.msra.mxu0 0.0
    %5247 = vmatprep.subr.mxu0 0.0
    %5248 = vmatpush1.msra.mxu0 0.0
    %5249 = vmatprep.subr.mxu0 0.0
    %5250 = vmatpush1.msra.mxu0 0.0
    %5251 = vmatprep.subr.mxu0 0.0
    %5252 = vmatpush1.msra.mxu0 0.0
    %5253 = vmatprep.subr.mxu0 0.0
    %5254 = vmatpush1.msra.mxu0 0.0
    %5255 = vmatprep.mubr.f32.mxu0 0.0
    %v5256 = vand.u32 %v4360, 4294901760
    %v5257 = vsub.f32 %v4360, %v5256
    %v5258 = vand.u32 %v5257, 4294901760
    %5259 = vmatmul.mubr.f32.gmra.mrb[0].mxu0 %v5258
    %v5260 = vpop.f32.mrb[0].mxu0
    %v5261 = vadd.f32 %v5067, %v5260
    %v5262 = vpop.f32.mrb[0].mxu0
    %5263 = vmatprep.mubr.f32.mxu0 0.0
    %v5264 = vand.u32 %v4367, 4294901760
    %v5265 = vsub.f32 %v4367, %v5264
    %v5266 = vand.u32 %v5265, 4294901760
    %5267 = vmatmul.mubr.f32.gmra.mrb[0].mxu0 %v5266
    %v5268 = vpop.f32.mrb[0].mxu0
    %v5269 = vadd.f32 %v5074, %v5268
    %v5270 = vpop.f32.mrb[0].mxu0
    %5271 = vmatprep.mubr.f32.mxu0 0.0
    %v5272 = vand.u32 %v4374, 4294901760
    %v5273 = vsub.f32 %v4374, %v5272
    %v5274 = vand.u32 %v5273, 4294901760
    %5275 = vmatmul.mubr.f32.gmra.mrb[0].mxu0 %v5274
    %v5276 = vpop.f32.mrb[0].mxu0
    %v5277 = vadd.f32 %v5081, %v5276
    %v5278 = vpop.f32.mrb[0].mxu0
    %5279 = vmatprep.mubr.f32.mxu0 0.0
    %v5280 = vand.u32 %v4381, 4294901760
    %v5281 = vsub.f32 %v4381, %v5280
    %v5282 = vand.u32 %v5281, 4294901760
    %5283 = vmatmul.mubr.f32.gmra.mrb[0].mxu0 %v5282
    %v5284 = vpop.f32.mrb[0].mxu0
    %v5285 = vadd.f32 %v5088, %v5284
    %v5286 = vpop.f32.mrb[0].mxu0
    %5287 = vmatprep.mubr.f32.mxu0 0.0
    %v5288 = vand.u32 %v4388, 4294901760
    %v5289 = vsub.f32 %v4388, %v5288
    %v5290 = vand.u32 %v5289, 4294901760
    %5291 = vmatmul.mubr.f32.gmra.mrb[0].mxu0 %v5290
    %v5292 = vpop.f32.mrb[0].mxu0
    %v5293 = vadd.f32 %v5095, %v5292
    %v5294 = vpop.f32.mrb[0].mxu0
    %5295 = vmatprep.mubr.f32.mxu0 0.0
    %v5296 = vand.u32 %v4395, 4294901760
    %v5297 = vsub.f32 %v4395, %v5296
    %v5298 = vand.u32 %v5297, 4294901760
    %5299 = vmatmul.mubr.f32.gmra.mrb[0].mxu0 %v5298
    %v5300 = vpop.f32.mrb[0].mxu0
    %v5301 = vadd.f32 %v5102, %v5300
    %v5302 = vpop.f32.mrb[0].mxu0
    %5303 = vmatprep.mubr.f32.mxu0 0.0
    %v5304 = vand.u32 %v4402, 4294901760
    %v5305 = vsub.f32 %v4402, %v5304
    %v5306 = vand.u32 %v5305, 4294901760
    %5307 = vmatmul.mubr.f32.gmra.mrb[0].mxu0 %v5306
    %v5308 = vpop.f32.mrb[0].mxu0
    %v5309 = vadd.f32 %v5109, %v5308
    %v5310 = vpop.f32.mrb[0].mxu0
    %5311 = vmatprep.mubr.f32.mxu0 0.0
    %v5312 = vand.u32 %v4409, 4294901760
    %v5313 = vsub.f32 %v4409, %v5312
    %v5314 = vand.u32 %v5313, 4294901760
    %5315 = vmatmul.mubr.f32.gmra.mrb[0].mxu0 %v5314
    %v5316 = vpop.f32.mrb[0].mxu0
    %v5317 = vadd.f32 %v5116, %v5316
    %v5318 = vpop.f32.mrb[0].mxu0
    %5319 = vmatprep.mubr.f32.mxu0 0.0
    %v5320 = vand.u32 %v4416, 4294901760
    %v5321 = vsub.f32 %v4416, %v5320
    %v5322 = vand.u32 %v5321, 4294901760
    %5323 = vmatmul.mubr.f32.gmra.mrb[0].mxu0 %v5322
    %v5324 = vpop.f32.mrb[0].mxu0
    %v5325 = vadd.f32 %v5123, %v5324
    %v5326 = vpop.f32.mrb[0].mxu0
    %5327 = vmatprep.mubr.f32.mxu0 0.0
    %v5328 = vand.u32 %v4423, 4294901760
    %v5329 = vsub.f32 %v4423, %v5328
    %v5330 = vand.u32 %v5329, 4294901760
    %5331 = vmatmul.mubr.f32.gmra.mrb[0].mxu0 %v5330
    %v5332 = vpop.f32.mrb[0].mxu0
    %v5333 = vadd.f32 %v5130, %v5332
    %v5334 = vpop.f32.mrb[0].mxu0
    %5335 = vmatprep.mubr.f32.mxu0 0.0
    %v5336 = vand.u32 %v4430, 4294901760
    %v5337 = vsub.f32 %v4430, %v5336
    %v5338 = vand.u32 %v5337, 4294901760
    %5339 = vmatmul.mubr.f32.gmra.mrb[0].mxu0 %v5338
    %v5340 = vpop.f32.mrb[0].mxu0
    %v5341 = vadd.f32 %v5137, %v5340
    %v5342 = vpop.f32.mrb[0].mxu0
    %5343 = vmatprep.mubr.f32.mxu0 0.0
    %v5344 = vand.u32 %v4437, 4294901760
    %v5345 = vsub.f32 %v4437, %v5344
    %v5346 = vand.u32 %v5345, 4294901760
    %5347 = vmatmul.mubr.f32.gmra.mrb[0].mxu0 %v5346
    %v5348 = vpop.f32.mrb[0].mxu0
    %v5349 = vadd.f32 %v5144, %v5348
    %v5350 = vpop.f32.mrb[0].mxu0
    %5351 = vmatprep.mubr.f32.mxu0 0.0
    %v5352 = vand.u32 %v4444, 4294901760
    %v5353 = vsub.f32 %v4444, %v5352
    %v5354 = vand.u32 %v5353, 4294901760
    %5355 = vmatmul.mubr.f32.gmra.mrb[0].mxu0 %v5354
    %v5356 = vpop.f32.mrb[0].mxu0
    %v5357 = vadd.f32 %v5151, %v5356
    %v5358 = vpop.f32.mrb[0].mxu0
    %5359 = vmatprep.mubr.f32.mxu0 0.0
    %v5360 = vand.u32 %v4451, 4294901760
    %v5361 = vsub.f32 %v4451, %v5360
    %v5362 = vand.u32 %v5361, 4294901760
    %5363 = vmatmul.mubr.f32.gmra.mrb[0].mxu0 %v5362
    %v5364 = vpop.f32.mrb[0].mxu0
    %v5365 = vadd.f32 %v5158, %v5364
    %v5366 = vpop.f32.mrb[0].mxu0
    %5367 = vmatprep.mubr.f32.mxu0 0.0
    %v5368 = vand.u32 %v4458, 4294901760
    %v5369 = vsub.f32 %v4458, %v5368
    %v5370 = vand.u32 %v5369, 4294901760
    %5371 = vmatmul.mubr.f32.gmra.mrb[0].mxu0 %v5370
    %v5372 = vpop.f32.mrb[0].mxu0
    %v5373 = vadd.f32 %v5165, %v5372
    %v5374 = vpop.f32.mrb[0].mxu0
    %5375 = vmatprep.mubr.f32.mxu0 0.0
    %v5376 = vand.u32 %v4465, 4294901760
    %v5377 = vsub.f32 %v4465, %v5376
    %v5378 = vand.u32 %v5377, 4294901760
    %5379 = vmatmul.mubr.f32.gmra.mrb[0].mxu0 %v5378
    %v5380 = vpop.f32.mrb[0].mxu0
    %v5381 = vadd.f32 %v5172, %v5380
    %v5382 = vpop.f32.mrb[0].mxu0
    %5383 = vdwg.mxu0
    %5384 = vmatprep.subr.mxu0 0.0
    %v5385 = vand.u32 %v4468, 4294901760
    %v5386 = vsub.f32 %v4468, %v5385
    %v5387 = vand.u32 %v5386, 4294901760
    %5388 = vmatpush1.msra.mxu0 %v5387
    %5389 = vmatprep.subr.mxu0 0.0
    %v5390 = vand.u32 %v4469, 4294901760
    %v5391 = vsub.f32 %v4469, %v5390
    %v5392 = vand.u32 %v5391, 4294901760
    %5393 = vmatpush1.msra.mxu0 %v5392
    %5394 = vmatprep.subr.mxu0 0.0
    %v5395 = vand.u32 %v4470, 4294901760
    %v5396 = vsub.f32 %v4470, %v5395
    %v5397 = vand.u32 %v5396, 4294901760
    %5398 = vmatpush1.msra.mxu0 %v5397
    %5399 = vmatprep.subr.mxu0 0.0
    %v5400 = vand.u32 %v4471, 4294901760
    %v5401 = vsub.f32 %v4471, %v5400
    %v5402 = vand.u32 %v5401, 4294901760
    %5403 = vmatpush1.msra.mxu0 %v5402
    %5404 = vmatprep.subr.mxu0 0.0
    %v5405 = vand.u32 %v4472, 4294901760
    %v5406 = vsub.f32 %v4472, %v5405
    %v5407 = vand.u32 %v5406, 4294901760
    %5408 = vmatpush1.msra.mxu0 %v5407
    %5409 = vmatprep.subr.mxu0 0.0
    %v5410 = vand.u32 %v4473, 4294901760
    %v5411 = vsub.f32 %v4473, %v5410
    %v5412 = vand.u32 %v5411, 4294901760
    %5413 = vmatpush1.msra.mxu0 %v5412
    %5414 = vmatprep.subr.mxu0 0.0
    %v5415 = vand.u32 %v4474, 4294901760
    %v5416 = vsub.f32 %v4474, %v5415
    %v5417 = vand.u32 %v5416, 4294901760
    %5418 = vmatpush1.msra.mxu0 %v5417
    %5419 = vmatprep.subr.mxu0 0.0
    %v5420 = vand.u32 %v4475, 4294901760
    %v5421 = vsub.f32 %v4475, %v5420
    %v5422 = vand.u32 %v5421, 4294901760
    %5423 = vmatpush1.msra.mxu0 %v5422
    %5424 = vmatprep.subr.mxu0 0.0
    %v5425 = vand.u32 %v4476, 4294901760
    %v5426 = vsub.f32 %v4476, %v5425
    %v5427 = vand.u32 %v5426, 4294901760
    %5428 = vmatpush1.msra.mxu0 %v5427
    %5429 = vmatprep.subr.mxu0 0.0
    %v5430 = vand.u32 %v4477, 4294901760
    %v5431 = vsub.f32 %v4477, %v5430
    %v5432 = vand.u32 %v5431, 4294901760
    %5433 = vmatpush1.msra.mxu0 %v5432
    %5434 = vmatprep.subr.mxu0 0.0
    %v5435 = vand.u32 %v4478, 4294901760
    %v5436 = vsub.f32 %v4478, %v5435
    %v5437 = vand.u32 %v5436, 4294901760
    %5438 = vmatpush1.msra.mxu0 %v5437
    %5439 = vmatprep.subr.mxu0 0.0
    %v5440 = vand.u32 %v4479, 4294901760
    %v5441 = vsub.f32 %v4479, %v5440
    %v5442 = vand.u32 %v5441, 4294901760
    %5443 = vmatpush1.msra.mxu0 %v5442
    %5444 = vmatprep.subr.mxu0 0.0
    %v5445 = vand.u32 %v4480, 4294901760
    %v5446 = vsub.f32 %v4480, %v5445
    %v5447 = vand.u32 %v5446, 4294901760
    %5448 = vmatpush1.msra.mxu0 %v5447
    %5449 = vmatprep.subr.mxu0 0.0
    %v5450 = vand.u32 %v4481, 4294901760
    %v5451 = vsub.f32 %v4481, %v5450
    %v5452 = vand.u32 %v5451, 4294901760
    %5453 = vmatpush1.msra.mxu0 %v5452
    %5454 = vmatprep.subr.mxu0 0.0
    %v5455 = vand.u32 %v4482, 4294901760
    %v5456 = vsub.f32 %v4482, %v5455
    %v5457 = vand.u32 %v5456, 4294901760
    %5458 = vmatpush1.msra.mxu0 %v5457
    %5459 = vmatprep.subr.mxu0 0.0
    %v5460 = vand.u32 %v4483, 4294901760
    %v5461 = vsub.f32 %v4483, %v5460
    %v5462 = vand.u32 %v5461, 4294901760
    %5463 = vmatpush1.msra.mxu0 %v5462
    %5464 = vmatprep.subr.mxu0 0.0
    %5465 = vmatpush1.msra.mxu0 0.0
    %5466 = vmatprep.subr.mxu0 0.0
    %5467 = vmatpush1.msra.mxu0 0.0
    %5468 = vmatprep.subr.mxu0 0.0
    %5469 = vmatpush1.msra.mxu0 0.0
    %5470 = vmatprep.subr.mxu0 0.0
    %5471 = vmatpush1.msra.mxu0 0.0
    %5472 = vmatprep.subr.mxu0 0.0
    %5473 = vmatpush1.msra.mxu0 0.0
    %5474 = vmatprep.subr.mxu0 0.0
    %5475 = vmatpush1.msra.mxu0 0.0
    %5476 = vmatprep.subr.mxu0 0.0
    %5477 = vmatpush1.msra.mxu0 0.0
    %5478 = vmatprep.subr.mxu0 0.0
    %5479 = vmatpush1.msra.mxu0 0.0
    %5480 = vmatprep.subr.mxu0 0.0
    %5481 = vmatpush1.msra.mxu0 0.0
    %5482 = vmatprep.subr.mxu0 0.0
    %5483 = vmatpush1.msra.mxu0 0.0
    %5484 = vmatprep.subr.mxu0 0.0
    %5485 = vmatpush1.msra.mxu0 0.0
    %5486 = vmatprep.subr.mxu0 0.0
    %5487 = vmatpush1.msra.mxu0 0.0
    %5488 = vmatprep.subr.mxu0 0.0
    %5489 = vmatpush1.msra.mxu0 0.0
    %5490 = vmatprep.subr.mxu0 0.0
    %5491 = vmatpush1.msra.mxu0 0.0
    %5492 = vmatprep.subr.mxu0 0.0
    %5493 = vmatpush1.msra.mxu0 0.0
    %5494 = vmatprep.subr.mxu0 0.0
    %5495 = vmatpush1.msra.mxu0 0.0
    %5496 = vmatprep.mubr.f32.mxu0 0.0
    %v5497 = vand.u32 %v4360, 4294901760
    %5498 = vmatmul.mubr.f32.gmra.mrb[0].mxu0 %v5497
    %v5499 = vpop.f32.mrb[0].mxu0
    %v5500 = vadd.f32 %v5261, %v5499
    %v5501 = vpop.f32.mrb[0].mxu0
    %5502 = vmatprep.mubr.f32.mxu0 0.0
    %v5503 = vand.u32 %v4367, 4294901760
    %5504 = vmatmul.mubr.f32.gmra.mrb[0].mxu0 %v5503
    %v5505 = vpop.f32.mrb[0].mxu0
    %v5506 = vadd.f32 %v5269, %v5505
    %v5507 = vpop.f32.mrb[0].mxu0
    %5508 = vmatprep.mubr.f32.mxu0 0.0
    %v5509 = vand.u32 %v4374, 4294901760
    %5510 = vmatmul.mubr.f32.gmra.mrb[0].mxu0 %v5509
    %v5511 = vpop.f32.mrb[0].mxu0
    %v5512 = vadd.f32 %v5277, %v5511
    %v5513 = vpop.f32.mrb[0].mxu0
    %5514 = vmatprep.mubr.f32.mxu0 0.0
    %v5515 = vand.u32 %v4381, 4294901760
    %5516 = vmatmul.mubr.f32.gmra.mrb[0].mxu0 %v5515
    %v5517 = vpop.f32.mrb[0].mxu0
    %v5518 = vadd.f32 %v5285, %v5517
    %v5519 = vpop.f32.mrb[0].mxu0
    %5520 = vmatprep.mubr.f32.mxu0 0.0
    %v5521 = vand.u32 %v4388, 4294901760
    %5522 = vmatmul.mubr.f32.gmra.mrb[0].mxu0 %v5521
    %v5523 = vpop.f32.mrb[0].mxu0
    %v5524 = vadd.f32 %v5293, %v5523
    %v5525 = vpop.f32.mrb[0].mxu0
    %5526 = vmatprep.mubr.f32.mxu0 0.0
    %v5527 = vand.u32 %v4395, 4294901760
    %5528 = vmatmul.mubr.f32.gmra.mrb[0].mxu0 %v5527
    %v5529 = vpop.f32.mrb[0].mxu0
    %v5530 = vadd.f32 %v5301, %v5529
    %v5531 = vpop.f32.mrb[0].mxu0
    %5532 = vmatprep.mubr.f32.mxu0 0.0
    %v5533 = vand.u32 %v4402, 4294901760
    %5534 = vmatmul.mubr.f32.gmra.mrb[0].mxu0 %v5533
    %v5535 = vpop.f32.mrb[0].mxu0
    %v5536 = vadd.f32 %v5309, %v5535
    %v5537 = vpop.f32.mrb[0].mxu0
    %5538 = vmatprep.mubr.f32.mxu0 0.0
    %v5539 = vand.u32 %v4409, 4294901760
    %5540 = vmatmul.mubr.f32.gmra.mrb[0].mxu0 %v5539
    %v5541 = vpop.f32.mrb[0].mxu0
    %v5542 = vadd.f32 %v5317, %v5541
    %v5543 = vpop.f32.mrb[0].mxu0
    %5544 = vmatprep.mubr.f32.mxu0 0.0
    %v5545 = vand.u32 %v4416, 4294901760
    %5546 = vmatmul.mubr.f32.gmra.mrb[0].mxu0 %v5545
    %v5547 = vpop.f32.mrb[0].mxu0
    %v5548 = vadd.f32 %v5325, %v5547
    %v5549 = vpop.f32.mrb[0].mxu0
    %5550 = vmatprep.mubr.f32.mxu0 0.0
    %v5551 = vand.u32 %v4423, 4294901760
    %5552 = vmatmul.mubr.f32.gmra.mrb[0].mxu0 %v5551
    %v5553 = vpop.f32.mrb[0].mxu0
    %v5554 = vadd.f32 %v5333, %v5553
    %v5555 = vpop.f32.mrb[0].mxu0
    %5556 = vmatprep.mubr.f32.mxu0 0.0
    %v5557 = vand.u32 %v4430, 4294901760
    %5558 = vmatmul.mubr.f32.gmra.mrb[0].mxu0 %v5557
    %v5559 = vpop.f32.mrb[0].mxu0
    %v5560 = vadd.f32 %v5341, %v5559
    %v5561 = vpop.f32.mrb[0].mxu0
    %5562 = vmatprep.mubr.f32.mxu0 0.0
    %v5563 = vand.u32 %v4437, 4294901760
    %5564 = vmatmul.mubr.f32.gmra.mrb[0].mxu0 %v5563
    %v5565 = vpop.f32.mrb[0].mxu0
    %v5566 = vadd.f32 %v5349, %v5565
    %v5567 = vpop.f32.mrb[0].mxu0
    %5568 = vmatprep.mubr.f32.mxu0 0.0
    %v5569 = vand.u32 %v4444, 4294901760
    %5570 = vmatmul.mubr.f32.gmra.mrb[0].mxu0 %v5569
    %v5571 = vpop.f32.mrb[0].mxu0
    %v5572 = vadd.f32 %v5357, %v5571
    %v5573 = vpop.f32.mrb[0].mxu0
    %5574 = vmatprep.mubr.f32.mxu0 0.0
    %v5575 = vand.u32 %v4451, 4294901760
    %5576 = vmatmul.mubr.f32.gmra.mrb[0].mxu0 %v5575
    %v5577 = vpop.f32.mrb[0].mxu0
    %v5578 = vadd.f32 %v5365, %v5577
    %v5579 = vpop.f32.mrb[0].mxu0
    %5580 = vmatprep.mubr.f32.mxu0 0.0
    %v5581 = vand.u32 %v4458, 4294901760
    %5582 = vmatmul.mubr.f32.gmra.mrb[0].mxu0 %v5581
    %v5583 = vpop.f32.mrb[0].mxu0
    %v5584 = vadd.f32 %v5373, %v5583
    %v5585 = vpop.f32.mrb[0].mxu0
    %5586 = vmatprep.mubr.f32.mxu0 0.0
    %v5587 = vand.u32 %v4465, 4294901760
    %5588 = vmatmul.mubr.f32.gmra.mrb[0].mxu0 %v5587
    %v5589 = vpop.f32.mrb[0].mxu0
    %v5590 = vadd.f32 %v5381, %v5589
    %v5591 = vpop.f32.mrb[0].mxu0
    %5592 = vdwg.mxu0
    %5593 = vmatprep.subr.mxu0 0.0
    %v5594 = vand.u32 %v4468, 4294901760
    %5595 = vmatpush1.msra.mxu0 %v5594
    %5596 = vmatprep.subr.mxu0 0.0
    %v5597 = vand.u32 %v4469, 4294901760
    %5598 = vmatpush1.msra.mxu0 %v5597
    %5599 = vmatprep.subr.mxu0 0.0
    %v5600 = vand.u32 %v4470, 4294901760
    %5601 = vmatpush1.msra.mxu0 %v5600
    %5602 = vmatprep.subr.mxu0 0.0
    %v5603 = vand.u32 %v4471, 4294901760
    %5604 = vmatpush1.msra.mxu0 %v5603
    %5605 = vmatprep.subr.mxu0 0.0
    %v5606 = vand.u32 %v4472, 4294901760
    %5607 = vmatpush1.msra.mxu0 %v5606
    %5608 = vmatprep.subr.mxu0 0.0
    %v5609 = vand.u32 %v4473, 4294901760
    %5610 = vmatpush1.msra.mxu0 %v5609
    %5611 = vmatprep.subr.mxu0 0.0
    %v5612 = vand.u32 %v4474, 4294901760
    %5613 = vmatpush1.msra.mxu0 %v5612
    %5614 = vmatprep.subr.mxu0 0.0
    %v5615 = vand.u32 %v4475, 4294901760
    %5616 = vmatpush1.msra.mxu0 %v5615
    %5617 = vmatprep.subr.mxu0 0.0
    %v5618 = vand.u32 %v4476, 4294901760
    %5619 = vmatpush1.msra.mxu0 %v5618
    %5620 = vmatprep.subr.mxu0 0.0
    %v5621 = vand.u32 %v4477, 4294901760
    %5622 = vmatpush1.msra.mxu0 %v5621
    %5623 = vmatprep.subr.mxu0 0.0
    %v5624 = vand.u32 %v4478, 4294901760
    %5625 = vmatpush1.msra.mxu0 %v5624
    %5626 = vmatprep.subr.mxu0 0.0
    %v5627 = vand.u32 %v4479, 4294901760
    %5628 = vmatpush1.msra.mxu0 %v5627
    %5629 = vmatprep.subr.mxu0 0.0
    %v5630 = vand.u32 %v4480, 4294901760
    %5631 = vmatpush1.msra.mxu0 %v5630
    %5632 = vmatprep.subr.mxu0 0.0
    %v5633 = vand.u32 %v4481, 4294901760
    %5634 = vmatpush1.msra.mxu0 %v5633
    %5635 = vmatprep.subr.mxu0 0.0
    %v5636 = vand.u32 %v4482, 4294901760
    %5637 = vmatpush1.msra.mxu0 %v5636
    %5638 = vmatprep.subr.mxu0 0.0
    %v5639 = vand.u32 %v4483, 4294901760
    %5640 = vmatpush1.msra.mxu0 %v5639
    %5641 = vmatprep.subr.mxu0 0.0
    %5642 = vmatpush1.msra.mxu0 0.0
    %5643 = vmatprep.subr.mxu0 0.0
    %5644 = vmatpush1.msra.mxu0 0.0
    %5645 = vmatprep.subr.mxu0 0.0
    %5646 = vmatpush1.msra.mxu0 0.0
    %5647 = vmatprep.subr.mxu0 0.0
    %5648 = vmatpush1.msra.mxu0 0.0
    %5649 = vmatprep.subr.mxu0 0.0
    %5650 = vmatpush1.msra.mxu0 0.0
    %5651 = vmatprep.subr.mxu0 0.0
    %5652 = vmatpush1.msra.mxu0 0.0
    %5653 = vmatprep.subr.mxu0 0.0
    %5654 = vmatpush1.msra.mxu0 0.0
    %5655 = vmatprep.subr.mxu0 0.0
    %5656 = vmatpush1.msra.mxu0 0.0
    %5657 = vmatprep.subr.mxu0 0.0
    %5658 = vmatpush1.msra.mxu0 0.0
    %5659 = vmatprep.subr.mxu0 0.0
    %5660 = vmatpush1.msra.mxu0 0.0
    %5661 = vmatprep.subr.mxu0 0.0
    %5662 = vmatpush1.msra.mxu0 0.0
    %5663 = vmatprep.subr.mxu0 0.0
    %5664 = vmatpush1.msra.mxu0 0.0
    %5665 = vmatprep.subr.mxu0 0.0
    %5666 = vmatpush1.msra.mxu0 0.0
    %5667 = vmatprep.subr.mxu0 0.0
    %5668 = vmatpush1.msra.mxu0 0.0
    %5669 = vmatprep.subr.mxu0 0.0
    %5670 = vmatpush1.msra.mxu0 0.0
    %5671 = vmatprep.subr.mxu0 0.0
    %5672 = vmatpush1.msra.mxu0 0.0
    %5673 = vmatprep.mubr.f32.mxu0 0.0
    %v5674 = vand.u32 %v4360, 4294901760
    %5675 = vmatmul.mubr.f32.gmra.mrb[0].mxu0 %v5674
    %v5676 = vpop.f32.mrb[0].mxu0
    %v5677 = vadd.f32 %v5500, %v5676
    %v5678 = vpop.f32.mrb[0].mxu0
    %5679 = vmatprep.mubr.f32.mxu0 0.0
    %v5680 = vand.u32 %v4367, 4294901760
    %5681 = vmatmul.mubr.f32.gmra.mrb[0].mxu0 %v5680
    %v5682 = vpop.f32.mrb[0].mxu0
    %v5683 = vadd.f32 %v5506, %v5682
    %v5684 = vpop.f32.mrb[0].mxu0
    %5685 = vmatprep.mubr.f32.mxu0 0.0
    %v5686 = vand.u32 %v4374, 4294901760
    %5687 = vmatmul.mubr.f32.gmra.mrb[0].mxu0 %v5686
    %v5688 = vpop.f32.mrb[0].mxu0
    %v5689 = vadd.f32 %v5512, %v5688
    %v5690 = vpop.f32.mrb[0].mxu0
    %5691 = vmatprep.mubr.f32.mxu0 0.0
    %v5692 = vand.u32 %v4381, 4294901760
    %5693 = vmatmul.mubr.f32.gmra.mrb[0].mxu0 %v5692
    %v5694 = vpop.f32.mrb[0].mxu0
    %v5695 = vadd.f32 %v5518, %v5694
    %v5696 = vpop.f32.mrb[0].mxu0
    %5697 = vmatprep.mubr.f32.mxu0 0.0
    %v5698 = vand.u32 %v4388, 4294901760
    %5699 = vmatmul.mubr.f32.gmra.mrb[0].mxu0 %v5698
    %v5700 = vpop.f32.mrb[0].mxu0
    %v5701 = vadd.f32 %v5524, %v5700
    %v5702 = vpop.f32.mrb[0].mxu0
    %5703 = vmatprep.mubr.f32.mxu0 0.0
    %v5704 = vand.u32 %v4395, 4294901760
    %5705 = vmatmul.mubr.f32.gmra.mrb[0].mxu0 %v5704
    %v5706 = vpop.f32.mrb[0].mxu0
    %v5707 = vadd.f32 %v5530, %v5706
    %v5708 = vpop.f32.mrb[0].mxu0
    %5709 = vmatprep.mubr.f32.mxu0 0.0
    %v5710 = vand.u32 %v4402, 4294901760
    %5711 = vmatmul.mubr.f32.gmra.mrb[0].mxu0 %v5710
    %v5712 = vpop.f32.mrb[0].mxu0
    %v5713 = vadd.f32 %v5536, %v5712
    %v5714 = vpop.f32.mrb[0].mxu0
    %5715 = vmatprep.mubr.f32.mxu0 0.0
    %v5716 = vand.u32 %v4409, 4294901760
    %5717 = vmatmul.mubr.f32.gmra.mrb[0].mxu0 %v5716
    %v5718 = vpop.f32.mrb[0].mxu0
    %v5719 = vadd.f32 %v5542, %v5718
    %v5720 = vpop.f32.mrb[0].mxu0
    %5721 = vmatprep.mubr.f32.mxu0 0.0
    %v5722 = vand.u32 %v4416, 4294901760
    %5723 = vmatmul.mubr.f32.gmra.mrb[0].mxu0 %v5722
    %v5724 = vpop.f32.mrb[0].mxu0
    %v5725 = vadd.f32 %v5548, %v5724
    %v5726 = vpop.f32.mrb[0].mxu0
    %5727 = vmatprep.mubr.f32.mxu0 0.0
    %v5728 = vand.u32 %v4423, 4294901760
    %5729 = vmatmul.mubr.f32.gmra.mrb[0].mxu0 %v5728
    %v5730 = vpop.f32.mrb[0].mxu0
    %v5731 = vadd.f32 %v5554, %v5730
    %v5732 = vpop.f32.mrb[0].mxu0
    %5733 = vmatprep.mubr.f32.mxu0 0.0
    %v5734 = vand.u32 %v4430, 4294901760
    %5735 = vmatmul.mubr.f32.gmra.mrb[0].mxu0 %v5734
    %v5736 = vpop.f32.mrb[0].mxu0
    %v5737 = vadd.f32 %v5560, %v5736
    %v5738 = vpop.f32.mrb[0].mxu0
    %5739 = vmatprep.mubr.f32.mxu0 0.0
    %v5740 = vand.u32 %v4437, 4294901760
    %5741 = vmatmul.mubr.f32.gmra.mrb[0].mxu0 %v5740
    %v5742 = vpop.f32.mrb[0].mxu0
    %v5743 = vadd.f32 %v5566, %v5742
    %v5744 = vpop.f32.mrb[0].mxu0
    %5745 = vmatprep.mubr.f32.mxu0 0.0
    %v5746 = vand.u32 %v4444, 4294901760
    %5747 = vmatmul.mubr.f32.gmra.mrb[0].mxu0 %v5746
    %v5748 = vpop.f32.mrb[0].mxu0
    %v5749 = vadd.f32 %v5572, %v5748
    %v5750 = vpop.f32.mrb[0].mxu0
    %5751 = vmatprep.mubr.f32.mxu0 0.0
    %v5752 = vand.u32 %v4451, 4294901760
    %5753 = vmatmul.mubr.f32.gmra.mrb[0].mxu0 %v5752
    %v5754 = vpop.f32.mrb[0].mxu0
    %v5755 = vadd.f32 %v5578, %v5754
    %v5756 = vpop.f32.mrb[0].mxu0
    %5757 = vmatprep.mubr.f32.mxu0 0.0
    %v5758 = vand.u32 %v4458, 4294901760
    %5759 = vmatmul.mubr.f32.gmra.mrb[0].mxu0 %v5758
    %v5760 = vpop.f32.mrb[0].mxu0
    %v5761 = vadd.f32 %v5584, %v5760
    %v5762 = vpop.f32.mrb[0].mxu0
    %5763 = vmatprep.mubr.f32.mxu0 0.0
    %v5764 = vand.u32 %v4465, 4294901760
    %5765 = vmatmul.mubr.f32.gmra.mrb[0].mxu0 %v5764
    %v5766 = vpop.f32.mrb[0].mxu0
    %v5767 = vadd.f32 %v5590, %v5766
    %v5768 = vpop.f32.mrb[0].mxu0
    %5769 = vdwg.mxu0
    %5770 = vmatprep.subr.mxu0 0.0
    %v5771 = vand.u32 %v5677, 4294901760
    %5772 = vmatpush1.msra.mxu0 %v5771
    %5773 = vmatprep.subr.mxu0 0.0
    %v5774 = vand.u32 %v5683, 4294901760
    %5775 = vmatpush1.msra.mxu0 %v5774
    %5776 = vmatprep.subr.mxu0 0.0
    %v5777 = vand.u32 %v5689, 4294901760
    %5778 = vmatpush1.msra.mxu0 %v5777
    %5779 = vmatprep.subr.mxu0 0.0
    %v5780 = vand.u32 %v5695, 4294901760
    %5781 = vmatpush1.msra.mxu0 %v5780
    %5782 = vmatprep.subr.mxu0 0.0
    %v5783 = vand.u32 %v5701, 4294901760
    %5784 = vmatpush1.msra.mxu0 %v5783
    %5785 = vmatprep.subr.mxu0 0.0
    %v5786 = vand.u32 %v5707, 4294901760
    %5787 = vmatpush1.msra.mxu0 %v5786
    %5788 = vmatprep.subr.mxu0 0.0
    %v5789 = vand.u32 %v5713, 4294901760
    %5790 = vmatpush1.msra.mxu0 %v5789
    %5791 = vmatprep.subr.mxu0 0.0
    %v5792 = vand.u32 %v5719, 4294901760
    %5793 = vmatpush1.msra.mxu0 %v5792
    %5794 = vmatprep.subr.mxu0 0.0
    %v5795 = vand.u32 %v5725, 4294901760
    %5796 = vmatpush1.msra.mxu0 %v5795
    %5797 = vmatprep.subr.mxu0 0.0
    %v5798 = vand.u32 %v5731, 4294901760
    %5799 = vmatpush1.msra.mxu0 %v5798
    %5800 = vmatprep.subr.mxu0 0.0
    %v5801 = vand.u32 %v5737, 4294901760
    %5802 = vmatpush1.msra.mxu0 %v5801
    %5803 = vmatprep.subr.mxu0 0.0
    %v5804 = vand.u32 %v5743, 4294901760
    %5805 = vmatpush1.msra.mxu0 %v5804
    %5806 = vmatprep.subr.mxu0 0.0
    %v5807 = vand.u32 %v5749, 4294901760
    %5808 = vmatpush1.msra.mxu0 %v5807
    %5809 = vmatprep.subr.mxu0 0.0
    %v5810 = vand.u32 %v5755, 4294901760
    %5811 = vmatpush1.msra.mxu0 %v5810
    %5812 = vmatprep.subr.mxu0 0.0
    %v5813 = vand.u32 %v5761, 4294901760
    %5814 = vmatpush1.msra.mxu0 %v5813
    %5815 = vmatprep.subr.mxu0 0.0
    %v5816 = vand.u32 %v5767, 4294901760
    %5817 = vmatpush1.msra.mxu0 %v5816
    %5818 = vmatprep.subr.mxu0 0.0
    %5819 = vmatpush1.msra.mxu0 0.0
    %5820 = vmatprep.subr.mxu0 0.0
    %5821 = vmatpush1.msra.mxu0 0.0
    %5822 = vmatprep.subr.mxu0 0.0
    %5823 = vmatpush1.msra.mxu0 0.0
    %5824 = vmatprep.subr.mxu0 0.0
    %5825 = vmatpush1.msra.mxu0 0.0
    %5826 = vmatprep.subr.mxu0 0.0
    %5827 = vmatpush1.msra.mxu0 0.0
    %5828 = vmatprep.subr.mxu0 0.0
    %5829 = vmatpush1.msra.mxu0 0.0
    %5830 = vmatprep.subr.mxu0 0.0
    %5831 = vmatpush1.msra.mxu0 0.0
    %5832 = vmatprep.subr.mxu0 0.0
    %5833 = vmatpush1.msra.mxu0 0.0
    %5834 = vmatprep.subr.mxu0 0.0
    %5835 = vmatpush1.msra.mxu0 0.0
    %5836 = vmatprep.subr.mxu0 0.0
    %5837 = vmatpush1.msra.mxu0 0.0
    %5838 = vmatprep.subr.mxu0 0.0
    %5839 = vmatpush1.msra.mxu0 0.0
    %5840 = vmatprep.subr.mxu0 0.0
    %5841 = vmatpush1.msra.mxu0 0.0
    %5842 = vmatprep.subr.mxu0 0.0
    %5843 = vmatpush1.msra.mxu0 0.0
    %5844 = vmatprep.subr.mxu0 0.0
    %5845 = vmatpush1.msra.mxu0 0.0
    %5846 = vmatprep.subr.mxu0 0.0
    %5847 = vmatpush1.msra.mxu0 0.0
    %5848 = vmatprep.subr.mxu0 0.0
    %5849 = vmatpush1.msra.mxu0 0.0
    %5850 = vmatprep.mubr.f32.mxu0 0.0
    %v5851 = vand.u32 %v872, 4294901760
    %v5852 = vsub.f32 %v872, %v5851
    %v5853 = vand.u32 %v5852, 4294901760
    %v5854 = vsub.f32 %v5852, %v5853
    %v5855 = vand.u32 %v5854, 4294901760
    %5856 = vmatmul.mubr.f32.gmra.mrb[0].mxu0 %v5855
    %v5857 = vpop.f32.mrb[0].mxu0
    %v5858 = vadd.f32 0.0, %v5857
    %v5859 = vpop.f32.mrb[0].mxu0
    %5860 = vmatprep.mubr.f32.mxu0 0.0
    %v5861 = vand.u32 %v873, 4294901760
    %v5862 = vsub.f32 %v873, %v5861
    %v5863 = vand.u32 %v5862, 4294901760
    %v5864 = vsub.f32 %v5862, %v5863
    %v5865 = vand.u32 %v5864, 4294901760
    %5866 = vmatmul.mubr.f32.gmra.mrb[0].mxu0 %v5865
    %v5867 = vpop.f32.mrb[0].mxu0
    %v5868 = vadd.f32 0.0, %v5867
    %v5869 = vpop.f32.mrb[0].mxu0
    %5870 = vmatprep.mubr.f32.mxu0 0.0
    %v5871 = vand.u32 %v874, 4294901760
    %v5872 = vsub.f32 %v874, %v5871
    %v5873 = vand.u32 %v5872, 4294901760
    %v5874 = vsub.f32 %v5872, %v5873
    %v5875 = vand.u32 %v5874, 4294901760
    %5876 = vmatmul.mubr.f32.gmra.mrb[0].mxu0 %v5875
    %v5877 = vpop.f32.mrb[0].mxu0
    %v5878 = vadd.f32 0.0, %v5877
    %v5879 = vpop.f32.mrb[0].mxu0
    %5880 = vmatprep.mubr.f32.mxu0 0.0
    %v5881 = vand.u32 %v875, 4294901760
    %v5882 = vsub.f32 %v875, %v5881
    %v5883 = vand.u32 %v5882, 4294901760
    %v5884 = vsub.f32 %v5882, %v5883
    %v5885 = vand.u32 %v5884, 4294901760
    %5886 = vmatmul.mubr.f32.gmra.mrb[0].mxu0 %v5885
    %v5887 = vpop.f32.mrb[0].mxu0
    %v5888 = vadd.f32 0.0, %v5887
    %v5889 = vpop.f32.mrb[0].mxu0
    %5890 = vmatprep.mubr.f32.mxu0 0.0
    %v5891 = vand.u32 %v876, 4294901760
    %v5892 = vsub.f32 %v876, %v5891
    %v5893 = vand.u32 %v5892, 4294901760
    %v5894 = vsub.f32 %v5892, %v5893
    %v5895 = vand.u32 %v5894, 4294901760
    %5896 = vmatmul.mubr.f32.gmra.mrb[0].mxu0 %v5895
    %v5897 = vpop.f32.mrb[0].mxu0
    %v5898 = vadd.f32 0.0, %v5897
    %v5899 = vpop.f32.mrb[0].mxu0
    %5900 = vmatprep.mubr.f32.mxu0 0.0
    %v5901 = vand.u32 %v877, 4294901760
    %v5902 = vsub.f32 %v877, %v5901
    %v5903 = vand.u32 %v5902, 4294901760
    %v5904 = vsub.f32 %v5902, %v5903
    %v5905 = vand.u32 %v5904, 4294901760
    %5906 = vmatmul.mubr.f32.gmra.mrb[0].mxu0 %v5905
    %v5907 = vpop.f32.mrb[0].mxu0
    %v5908 = vadd.f32 0.0, %v5907
    %v5909 = vpop.f32.mrb[0].mxu0
    %5910 = vmatprep.mubr.f32.mxu0 0.0
    %v5911 = vand.u32 %v878, 4294901760
    %v5912 = vsub.f32 %v878, %v5911
    %v5913 = vand.u32 %v5912, 4294901760
    %v5914 = vsub.f32 %v5912, %v5913
    %v5915 = vand.u32 %v5914, 4294901760
    %5916 = vmatmul.mubr.f32.gmra.mrb[0].mxu0 %v5915
    %v5917 = vpop.f32.mrb[0].mxu0
    %v5918 = vadd.f32 0.0, %v5917
    %v5919 = vpop.f32.mrb[0].mxu0
    %5920 = vmatprep.mubr.f32.mxu0 0.0
    %v5921 = vand.u32 %v879, 4294901760
    %v5922 = vsub.f32 %v879, %v5921
    %v5923 = vand.u32 %v5922, 4294901760
    %v5924 = vsub.f32 %v5922, %v5923
    %v5925 = vand.u32 %v5924, 4294901760
    %5926 = vmatmul.mubr.f32.gmra.mrb[0].mxu0 %v5925
    %v5927 = vpop.f32.mrb[0].mxu0
    %v5928 = vadd.f32 0.0, %v5927
    %v5929 = vpop.f32.mrb[0].mxu0
    %5930 = vmatprep.mubr.f32.mxu0 0.0
    %v5931 = vand.u32 %v880, 4294901760
    %v5932 = vsub.f32 %v880, %v5931
    %v5933 = vand.u32 %v5932, 4294901760
    %v5934 = vsub.f32 %v5932, %v5933
    %v5935 = vand.u32 %v5934, 4294901760
    %5936 = vmatmul.mubr.f32.gmra.mrb[0].mxu0 %v5935
    %v5937 = vpop.f32.mrb[0].mxu0
    %v5938 = vadd.f32 0.0, %v5937
    %v5939 = vpop.f32.mrb[0].mxu0
    %5940 = vmatprep.mubr.f32.mxu0 0.0
    %v5941 = vand.u32 %v881, 4294901760
    %v5942 = vsub.f32 %v881, %v5941
    %v5943 = vand.u32 %v5942, 4294901760
    %v5944 = vsub.f32 %v5942, %v5943
    %v5945 = vand.u32 %v5944, 4294901760
    %5946 = vmatmul.mubr.f32.gmra.mrb[0].mxu0 %v5945
    %v5947 = vpop.f32.mrb[0].mxu0
    %v5948 = vadd.f32 0.0, %v5947
    %v5949 = vpop.f32.mrb[0].mxu0
    %5950 = vmatprep.mubr.f32.mxu0 0.0
    %v5951 = vand.u32 %v882, 4294901760
    %v5952 = vsub.f32 %v882, %v5951
    %v5953 = vand.u32 %v5952, 4294901760
    %v5954 = vsub.f32 %v5952, %v5953
    %v5955 = vand.u32 %v5954, 4294901760
    %5956 = vmatmul.mubr.f32.gmra.mrb[0].mxu0 %v5955
    %v5957 = vpop.f32.mrb[0].mxu0
    %v5958 = vadd.f32 0.0, %v5957
    %v5959 = vpop.f32.mrb[0].mxu0
    %5960 = vmatprep.mubr.f32.mxu0 0.0
    %v5961 = vand.u32 %v883, 4294901760
    %v5962 = vsub.f32 %v883, %v5961
    %v5963 = vand.u32 %v5962, 4294901760
    %v5964 = vsub.f32 %v5962, %v5963
    %v5965 = vand.u32 %v5964, 4294901760
    %5966 = vmatmul.mubr.f32.gmra.mrb[0].mxu0 %v5965
    %v5967 = vpop.f32.mrb[0].mxu0
    %v5968 = vadd.f32 0.0, %v5967
    %v5969 = vpop.f32.mrb[0].mxu0
    %5970 = vmatprep.mubr.f32.mxu0 0.0
    %v5971 = vand.u32 %v884, 4294901760
    %v5972 = vsub.f32 %v884, %v5971
    %v5973 = vand.u32 %v5972, 4294901760
    %v5974 = vsub.f32 %v5972, %v5973
    %v5975 = vand.u32 %v5974, 4294901760
    %5976 = vmatmul.mubr.f32.gmra.mrb[0].mxu0 %v5975
    %v5977 = vpop.f32.mrb[0].mxu0
    %v5978 = vadd.f32 0.0, %v5977
    %v5979 = vpop.f32.mrb[0].mxu0
    %5980 = vmatprep.mubr.f32.mxu0 0.0
    %v5981 = vand.u32 %v885, 4294901760
    %v5982 = vsub.f32 %v885, %v5981
    %v5983 = vand.u32 %v5982, 4294901760
    %v5984 = vsub.f32 %v5982, %v5983
    %v5985 = vand.u32 %v5984, 4294901760
    %5986 = vmatmul.mubr.f32.gmra.mrb[0].mxu0 %v5985
    %v5987 = vpop.f32.mrb[0].mxu0
    %v5988 = vadd.f32 0.0, %v5987
    %v5989 = vpop.f32.mrb[0].mxu0
    %5990 = vmatprep.mubr.f32.mxu0 0.0
    %v5991 = vand.u32 %v886, 4294901760
    %v5992 = vsub.f32 %v886, %v5991
    %v5993 = vand.u32 %v5992, 4294901760
    %v5994 = vsub.f32 %v5992, %v5993
    %v5995 = vand.u32 %v5994, 4294901760
    %5996 = vmatmul.mubr.f32.gmra.mrb[0].mxu0 %v5995
    %v5997 = vpop.f32.mrb[0].mxu0
    %v5998 = vadd.f32 0.0, %v5997
    %v5999 = vpop.f32.mrb[0].mxu0
    %6000 = vmatprep.mubr.f32.mxu0 0.0
    %v6001 = vand.u32 %v887, 4294901760
    %v6002 = vsub.f32 %v887, %v6001
    %v6003 = vand.u32 %v6002, 4294901760
    %v6004 = vsub.f32 %v6002, %v6003
    %v6005 = vand.u32 %v6004, 4294901760
    %6006 = vmatmul.mubr.f32.gmra.mrb[0].mxu0 %v6005
    %v6007 = vpop.f32.mrb[0].mxu0
    %v6008 = vadd.f32 0.0, %v6007
    %v6009 = vpop.f32.mrb[0].mxu0
    %6010 = vmatprep.mubr.f32.mxu0 0.0
    %v6011 = vand.u32 %v888, 4294901760
    %v6012 = vsub.f32 %v888, %v6011
    %v6013 = vand.u32 %v6012, 4294901760
    %v6014 = vsub.f32 %v6012, %v6013
    %v6015 = vand.u32 %v6014, 4294901760
    %6016 = vmatmul.mubr.f32.gmra.mrb[0].mxu0 %v6015
    %v6017 = vpop.f32.mrb[0].mxu0
    %v6018 = vadd.f32 0.0, %v6017
    %v6019 = vpop.f32.mrb[0].mxu0
    %6020 = vmatprep.mubr.f32.mxu0 0.0
    %v6021 = vand.u32 %v889, 4294901760
    %v6022 = vsub.f32 %v889, %v6021
    %v6023 = vand.u32 %v6022, 4294901760
    %v6024 = vsub.f32 %v6022, %v6023
    %v6025 = vand.u32 %v6024, 4294901760
    %6026 = vmatmul.mubr.f32.gmra.mrb[0].mxu0 %v6025
    %v6027 = vpop.f32.mrb[0].mxu0
    %v6028 = vadd.f32 0.0, %v6027
    %v6029 = vpop.f32.mrb[0].mxu0
    %6030 = vmatprep.mubr.f32.mxu0 0.0
    %v6031 = vand.u32 %v890, 4294901760
    %v6032 = vsub.f32 %v890, %v6031
    %v6033 = vand.u32 %v6032, 4294901760
    %v6034 = vsub.f32 %v6032, %v6033
    %v6035 = vand.u32 %v6034, 4294901760
    %6036 = vmatmul.mubr.f32.gmra.mrb[0].mxu0 %v6035
    %v6037 = vpop.f32.mrb[0].mxu0
    %v6038 = vadd.f32 0.0, %v6037
    %v6039 = vpop.f32.mrb[0].mxu0
    %6040 = vmatprep.mubr.f32.mxu0 0.0
    %v6041 = vand.u32 %v891, 4294901760
    %v6042 = vsub.f32 %v891, %v6041
    %v6043 = vand.u32 %v6042, 4294901760
    %v6044 = vsub.f32 %v6042, %v6043
    %v6045 = vand.u32 %v6044, 4294901760
    %6046 = vmatmul.mubr.f32.gmra.mrb[0].mxu0 %v6045
    %v6047 = vpop.f32.mrb[0].mxu0
    %v6048 = vadd.f32 0.0, %v6047
    %v6049 = vpop.f32.mrb[0].mxu0
    %6050 = vmatprep.mubr.f32.mxu0 0.0
    %v6051 = vand.u32 %v892, 4294901760
    %v6052 = vsub.f32 %v892, %v6051
    %v6053 = vand.u32 %v6052, 4294901760
    %v6054 = vsub.f32 %v6052, %v6053
    %v6055 = vand.u32 %v6054, 4294901760
    %6056 = vmatmul.mubr.f32.gmra.mrb[0].mxu0 %v6055
    %v6057 = vpop.f32.mrb[0].mxu0
    %v6058 = vadd.f32 0.0, %v6057
    %v6059 = vpop.f32.mrb[0].mxu0
    %6060 = vmatprep.mubr.f32.mxu0 0.0
    %v6061 = vand.u32 %v893, 4294901760
    %v6062 = vsub.f32 %v893, %v6061
    %v6063 = vand.u32 %v6062, 4294901760
    %v6064 = vsub.f32 %v6062, %v6063
    %v6065 = vand.u32 %v6064, 4294901760
    %6066 = vmatmul.mubr.f32.gmra.mrb[0].mxu0 %v6065
    %v6067 = vpop.f32.mrb[0].mxu0
    %v6068 = vadd.f32 0.0, %v6067
    %v6069 = vpop.f32.mrb[0].mxu0
    %6070 = vmatprep.mubr.f32.mxu0 0.0
    %v6071 = vand.u32 %v894, 4294901760
    %v6072 = vsub.f32 %v894, %v6071
    %v6073 = vand.u32 %v6072, 4294901760
    %v6074 = vsub.f32 %v6072, %v6073
    %v6075 = vand.u32 %v6074, 4294901760
    %6076 = vmatmul.mubr.f32.gmra.mrb[0].mxu0 %v6075
    %v6077 = vpop.f32.mrb[0].mxu0
    %v6078 = vadd.f32 0.0, %v6077
    %v6079 = vpop.f32.mrb[0].mxu0
    %6080 = vmatprep.mubr.f32.mxu0 0.0
    %v6081 = vand.u32 %v895, 4294901760
    %v6082 = vsub.f32 %v895, %v6081
    %v6083 = vand.u32 %v6082, 4294901760
    %v6084 = vsub.f32 %v6082, %v6083
    %v6085 = vand.u32 %v6084, 4294901760
    %6086 = vmatmul.mubr.f32.gmra.mrb[0].mxu0 %v6085
    %v6087 = vpop.f32.mrb[0].mxu0
    %v6088 = vadd.f32 0.0, %v6087
    %v6089 = vpop.f32.mrb[0].mxu0
    %6090 = vmatprep.mubr.f32.mxu0 0.0
    %v6091 = vand.u32 %v896, 4294901760
    %v6092 = vsub.f32 %v896, %v6091
    %v6093 = vand.u32 %v6092, 4294901760
    %v6094 = vsub.f32 %v6092, %v6093
    %v6095 = vand.u32 %v6094, 4294901760
    %6096 = vmatmul.mubr.f32.gmra.mrb[0].mxu0 %v6095
    %v6097 = vpop.f32.mrb[0].mxu0
    %v6098 = vadd.f32 0.0, %v6097
    %v6099 = vpop.f32.mrb[0].mxu0
    %6100 = vmatprep.mubr.f32.mxu0 0.0
    %v6101 = vand.u32 %v897, 4294901760
    %v6102 = vsub.f32 %v897, %v6101
    %v6103 = vand.u32 %v6102, 4294901760
    %v6104 = vsub.f32 %v6102, %v6103
    %v6105 = vand.u32 %v6104, 4294901760
    %6106 = vmatmul.mubr.f32.gmra.mrb[0].mxu0 %v6105
    %v6107 = vpop.f32.mrb[0].mxu0
    %v6108 = vadd.f32 0.0, %v6107
    %v6109 = vpop.f32.mrb[0].mxu0
    %6110 = vmatprep.mubr.f32.mxu0 0.0
    %v6111 = vand.u32 %v898, 4294901760
    %v6112 = vsub.f32 %v898, %v6111
    %v6113 = vand.u32 %v6112, 4294901760
    %v6114 = vsub.f32 %v6112, %v6113
    %v6115 = vand.u32 %v6114, 4294901760
    %6116 = vmatmul.mubr.f32.gmra.mrb[0].mxu0 %v6115
    %v6117 = vpop.f32.mrb[0].mxu0
    %v6118 = vadd.f32 0.0, %v6117
    %v6119 = vpop.f32.mrb[0].mxu0
    %6120 = vmatprep.mubr.f32.mxu0 0.0
    %v6121 = vand.u32 %v899, 4294901760
    %v6122 = vsub.f32 %v899, %v6121
    %v6123 = vand.u32 %v6122, 4294901760
    %v6124 = vsub.f32 %v6122, %v6123
    %v6125 = vand.u32 %v6124, 4294901760
    %6126 = vmatmul.mubr.f32.gmra.mrb[0].mxu0 %v6125
    %v6127 = vpop.f32.mrb[0].mxu0
    %v6128 = vadd.f32 0.0, %v6127
    %v6129 = vpop.f32.mrb[0].mxu0
    %6130 = vmatprep.mubr.f32.mxu0 0.0
    %v6131 = vand.u32 %v900, 4294901760
    %v6132 = vsub.f32 %v900, %v6131
    %v6133 = vand.u32 %v6132, 4294901760
    %v6134 = vsub.f32 %v6132, %v6133
    %v6135 = vand.u32 %v6134, 4294901760
    %6136 = vmatmul.mubr.f32.gmra.mrb[0].mxu0 %v6135
    %v6137 = vpop.f32.mrb[0].mxu0
    %v6138 = vadd.f32 0.0, %v6137
    %v6139 = vpop.f32.mrb[0].mxu0
    %6140 = vmatprep.mubr.f32.mxu0 0.0
    %v6141 = vand.u32 %v901, 4294901760
    %v6142 = vsub.f32 %v901, %v6141
    %v6143 = vand.u32 %v6142, 4294901760
    %v6144 = vsub.f32 %v6142, %v6143
    %v6145 = vand.u32 %v6144, 4294901760
    %6146 = vmatmul.mubr.f32.gmra.mrb[0].mxu0 %v6145
    %v6147 = vpop.f32.mrb[0].mxu0
    %v6148 = vadd.f32 0.0, %v6147
    %v6149 = vpop.f32.mrb[0].mxu0
    %6150 = vmatprep.mubr.f32.mxu0 0.0
    %v6151 = vand.u32 %v902, 4294901760
    %v6152 = vsub.f32 %v902, %v6151
    %v6153 = vand.u32 %v6152, 4294901760
    %v6154 = vsub.f32 %v6152, %v6153
    %v6155 = vand.u32 %v6154, 4294901760
    %6156 = vmatmul.mubr.f32.gmra.mrb[0].mxu0 %v6155
    %v6157 = vpop.f32.mrb[0].mxu0
    %v6158 = vadd.f32 0.0, %v6157
    %v6159 = vpop.f32.mrb[0].mxu0
    %6160 = vmatprep.mubr.f32.mxu0 0.0
    %v6161 = vand.u32 %v903, 4294901760
    %v6162 = vsub.f32 %v903, %v6161
    %v6163 = vand.u32 %v6162, 4294901760
    %v6164 = vsub.f32 %v6162, %v6163
    %v6165 = vand.u32 %v6164, 4294901760
    %6166 = vmatmul.mubr.f32.gmra.mrb[0].mxu0 %v6165
    %v6167 = vpop.f32.mrb[0].mxu0
    %v6168 = vadd.f32 0.0, %v6167
    %v6169 = vpop.f32.mrb[0].mxu0
    %6170 = vmatprep.mubr.f32.mxu0 0.0
    %v6171 = vand.u32 %v904, 4294901760
    %v6172 = vsub.f32 %v904, %v6171
    %v6173 = vand.u32 %v6172, 4294901760
    %v6174 = vsub.f32 %v6172, %v6173
    %v6175 = vand.u32 %v6174, 4294901760
    %6176 = vmatmul.mubr.f32.gmra.mrb[0].mxu0 %v6175
    %v6177 = vpop.f32.mrb[0].mxu0
    %v6178 = vadd.f32 0.0, %v6177
    %v6179 = vpop.f32.mrb[0].mxu0
    %6180 = vmatprep.mubr.f32.mxu0 0.0
    %v6181 = vand.u32 %v905, 4294901760
    %v6182 = vsub.f32 %v905, %v6181
    %v6183 = vand.u32 %v6182, 4294901760
    %v6184 = vsub.f32 %v6182, %v6183
    %v6185 = vand.u32 %v6184, 4294901760
    %6186 = vmatmul.mubr.f32.gmra.mrb[0].mxu0 %v6185
    %v6187 = vpop.f32.mrb[0].mxu0
    %v6188 = vadd.f32 0.0, %v6187
    %v6189 = vpop.f32.mrb[0].mxu0
    %6190 = vmatprep.mubr.f32.mxu0 0.0
    %v6191 = vand.u32 %v906, 4294901760
    %v6192 = vsub.f32 %v906, %v6191
    %v6193 = vand.u32 %v6192, 4294901760
    %v6194 = vsub.f32 %v6192, %v6193
    %v6195 = vand.u32 %v6194, 4294901760
    %6196 = vmatmul.mubr.f32.gmra.mrb[0].mxu0 %v6195
    %v6197 = vpop.f32.mrb[0].mxu0
    %v6198 = vadd.f32 0.0, %v6197
    %v6199 = vpop.f32.mrb[0].mxu0
    %6200 = vmatprep.mubr.f32.mxu0 0.0
    %v6201 = vand.u32 %v907, 4294901760
    %v6202 = vsub.f32 %v907, %v6201
    %v6203 = vand.u32 %v6202, 4294901760
    %v6204 = vsub.f32 %v6202, %v6203
    %v6205 = vand.u32 %v6204, 4294901760
    %6206 = vmatmul.mubr.f32.gmra.mrb[0].mxu0 %v6205
    %v6207 = vpop.f32.mrb[0].mxu0
    %v6208 = vadd.f32 0.0, %v6207
    %v6209 = vpop.f32.mrb[0].mxu0
    %6210 = vmatprep.mubr.f32.mxu0 0.0
    %v6211 = vand.u32 %v908, 4294901760
    %v6212 = vsub.f32 %v908, %v6211
    %v6213 = vand.u32 %v6212, 4294901760
    %v6214 = vsub.f32 %v6212, %v6213
    %v6215 = vand.u32 %v6214, 4294901760
    %6216 = vmatmul.mubr.f32.gmra.mrb[0].mxu0 %v6215
    %v6217 = vpop.f32.mrb[0].mxu0
    %v6218 = vadd.f32 0.0, %v6217
    %v6219 = vpop.f32.mrb[0].mxu0
    %6220 = vmatprep.mubr.f32.mxu0 0.0
    %v6221 = vand.u32 %v909, 4294901760
    %v6222 = vsub.f32 %v909, %v6221
    %v6223 = vand.u32 %v6222, 4294901760
    %v6224 = vsub.f32 %v6222, %v6223
    %v6225 = vand.u32 %v6224, 4294901760
    %6226 = vmatmul.mubr.f32.gmra.mrb[0].mxu0 %v6225
    %v6227 = vpop.f32.mrb[0].mxu0
    %v6228 = vadd.f32 0.0, %v6227
    %v6229 = vpop.f32.mrb[0].mxu0
    %6230 = vmatprep.mubr.f32.mxu0 0.0
    %v6231 = vand.u32 %v910, 4294901760
    %v6232 = vsub.f32 %v910, %v6231
    %v6233 = vand.u32 %v6232, 4294901760
    %v6234 = vsub.f32 %v6232, %v6233
    %v6235 = vand.u32 %v6234, 4294901760
    %6236 = vmatmul.mubr.f32.gmra.mrb[0].mxu0 %v6235
    %v6237 = vpop.f32.mrb[0].mxu0
    %v6238 = vadd.f32 0.0, %v6237
    %v6239 = vpop.f32.mrb[0].mxu0
    %6240 = vmatprep.mubr.f32.mxu0 0.0
    %v6241 = vand.u32 %v911, 4294901760
    %v6242 = vsub.f32 %v911, %v6241
    %v6243 = vand.u32 %v6242, 4294901760
    %v6244 = vsub.f32 %v6242, %v6243
    %v6245 = vand.u32 %v6244, 4294901760
    %6246 = vmatmul.mubr.f32.gmra.mrb[0].mxu0 %v6245
    %v6247 = vpop.f32.mrb[0].mxu0
    %v6248 = vadd.f32 0.0, %v6247
    %v6249 = vpop.f32.mrb[0].mxu0
    %6250 = vmatprep.mubr.f32.mxu0 0.0
    %v6251 = vand.u32 %v912, 4294901760
    %v6252 = vsub.f32 %v912, %v6251
    %v6253 = vand.u32 %v6252, 4294901760
    %v6254 = vsub.f32 %v6252, %v6253
    %v6255 = vand.u32 %v6254, 4294901760
    %6256 = vmatmul.mubr.f32.gmra.mrb[0].mxu0 %v6255
    %v6257 = vpop.f32.mrb[0].mxu0
    %v6258 = vadd.f32 0.0, %v6257
    %v6259 = vpop.f32.mrb[0].mxu0
    %6260 = vmatprep.mubr.f32.mxu0 0.0
    %v6261 = vand.u32 %v913, 4294901760
    %v6262 = vsub.f32 %v913, %v6261
    %v6263 = vand.u32 %v6262, 4294901760
    %v6264 = vsub.f32 %v6262, %v6263
    %v6265 = vand.u32 %v6264, 4294901760
    %6266 = vmatmul.mubr.f32.gmra.mrb[0].mxu0 %v6265
    %v6267 = vpop.f32.mrb[0].mxu0
    %v6268 = vadd.f32 0.0, %v6267
    %v6269 = vpop.f32.mrb[0].mxu0
    %6270 = vmatprep.mubr.f32.mxu0 0.0
    %v6271 = vand.u32 %v914, 4294901760
    %v6272 = vsub.f32 %v914, %v6271
    %v6273 = vand.u32 %v6272, 4294901760
    %v6274 = vsub.f32 %v6272, %v6273
    %v6275 = vand.u32 %v6274, 4294901760
    %6276 = vmatmul.mubr.f32.gmra.mrb[0].mxu0 %v6275
    %v6277 = vpop.f32.mrb[0].mxu0
    %v6278 = vadd.f32 0.0, %v6277
    %v6279 = vpop.f32.mrb[0].mxu0
    %6280 = vmatprep.mubr.f32.mxu0 0.0
    %v6281 = vand.u32 %v915, 4294901760
    %v6282 = vsub.f32 %v915, %v6281
    %v6283 = vand.u32 %v6282, 4294901760
    %v6284 = vsub.f32 %v6282, %v6283
    %v6285 = vand.u32 %v6284, 4294901760
    %6286 = vmatmul.mubr.f32.gmra.mrb[0].mxu0 %v6285
    %v6287 = vpop.f32.mrb[0].mxu0
    %v6288 = vadd.f32 0.0, %v6287
    %v6289 = vpop.f32.mrb[0].mxu0
    %6290 = vmatprep.mubr.f32.mxu0 0.0
    %v6291 = vand.u32 %v916, 4294901760
    %v6292 = vsub.f32 %v916, %v6291
    %v6293 = vand.u32 %v6292, 4294901760
    %v6294 = vsub.f32 %v6292, %v6293
    %v6295 = vand.u32 %v6294, 4294901760
    %6296 = vmatmul.mubr.f32.gmra.mrb[0].mxu0 %v6295
    %v6297 = vpop.f32.mrb[0].mxu0
    %v6298 = vadd.f32 0.0, %v6297
    %v6299 = vpop.f32.mrb[0].mxu0
    %6300 = vmatprep.mubr.f32.mxu0 0.0
    %v6301 = vand.u32 %v917, 4294901760
    %v6302 = vsub.f32 %v917, %v6301
    %v6303 = vand.u32 %v6302, 4294901760
    %v6304 = vsub.f32 %v6302, %v6303
    %v6305 = vand.u32 %v6304, 4294901760
    %6306 = vmatmul.mubr.f32.gmra.mrb[0].mxu0 %v6305
    %v6307 = vpop.f32.mrb[0].mxu0
    %v6308 = vadd.f32 0.0, %v6307
    %v6309 = vpop.f32.mrb[0].mxu0
    %6310 = vmatprep.mubr.f32.mxu0 0.0
    %v6311 = vand.u32 %v918, 4294901760
    %v6312 = vsub.f32 %v918, %v6311
    %v6313 = vand.u32 %v6312, 4294901760
    %v6314 = vsub.f32 %v6312, %v6313
    %v6315 = vand.u32 %v6314, 4294901760
    %6316 = vmatmul.mubr.f32.gmra.mrb[0].mxu0 %v6315
    %v6317 = vpop.f32.mrb[0].mxu0
    %v6318 = vadd.f32 0.0, %v6317
    %v6319 = vpop.f32.mrb[0].mxu0
    %6320 = vmatprep.mubr.f32.mxu0 0.0
    %v6321 = vand.u32 %v919, 4294901760
    %v6322 = vsub.f32 %v919, %v6321
    %v6323 = vand.u32 %v6322, 4294901760
    %v6324 = vsub.f32 %v6322, %v6323
    %v6325 = vand.u32 %v6324, 4294901760
    %6326 = vmatmul.mubr.f32.gmra.mrb[0].mxu0 %v6325
    %v6327 = vpop.f32.mrb[0].mxu0
    %v6328 = vadd.f32 0.0, %v6327
    %v6329 = vpop.f32.mrb[0].mxu0
    %6330 = vmatprep.mubr.f32.mxu0 0.0
    %v6331 = vand.u32 %v920, 4294901760
    %v6332 = vsub.f32 %v920, %v6331
    %v6333 = vand.u32 %v6332, 4294901760
    %v6334 = vsub.f32 %v6332, %v6333
    %v6335 = vand.u32 %v6334, 4294901760
    %6336 = vmatmul.mubr.f32.gmra.mrb[0].mxu0 %v6335
    %v6337 = vpop.f32.mrb[0].mxu0
    %v6338 = vadd.f32 0.0, %v6337
    %v6339 = vpop.f32.mrb[0].mxu0
    %6340 = vmatprep.mubr.f32.mxu0 0.0
    %v6341 = vand.u32 %v921, 4294901760
    %v6342 = vsub.f32 %v921, %v6341
    %v6343 = vand.u32 %v6342, 4294901760
    %v6344 = vsub.f32 %v6342, %v6343
    %v6345 = vand.u32 %v6344, 4294901760
    %6346 = vmatmul.mubr.f32.gmra.mrb[0].mxu0 %v6345
    %v6347 = vpop.f32.mrb[0].mxu0
    %v6348 = vadd.f32 0.0, %v6347
    %v6349 = vpop.f32.mrb[0].mxu0
    %6350 = vmatprep.mubr.f32.mxu0 0.0
    %v6351 = vand.u32 %v922, 4294901760
    %v6352 = vsub.f32 %v922, %v6351
    %v6353 = vand.u32 %v6352, 4294901760
    %v6354 = vsub.f32 %v6352, %v6353
    %v6355 = vand.u32 %v6354, 4294901760
    %6356 = vmatmul.mubr.f32.gmra.mrb[0].mxu0 %v6355
    %v6357 = vpop.f32.mrb[0].mxu0
    %v6358 = vadd.f32 0.0, %v6357
    %v6359 = vpop.f32.mrb[0].mxu0
    %6360 = vmatprep.mubr.f32.mxu0 0.0
    %v6361 = vand.u32 %v923, 4294901760
    %v6362 = vsub.f32 %v923, %v6361
    %v6363 = vand.u32 %v6362, 4294901760
    %v6364 = vsub.f32 %v6362, %v6363
    %v6365 = vand.u32 %v6364, 4294901760
    %6366 = vmatmul.mubr.f32.gmra.mrb[0].mxu0 %v6365
    %v6367 = vpop.f32.mrb[0].mxu0
    %v6368 = vadd.f32 0.0, %v6367
    %v6369 = vpop.f32.mrb[0].mxu0
    %6370 = vmatprep.mubr.f32.mxu0 0.0
    %v6371 = vand.u32 %v924, 4294901760
    %v6372 = vsub.f32 %v924, %v6371
    %v6373 = vand.u32 %v6372, 4294901760
    %v6374 = vsub.f32 %v6372, %v6373
    %v6375 = vand.u32 %v6374, 4294901760
    %6376 = vmatmul.mubr.f32.gmra.mrb[0].mxu0 %v6375
    %v6377 = vpop.f32.mrb[0].mxu0
    %v6378 = vadd.f32 0.0, %v6377
    %v6379 = vpop.f32.mrb[0].mxu0
    %6380 = vmatprep.mubr.f32.mxu0 0.0
    %v6381 = vand.u32 %v925, 4294901760
    %v6382 = vsub.f32 %v925, %v6381
    %v6383 = vand.u32 %v6382, 4294901760
    %v6384 = vsub.f32 %v6382, %v6383
    %v6385 = vand.u32 %v6384, 4294901760
    %6386 = vmatmul.mubr.f32.gmra.mrb[0].mxu0 %v6385
    %v6387 = vpop.f32.mrb[0].mxu0
    %v6388 = vadd.f32 0.0, %v6387
    %v6389 = vpop.f32.mrb[0].mxu0
    %6390 = vmatprep.mubr.f32.mxu0 0.0
    %v6391 = vand.u32 %v926, 4294901760
    %v6392 = vsub.f32 %v926, %v6391
    %v6393 = vand.u32 %v6392, 4294901760
    %v6394 = vsub.f32 %v6392, %v6393
    %v6395 = vand.u32 %v6394, 4294901760
    %6396 = vmatmul.mubr.f32.gmra.mrb[0].mxu0 %v6395
    %v6397 = vpop.f32.mrb[0].mxu0
    %v6398 = vadd.f32 0.0, %v6397
    %v6399 = vpop.f32.mrb[0].mxu0
    %6400 = vmatprep.mubr.f32.mxu0 0.0
    %v6401 = vand.u32 %v927, 4294901760
    %v6402 = vsub.f32 %v927, %v6401
    %v6403 = vand.u32 %v6402, 4294901760
    %v6404 = vsub.f32 %v6402, %v6403
    %v6405 = vand.u32 %v6404, 4294901760
    %6406 = vmatmul.mubr.f32.gmra.mrb[0].mxu0 %v6405
    %v6407 = vpop.f32.mrb[0].mxu0
    %v6408 = vadd.f32 0.0, %v6407
    %v6409 = vpop.f32.mrb[0].mxu0
    %6410 = vmatprep.mubr.f32.mxu0 0.0
    %v6411 = vand.u32 %v928, 4294901760
    %v6412 = vsub.f32 %v928, %v6411
    %v6413 = vand.u32 %v6412, 4294901760
    %v6414 = vsub.f32 %v6412, %v6413
    %v6415 = vand.u32 %v6414, 4294901760
    %6416 = vmatmul.mubr.f32.gmra.mrb[0].mxu0 %v6415
    %v6417 = vpop.f32.mrb[0].mxu0
    %v6418 = vadd.f32 0.0, %v6417
    %v6419 = vpop.f32.mrb[0].mxu0
    %6420 = vmatprep.mubr.f32.mxu0 0.0
    %v6421 = vand.u32 %v929, 4294901760
    %v6422 = vsub.f32 %v929, %v6421
    %v6423 = vand.u32 %v6422, 4294901760
    %v6424 = vsub.f32 %v6422, %v6423
    %v6425 = vand.u32 %v6424, 4294901760
    %6426 = vmatmul.mubr.f32.gmra.mrb[0].mxu0 %v6425
    %v6427 = vpop.f32.mrb[0].mxu0
    %v6428 = vadd.f32 0.0, %v6427
    %v6429 = vpop.f32.mrb[0].mxu0
    %6430 = vmatprep.mubr.f32.mxu0 0.0
    %v6431 = vand.u32 %v930, 4294901760
    %v6432 = vsub.f32 %v930, %v6431
    %v6433 = vand.u32 %v6432, 4294901760
    %v6434 = vsub.f32 %v6432, %v6433
    %v6435 = vand.u32 %v6434, 4294901760
    %6436 = vmatmul.mubr.f32.gmra.mrb[0].mxu0 %v6435
    %v6437 = vpop.f32.mrb[0].mxu0
    %v6438 = vadd.f32 0.0, %v6437
    %v6439 = vpop.f32.mrb[0].mxu0
    %6440 = vmatprep.mubr.f32.mxu0 0.0
    %v6441 = vand.u32 %v931, 4294901760
    %v6442 = vsub.f32 %v931, %v6441
    %v6443 = vand.u32 %v6442, 4294901760
    %v6444 = vsub.f32 %v6442, %v6443
    %v6445 = vand.u32 %v6444, 4294901760
    %6446 = vmatmul.mubr.f32.gmra.mrb[0].mxu0 %v6445
    %v6447 = vpop.f32.mrb[0].mxu0
    %v6448 = vadd.f32 0.0, %v6447
    %v6449 = vpop.f32.mrb[0].mxu0
    %6450 = vmatprep.mubr.f32.mxu0 0.0
    %v6451 = vand.u32 %v932, 4294901760
    %v6452 = vsub.f32 %v932, %v6451
    %v6453 = vand.u32 %v6452, 4294901760
    %v6454 = vsub.f32 %v6452, %v6453
    %v6455 = vand.u32 %v6454, 4294901760
    %6456 = vmatmul.mubr.f32.gmra.mrb[0].mxu0 %v6455
    %v6457 = vpop.f32.mrb[0].mxu0
    %v6458 = vadd.f32 0.0, %v6457
    %v6459 = vpop.f32.mrb[0].mxu0
    %6460 = vmatprep.mubr.f32.mxu0 0.0
    %v6461 = vand.u32 %v933, 4294901760
    %v6462 = vsub.f32 %v933, %v6461
    %v6463 = vand.u32 %v6462, 4294901760
    %v6464 = vsub.f32 %v6462, %v6463
    %v6465 = vand.u32 %v6464, 4294901760
    %6466 = vmatmul.mubr.f32.gmra.mrb[0].mxu0 %v6465
    %v6467 = vpop.f32.mrb[0].mxu0
    %v6468 = vadd.f32 0.0, %v6467
    %v6469 = vpop.f32.mrb[0].mxu0
    %6470 = vmatprep.mubr.f32.mxu0 0.0
    %v6471 = vand.u32 %v934, 4294901760
    %v6472 = vsub.f32 %v934, %v6471
    %v6473 = vand.u32 %v6472, 4294901760
    %v6474 = vsub.f32 %v6472, %v6473
    %v6475 = vand.u32 %v6474, 4294901760
    %6476 = vmatmul.mubr.f32.gmra.mrb[0].mxu0 %v6475
    %v6477 = vpop.f32.mrb[0].mxu0
    %v6478 = vadd.f32 0.0, %v6477
    %v6479 = vpop.f32.mrb[0].mxu0
    %6480 = vmatprep.mubr.f32.mxu0 0.0
    %v6481 = vand.u32 %v935, 4294901760
    %v6482 = vsub.f32 %v935, %v6481
    %v6483 = vand.u32 %v6482, 4294901760
    %v6484 = vsub.f32 %v6482, %v6483
    %v6485 = vand.u32 %v6484, 4294901760
    %6486 = vmatmul.mubr.f32.gmra.mrb[0].mxu0 %v6485
    %v6487 = vpop.f32.mrb[0].mxu0
    %v6488 = vadd.f32 0.0, %v6487
    %v6489 = vpop.f32.mrb[0].mxu0
    %6490 = vdwg.mxu0
    %6491 = vmatprep.subr.mxu0 0.0
    %v6492 = vand.u32 %v5677, 4294901760
    %v6493 = vsub.f32 %v5677, %v6492
    %v6494 = vand.u32 %v6493, 4294901760
    %v6495 = vsub.f32 %v6493, %v6494
    %v6496 = vand.u32 %v6495, 4294901760
    %6497 = vmatpush1.msra.mxu0 %v6496
    %6498 = vmatprep.subr.mxu0 0.0
    %v6499 = vand.u32 %v5683, 4294901760
    %v6500 = vsub.f32 %v5683, %v6499
    %v6501 = vand.u32 %v6500, 4294901760
    %v6502 = vsub.f32 %v6500, %v6501
    %v6503 = vand.u32 %v6502, 4294901760
    %6504 = vmatpush1.msra.mxu0 %v6503
    %6505 = vmatprep.subr.mxu0 0.0
    %v6506 = vand.u32 %v5689, 4294901760
    %v6507 = vsub.f32 %v5689, %v6506
    %v6508 = vand.u32 %v6507, 4294901760
    %v6509 = vsub.f32 %v6507, %v6508
    %v6510 = vand.u32 %v6509, 4294901760
    %6511 = vmatpush1.msra.mxu0 %v6510
    %6512 = vmatprep.subr.mxu0 0.0
    %v6513 = vand.u32 %v5695, 4294901760
    %v6514 = vsub.f32 %v5695, %v6513
    %v6515 = vand.u32 %v6514, 4294901760
    %v6516 = vsub.f32 %v6514, %v6515
    %v6517 = vand.u32 %v6516, 4294901760
    %6518 = vmatpush1.msra.mxu0 %v6517
    %6519 = vmatprep.subr.mxu0 0.0
    %v6520 = vand.u32 %v5701, 4294901760
    %v6521 = vsub.f32 %v5701, %v6520
    %v6522 = vand.u32 %v6521, 4294901760
    %v6523 = vsub.f32 %v6521, %v6522
    %v6524 = vand.u32 %v6523, 4294901760
    %6525 = vmatpush1.msra.mxu0 %v6524
    %6526 = vmatprep.subr.mxu0 0.0
    %v6527 = vand.u32 %v5707, 4294901760
    %v6528 = vsub.f32 %v5707, %v6527
    %v6529 = vand.u32 %v6528, 4294901760
    %v6530 = vsub.f32 %v6528, %v6529
    %v6531 = vand.u32 %v6530, 4294901760
    %6532 = vmatpush1.msra.mxu0 %v6531
    %6533 = vmatprep.subr.mxu0 0.0
    %v6534 = vand.u32 %v5713, 4294901760
    %v6535 = vsub.f32 %v5713, %v6534
    %v6536 = vand.u32 %v6535, 4294901760
    %v6537 = vsub.f32 %v6535, %v6536
    %v6538 = vand.u32 %v6537, 4294901760
    %6539 = vmatpush1.msra.mxu0 %v6538
    %6540 = vmatprep.subr.mxu0 0.0
    %v6541 = vand.u32 %v5719, 4294901760
    %v6542 = vsub.f32 %v5719, %v6541
    %v6543 = vand.u32 %v6542, 4294901760
    %v6544 = vsub.f32 %v6542, %v6543
    %v6545 = vand.u32 %v6544, 4294901760
    %6546 = vmatpush1.msra.mxu0 %v6545
    %6547 = vmatprep.subr.mxu0 0.0
    %v6548 = vand.u32 %v5725, 4294901760
    %v6549 = vsub.f32 %v5725, %v6548
    %v6550 = vand.u32 %v6549, 4294901760
    %v6551 = vsub.f32 %v6549, %v6550
    %v6552 = vand.u32 %v6551, 4294901760
    %6553 = vmatpush1.msra.mxu0 %v6552
    %6554 = vmatprep.subr.mxu0 0.0
    %v6555 = vand.u32 %v5731, 4294901760
    %v6556 = vsub.f32 %v5731, %v6555
    %v6557 = vand.u32 %v6556, 4294901760
    %v6558 = vsub.f32 %v6556, %v6557
    %v6559 = vand.u32 %v6558, 4294901760
    %6560 = vmatpush1.msra.mxu0 %v6559
    %6561 = vmatprep.subr.mxu0 0.0
    %v6562 = vand.u32 %v5737, 4294901760
    %v6563 = vsub.f32 %v5737, %v6562
    %v6564 = vand.u32 %v6563, 4294901760
    %v6565 = vsub.f32 %v6563, %v6564
    %v6566 = vand.u32 %v6565, 4294901760
    %6567 = vmatpush1.msra.mxu0 %v6566
    %6568 = vmatprep.subr.mxu0 0.0
    %v6569 = vand.u32 %v5743, 4294901760
    %v6570 = vsub.f32 %v5743, %v6569
    %v6571 = vand.u32 %v6570, 4294901760
    %v6572 = vsub.f32 %v6570, %v6571
    %v6573 = vand.u32 %v6572, 4294901760
    %6574 = vmatpush1.msra.mxu0 %v6573
    %6575 = vmatprep.subr.mxu0 0.0
    %v6576 = vand.u32 %v5749, 4294901760
    %v6577 = vsub.f32 %v5749, %v6576
    %v6578 = vand.u32 %v6577, 4294901760
    %v6579 = vsub.f32 %v6577, %v6578
    %v6580 = vand.u32 %v6579, 4294901760
    %6581 = vmatpush1.msra.mxu0 %v6580
    %6582 = vmatprep.subr.mxu0 0.0
    %v6583 = vand.u32 %v5755, 4294901760
    %v6584 = vsub.f32 %v5755, %v6583
    %v6585 = vand.u32 %v6584, 4294901760
    %v6586 = vsub.f32 %v6584, %v6585
    %v6587 = vand.u32 %v6586, 4294901760
    %6588 = vmatpush1.msra.mxu0 %v6587
    %6589 = vmatprep.subr.mxu0 0.0
    %v6590 = vand.u32 %v5761, 4294901760
    %v6591 = vsub.f32 %v5761, %v6590
    %v6592 = vand.u32 %v6591, 4294901760
    %v6593 = vsub.f32 %v6591, %v6592
    %v6594 = vand.u32 %v6593, 4294901760
    %6595 = vmatpush1.msra.mxu0 %v6594
    %6596 = vmatprep.subr.mxu0 0.0
    %v6597 = vand.u32 %v5767, 4294901760
    %v6598 = vsub.f32 %v5767, %v6597
    %v6599 = vand.u32 %v6598, 4294901760
    %v6600 = vsub.f32 %v6598, %v6599
    %v6601 = vand.u32 %v6600, 4294901760
    %6602 = vmatpush1.msra.mxu0 %v6601
    %6603 = vmatprep.subr.mxu0 0.0
    %6604 = vmatpush1.msra.mxu0 0.0
    %6605 = vmatprep.subr.mxu0 0.0
    %6606 = vmatpush1.msra.mxu0 0.0
    %6607 = vmatprep.subr.mxu0 0.0
    %6608 = vmatpush1.msra.mxu0 0.0
    %6609 = vmatprep.subr.mxu0 0.0
    %6610 = vmatpush1.msra.mxu0 0.0
    %6611 = vmatprep.subr.mxu0 0.0
    %6612 = vmatpush1.msra.mxu0 0.0
    %6613 = vmatprep.subr.mxu0 0.0
    %6614 = vmatpush1.msra.mxu0 0.0
    %6615 = vmatprep.subr.mxu0 0.0
    %6616 = vmatpush1.msra.mxu0 0.0
    %6617 = vmatprep.subr.mxu0 0.0
    %6618 = vmatpush1.msra.mxu0 0.0
    %6619 = vmatprep.subr.mxu0 0.0
    %6620 = vmatpush1.msra.mxu0 0.0
    %6621 = vmatprep.subr.mxu0 0.0
    %6622 = vmatpush1.msra.mxu0 0.0
    %6623 = vmatprep.subr.mxu0 0.0
    %6624 = vmatpush1.msra.mxu0 0.0
    %6625 = vmatprep.subr.mxu0 0.0
    %6626 = vmatpush1.msra.mxu0 0.0
    %6627 = vmatprep.subr.mxu0 0.0
    %6628 = vmatpush1.msra.mxu0 0.0
    %6629 = vmatprep.subr.mxu0 0.0
    %6630 = vmatpush1.msra.mxu0 0.0
    %6631 = vmatprep.subr.mxu0 0.0
    %6632 = vmatpush1.msra.mxu0 0.0
    %6633 = vmatprep.subr.mxu0 0.0
    %6634 = vmatpush1.msra.mxu0 0.0
    %6635 = vmatprep.mubr.f32.mxu0 0.0
    %v6636 = vand.u32 %v872, 4294901760
    %6637 = vmatmul.mubr.f32.gmra.mrb[0].mxu0 %v6636
    %v6638 = vpop.f32.mrb[0].mxu0
    %v6639 = vadd.f32 %v5858, %v6638
    %v6640 = vpop.f32.mrb[0].mxu0
    %6641 = vmatprep.mubr.f32.mxu0 0.0
    %v6642 = vand.u32 %v873, 4294901760
    %6643 = vmatmul.mubr.f32.gmra.mrb[0].mxu0 %v6642
    %v6644 = vpop.f32.mrb[0].mxu0
    %v6645 = vadd.f32 %v5868, %v6644
    %v6646 = vpop.f32.mrb[0].mxu0
    %6647 = vmatprep.mubr.f32.mxu0 0.0
    %v6648 = vand.u32 %v874, 4294901760
    %6649 = vmatmul.mubr.f32.gmra.mrb[0].mxu0 %v6648
    %v6650 = vpop.f32.mrb[0].mxu0
    %v6651 = vadd.f32 %v5878, %v6650
    %v6652 = vpop.f32.mrb[0].mxu0
    %6653 = vmatprep.mubr.f32.mxu0 0.0
    %v6654 = vand.u32 %v875, 4294901760
    %6655 = vmatmul.mubr.f32.gmra.mrb[0].mxu0 %v6654
    %v6656 = vpop.f32.mrb[0].mxu0
    %v6657 = vadd.f32 %v5888, %v6656
    %v6658 = vpop.f32.mrb[0].mxu0
    %6659 = vmatprep.mubr.f32.mxu0 0.0
    %v6660 = vand.u32 %v876, 4294901760
    %6661 = vmatmul.mubr.f32.gmra.mrb[0].mxu0 %v6660
    %v6662 = vpop.f32.mrb[0].mxu0
    %v6663 = vadd.f32 %v5898, %v6662
    %v6664 = vpop.f32.mrb[0].mxu0
    %6665 = vmatprep.mubr.f32.mxu0 0.0
    %v6666 = vand.u32 %v877, 4294901760
    %6667 = vmatmul.mubr.f32.gmra.mrb[0].mxu0 %v6666
    %v6668 = vpop.f32.mrb[0].mxu0
    %v6669 = vadd.f32 %v5908, %v6668
    %v6670 = vpop.f32.mrb[0].mxu0
    %6671 = vmatprep.mubr.f32.mxu0 0.0
    %v6672 = vand.u32 %v878, 4294901760
    %6673 = vmatmul.mubr.f32.gmra.mrb[0].mxu0 %v6672
    %v6674 = vpop.f32.mrb[0].mxu0
    %v6675 = vadd.f32 %v5918, %v6674
    %v6676 = vpop.f32.mrb[0].mxu0
    %6677 = vmatprep.mubr.f32.mxu0 0.0
    %v6678 = vand.u32 %v879, 4294901760
    %6679 = vmatmul.mubr.f32.gmra.mrb[0].mxu0 %v6678
    %v6680 = vpop.f32.mrb[0].mxu0
    %v6681 = vadd.f32 %v5928, %v6680
    %v6682 = vpop.f32.mrb[0].mxu0
    %6683 = vmatprep.mubr.f32.mxu0 0.0
    %v6684 = vand.u32 %v880, 4294901760
    %6685 = vmatmul.mubr.f32.gmra.mrb[0].mxu0 %v6684
    %v6686 = vpop.f32.mrb[0].mxu0
    %v6687 = vadd.f32 %v5938, %v6686
    %v6688 = vpop.f32.mrb[0].mxu0
    %6689 = vmatprep.mubr.f32.mxu0 0.0
    %v6690 = vand.u32 %v881, 4294901760
    %6691 = vmatmul.mubr.f32.gmra.mrb[0].mxu0 %v6690
    %v6692 = vpop.f32.mrb[0].mxu0
    %v6693 = vadd.f32 %v5948, %v6692
    %v6694 = vpop.f32.mrb[0].mxu0
    %6695 = vmatprep.mubr.f32.mxu0 0.0
    %v6696 = vand.u32 %v882, 4294901760
    %6697 = vmatmul.mubr.f32.gmra.mrb[0].mxu0 %v6696
    %v6698 = vpop.f32.mrb[0].mxu0
    %v6699 = vadd.f32 %v5958, %v6698
    %v6700 = vpop.f32.mrb[0].mxu0
    %6701 = vmatprep.mubr.f32.mxu0 0.0
    %v6702 = vand.u32 %v883, 4294901760
    %6703 = vmatmul.mubr.f32.gmra.mrb[0].mxu0 %v6702
    %v6704 = vpop.f32.mrb[0].mxu0
    %v6705 = vadd.f32 %v5968, %v6704
    %v6706 = vpop.f32.mrb[0].mxu0
    %6707 = vmatprep.mubr.f32.mxu0 0.0
    %v6708 = vand.u32 %v884, 4294901760
    %6709 = vmatmul.mubr.f32.gmra.mrb[0].mxu0 %v6708
    %v6710 = vpop.f32.mrb[0].mxu0
    %v6711 = vadd.f32 %v5978, %v6710
    %v6712 = vpop.f32.mrb[0].mxu0
    %6713 = vmatprep.mubr.f32.mxu0 0.0
    %v6714 = vand.u32 %v885, 4294901760
    %6715 = vmatmul.mubr.f32.gmra.mrb[0].mxu0 %v6714
    %v6716 = vpop.f32.mrb[0].mxu0
    %v6717 = vadd.f32 %v5988, %v6716
    %v6718 = vpop.f32.mrb[0].mxu0
    %6719 = vmatprep.mubr.f32.mxu0 0.0
    %v6720 = vand.u32 %v886, 4294901760
    %6721 = vmatmul.mubr.f32.gmra.mrb[0].mxu0 %v6720
    %v6722 = vpop.f32.mrb[0].mxu0
    %v6723 = vadd.f32 %v5998, %v6722
    %v6724 = vpop.f32.mrb[0].mxu0
    %6725 = vmatprep.mubr.f32.mxu0 0.0
    %v6726 = vand.u32 %v887, 4294901760
    %6727 = vmatmul.mubr.f32.gmra.mrb[0].mxu0 %v6726
    %v6728 = vpop.f32.mrb[0].mxu0
    %v6729 = vadd.f32 %v6008, %v6728
    %v6730 = vpop.f32.mrb[0].mxu0
    %6731 = vmatprep.mubr.f32.mxu0 0.0
    %v6732 = vand.u32 %v888, 4294901760
    %6733 = vmatmul.mubr.f32.gmra.mrb[0].mxu0 %v6732
    %v6734 = vpop.f32.mrb[0].mxu0
    %v6735 = vadd.f32 %v6018, %v6734
    %v6736 = vpop.f32.mrb[0].mxu0
    %6737 = vmatprep.mubr.f32.mxu0 0.0
    %v6738 = vand.u32 %v889, 4294901760
    %6739 = vmatmul.mubr.f32.gmra.mrb[0].mxu0 %v6738
    %v6740 = vpop.f32.mrb[0].mxu0
    %v6741 = vadd.f32 %v6028, %v6740
    %v6742 = vpop.f32.mrb[0].mxu0
    %6743 = vmatprep.mubr.f32.mxu0 0.0
    %v6744 = vand.u32 %v890, 4294901760
    %6745 = vmatmul.mubr.f32.gmra.mrb[0].mxu0 %v6744
    %v6746 = vpop.f32.mrb[0].mxu0
    %v6747 = vadd.f32 %v6038, %v6746
    %v6748 = vpop.f32.mrb[0].mxu0
    %6749 = vmatprep.mubr.f32.mxu0 0.0
    %v6750 = vand.u32 %v891, 4294901760
    %6751 = vmatmul.mubr.f32.gmra.mrb[0].mxu0 %v6750
    %v6752 = vpop.f32.mrb[0].mxu0
    %v6753 = vadd.f32 %v6048, %v6752
    %v6754 = vpop.f32.mrb[0].mxu0
    %6755 = vmatprep.mubr.f32.mxu0 0.0
    %v6756 = vand.u32 %v892, 4294901760
    %6757 = vmatmul.mubr.f32.gmra.mrb[0].mxu0 %v6756
    %v6758 = vpop.f32.mrb[0].mxu0
    %v6759 = vadd.f32 %v6058, %v6758
    %v6760 = vpop.f32.mrb[0].mxu0
    %6761 = vmatprep.mubr.f32.mxu0 0.0
    %v6762 = vand.u32 %v893, 4294901760
    %6763 = vmatmul.mubr.f32.gmra.mrb[0].mxu0 %v6762
    %v6764 = vpop.f32.mrb[0].mxu0
    %v6765 = vadd.f32 %v6068, %v6764
    %v6766 = vpop.f32.mrb[0].mxu0
    %6767 = vmatprep.mubr.f32.mxu0 0.0
    %v6768 = vand.u32 %v894, 4294901760
    %6769 = vmatmul.mubr.f32.gmra.mrb[0].mxu0 %v6768
    %v6770 = vpop.f32.mrb[0].mxu0
    %v6771 = vadd.f32 %v6078, %v6770
    %v6772 = vpop.f32.mrb[0].mxu0
    %6773 = vmatprep.mubr.f32.mxu0 0.0
    %v6774 = vand.u32 %v895, 4294901760
    %6775 = vmatmul.mubr.f32.gmra.mrb[0].mxu0 %v6774
    %v6776 = vpop.f32.mrb[0].mxu0
    %v6777 = vadd.f32 %v6088, %v6776
    %v6778 = vpop.f32.mrb[0].mxu0
    %6779 = vmatprep.mubr.f32.mxu0 0.0
    %v6780 = vand.u32 %v896, 4294901760
    %6781 = vmatmul.mubr.f32.gmra.mrb[0].mxu0 %v6780
    %v6782 = vpop.f32.mrb[0].mxu0
    %v6783 = vadd.f32 %v6098, %v6782
    %v6784 = vpop.f32.mrb[0].mxu0
    %6785 = vmatprep.mubr.f32.mxu0 0.0
    %v6786 = vand.u32 %v897, 4294901760
    %6787 = vmatmul.mubr.f32.gmra.mrb[0].mxu0 %v6786
    %v6788 = vpop.f32.mrb[0].mxu0
    %v6789 = vadd.f32 %v6108, %v6788
    %v6790 = vpop.f32.mrb[0].mxu0
    %6791 = vmatprep.mubr.f32.mxu0 0.0
    %v6792 = vand.u32 %v898, 4294901760
    %6793 = vmatmul.mubr.f32.gmra.mrb[0].mxu0 %v6792
    %v6794 = vpop.f32.mrb[0].mxu0
    %v6795 = vadd.f32 %v6118, %v6794
    %v6796 = vpop.f32.mrb[0].mxu0
    %6797 = vmatprep.mubr.f32.mxu0 0.0
    %v6798 = vand.u32 %v899, 4294901760
    %6799 = vmatmul.mubr.f32.gmra.mrb[0].mxu0 %v6798
    %v6800 = vpop.f32.mrb[0].mxu0
    %v6801 = vadd.f32 %v6128, %v6800
    %v6802 = vpop.f32.mrb[0].mxu0
    %6803 = vmatprep.mubr.f32.mxu0 0.0
    %v6804 = vand.u32 %v900, 4294901760
    %6805 = vmatmul.mubr.f32.gmra.mrb[0].mxu0 %v6804
    %v6806 = vpop.f32.mrb[0].mxu0
    %v6807 = vadd.f32 %v6138, %v6806
    %v6808 = vpop.f32.mrb[0].mxu0
    %6809 = vmatprep.mubr.f32.mxu0 0.0
    %v6810 = vand.u32 %v901, 4294901760
    %6811 = vmatmul.mubr.f32.gmra.mrb[0].mxu0 %v6810
    %v6812 = vpop.f32.mrb[0].mxu0
    %v6813 = vadd.f32 %v6148, %v6812
    %v6814 = vpop.f32.mrb[0].mxu0
    %6815 = vmatprep.mubr.f32.mxu0 0.0
    %v6816 = vand.u32 %v902, 4294901760
    %6817 = vmatmul.mubr.f32.gmra.mrb[0].mxu0 %v6816
    %v6818 = vpop.f32.mrb[0].mxu0
    %v6819 = vadd.f32 %v6158, %v6818
    %v6820 = vpop.f32.mrb[0].mxu0
    %6821 = vmatprep.mubr.f32.mxu0 0.0
    %v6822 = vand.u32 %v903, 4294901760
    %6823 = vmatmul.mubr.f32.gmra.mrb[0].mxu0 %v6822
    %v6824 = vpop.f32.mrb[0].mxu0
    %v6825 = vadd.f32 %v6168, %v6824
    %v6826 = vpop.f32.mrb[0].mxu0
    %6827 = vmatprep.mubr.f32.mxu0 0.0
    %v6828 = vand.u32 %v904, 4294901760
    %6829 = vmatmul.mubr.f32.gmra.mrb[0].mxu0 %v6828
    %v6830 = vpop.f32.mrb[0].mxu0
    %v6831 = vadd.f32 %v6178, %v6830
    %v6832 = vpop.f32.mrb[0].mxu0
    %6833 = vmatprep.mubr.f32.mxu0 0.0
    %v6834 = vand.u32 %v905, 4294901760
    %6835 = vmatmul.mubr.f32.gmra.mrb[0].mxu0 %v6834
    %v6836 = vpop.f32.mrb[0].mxu0
    %v6837 = vadd.f32 %v6188, %v6836
    %v6838 = vpop.f32.mrb[0].mxu0
    %6839 = vmatprep.mubr.f32.mxu0 0.0
    %v6840 = vand.u32 %v906, 4294901760
    %6841 = vmatmul.mubr.f32.gmra.mrb[0].mxu0 %v6840
    %v6842 = vpop.f32.mrb[0].mxu0
    %v6843 = vadd.f32 %v6198, %v6842
    %v6844 = vpop.f32.mrb[0].mxu0
    %6845 = vmatprep.mubr.f32.mxu0 0.0
    %v6846 = vand.u32 %v907, 4294901760
    %6847 = vmatmul.mubr.f32.gmra.mrb[0].mxu0 %v6846
    %v6848 = vpop.f32.mrb[0].mxu0
    %v6849 = vadd.f32 %v6208, %v6848
    %v6850 = vpop.f32.mrb[0].mxu0
    %6851 = vmatprep.mubr.f32.mxu0 0.0
    %v6852 = vand.u32 %v908, 4294901760
    %6853 = vmatmul.mubr.f32.gmra.mrb[0].mxu0 %v6852
    %v6854 = vpop.f32.mrb[0].mxu0
    %v6855 = vadd.f32 %v6218, %v6854
    %v6856 = vpop.f32.mrb[0].mxu0
    %6857 = vmatprep.mubr.f32.mxu0 0.0
    %v6858 = vand.u32 %v909, 4294901760
    %6859 = vmatmul.mubr.f32.gmra.mrb[0].mxu0 %v6858
    %v6860 = vpop.f32.mrb[0].mxu0
    %v6861 = vadd.f32 %v6228, %v6860
    %v6862 = vpop.f32.mrb[0].mxu0
    %6863 = vmatprep.mubr.f32.mxu0 0.0
    %v6864 = vand.u32 %v910, 4294901760
    %6865 = vmatmul.mubr.f32.gmra.mrb[0].mxu0 %v6864
    %v6866 = vpop.f32.mrb[0].mxu0
    %v6867 = vadd.f32 %v6238, %v6866
    %v6868 = vpop.f32.mrb[0].mxu0
    %6869 = vmatprep.mubr.f32.mxu0 0.0
    %v6870 = vand.u32 %v911, 4294901760
    %6871 = vmatmul.mubr.f32.gmra.mrb[0].mxu0 %v6870
    %v6872 = vpop.f32.mrb[0].mxu0
    %v6873 = vadd.f32 %v6248, %v6872
    %v6874 = vpop.f32.mrb[0].mxu0
    %6875 = vmatprep.mubr.f32.mxu0 0.0
    %v6876 = vand.u32 %v912, 4294901760
    %6877 = vmatmul.mubr.f32.gmra.mrb[0].mxu0 %v6876
    %v6878 = vpop.f32.mrb[0].mxu0
    %v6879 = vadd.f32 %v6258, %v6878
    %v6880 = vpop.f32.mrb[0].mxu0
    %6881 = vmatprep.mubr.f32.mxu0 0.0
    %v6882 = vand.u32 %v913, 4294901760
    %6883 = vmatmul.mubr.f32.gmra.mrb[0].mxu0 %v6882
    %v6884 = vpop.f32.mrb[0].mxu0
    %v6885 = vadd.f32 %v6268, %v6884
    %v6886 = vpop.f32.mrb[0].mxu0
    %6887 = vmatprep.mubr.f32.mxu0 0.0
    %v6888 = vand.u32 %v914, 4294901760
    %6889 = vmatmul.mubr.f32.gmra.mrb[0].mxu0 %v6888
    %v6890 = vpop.f32.mrb[0].mxu0
    %v6891 = vadd.f32 %v6278, %v6890
    %v6892 = vpop.f32.mrb[0].mxu0
    %6893 = vmatprep.mubr.f32.mxu0 0.0
    %v6894 = vand.u32 %v915, 4294901760
    %6895 = vmatmul.mubr.f32.gmra.mrb[0].mxu0 %v6894
    %v6896 = vpop.f32.mrb[0].mxu0
    %v6897 = vadd.f32 %v6288, %v6896
    %v6898 = vpop.f32.mrb[0].mxu0
    %6899 = vmatprep.mubr.f32.mxu0 0.0
    %v6900 = vand.u32 %v916, 4294901760
    %6901 = vmatmul.mubr.f32.gmra.mrb[0].mxu0 %v6900
    %v6902 = vpop.f32.mrb[0].mxu0
    %v6903 = vadd.f32 %v6298, %v6902
    %v6904 = vpop.f32.mrb[0].mxu0
    %6905 = vmatprep.mubr.f32.mxu0 0.0
    %v6906 = vand.u32 %v917, 4294901760
    %6907 = vmatmul.mubr.f32.gmra.mrb[0].mxu0 %v6906
    %v6908 = vpop.f32.mrb[0].mxu0
    %v6909 = vadd.f32 %v6308, %v6908
    %v6910 = vpop.f32.mrb[0].mxu0
    %6911 = vmatprep.mubr.f32.mxu0 0.0
    %v6912 = vand.u32 %v918, 4294901760
    %6913 = vmatmul.mubr.f32.gmra.mrb[0].mxu0 %v6912
    %v6914 = vpop.f32.mrb[0].mxu0
    %v6915 = vadd.f32 %v6318, %v6914
    %v6916 = vpop.f32.mrb[0].mxu0
    %6917 = vmatprep.mubr.f32.mxu0 0.0
    %v6918 = vand.u32 %v919, 4294901760
    %6919 = vmatmul.mubr.f32.gmra.mrb[0].mxu0 %v6918
    %v6920 = vpop.f32.mrb[0].mxu0
    %v6921 = vadd.f32 %v6328, %v6920
    %v6922 = vpop.f32.mrb[0].mxu0
    %6923 = vmatprep.mubr.f32.mxu0 0.0
    %v6924 = vand.u32 %v920, 4294901760
    %6925 = vmatmul.mubr.f32.gmra.mrb[0].mxu0 %v6924
    %v6926 = vpop.f32.mrb[0].mxu0
    %v6927 = vadd.f32 %v6338, %v6926
    %v6928 = vpop.f32.mrb[0].mxu0
    %6929 = vmatprep.mubr.f32.mxu0 0.0
    %v6930 = vand.u32 %v921, 4294901760
    %6931 = vmatmul.mubr.f32.gmra.mrb[0].mxu0 %v6930
    %v6932 = vpop.f32.mrb[0].mxu0
    %v6933 = vadd.f32 %v6348, %v6932
    %v6934 = vpop.f32.mrb[0].mxu0
    %6935 = vmatprep.mubr.f32.mxu0 0.0
    %v6936 = vand.u32 %v922, 4294901760
    %6937 = vmatmul.mubr.f32.gmra.mrb[0].mxu0 %v6936
    %v6938 = vpop.f32.mrb[0].mxu0
    %v6939 = vadd.f32 %v6358, %v6938
    %v6940 = vpop.f32.mrb[0].mxu0
    %6941 = vmatprep.mubr.f32.mxu0 0.0
    %v6942 = vand.u32 %v923, 4294901760
    %6943 = vmatmul.mubr.f32.gmra.mrb[0].mxu0 %v6942
    %v6944 = vpop.f32.mrb[0].mxu0
    %v6945 = vadd.f32 %v6368, %v6944
    %v6946 = vpop.f32.mrb[0].mxu0
    %6947 = vmatprep.mubr.f32.mxu0 0.0
    %v6948 = vand.u32 %v924, 4294901760
    %6949 = vmatmul.mubr.f32.gmra.mrb[0].mxu0 %v6948
    %v6950 = vpop.f32.mrb[0].mxu0
    %v6951 = vadd.f32 %v6378, %v6950
    %v6952 = vpop.f32.mrb[0].mxu0
    %6953 = vmatprep.mubr.f32.mxu0 0.0
    %v6954 = vand.u32 %v925, 4294901760
    %6955 = vmatmul.mubr.f32.gmra.mrb[0].mxu0 %v6954
    %v6956 = vpop.f32.mrb[0].mxu0
    %v6957 = vadd.f32 %v6388, %v6956
    %v6958 = vpop.f32.mrb[0].mxu0
    %6959 = vmatprep.mubr.f32.mxu0 0.0
    %v6960 = vand.u32 %v926, 4294901760
    %6961 = vmatmul.mubr.f32.gmra.mrb[0].mxu0 %v6960
    %v6962 = vpop.f32.mrb[0].mxu0
    %v6963 = vadd.f32 %v6398, %v6962
    %v6964 = vpop.f32.mrb[0].mxu0
    %6965 = vmatprep.mubr.f32.mxu0 0.0
    %v6966 = vand.u32 %v927, 4294901760
    %6967 = vmatmul.mubr.f32.gmra.mrb[0].mxu0 %v6966
    %v6968 = vpop.f32.mrb[0].mxu0
    %v6969 = vadd.f32 %v6408, %v6968
    %v6970 = vpop.f32.mrb[0].mxu0
    %6971 = vmatprep.mubr.f32.mxu0 0.0
    %v6972 = vand.u32 %v928, 4294901760
    %6973 = vmatmul.mubr.f32.gmra.mrb[0].mxu0 %v6972
    %v6974 = vpop.f32.mrb[0].mxu0
    %v6975 = vadd.f32 %v6418, %v6974
    %v6976 = vpop.f32.mrb[0].mxu0
    %6977 = vmatprep.mubr.f32.mxu0 0.0
    %v6978 = vand.u32 %v929, 4294901760
    %6979 = vmatmul.mubr.f32.gmra.mrb[0].mxu0 %v6978
    %v6980 = vpop.f32.mrb[0].mxu0
    %v6981 = vadd.f32 %v6428, %v6980
    %v6982 = vpop.f32.mrb[0].mxu0
    %6983 = vmatprep.mubr.f32.mxu0 0.0
    %v6984 = vand.u32 %v930, 4294901760
    %6985 = vmatmul.mubr.f32.gmra.mrb[0].mxu0 %v6984
    %v6986 = vpop.f32.mrb[0].mxu0
    %v6987 = vadd.f32 %v6438, %v6986
    %v6988 = vpop.f32.mrb[0].mxu0
    %6989 = vmatprep.mubr.f32.mxu0 0.0
    %v6990 = vand.u32 %v931, 4294901760
    %6991 = vmatmul.mubr.f32.gmra.mrb[0].mxu0 %v6990
    %v6992 = vpop.f32.mrb[0].mxu0
    %v6993 = vadd.f32 %v6448, %v6992
    %v6994 = vpop.f32.mrb[0].mxu0
    %6995 = vmatprep.mubr.f32.mxu0 0.0
    %v6996 = vand.u32 %v932, 4294901760
    %6997 = vmatmul.mubr.f32.gmra.mrb[0].mxu0 %v6996
    %v6998 = vpop.f32.mrb[0].mxu0
    %v6999 = vadd.f32 %v6458, %v6998
    %v7000 = vpop.f32.mrb[0].mxu0
    %7001 = vmatprep.mubr.f32.mxu0 0.0
    %v7002 = vand.u32 %v933, 4294901760
    %7003 = vmatmul.mubr.f32.gmra.mrb[0].mxu0 %v7002
    %v7004 = vpop.f32.mrb[0].mxu0
    %v7005 = vadd.f32 %v6468, %v7004
    %v7006 = vpop.f32.mrb[0].mxu0
    %7007 = vmatprep.mubr.f32.mxu0 0.0
    %v7008 = vand.u32 %v934, 4294901760
    %7009 = vmatmul.mubr.f32.gmra.mrb[0].mxu0 %v7008
    %v7010 = vpop.f32.mrb[0].mxu0
    %v7011 = vadd.f32 %v6478, %v7010
    %v7012 = vpop.f32.mrb[0].mxu0
    %7013 = vmatprep.mubr.f32.mxu0 0.0
    %v7014 = vand.u32 %v935, 4294901760
    %7015 = vmatmul.mubr.f32.gmra.mrb[0].mxu0 %v7014
    %v7016 = vpop.f32.mrb[0].mxu0
    %v7017 = vadd.f32 %v6488, %v7016
    %v7018 = vpop.f32.mrb[0].mxu0
    %7019 = vdwg.mxu0
    %7020 = vmatprep.subr.mxu0 0.0
    %v7021 = vand.u32 %v5677, 4294901760
    %v7022 = vsub.f32 %v5677, %v7021
    %7023 = vmatpush1.msra.mxu0 %v7022
    %7024 = vmatprep.subr.mxu0 0.0
    %v7025 = vand.u32 %v5683, 4294901760
    %v7026 = vsub.f32 %v5683, %v7025
    %7027 = vmatpush1.msra.mxu0 %v7026
    %7028 = vmatprep.subr.mxu0 0.0
    %v7029 = vand.u32 %v5689, 4294901760
    %v7030 = vsub.f32 %v5689, %v7029
    %7031 = vmatpush1.msra.mxu0 %v7030
    %7032 = vmatprep.subr.mxu0 0.0
    %v7033 = vand.u32 %v5695, 4294901760
    %v7034 = vsub.f32 %v5695, %v7033
    %7035 = vmatpush1.msra.mxu0 %v7034
    %7036 = vmatprep.subr.mxu0 0.0
    %v7037 = vand.u32 %v5701, 4294901760
    %v7038 = vsub.f32 %v5701, %v7037
    %7039 = vmatpush1.msra.mxu0 %v7038
    %7040 = vmatprep.subr.mxu0 0.0
    %v7041 = vand.u32 %v5707, 4294901760
    %v7042 = vsub.f32 %v5707, %v7041
    %7043 = vmatpush1.msra.mxu0 %v7042
    %7044 = vmatprep.subr.mxu0 0.0
    %v7045 = vand.u32 %v5713, 4294901760
    %v7046 = vsub.f32 %v5713, %v7045
    %7047 = vmatpush1.msra.mxu0 %v7046
    %7048 = vmatprep.subr.mxu0 0.0
    %v7049 = vand.u32 %v5719, 4294901760
    %v7050 = vsub.f32 %v5719, %v7049
    %7051 = vmatpush1.msra.mxu0 %v7050
    %7052 = vmatprep.subr.mxu0 0.0
    %v7053 = vand.u32 %v5725, 4294901760
    %v7054 = vsub.f32 %v5725, %v7053
    %7055 = vmatpush1.msra.mxu0 %v7054
    %7056 = vmatprep.subr.mxu0 0.0
    %v7057 = vand.u32 %v5731, 4294901760
    %v7058 = vsub.f32 %v5731, %v7057
    %7059 = vmatpush1.msra.mxu0 %v7058
    %7060 = vmatprep.subr.mxu0 0.0
    %v7061 = vand.u32 %v5737, 4294901760
    %v7062 = vsub.f32 %v5737, %v7061
    %7063 = vmatpush1.msra.mxu0 %v7062
    %7064 = vmatprep.subr.mxu0 0.0
    %v7065 = vand.u32 %v5743, 4294901760
    %v7066 = vsub.f32 %v5743, %v7065
    %7067 = vmatpush1.msra.mxu0 %v7066
    %7068 = vmatprep.subr.mxu0 0.0
    %v7069 = vand.u32 %v5749, 4294901760
    %v7070 = vsub.f32 %v5749, %v7069
    %7071 = vmatpush1.msra.mxu0 %v7070
    %7072 = vmatprep.subr.mxu0 0.0
    %v7073 = vand.u32 %v5755, 4294901760
    %v7074 = vsub.f32 %v5755, %v7073
    %7075 = vmatpush1.msra.mxu0 %v7074
    %7076 = vmatprep.subr.mxu0 0.0
    %v7077 = vand.u32 %v5761, 4294901760
    %v7078 = vsub.f32 %v5761, %v7077
    %7079 = vmatpush1.msra.mxu0 %v7078
    %7080 = vmatprep.subr.mxu0 0.0
    %v7081 = vand.u32 %v5767, 4294901760
    %v7082 = vsub.f32 %v5767, %v7081
    %7083 = vmatpush1.msra.mxu0 %v7082
    %7084 = vmatprep.subr.mxu0 0.0
    %7085 = vmatpush1.msra.mxu0 0.0
    %7086 = vmatprep.subr.mxu0 0.0
    %7087 = vmatpush1.msra.mxu0 0.0
    %7088 = vmatprep.subr.mxu0 0.0
    %7089 = vmatpush1.msra.mxu0 0.0
    %7090 = vmatprep.subr.mxu0 0.0
    %7091 = vmatpush1.msra.mxu0 0.0
    %7092 = vmatprep.subr.mxu0 0.0
    %7093 = vmatpush1.msra.mxu0 0.0
    %7094 = vmatprep.subr.mxu0 0.0
    %7095 = vmatpush1.msra.mxu0 0.0
    %7096 = vmatprep.subr.mxu0 0.0
    %7097 = vmatpush1.msra.mxu0 0.0
    %7098 = vmatprep.subr.mxu0 0.0
    %7099 = vmatpush1.msra.mxu0 0.0
    %7100 = vmatprep.subr.mxu0 0.0
    %7101 = vmatpush1.msra.mxu0 0.0
    %7102 = vmatprep.subr.mxu0 0.0
    %7103 = vmatpush1.msra.mxu0 0.0
    %7104 = vmatprep.subr.mxu0 0.0
    %7105 = vmatpush1.msra.mxu0 0.0
    %7106 = vmatprep.subr.mxu0 0.0
    %7107 = vmatpush1.msra.mxu0 0.0
    %7108 = vmatprep.subr.mxu0 0.0
    %7109 = vmatpush1.msra.mxu0 0.0
    %7110 = vmatprep.subr.mxu0 0.0
    %7111 = vmatpush1.msra.mxu0 0.0
    %7112 = vmatprep.subr.mxu0 0.0
    %7113 = vmatpush1.msra.mxu0 0.0
    %7114 = vmatprep.subr.mxu0 0.0
    %7115 = vmatpush1.msra.mxu0 0.0
    %7116 = vmatprep.mubr.f32.mxu0 0.0
    %v7117 = vand.u32 %v872, 4294901760
    %v7118 = vsub.f32 %v872, %v7117
    %7119 = vmatmul.mubr.f32.gmra.mrb[0].mxu0 %v7118
    %v7120 = vpop.f32.mrb[0].mxu0
    %v7121 = vadd.f32 %v6639, %v7120
    %v7122 = vpop.f32.mrb[0].mxu0
    %7123 = vmatprep.mubr.f32.mxu0 0.0
    %v7124 = vand.u32 %v873, 4294901760
    %v7125 = vsub.f32 %v873, %v7124
    %7126 = vmatmul.mubr.f32.gmra.mrb[0].mxu0 %v7125
    %v7127 = vpop.f32.mrb[0].mxu0
    %v7128 = vadd.f32 %v6645, %v7127
    %v7129 = vpop.f32.mrb[0].mxu0
    %7130 = vmatprep.mubr.f32.mxu0 0.0
    %v7131 = vand.u32 %v874, 4294901760
    %v7132 = vsub.f32 %v874, %v7131
    %7133 = vmatmul.mubr.f32.gmra.mrb[0].mxu0 %v7132
    %v7134 = vpop.f32.mrb[0].mxu0
    %v7135 = vadd.f32 %v6651, %v7134
    %v7136 = vpop.f32.mrb[0].mxu0
    %7137 = vmatprep.mubr.f32.mxu0 0.0
    %v7138 = vand.u32 %v875, 4294901760
    %v7139 = vsub.f32 %v875, %v7138
    %7140 = vmatmul.mubr.f32.gmra.mrb[0].mxu0 %v7139
    %v7141 = vpop.f32.mrb[0].mxu0
    %v7142 = vadd.f32 %v6657, %v7141
    %v7143 = vpop.f32.mrb[0].mxu0
    %7144 = vmatprep.mubr.f32.mxu0 0.0
    %v7145 = vand.u32 %v876, 4294901760
    %v7146 = vsub.f32 %v876, %v7145
    %7147 = vmatmul.mubr.f32.gmra.mrb[0].mxu0 %v7146
    %v7148 = vpop.f32.mrb[0].mxu0
    %v7149 = vadd.f32 %v6663, %v7148
    %v7150 = vpop.f32.mrb[0].mxu0
    %7151 = vmatprep.mubr.f32.mxu0 0.0
    %v7152 = vand.u32 %v877, 4294901760
    %v7153 = vsub.f32 %v877, %v7152
    %7154 = vmatmul.mubr.f32.gmra.mrb[0].mxu0 %v7153
    %v7155 = vpop.f32.mrb[0].mxu0
    %v7156 = vadd.f32 %v6669, %v7155
    %v7157 = vpop.f32.mrb[0].mxu0
    %7158 = vmatprep.mubr.f32.mxu0 0.0
    %v7159 = vand.u32 %v878, 4294901760
    %v7160 = vsub.f32 %v878, %v7159
    %7161 = vmatmul.mubr.f32.gmra.mrb[0].mxu0 %v7160
    %v7162 = vpop.f32.mrb[0].mxu0
    %v7163 = vadd.f32 %v6675, %v7162
    %v7164 = vpop.f32.mrb[0].mxu0
    %7165 = vmatprep.mubr.f32.mxu0 0.0
    %v7166 = vand.u32 %v879, 4294901760
    %v7167 = vsub.f32 %v879, %v7166
    %7168 = vmatmul.mubr.f32.gmra.mrb[0].mxu0 %v7167
    %v7169 = vpop.f32.mrb[0].mxu0
    %v7170 = vadd.f32 %v6681, %v7169
    %v7171 = vpop.f32.mrb[0].mxu0
    %7172 = vmatprep.mubr.f32.mxu0 0.0
    %v7173 = vand.u32 %v880, 4294901760
    %v7174 = vsub.f32 %v880, %v7173
    %7175 = vmatmul.mubr.f32.gmra.mrb[0].mxu0 %v7174
    %v7176 = vpop.f32.mrb[0].mxu0
    %v7177 = vadd.f32 %v6687, %v7176
    %v7178 = vpop.f32.mrb[0].mxu0
    %7179 = vmatprep.mubr.f32.mxu0 0.0
    %v7180 = vand.u32 %v881, 4294901760
    %v7181 = vsub.f32 %v881, %v7180
    %7182 = vmatmul.mubr.f32.gmra.mrb[0].mxu0 %v7181
    %v7183 = vpop.f32.mrb[0].mxu0
    %v7184 = vadd.f32 %v6693, %v7183
    %v7185 = vpop.f32.mrb[0].mxu0
    %7186 = vmatprep.mubr.f32.mxu0 0.0
    %v7187 = vand.u32 %v882, 4294901760
    %v7188 = vsub.f32 %v882, %v7187
    %7189 = vmatmul.mubr.f32.gmra.mrb[0].mxu0 %v7188
    %v7190 = vpop.f32.mrb[0].mxu0
    %v7191 = vadd.f32 %v6699, %v7190
    %v7192 = vpop.f32.mrb[0].mxu0
    %7193 = vmatprep.mubr.f32.mxu0 0.0
    %v7194 = vand.u32 %v883, 4294901760
    %v7195 = vsub.f32 %v883, %v7194
    %7196 = vmatmul.mubr.f32.gmra.mrb[0].mxu0 %v7195
    %v7197 = vpop.f32.mrb[0].mxu0
    %v7198 = vadd.f32 %v6705, %v7197
    %v7199 = vpop.f32.mrb[0].mxu0
    %7200 = vmatprep.mubr.f32.mxu0 0.0
    %v7201 = vand.u32 %v884, 4294901760
    %v7202 = vsub.f32 %v884, %v7201
    %7203 = vmatmul.mubr.f32.gmra.mrb[0].mxu0 %v7202
    %v7204 = vpop.f32.mrb[0].mxu0
    %v7205 = vadd.f32 %v6711, %v7204
    %v7206 = vpop.f32.mrb[0].mxu0
    %7207 = vmatprep.mubr.f32.mxu0 0.0
    %v7208 = vand.u32 %v885, 4294901760
    %v7209 = vsub.f32 %v885, %v7208
    %7210 = vmatmul.mubr.f32.gmra.mrb[0].mxu0 %v7209
    %v7211 = vpop.f32.mrb[0].mxu0
    %v7212 = vadd.f32 %v6717, %v7211
    %v7213 = vpop.f32.mrb[0].mxu0
    %7214 = vmatprep.mubr.f32.mxu0 0.0
    %v7215 = vand.u32 %v886, 4294901760
    %v7216 = vsub.f32 %v886, %v7215
    %7217 = vmatmul.mubr.f32.gmra.mrb[0].mxu0 %v7216
    %v7218 = vpop.f32.mrb[0].mxu0
    %v7219 = vadd.f32 %v6723, %v7218
    %v7220 = vpop.f32.mrb[0].mxu0
    %7221 = vmatprep.mubr.f32.mxu0 0.0
    %v7222 = vand.u32 %v887, 4294901760
    %v7223 = vsub.f32 %v887, %v7222
    %7224 = vmatmul.mubr.f32.gmra.mrb[0].mxu0 %v7223
    %v7225 = vpop.f32.mrb[0].mxu0
    %v7226 = vadd.f32 %v6729, %v7225
    %v7227 = vpop.f32.mrb[0].mxu0
    %7228 = vmatprep.mubr.f32.mxu0 0.0
    %v7229 = vand.u32 %v888, 4294901760
    %v7230 = vsub.f32 %v888, %v7229
    %7231 = vmatmul.mubr.f32.gmra.mrb[0].mxu0 %v7230
    %v7232 = vpop.f32.mrb[0].mxu0
    %v7233 = vadd.f32 %v6735, %v7232
    %v7234 = vpop.f32.mrb[0].mxu0
    %7235 = vmatprep.mubr.f32.mxu0 0.0
    %v7236 = vand.u32 %v889, 4294901760
    %v7237 = vsub.f32 %v889, %v7236
    %7238 = vmatmul.mubr.f32.gmra.mrb[0].mxu0 %v7237
    %v7239 = vpop.f32.mrb[0].mxu0
    %v7240 = vadd.f32 %v6741, %v7239
    %v7241 = vpop.f32.mrb[0].mxu0
    %7242 = vmatprep.mubr.f32.mxu0 0.0
    %v7243 = vand.u32 %v890, 4294901760
    %v7244 = vsub.f32 %v890, %v7243
    %7245 = vmatmul.mubr.f32.gmra.mrb[0].mxu0 %v7244
    %v7246 = vpop.f32.mrb[0].mxu0
    %v7247 = vadd.f32 %v6747, %v7246
    %v7248 = vpop.f32.mrb[0].mxu0
    %7249 = vmatprep.mubr.f32.mxu0 0.0
    %v7250 = vand.u32 %v891, 4294901760
    %v7251 = vsub.f32 %v891, %v7250
    %7252 = vmatmul.mubr.f32.gmra.mrb[0].mxu0 %v7251
    %v7253 = vpop.f32.mrb[0].mxu0
    %v7254 = vadd.f32 %v6753, %v7253
    %v7255 = vpop.f32.mrb[0].mxu0
    %7256 = vmatprep.mubr.f32.mxu0 0.0
    %v7257 = vand.u32 %v892, 4294901760
    %v7258 = vsub.f32 %v892, %v7257
    %7259 = vmatmul.mubr.f32.gmra.mrb[0].mxu0 %v7258
    %v7260 = vpop.f32.mrb[0].mxu0
    %v7261 = vadd.f32 %v6759, %v7260
    %v7262 = vpop.f32.mrb[0].mxu0
    %7263 = vmatprep.mubr.f32.mxu0 0.0
    %v7264 = vand.u32 %v893, 4294901760
    %v7265 = vsub.f32 %v893, %v7264
    %7266 = vmatmul.mubr.f32.gmra.mrb[0].mxu0 %v7265
    %v7267 = vpop.f32.mrb[0].mxu0
    %v7268 = vadd.f32 %v6765, %v7267
    %v7269 = vpop.f32.mrb[0].mxu0
    %7270 = vmatprep.mubr.f32.mxu0 0.0
    %v7271 = vand.u32 %v894, 4294901760
    %v7272 = vsub.f32 %v894, %v7271
    %7273 = vmatmul.mubr.f32.gmra.mrb[0].mxu0 %v7272
    %v7274 = vpop.f32.mrb[0].mxu0
    %v7275 = vadd.f32 %v6771, %v7274
    %v7276 = vpop.f32.mrb[0].mxu0
    %7277 = vmatprep.mubr.f32.mxu0 0.0
    %v7278 = vand.u32 %v895, 4294901760
    %v7279 = vsub.f32 %v895, %v7278
    %7280 = vmatmul.mubr.f32.gmra.mrb[0].mxu0 %v7279
    %v7281 = vpop.f32.mrb[0].mxu0
    %v7282 = vadd.f32 %v6777, %v7281
    %v7283 = vpop.f32.mrb[0].mxu0
    %7284 = vmatprep.mubr.f32.mxu0 0.0
    %v7285 = vand.u32 %v896, 4294901760
    %v7286 = vsub.f32 %v896, %v7285
    %7287 = vmatmul.mubr.f32.gmra.mrb[0].mxu0 %v7286
    %v7288 = vpop.f32.mrb[0].mxu0
    %v7289 = vadd.f32 %v6783, %v7288
    %v7290 = vpop.f32.mrb[0].mxu0
    %7291 = vmatprep.mubr.f32.mxu0 0.0
    %v7292 = vand.u32 %v897, 4294901760
    %v7293 = vsub.f32 %v897, %v7292
    %7294 = vmatmul.mubr.f32.gmra.mrb[0].mxu0 %v7293
    %v7295 = vpop.f32.mrb[0].mxu0
    %v7296 = vadd.f32 %v6789, %v7295
    %v7297 = vpop.f32.mrb[0].mxu0
    %7298 = vmatprep.mubr.f32.mxu0 0.0
    %v7299 = vand.u32 %v898, 4294901760
    %v7300 = vsub.f32 %v898, %v7299
    %7301 = vmatmul.mubr.f32.gmra.mrb[0].mxu0 %v7300
    %v7302 = vpop.f32.mrb[0].mxu0
    %v7303 = vadd.f32 %v6795, %v7302
    %v7304 = vpop.f32.mrb[0].mxu0
    %7305 = vmatprep.mubr.f32.mxu0 0.0
    %v7306 = vand.u32 %v899, 4294901760
    %v7307 = vsub.f32 %v899, %v7306
    %7308 = vmatmul.mubr.f32.gmra.mrb[0].mxu0 %v7307
    %v7309 = vpop.f32.mrb[0].mxu0
    %v7310 = vadd.f32 %v6801, %v7309
    %v7311 = vpop.f32.mrb[0].mxu0
    %7312 = vmatprep.mubr.f32.mxu0 0.0
    %v7313 = vand.u32 %v900, 4294901760
    %v7314 = vsub.f32 %v900, %v7313
    %7315 = vmatmul.mubr.f32.gmra.mrb[0].mxu0 %v7314
    %v7316 = vpop.f32.mrb[0].mxu0
    %v7317 = vadd.f32 %v6807, %v7316
    %v7318 = vpop.f32.mrb[0].mxu0
    %7319 = vmatprep.mubr.f32.mxu0 0.0
    %v7320 = vand.u32 %v901, 4294901760
    %v7321 = vsub.f32 %v901, %v7320
    %7322 = vmatmul.mubr.f32.gmra.mrb[0].mxu0 %v7321
    %v7323 = vpop.f32.mrb[0].mxu0
    %v7324 = vadd.f32 %v6813, %v7323
    %v7325 = vpop.f32.mrb[0].mxu0
    %7326 = vmatprep.mubr.f32.mxu0 0.0
    %v7327 = vand.u32 %v902, 4294901760
    %v7328 = vsub.f32 %v902, %v7327
    %7329 = vmatmul.mubr.f32.gmra.mrb[0].mxu0 %v7328
    %v7330 = vpop.f32.mrb[0].mxu0
    %v7331 = vadd.f32 %v6819, %v7330
    %v7332 = vpop.f32.mrb[0].mxu0
    %7333 = vmatprep.mubr.f32.mxu0 0.0
    %v7334 = vand.u32 %v903, 4294901760
    %v7335 = vsub.f32 %v903, %v7334
    %7336 = vmatmul.mubr.f32.gmra.mrb[0].mxu0 %v7335
    %v7337 = vpop.f32.mrb[0].mxu0
    %v7338 = vadd.f32 %v6825, %v7337
    %v7339 = vpop.f32.mrb[0].mxu0
    %7340 = vmatprep.mubr.f32.mxu0 0.0
    %v7341 = vand.u32 %v904, 4294901760
    %v7342 = vsub.f32 %v904, %v7341
    %7343 = vmatmul.mubr.f32.gmra.mrb[0].mxu0 %v7342
    %v7344 = vpop.f32.mrb[0].mxu0
    %v7345 = vadd.f32 %v6831, %v7344
    %v7346 = vpop.f32.mrb[0].mxu0
    %7347 = vmatprep.mubr.f32.mxu0 0.0
    %v7348 = vand.u32 %v905, 4294901760
    %v7349 = vsub.f32 %v905, %v7348
    %7350 = vmatmul.mubr.f32.gmra.mrb[0].mxu0 %v7349
    %v7351 = vpop.f32.mrb[0].mxu0
    %v7352 = vadd.f32 %v6837, %v7351
    %v7353 = vpop.f32.mrb[0].mxu0
    %7354 = vmatprep.mubr.f32.mxu0 0.0
    %v7355 = vand.u32 %v906, 4294901760
    %v7356 = vsub.f32 %v906, %v7355
    %7357 = vmatmul.mubr.f32.gmra.mrb[0].mxu0 %v7356
    %v7358 = vpop.f32.mrb[0].mxu0
    %v7359 = vadd.f32 %v6843, %v7358
    %v7360 = vpop.f32.mrb[0].mxu0
    %7361 = vmatprep.mubr.f32.mxu0 0.0
    %v7362 = vand.u32 %v907, 4294901760
    %v7363 = vsub.f32 %v907, %v7362
    %7364 = vmatmul.mubr.f32.gmra.mrb[0].mxu0 %v7363
    %v7365 = vpop.f32.mrb[0].mxu0
    %v7366 = vadd.f32 %v6849, %v7365
    %v7367 = vpop.f32.mrb[0].mxu0
    %7368 = vmatprep.mubr.f32.mxu0 0.0
    %v7369 = vand.u32 %v908, 4294901760
    %v7370 = vsub.f32 %v908, %v7369
    %7371 = vmatmul.mubr.f32.gmra.mrb[0].mxu0 %v7370
    %v7372 = vpop.f32.mrb[0].mxu0
    %v7373 = vadd.f32 %v6855, %v7372
    %v7374 = vpop.f32.mrb[0].mxu0
    %7375 = vmatprep.mubr.f32.mxu0 0.0
    %v7376 = vand.u32 %v909, 4294901760
    %v7377 = vsub.f32 %v909, %v7376
    %7378 = vmatmul.mubr.f32.gmra.mrb[0].mxu0 %v7377
    %v7379 = vpop.f32.mrb[0].mxu0
    %v7380 = vadd.f32 %v6861, %v7379
    %v7381 = vpop.f32.mrb[0].mxu0
    %7382 = vmatprep.mubr.f32.mxu0 0.0
    %v7383 = vand.u32 %v910, 4294901760
    %v7384 = vsub.f32 %v910, %v7383
    %7385 = vmatmul.mubr.f32.gmra.mrb[0].mxu0 %v7384
    %v7386 = vpop.f32.mrb[0].mxu0
    %v7387 = vadd.f32 %v6867, %v7386
    %v7388 = vpop.f32.mrb[0].mxu0
    %7389 = vmatprep.mubr.f32.mxu0 0.0
    %v7390 = vand.u32 %v911, 4294901760
    %v7391 = vsub.f32 %v911, %v7390
    %7392 = vmatmul.mubr.f32.gmra.mrb[0].mxu0 %v7391
    %v7393 = vpop.f32.mrb[0].mxu0
    %v7394 = vadd.f32 %v6873, %v7393
    %v7395 = vpop.f32.mrb[0].mxu0
    %7396 = vmatprep.mubr.f32.mxu0 0.0
    %v7397 = vand.u32 %v912, 4294901760
    %v7398 = vsub.f32 %v912, %v7397
    %7399 = vmatmul.mubr.f32.gmra.mrb[0].mxu0 %v7398
    %v7400 = vpop.f32.mrb[0].mxu0
    %v7401 = vadd.f32 %v6879, %v7400
    %v7402 = vpop.f32.mrb[0].mxu0
    %7403 = vmatprep.mubr.f32.mxu0 0.0
    %v7404 = vand.u32 %v913, 4294901760
    %v7405 = vsub.f32 %v913, %v7404
    %7406 = vmatmul.mubr.f32.gmra.mrb[0].mxu0 %v7405
    %v7407 = vpop.f32.mrb[0].mxu0
    %v7408 = vadd.f32 %v6885, %v7407
    %v7409 = vpop.f32.mrb[0].mxu0
    %7410 = vmatprep.mubr.f32.mxu0 0.0
    %v7411 = vand.u32 %v914, 4294901760
    %v7412 = vsub.f32 %v914, %v7411
    %7413 = vmatmul.mubr.f32.gmra.mrb[0].mxu0 %v7412
    %v7414 = vpop.f32.mrb[0].mxu0
    %v7415 = vadd.f32 %v6891, %v7414
    %v7416 = vpop.f32.mrb[0].mxu0
    %7417 = vmatprep.mubr.f32.mxu0 0.0
    %v7418 = vand.u32 %v915, 4294901760
    %v7419 = vsub.f32 %v915, %v7418
    %7420 = vmatmul.mubr.f32.gmra.mrb[0].mxu0 %v7419
    %v7421 = vpop.f32.mrb[0].mxu0
    %v7422 = vadd.f32 %v6897, %v7421
    %v7423 = vpop.f32.mrb[0].mxu0
    %7424 = vmatprep.mubr.f32.mxu0 0.0
    %v7425 = vand.u32 %v916, 4294901760
    %v7426 = vsub.f32 %v916, %v7425
    %7427 = vmatmul.mubr.f32.gmra.mrb[0].mxu0 %v7426
    %v7428 = vpop.f32.mrb[0].mxu0
    %v7429 = vadd.f32 %v6903, %v7428
    %v7430 = vpop.f32.mrb[0].mxu0
    %7431 = vmatprep.mubr.f32.mxu0 0.0
    %v7432 = vand.u32 %v917, 4294901760
    %v7433 = vsub.f32 %v917, %v7432
    %7434 = vmatmul.mubr.f32.gmra.mrb[0].mxu0 %v7433
    %v7435 = vpop.f32.mrb[0].mxu0
    %v7436 = vadd.f32 %v6909, %v7435
    %v7437 = vpop.f32.mrb[0].mxu0
    %7438 = vmatprep.mubr.f32.mxu0 0.0
    %v7439 = vand.u32 %v918, 4294901760
    %v7440 = vsub.f32 %v918, %v7439
    %7441 = vmatmul.mubr.f32.gmra.mrb[0].mxu0 %v7440
    %v7442 = vpop.f32.mrb[0].mxu0
    %v7443 = vadd.f32 %v6915, %v7442
    %v7444 = vpop.f32.mrb[0].mxu0
    %7445 = vmatprep.mubr.f32.mxu0 0.0
    %v7446 = vand.u32 %v919, 4294901760
    %v7447 = vsub.f32 %v919, %v7446
    %7448 = vmatmul.mubr.f32.gmra.mrb[0].mxu0 %v7447
    %v7449 = vpop.f32.mrb[0].mxu0
    %v7450 = vadd.f32 %v6921, %v7449
    %v7451 = vpop.f32.mrb[0].mxu0
    %7452 = vmatprep.mubr.f32.mxu0 0.0
    %v7453 = vand.u32 %v920, 4294901760
    %v7454 = vsub.f32 %v920, %v7453
    %7455 = vmatmul.mubr.f32.gmra.mrb[0].mxu0 %v7454
    %v7456 = vpop.f32.mrb[0].mxu0
    %v7457 = vadd.f32 %v6927, %v7456
    %v7458 = vpop.f32.mrb[0].mxu0
    %7459 = vmatprep.mubr.f32.mxu0 0.0
    %v7460 = vand.u32 %v921, 4294901760
    %v7461 = vsub.f32 %v921, %v7460
    %7462 = vmatmul.mubr.f32.gmra.mrb[0].mxu0 %v7461
    %v7463 = vpop.f32.mrb[0].mxu0
    %v7464 = vadd.f32 %v6933, %v7463
    %v7465 = vpop.f32.mrb[0].mxu0
    %7466 = vmatprep.mubr.f32.mxu0 0.0
    %v7467 = vand.u32 %v922, 4294901760
    %v7468 = vsub.f32 %v922, %v7467
    %7469 = vmatmul.mubr.f32.gmra.mrb[0].mxu0 %v7468
    %v7470 = vpop.f32.mrb[0].mxu0
    %v7471 = vadd.f32 %v6939, %v7470
    %v7472 = vpop.f32.mrb[0].mxu0
    %7473 = vmatprep.mubr.f32.mxu0 0.0
    %v7474 = vand.u32 %v923, 4294901760
    %v7475 = vsub.f32 %v923, %v7474
    %7476 = vmatmul.mubr.f32.gmra.mrb[0].mxu0 %v7475
    %v7477 = vpop.f32.mrb[0].mxu0
    %v7478 = vadd.f32 %v6945, %v7477
    %v7479 = vpop.f32.mrb[0].mxu0
    %7480 = vmatprep.mubr.f32.mxu0 0.0
    %v7481 = vand.u32 %v924, 4294901760
    %v7482 = vsub.f32 %v924, %v7481
    %7483 = vmatmul.mubr.f32.gmra.mrb[0].mxu0 %v7482
    %v7484 = vpop.f32.mrb[0].mxu0
    %v7485 = vadd.f32 %v6951, %v7484
    %v7486 = vpop.f32.mrb[0].mxu0
    %7487 = vmatprep.mubr.f32.mxu0 0.0
    %v7488 = vand.u32 %v925, 4294901760
    %v7489 = vsub.f32 %v925, %v7488
    %7490 = vmatmul.mubr.f32.gmra.mrb[0].mxu0 %v7489
    %v7491 = vpop.f32.mrb[0].mxu0
    %v7492 = vadd.f32 %v6957, %v7491
    %v7493 = vpop.f32.mrb[0].mxu0
    %7494 = vmatprep.mubr.f32.mxu0 0.0
    %v7495 = vand.u32 %v926, 4294901760
    %v7496 = vsub.f32 %v926, %v7495
    %7497 = vmatmul.mubr.f32.gmra.mrb[0].mxu0 %v7496
    %v7498 = vpop.f32.mrb[0].mxu0
    %v7499 = vadd.f32 %v6963, %v7498
    %v7500 = vpop.f32.mrb[0].mxu0
    %7501 = vmatprep.mubr.f32.mxu0 0.0
    %v7502 = vand.u32 %v927, 4294901760
    %v7503 = vsub.f32 %v927, %v7502
    %7504 = vmatmul.mubr.f32.gmra.mrb[0].mxu0 %v7503
    %v7505 = vpop.f32.mrb[0].mxu0
    %v7506 = vadd.f32 %v6969, %v7505
    %v7507 = vpop.f32.mrb[0].mxu0
    %7508 = vmatprep.mubr.f32.mxu0 0.0
    %v7509 = vand.u32 %v928, 4294901760
    %v7510 = vsub.f32 %v928, %v7509
    %7511 = vmatmul.mubr.f32.gmra.mrb[0].mxu0 %v7510
    %v7512 = vpop.f32.mrb[0].mxu0
    %v7513 = vadd.f32 %v6975, %v7512
    %v7514 = vpop.f32.mrb[0].mxu0
    %7515 = vmatprep.mubr.f32.mxu0 0.0
    %v7516 = vand.u32 %v929, 4294901760
    %v7517 = vsub.f32 %v929, %v7516
    %7518 = vmatmul.mubr.f32.gmra.mrb[0].mxu0 %v7517
    %v7519 = vpop.f32.mrb[0].mxu0
    %v7520 = vadd.f32 %v6981, %v7519
    %v7521 = vpop.f32.mrb[0].mxu0
    %7522 = vmatprep.mubr.f32.mxu0 0.0
    %v7523 = vand.u32 %v930, 4294901760
    %v7524 = vsub.f32 %v930, %v7523
    %7525 = vmatmul.mubr.f32.gmra.mrb[0].mxu0 %v7524
    %v7526 = vpop.f32.mrb[0].mxu0
    %v7527 = vadd.f32 %v6987, %v7526
    %v7528 = vpop.f32.mrb[0].mxu0
    %7529 = vmatprep.mubr.f32.mxu0 0.0
    %v7530 = vand.u32 %v931, 4294901760
    %v7531 = vsub.f32 %v931, %v7530
    %7532 = vmatmul.mubr.f32.gmra.mrb[0].mxu0 %v7531
    %v7533 = vpop.f32.mrb[0].mxu0
    %v7534 = vadd.f32 %v6993, %v7533
    %v7535 = vpop.f32.mrb[0].mxu0
    %7536 = vmatprep.mubr.f32.mxu0 0.0
    %v7537 = vand.u32 %v932, 4294901760
    %v7538 = vsub.f32 %v932, %v7537
    %7539 = vmatmul.mubr.f32.gmra.mrb[0].mxu0 %v7538
    %v7540 = vpop.f32.mrb[0].mxu0
    %v7541 = vadd.f32 %v6999, %v7540
    %v7542 = vpop.f32.mrb[0].mxu0
    %7543 = vmatprep.mubr.f32.mxu0 0.0
    %v7544 = vand.u32 %v933, 4294901760
    %v7545 = vsub.f32 %v933, %v7544
    %7546 = vmatmul.mubr.f32.gmra.mrb[0].mxu0 %v7545
    %v7547 = vpop.f32.mrb[0].mxu0
    %v7548 = vadd.f32 %v7005, %v7547
    %v7549 = vpop.f32.mrb[0].mxu0
    %7550 = vmatprep.mubr.f32.mxu0 0.0
    %v7551 = vand.u32 %v934, 4294901760
    %v7552 = vsub.f32 %v934, %v7551
    %7553 = vmatmul.mubr.f32.gmra.mrb[0].mxu0 %v7552
    %v7554 = vpop.f32.mrb[0].mxu0
    %v7555 = vadd.f32 %v7011, %v7554
    %v7556 = vpop.f32.mrb[0].mxu0
    %7557 = vmatprep.mubr.f32.mxu0 0.0
    %v7558 = vand.u32 %v935, 4294901760
    %v7559 = vsub.f32 %v935, %v7558
    %7560 = vmatmul.mubr.f32.gmra.mrb[0].mxu0 %v7559
    %v7561 = vpop.f32.mrb[0].mxu0
    %v7562 = vadd.f32 %v7017, %v7561
    %v7563 = vpop.f32.mrb[0].mxu0
    %7564 = vdwg.mxu0
    %7565 = vmatprep.subr.mxu0 0.0
    %v7566 = vand.u32 %v5677, 4294901760
    %7567 = vmatpush1.msra.mxu0 %v7566
    %7568 = vmatprep.subr.mxu0 0.0
    %v7569 = vand.u32 %v5683, 4294901760
    %7570 = vmatpush1.msra.mxu0 %v7569
    %7571 = vmatprep.subr.mxu0 0.0
    %v7572 = vand.u32 %v5689, 4294901760
    %7573 = vmatpush1.msra.mxu0 %v7572
    %7574 = vmatprep.subr.mxu0 0.0
    %v7575 = vand.u32 %v5695, 4294901760
    %7576 = vmatpush1.msra.mxu0 %v7575
    %7577 = vmatprep.subr.mxu0 0.0
    %v7578 = vand.u32 %v5701, 4294901760
    %7579 = vmatpush1.msra.mxu0 %v7578
    %7580 = vmatprep.subr.mxu0 0.0
    %v7581 = vand.u32 %v5707, 4294901760
    %7582 = vmatpush1.msra.mxu0 %v7581
    %7583 = vmatprep.subr.mxu0 0.0
    %v7584 = vand.u32 %v5713, 4294901760
    %7585 = vmatpush1.msra.mxu0 %v7584
    %7586 = vmatprep.subr.mxu0 0.0
    %v7587 = vand.u32 %v5719, 4294901760
    %7588 = vmatpush1.msra.mxu0 %v7587
    %7589 = vmatprep.subr.mxu0 0.0
    %v7590 = vand.u32 %v5725, 4294901760
    %7591 = vmatpush1.msra.mxu0 %v7590
    %7592 = vmatprep.subr.mxu0 0.0
    %v7593 = vand.u32 %v5731, 4294901760
    %7594 = vmatpush1.msra.mxu0 %v7593
    %7595 = vmatprep.subr.mxu0 0.0
    %v7596 = vand.u32 %v5737, 4294901760
    %7597 = vmatpush1.msra.mxu0 %v7596
    %7598 = vmatprep.subr.mxu0 0.0
    %v7599 = vand.u32 %v5743, 4294901760
    %7600 = vmatpush1.msra.mxu0 %v7599
    %7601 = vmatprep.subr.mxu0 0.0
    %v7602 = vand.u32 %v5749, 4294901760
    %7603 = vmatpush1.msra.mxu0 %v7602
    %7604 = vmatprep.subr.mxu0 0.0
    %v7605 = vand.u32 %v5755, 4294901760
    %7606 = vmatpush1.msra.mxu0 %v7605
    %7607 = vmatprep.subr.mxu0 0.0
    %v7608 = vand.u32 %v5761, 4294901760
    %7609 = vmatpush1.msra.mxu0 %v7608
    %7610 = vmatprep.subr.mxu0 0.0
    %v7611 = vand.u32 %v5767, 4294901760
    %7612 = vmatpush1.msra.mxu0 %v7611
    %7613 = vmatprep.subr.mxu0 0.0
    %7614 = vmatpush1.msra.mxu0 0.0
    %7615 = vmatprep.subr.mxu0 0.0
    %7616 = vmatpush1.msra.mxu0 0.0
    %7617 = vmatprep.subr.mxu0 0.0
    %7618 = vmatpush1.msra.mxu0 0.0
    %7619 = vmatprep.subr.mxu0 0.0
    %7620 = vmatpush1.msra.mxu0 0.0
    %7621 = vmatprep.subr.mxu0 0.0
    %7622 = vmatpush1.msra.mxu0 0.0
    %7623 = vmatprep.subr.mxu0 0.0
    %7624 = vmatpush1.msra.mxu0 0.0
    %7625 = vmatprep.subr.mxu0 0.0
    %7626 = vmatpush1.msra.mxu0 0.0
    %7627 = vmatprep.subr.mxu0 0.0
    %7628 = vmatpush1.msra.mxu0 0.0
    %7629 = vmatprep.subr.mxu0 0.0
    %7630 = vmatpush1.msra.mxu0 0.0
    %7631 = vmatprep.subr.mxu0 0.0
    %7632 = vmatpush1.msra.mxu0 0.0
    %7633 = vmatprep.subr.mxu0 0.0
    %7634 = vmatpush1.msra.mxu0 0.0
    %7635 = vmatprep.subr.mxu0 0.0
    %7636 = vmatpush1.msra.mxu0 0.0
    %7637 = vmatprep.subr.mxu0 0.0
    %7638 = vmatpush1.msra.mxu0 0.0
    %7639 = vmatprep.subr.mxu0 0.0
    %7640 = vmatpush1.msra.mxu0 0.0
    %7641 = vmatprep.subr.mxu0 0.0
    %7642 = vmatpush1.msra.mxu0 0.0
    %7643 = vmatprep.subr.mxu0 0.0
    %7644 = vmatpush1.msra.mxu0 0.0
    %7645 = vmatprep.mubr.f32.mxu0 0.0
    %v7646 = vand.u32 %v872, 4294901760
    %v7647 = vsub.f32 %v872, %v7646
    %v7648 = vand.u32 %v7647, 4294901760
    %7649 = vmatmul.mubr.f32.gmra.mrb[0].mxu0 %v7648
    %v7650 = vpop.f32.mrb[0].mxu0
    %v7651 = vadd.f32 %v7121, %v7650
    %v7652 = vpop.f32.mrb[0].mxu0
    %7653 = vmatprep.mubr.f32.mxu0 0.0
    %v7654 = vand.u32 %v873, 4294901760
    %v7655 = vsub.f32 %v873, %v7654
    %v7656 = vand.u32 %v7655, 4294901760
    %7657 = vmatmul.mubr.f32.gmra.mrb[0].mxu0 %v7656
    %v7658 = vpop.f32.mrb[0].mxu0
    %v7659 = vadd.f32 %v7128, %v7658
    %v7660 = vpop.f32.mrb[0].mxu0
    %7661 = vmatprep.mubr.f32.mxu0 0.0
    %v7662 = vand.u32 %v874, 4294901760
    %v7663 = vsub.f32 %v874, %v7662
    %v7664 = vand.u32 %v7663, 4294901760
    %7665 = vmatmul.mubr.f32.gmra.mrb[0].mxu0 %v7664
    %v7666 = vpop.f32.mrb[0].mxu0
    %v7667 = vadd.f32 %v7135, %v7666
    %v7668 = vpop.f32.mrb[0].mxu0
    %7669 = vmatprep.mubr.f32.mxu0 0.0
    %v7670 = vand.u32 %v875, 4294901760
    %v7671 = vsub.f32 %v875, %v7670
    %v7672 = vand.u32 %v7671, 4294901760
    %7673 = vmatmul.mubr.f32.gmra.mrb[0].mxu0 %v7672
    %v7674 = vpop.f32.mrb[0].mxu0
    %v7675 = vadd.f32 %v7142, %v7674
    %v7676 = vpop.f32.mrb[0].mxu0
    %7677 = vmatprep.mubr.f32.mxu0 0.0
    %v7678 = vand.u32 %v876, 4294901760
    %v7679 = vsub.f32 %v876, %v7678
    %v7680 = vand.u32 %v7679, 4294901760
    %7681 = vmatmul.mubr.f32.gmra.mrb[0].mxu0 %v7680
    %v7682 = vpop.f32.mrb[0].mxu0
    %v7683 = vadd.f32 %v7149, %v7682
    %v7684 = vpop.f32.mrb[0].mxu0
    %7685 = vmatprep.mubr.f32.mxu0 0.0
    %v7686 = vand.u32 %v877, 4294901760
    %v7687 = vsub.f32 %v877, %v7686
    %v7688 = vand.u32 %v7687, 4294901760
    %7689 = vmatmul.mubr.f32.gmra.mrb[0].mxu0 %v7688
    %v7690 = vpop.f32.mrb[0].mxu0
    %v7691 = vadd.f32 %v7156, %v7690
    %v7692 = vpop.f32.mrb[0].mxu0
    %7693 = vmatprep.mubr.f32.mxu0 0.0
    %v7694 = vand.u32 %v878, 4294901760
    %v7695 = vsub.f32 %v878, %v7694
    %v7696 = vand.u32 %v7695, 4294901760
    %7697 = vmatmul.mubr.f32.gmra.mrb[0].mxu0 %v7696
    %v7698 = vpop.f32.mrb[0].mxu0
    %v7699 = vadd.f32 %v7163, %v7698
    %v7700 = vpop.f32.mrb[0].mxu0
    %7701 = vmatprep.mubr.f32.mxu0 0.0
    %v7702 = vand.u32 %v879, 4294901760
    %v7703 = vsub.f32 %v879, %v7702
    %v7704 = vand.u32 %v7703, 4294901760
    %7705 = vmatmul.mubr.f32.gmra.mrb[0].mxu0 %v7704
    %v7706 = vpop.f32.mrb[0].mxu0
    %v7707 = vadd.f32 %v7170, %v7706
    %v7708 = vpop.f32.mrb[0].mxu0
    %7709 = vmatprep.mubr.f32.mxu0 0.0
    %v7710 = vand.u32 %v880, 4294901760
    %v7711 = vsub.f32 %v880, %v7710
    %v7712 = vand.u32 %v7711, 4294901760
    %7713 = vmatmul.mubr.f32.gmra.mrb[0].mxu0 %v7712
    %v7714 = vpop.f32.mrb[0].mxu0
    %v7715 = vadd.f32 %v7177, %v7714
    %v7716 = vpop.f32.mrb[0].mxu0
    %7717 = vmatprep.mubr.f32.mxu0 0.0
    %v7718 = vand.u32 %v881, 4294901760
    %v7719 = vsub.f32 %v881, %v7718
    %v7720 = vand.u32 %v7719, 4294901760
    %7721 = vmatmul.mubr.f32.gmra.mrb[0].mxu0 %v7720
    %v7722 = vpop.f32.mrb[0].mxu0
    %v7723 = vadd.f32 %v7184, %v7722
    %v7724 = vpop.f32.mrb[0].mxu0
    %7725 = vmatprep.mubr.f32.mxu0 0.0
    %v7726 = vand.u32 %v882, 4294901760
    %v7727 = vsub.f32 %v882, %v7726
    %v7728 = vand.u32 %v7727, 4294901760
    %7729 = vmatmul.mubr.f32.gmra.mrb[0].mxu0 %v7728
    %v7730 = vpop.f32.mrb[0].mxu0
    %v7731 = vadd.f32 %v7191, %v7730
    %v7732 = vpop.f32.mrb[0].mxu0
    %7733 = vmatprep.mubr.f32.mxu0 0.0
    %v7734 = vand.u32 %v883, 4294901760
    %v7735 = vsub.f32 %v883, %v7734
    %v7736 = vand.u32 %v7735, 4294901760
    %7737 = vmatmul.mubr.f32.gmra.mrb[0].mxu0 %v7736
    %v7738 = vpop.f32.mrb[0].mxu0
    %v7739 = vadd.f32 %v7198, %v7738
    %v7740 = vpop.f32.mrb[0].mxu0
    %7741 = vmatprep.mubr.f32.mxu0 0.0
    %v7742 = vand.u32 %v884, 4294901760
    %v7743 = vsub.f32 %v884, %v7742
    %v7744 = vand.u32 %v7743, 4294901760
    %7745 = vmatmul.mubr.f32.gmra.mrb[0].mxu0 %v7744
    %v7746 = vpop.f32.mrb[0].mxu0
    %v7747 = vadd.f32 %v7205, %v7746
    %v7748 = vpop.f32.mrb[0].mxu0
    %7749 = vmatprep.mubr.f32.mxu0 0.0
    %v7750 = vand.u32 %v885, 4294901760
    %v7751 = vsub.f32 %v885, %v7750
    %v7752 = vand.u32 %v7751, 4294901760
    %7753 = vmatmul.mubr.f32.gmra.mrb[0].mxu0 %v7752
    %v7754 = vpop.f32.mrb[0].mxu0
    %v7755 = vadd.f32 %v7212, %v7754
    %v7756 = vpop.f32.mrb[0].mxu0
    %7757 = vmatprep.mubr.f32.mxu0 0.0
    %v7758 = vand.u32 %v886, 4294901760
    %v7759 = vsub.f32 %v886, %v7758
    %v7760 = vand.u32 %v7759, 4294901760
    %7761 = vmatmul.mubr.f32.gmra.mrb[0].mxu0 %v7760
    %v7762 = vpop.f32.mrb[0].mxu0
    %v7763 = vadd.f32 %v7219, %v7762
    %v7764 = vpop.f32.mrb[0].mxu0
    %7765 = vmatprep.mubr.f32.mxu0 0.0
    %v7766 = vand.u32 %v887, 4294901760
    %v7767 = vsub.f32 %v887, %v7766
    %v7768 = vand.u32 %v7767, 4294901760
    %7769 = vmatmul.mubr.f32.gmra.mrb[0].mxu0 %v7768
    %v7770 = vpop.f32.mrb[0].mxu0
    %v7771 = vadd.f32 %v7226, %v7770
    %v7772 = vpop.f32.mrb[0].mxu0
    %7773 = vmatprep.mubr.f32.mxu0 0.0
    %v7774 = vand.u32 %v888, 4294901760
    %v7775 = vsub.f32 %v888, %v7774
    %v7776 = vand.u32 %v7775, 4294901760
    %7777 = vmatmul.mubr.f32.gmra.mrb[0].mxu0 %v7776
    %v7778 = vpop.f32.mrb[0].mxu0
    %v7779 = vadd.f32 %v7233, %v7778
    %v7780 = vpop.f32.mrb[0].mxu0
    %7781 = vmatprep.mubr.f32.mxu0 0.0
    %v7782 = vand.u32 %v889, 4294901760
    %v7783 = vsub.f32 %v889, %v7782
    %v7784 = vand.u32 %v7783, 4294901760
    %7785 = vmatmul.mubr.f32.gmra.mrb[0].mxu0 %v7784
    %v7786 = vpop.f32.mrb[0].mxu0
    %v7787 = vadd.f32 %v7240, %v7786
    %v7788 = vpop.f32.mrb[0].mxu0
    %7789 = vmatprep.mubr.f32.mxu0 0.0
    %v7790 = vand.u32 %v890, 4294901760
    %v7791 = vsub.f32 %v890, %v7790
    %v7792 = vand.u32 %v7791, 4294901760
    %7793 = vmatmul.mubr.f32.gmra.mrb[0].mxu0 %v7792
    %v7794 = vpop.f32.mrb[0].mxu0
    %v7795 = vadd.f32 %v7247, %v7794
    %v7796 = vpop.f32.mrb[0].mxu0
    %7797 = vmatprep.mubr.f32.mxu0 0.0
    %v7798 = vand.u32 %v891, 4294901760
    %v7799 = vsub.f32 %v891, %v7798
    %v7800 = vand.u32 %v7799, 4294901760
    %7801 = vmatmul.mubr.f32.gmra.mrb[0].mxu0 %v7800
    %v7802 = vpop.f32.mrb[0].mxu0
    %v7803 = vadd.f32 %v7254, %v7802
    %v7804 = vpop.f32.mrb[0].mxu0
    %7805 = vmatprep.mubr.f32.mxu0 0.0
    %v7806 = vand.u32 %v892, 4294901760
    %v7807 = vsub.f32 %v892, %v7806
    %v7808 = vand.u32 %v7807, 4294901760
    %7809 = vmatmul.mubr.f32.gmra.mrb[0].mxu0 %v7808
    %v7810 = vpop.f32.mrb[0].mxu0
    %v7811 = vadd.f32 %v7261, %v7810
    %v7812 = vpop.f32.mrb[0].mxu0
    %7813 = vmatprep.mubr.f32.mxu0 0.0
    %v7814 = vand.u32 %v893, 4294901760
    %v7815 = vsub.f32 %v893, %v7814
    %v7816 = vand.u32 %v7815, 4294901760
    %7817 = vmatmul.mubr.f32.gmra.mrb[0].mxu0 %v7816
    %v7818 = vpop.f32.mrb[0].mxu0
    %v7819 = vadd.f32 %v7268, %v7818
    %v7820 = vpop.f32.mrb[0].mxu0
    %7821 = vmatprep.mubr.f32.mxu0 0.0
    %v7822 = vand.u32 %v894, 4294901760
    %v7823 = vsub.f32 %v894, %v7822
    %v7824 = vand.u32 %v7823, 4294901760
    %7825 = vmatmul.mubr.f32.gmra.mrb[0].mxu0 %v7824
    %v7826 = vpop.f32.mrb[0].mxu0
    %v7827 = vadd.f32 %v7275, %v7826
    %v7828 = vpop.f32.mrb[0].mxu0
    %7829 = vmatprep.mubr.f32.mxu0 0.0
    %v7830 = vand.u32 %v895, 4294901760
    %v7831 = vsub.f32 %v895, %v7830
    %v7832 = vand.u32 %v7831, 4294901760
    %7833 = vmatmul.mubr.f32.gmra.mrb[0].mxu0 %v7832
    %v7834 = vpop.f32.mrb[0].mxu0
    %v7835 = vadd.f32 %v7282, %v7834
    %v7836 = vpop.f32.mrb[0].mxu0
    %7837 = vmatprep.mubr.f32.mxu0 0.0
    %v7838 = vand.u32 %v896, 4294901760
    %v7839 = vsub.f32 %v896, %v7838
    %v7840 = vand.u32 %v7839, 4294901760
    %7841 = vmatmul.mubr.f32.gmra.mrb[0].mxu0 %v7840
    %v7842 = vpop.f32.mrb[0].mxu0
    %v7843 = vadd.f32 %v7289, %v7842
    %v7844 = vpop.f32.mrb[0].mxu0
    %7845 = vmatprep.mubr.f32.mxu0 0.0
    %v7846 = vand.u32 %v897, 4294901760
    %v7847 = vsub.f32 %v897, %v7846
    %v7848 = vand.u32 %v7847, 4294901760
    %7849 = vmatmul.mubr.f32.gmra.mrb[0].mxu0 %v7848
    %v7850 = vpop.f32.mrb[0].mxu0
    %v7851 = vadd.f32 %v7296, %v7850
    %v7852 = vpop.f32.mrb[0].mxu0
    %7853 = vmatprep.mubr.f32.mxu0 0.0
    %v7854 = vand.u32 %v898, 4294901760
    %v7855 = vsub.f32 %v898, %v7854
    %v7856 = vand.u32 %v7855, 4294901760
    %7857 = vmatmul.mubr.f32.gmra.mrb[0].mxu0 %v7856
    %v7858 = vpop.f32.mrb[0].mxu0
    %v7859 = vadd.f32 %v7303, %v7858
    %v7860 = vpop.f32.mrb[0].mxu0
    %7861 = vmatprep.mubr.f32.mxu0 0.0
    %v7862 = vand.u32 %v899, 4294901760
    %v7863 = vsub.f32 %v899, %v7862
    %v7864 = vand.u32 %v7863, 4294901760
    %7865 = vmatmul.mubr.f32.gmra.mrb[0].mxu0 %v7864
    %v7866 = vpop.f32.mrb[0].mxu0
    %v7867 = vadd.f32 %v7310, %v7866
    %v7868 = vpop.f32.mrb[0].mxu0
    %7869 = vmatprep.mubr.f32.mxu0 0.0
    %v7870 = vand.u32 %v900, 4294901760
    %v7871 = vsub.f32 %v900, %v7870
    %v7872 = vand.u32 %v7871, 4294901760
    %7873 = vmatmul.mubr.f32.gmra.mrb[0].mxu0 %v7872
    %v7874 = vpop.f32.mrb[0].mxu0
    %v7875 = vadd.f32 %v7317, %v7874
    %v7876 = vpop.f32.mrb[0].mxu0
    %7877 = vmatprep.mubr.f32.mxu0 0.0
    %v7878 = vand.u32 %v901, 4294901760
    %v7879 = vsub.f32 %v901, %v7878
    %v7880 = vand.u32 %v7879, 4294901760
    %7881 = vmatmul.mubr.f32.gmra.mrb[0].mxu0 %v7880
    %v7882 = vpop.f32.mrb[0].mxu0
    %v7883 = vadd.f32 %v7324, %v7882
    %v7884 = vpop.f32.mrb[0].mxu0
    %7885 = vmatprep.mubr.f32.mxu0 0.0
    %v7886 = vand.u32 %v902, 4294901760
    %v7887 = vsub.f32 %v902, %v7886
    %v7888 = vand.u32 %v7887, 4294901760
    %7889 = vmatmul.mubr.f32.gmra.mrb[0].mxu0 %v7888
    %v7890 = vpop.f32.mrb[0].mxu0
    %v7891 = vadd.f32 %v7331, %v7890
    %v7892 = vpop.f32.mrb[0].mxu0
    %7893 = vmatprep.mubr.f32.mxu0 0.0
    %v7894 = vand.u32 %v903, 4294901760
    %v7895 = vsub.f32 %v903, %v7894
    %v7896 = vand.u32 %v7895, 4294901760
    %7897 = vmatmul.mubr.f32.gmra.mrb[0].mxu0 %v7896
    %v7898 = vpop.f32.mrb[0].mxu0
    %v7899 = vadd.f32 %v7338, %v7898
    %v7900 = vpop.f32.mrb[0].mxu0
    %7901 = vmatprep.mubr.f32.mxu0 0.0
    %v7902 = vand.u32 %v904, 4294901760
    %v7903 = vsub.f32 %v904, %v7902
    %v7904 = vand.u32 %v7903, 4294901760
    %7905 = vmatmul.mubr.f32.gmra.mrb[0].mxu0 %v7904
    %v7906 = vpop.f32.mrb[0].mxu0
    %v7907 = vadd.f32 %v7345, %v7906
    %v7908 = vpop.f32.mrb[0].mxu0
    %7909 = vmatprep.mubr.f32.mxu0 0.0
    %v7910 = vand.u32 %v905, 4294901760
    %v7911 = vsub.f32 %v905, %v7910
    %v7912 = vand.u32 %v7911, 4294901760
    %7913 = vmatmul.mubr.f32.gmra.mrb[0].mxu0 %v7912
    %v7914 = vpop.f32.mrb[0].mxu0
    %v7915 = vadd.f32 %v7352, %v7914
    %v7916 = vpop.f32.mrb[0].mxu0
    %7917 = vmatprep.mubr.f32.mxu0 0.0
    %v7918 = vand.u32 %v906, 4294901760
    %v7919 = vsub.f32 %v906, %v7918
    %v7920 = vand.u32 %v7919, 4294901760
    %7921 = vmatmul.mubr.f32.gmra.mrb[0].mxu0 %v7920
    %v7922 = vpop.f32.mrb[0].mxu0
    %v7923 = vadd.f32 %v7359, %v7922
    %v7924 = vpop.f32.mrb[0].mxu0
    %7925 = vmatprep.mubr.f32.mxu0 0.0
    %v7926 = vand.u32 %v907, 4294901760
    %v7927 = vsub.f32 %v907, %v7926
    %v7928 = vand.u32 %v7927, 4294901760
    %7929 = vmatmul.mubr.f32.gmra.mrb[0].mxu0 %v7928
    %v7930 = vpop.f32.mrb[0].mxu0
    %v7931 = vadd.f32 %v7366, %v7930
    %v7932 = vpop.f32.mrb[0].mxu0
    %7933 = vmatprep.mubr.f32.mxu0 0.0
    %v7934 = vand.u32 %v908, 4294901760
    %v7935 = vsub.f32 %v908, %v7934
    %v7936 = vand.u32 %v7935, 4294901760
    %7937 = vmatmul.mubr.f32.gmra.mrb[0].mxu0 %v7936
    %v7938 = vpop.f32.mrb[0].mxu0
    %v7939 = vadd.f32 %v7373, %v7938
    %v7940 = vpop.f32.mrb[0].mxu0
    %7941 = vmatprep.mubr.f32.mxu0 0.0
    %v7942 = vand.u32 %v909, 4294901760
    %v7943 = vsub.f32 %v909, %v7942
    %v7944 = vand.u32 %v7943, 4294901760
    %7945 = vmatmul.mubr.f32.gmra.mrb[0].mxu0 %v7944
    %v7946 = vpop.f32.mrb[0].mxu0
    %v7947 = vadd.f32 %v7380, %v7946
    %v7948 = vpop.f32.mrb[0].mxu0
    %7949 = vmatprep.mubr.f32.mxu0 0.0
    %v7950 = vand.u32 %v910, 4294901760
    %v7951 = vsub.f32 %v910, %v7950
    %v7952 = vand.u32 %v7951, 4294901760
    %7953 = vmatmul.mubr.f32.gmra.mrb[0].mxu0 %v7952
    %v7954 = vpop.f32.mrb[0].mxu0
    %v7955 = vadd.f32 %v7387, %v7954
    %v7956 = vpop.f32.mrb[0].mxu0
    %7957 = vmatprep.mubr.f32.mxu0 0.0
    %v7958 = vand.u32 %v911, 4294901760
    %v7959 = vsub.f32 %v911, %v7958
    %v7960 = vand.u32 %v7959, 4294901760
    %7961 = vmatmul.mubr.f32.gmra.mrb[0].mxu0 %v7960
    %v7962 = vpop.f32.mrb[0].mxu0
    %v7963 = vadd.f32 %v7394, %v7962
    %v7964 = vpop.f32.mrb[0].mxu0
    %7965 = vmatprep.mubr.f32.mxu0 0.0
    %v7966 = vand.u32 %v912, 4294901760
    %v7967 = vsub.f32 %v912, %v7966
    %v7968 = vand.u32 %v7967, 4294901760
    %7969 = vmatmul.mubr.f32.gmra.mrb[0].mxu0 %v7968
    %v7970 = vpop.f32.mrb[0].mxu0
    %v7971 = vadd.f32 %v7401, %v7970
    %v7972 = vpop.f32.mrb[0].mxu0
    %7973 = vmatprep.mubr.f32.mxu0 0.0
    %v7974 = vand.u32 %v913, 4294901760
    %v7975 = vsub.f32 %v913, %v7974
    %v7976 = vand.u32 %v7975, 4294901760
    %7977 = vmatmul.mubr.f32.gmra.mrb[0].mxu0 %v7976
    %v7978 = vpop.f32.mrb[0].mxu0
    %v7979 = vadd.f32 %v7408, %v7978
    %v7980 = vpop.f32.mrb[0].mxu0
    %7981 = vmatprep.mubr.f32.mxu0 0.0
    %v7982 = vand.u32 %v914, 4294901760
    %v7983 = vsub.f32 %v914, %v7982
    %v7984 = vand.u32 %v7983, 4294901760
    %7985 = vmatmul.mubr.f32.gmra.mrb[0].mxu0 %v7984
    %v7986 = vpop.f32.mrb[0].mxu0
    %v7987 = vadd.f32 %v7415, %v7986
    %v7988 = vpop.f32.mrb[0].mxu0
    %7989 = vmatprep.mubr.f32.mxu0 0.0
    %v7990 = vand.u32 %v915, 4294901760
    %v7991 = vsub.f32 %v915, %v7990
    %v7992 = vand.u32 %v7991, 4294901760
    %7993 = vmatmul.mubr.f32.gmra.mrb[0].mxu0 %v7992
    %v7994 = vpop.f32.mrb[0].mxu0
    %v7995 = vadd.f32 %v7422, %v7994
    %v7996 = vpop.f32.mrb[0].mxu0
    %7997 = vmatprep.mubr.f32.mxu0 0.0
    %v7998 = vand.u32 %v916, 4294901760
    %v7999 = vsub.f32 %v916, %v7998
    %v8000 = vand.u32 %v7999, 4294901760
    %8001 = vmatmul.mubr.f32.gmra.mrb[0].mxu0 %v8000
    %v8002 = vpop.f32.mrb[0].mxu0
    %v8003 = vadd.f32 %v7429, %v8002
    %v8004 = vpop.f32.mrb[0].mxu0
    %8005 = vmatprep.mubr.f32.mxu0 0.0
    %v8006 = vand.u32 %v917, 4294901760
    %v8007 = vsub.f32 %v917, %v8006
    %v8008 = vand.u32 %v8007, 4294901760
    %8009 = vmatmul.mubr.f32.gmra.mrb[0].mxu0 %v8008
    %v8010 = vpop.f32.mrb[0].mxu0
    %v8011 = vadd.f32 %v7436, %v8010
    %v8012 = vpop.f32.mrb[0].mxu0
    %8013 = vmatprep.mubr.f32.mxu0 0.0
    %v8014 = vand.u32 %v918, 4294901760
    %v8015 = vsub.f32 %v918, %v8014
    %v8016 = vand.u32 %v8015, 4294901760
    %8017 = vmatmul.mubr.f32.gmra.mrb[0].mxu0 %v8016
    %v8018 = vpop.f32.mrb[0].mxu0
    %v8019 = vadd.f32 %v7443, %v8018
    %v8020 = vpop.f32.mrb[0].mxu0
    %8021 = vmatprep.mubr.f32.mxu0 0.0
    %v8022 = vand.u32 %v919, 4294901760
    %v8023 = vsub.f32 %v919, %v8022
    %v8024 = vand.u32 %v8023, 4294901760
    %8025 = vmatmul.mubr.f32.gmra.mrb[0].mxu0 %v8024
    %v8026 = vpop.f32.mrb[0].mxu0
    %v8027 = vadd.f32 %v7450, %v8026
    %v8028 = vpop.f32.mrb[0].mxu0
    %8029 = vmatprep.mubr.f32.mxu0 0.0
    %v8030 = vand.u32 %v920, 4294901760
    %v8031 = vsub.f32 %v920, %v8030
    %v8032 = vand.u32 %v8031, 4294901760
    %8033 = vmatmul.mubr.f32.gmra.mrb[0].mxu0 %v8032
    %v8034 = vpop.f32.mrb[0].mxu0
    %v8035 = vadd.f32 %v7457, %v8034
    %v8036 = vpop.f32.mrb[0].mxu0
    %8037 = vmatprep.mubr.f32.mxu0 0.0
    %v8038 = vand.u32 %v921, 4294901760
    %v8039 = vsub.f32 %v921, %v8038
    %v8040 = vand.u32 %v8039, 4294901760
    %8041 = vmatmul.mubr.f32.gmra.mrb[0].mxu0 %v8040
    %v8042 = vpop.f32.mrb[0].mxu0
    %v8043 = vadd.f32 %v7464, %v8042
    %v8044 = vpop.f32.mrb[0].mxu0
    %8045 = vmatprep.mubr.f32.mxu0 0.0
    %v8046 = vand.u32 %v922, 4294901760
    %v8047 = vsub.f32 %v922, %v8046
    %v8048 = vand.u32 %v8047, 4294901760
    %8049 = vmatmul.mubr.f32.gmra.mrb[0].mxu0 %v8048
    %v8050 = vpop.f32.mrb[0].mxu0
    %v8051 = vadd.f32 %v7471, %v8050
    %v8052 = vpop.f32.mrb[0].mxu0
    %8053 = vmatprep.mubr.f32.mxu0 0.0
    %v8054 = vand.u32 %v923, 4294901760
    %v8055 = vsub.f32 %v923, %v8054
    %v8056 = vand.u32 %v8055, 4294901760
    %8057 = vmatmul.mubr.f32.gmra.mrb[0].mxu0 %v8056
    %v8058 = vpop.f32.mrb[0].mxu0
    %v8059 = vadd.f32 %v7478, %v8058
    %v8060 = vpop.f32.mrb[0].mxu0
    %8061 = vmatprep.mubr.f32.mxu0 0.0
    %v8062 = vand.u32 %v924, 4294901760
    %v8063 = vsub.f32 %v924, %v8062
    %v8064 = vand.u32 %v8063, 4294901760
    %8065 = vmatmul.mubr.f32.gmra.mrb[0].mxu0 %v8064
    %v8066 = vpop.f32.mrb[0].mxu0
    %v8067 = vadd.f32 %v7485, %v8066
    %v8068 = vpop.f32.mrb[0].mxu0
    %8069 = vmatprep.mubr.f32.mxu0 0.0
    %v8070 = vand.u32 %v925, 4294901760
    %v8071 = vsub.f32 %v925, %v8070
    %v8072 = vand.u32 %v8071, 4294901760
    %8073 = vmatmul.mubr.f32.gmra.mrb[0].mxu0 %v8072
    %v8074 = vpop.f32.mrb[0].mxu0
    %v8075 = vadd.f32 %v7492, %v8074
    %v8076 = vpop.f32.mrb[0].mxu0
    %8077 = vmatprep.mubr.f32.mxu0 0.0
    %v8078 = vand.u32 %v926, 4294901760
    %v8079 = vsub.f32 %v926, %v8078
    %v8080 = vand.u32 %v8079, 4294901760
    %8081 = vmatmul.mubr.f32.gmra.mrb[0].mxu0 %v8080
    %v8082 = vpop.f32.mrb[0].mxu0
    %v8083 = vadd.f32 %v7499, %v8082
    %v8084 = vpop.f32.mrb[0].mxu0
    %8085 = vmatprep.mubr.f32.mxu0 0.0
    %v8086 = vand.u32 %v927, 4294901760
    %v8087 = vsub.f32 %v927, %v8086
    %v8088 = vand.u32 %v8087, 4294901760
    %8089 = vmatmul.mubr.f32.gmra.mrb[0].mxu0 %v8088
    %v8090 = vpop.f32.mrb[0].mxu0
    %v8091 = vadd.f32 %v7506, %v8090
    %v8092 = vpop.f32.mrb[0].mxu0
    %8093 = vmatprep.mubr.f32.mxu0 0.0
    %v8094 = vand.u32 %v928, 4294901760
    %v8095 = vsub.f32 %v928, %v8094
    %v8096 = vand.u32 %v8095, 4294901760
    %8097 = vmatmul.mubr.f32.gmra.mrb[0].mxu0 %v8096
    %v8098 = vpop.f32.mrb[0].mxu0
    %v8099 = vadd.f32 %v7513, %v8098
    %v8100 = vpop.f32.mrb[0].mxu0
    %8101 = vmatprep.mubr.f32.mxu0 0.0
    %v8102 = vand.u32 %v929, 4294901760
    %v8103 = vsub.f32 %v929, %v8102
    %v8104 = vand.u32 %v8103, 4294901760
    %8105 = vmatmul.mubr.f32.gmra.mrb[0].mxu0 %v8104
    %v8106 = vpop.f32.mrb[0].mxu0
    %v8107 = vadd.f32 %v7520, %v8106
    %v8108 = vpop.f32.mrb[0].mxu0
    %8109 = vmatprep.mubr.f32.mxu0 0.0
    %v8110 = vand.u32 %v930, 4294901760
    %v8111 = vsub.f32 %v930, %v8110
    %v8112 = vand.u32 %v8111, 4294901760
    %8113 = vmatmul.mubr.f32.gmra.mrb[0].mxu0 %v8112
    %v8114 = vpop.f32.mrb[0].mxu0
    %v8115 = vadd.f32 %v7527, %v8114
    %v8116 = vpop.f32.mrb[0].mxu0
    %8117 = vmatprep.mubr.f32.mxu0 0.0
    %v8118 = vand.u32 %v931, 4294901760
    %v8119 = vsub.f32 %v931, %v8118
    %v8120 = vand.u32 %v8119, 4294901760
    %8121 = vmatmul.mubr.f32.gmra.mrb[0].mxu0 %v8120
    %v8122 = vpop.f32.mrb[0].mxu0
    %v8123 = vadd.f32 %v7534, %v8122
    %v8124 = vpop.f32.mrb[0].mxu0
    %8125 = vmatprep.mubr.f32.mxu0 0.0
    %v8126 = vand.u32 %v932, 4294901760
    %v8127 = vsub.f32 %v932, %v8126
    %v8128 = vand.u32 %v8127, 4294901760
    %8129 = vmatmul.mubr.f32.gmra.mrb[0].mxu0 %v8128
    %v8130 = vpop.f32.mrb[0].mxu0
    %v8131 = vadd.f32 %v7541, %v8130
    %v8132 = vpop.f32.mrb[0].mxu0
    %8133 = vmatprep.mubr.f32.mxu0 0.0
    %v8134 = vand.u32 %v933, 4294901760
    %v8135 = vsub.f32 %v933, %v8134
    %v8136 = vand.u32 %v8135, 4294901760
    %8137 = vmatmul.mubr.f32.gmra.mrb[0].mxu0 %v8136
    %v8138 = vpop.f32.mrb[0].mxu0
    %v8139 = vadd.f32 %v7548, %v8138
    %v8140 = vpop.f32.mrb[0].mxu0
    %8141 = vmatprep.mubr.f32.mxu0 0.0
    %v8142 = vand.u32 %v934, 4294901760
    %v8143 = vsub.f32 %v934, %v8142
    %v8144 = vand.u32 %v8143, 4294901760
    %8145 = vmatmul.mubr.f32.gmra.mrb[0].mxu0 %v8144
    %v8146 = vpop.f32.mrb[0].mxu0
    %v8147 = vadd.f32 %v7555, %v8146
    %v8148 = vpop.f32.mrb[0].mxu0
    %8149 = vmatprep.mubr.f32.mxu0 0.0
    %v8150 = vand.u32 %v935, 4294901760
    %v8151 = vsub.f32 %v935, %v8150
    %v8152 = vand.u32 %v8151, 4294901760
    %8153 = vmatmul.mubr.f32.gmra.mrb[0].mxu0 %v8152
    %v8154 = vpop.f32.mrb[0].mxu0
    %v8155 = vadd.f32 %v7562, %v8154
    %v8156 = vpop.f32.mrb[0].mxu0
    %8157 = vdwg.mxu0
    %8158 = vmatprep.subr.mxu0 0.0
    %v8159 = vand.u32 %v5677, 4294901760
    %v8160 = vsub.f32 %v5677, %v8159
    %v8161 = vand.u32 %v8160, 4294901760
    %8162 = vmatpush1.msra.mxu0 %v8161
    %8163 = vmatprep.subr.mxu0 0.0
    %v8164 = vand.u32 %v5683, 4294901760
    %v8165 = vsub.f32 %v5683, %v8164
    %v8166 = vand.u32 %v8165, 4294901760
    %8167 = vmatpush1.msra.mxu0 %v8166
    %8168 = vmatprep.subr.mxu0 0.0
    %v8169 = vand.u32 %v5689, 4294901760
    %v8170 = vsub.f32 %v5689, %v8169
    %v8171 = vand.u32 %v8170, 4294901760
    %8172 = vmatpush1.msra.mxu0 %v8171
    %8173 = vmatprep.subr.mxu0 0.0
    %v8174 = vand.u32 %v5695, 4294901760
    %v8175 = vsub.f32 %v5695, %v8174
    %v8176 = vand.u32 %v8175, 4294901760
    %8177 = vmatpush1.msra.mxu0 %v8176
    %8178 = vmatprep.subr.mxu0 0.0
    %v8179 = vand.u32 %v5701, 4294901760
    %v8180 = vsub.f32 %v5701, %v8179
    %v8181 = vand.u32 %v8180, 4294901760
    %8182 = vmatpush1.msra.mxu0 %v8181
    %8183 = vmatprep.subr.mxu0 0.0
    %v8184 = vand.u32 %v5707, 4294901760
    %v8185 = vsub.f32 %v5707, %v8184
    %v8186 = vand.u32 %v8185, 4294901760
    %8187 = vmatpush1.msra.mxu0 %v8186
    %8188 = vmatprep.subr.mxu0 0.0
    %v8189 = vand.u32 %v5713, 4294901760
    %v8190 = vsub.f32 %v5713, %v8189
    %v8191 = vand.u32 %v8190, 4294901760
    %8192 = vmatpush1.msra.mxu0 %v8191
    %8193 = vmatprep.subr.mxu0 0.0
    %v8194 = vand.u32 %v5719, 4294901760
    %v8195 = vsub.f32 %v5719, %v8194
    %v8196 = vand.u32 %v8195, 4294901760
    %8197 = vmatpush1.msra.mxu0 %v8196
    %8198 = vmatprep.subr.mxu0 0.0
    %v8199 = vand.u32 %v5725, 4294901760
    %v8200 = vsub.f32 %v5725, %v8199
    %v8201 = vand.u32 %v8200, 4294901760
    %8202 = vmatpush1.msra.mxu0 %v8201
    %8203 = vmatprep.subr.mxu0 0.0
    %v8204 = vand.u32 %v5731, 4294901760
    %v8205 = vsub.f32 %v5731, %v8204
    %v8206 = vand.u32 %v8205, 4294901760
    %8207 = vmatpush1.msra.mxu0 %v8206
    %8208 = vmatprep.subr.mxu0 0.0
    %v8209 = vand.u32 %v5737, 4294901760
    %v8210 = vsub.f32 %v5737, %v8209
    %v8211 = vand.u32 %v8210, 4294901760
    %8212 = vmatpush1.msra.mxu0 %v8211
    %8213 = vmatprep.subr.mxu0 0.0
    %v8214 = vand.u32 %v5743, 4294901760
    %v8215 = vsub.f32 %v5743, %v8214
    %v8216 = vand.u32 %v8215, 4294901760
    %8217 = vmatpush1.msra.mxu0 %v8216
    %8218 = vmatprep.subr.mxu0 0.0
    %v8219 = vand.u32 %v5749, 4294901760
    %v8220 = vsub.f32 %v5749, %v8219
    %v8221 = vand.u32 %v8220, 4294901760
    %8222 = vmatpush1.msra.mxu0 %v8221
    %8223 = vmatprep.subr.mxu0 0.0
    %v8224 = vand.u32 %v5755, 4294901760
    %v8225 = vsub.f32 %v5755, %v8224
    %v8226 = vand.u32 %v8225, 4294901760
    %8227 = vmatpush1.msra.mxu0 %v8226
    %8228 = vmatprep.subr.mxu0 0.0
    %v8229 = vand.u32 %v5761, 4294901760
    %v8230 = vsub.f32 %v5761, %v8229
    %v8231 = vand.u32 %v8230, 4294901760
    %8232 = vmatpush1.msra.mxu0 %v8231
    %8233 = vmatprep.subr.mxu0 0.0
    %v8234 = vand.u32 %v5767, 4294901760
    %v8235 = vsub.f32 %v5767, %v8234
    %v8236 = vand.u32 %v8235, 4294901760
    %8237 = vmatpush1.msra.mxu0 %v8236
    %8238 = vmatprep.subr.mxu0 0.0
    %8239 = vmatpush1.msra.mxu0 0.0
    %8240 = vmatprep.subr.mxu0 0.0
    %8241 = vmatpush1.msra.mxu0 0.0
    %8242 = vmatprep.subr.mxu0 0.0
    %8243 = vmatpush1.msra.mxu0 0.0
    %8244 = vmatprep.subr.mxu0 0.0
    %8245 = vmatpush1.msra.mxu0 0.0
    %8246 = vmatprep.subr.mxu0 0.0
    %8247 = vmatpush1.msra.mxu0 0.0
    %8248 = vmatprep.subr.mxu0 0.0
    %8249 = vmatpush1.msra.mxu0 0.0
    %8250 = vmatprep.subr.mxu0 0.0
    %8251 = vmatpush1.msra.mxu0 0.0
    %8252 = vmatprep.subr.mxu0 0.0
    %8253 = vmatpush1.msra.mxu0 0.0
    %8254 = vmatprep.subr.mxu0 0.0
    %8255 = vmatpush1.msra.mxu0 0.0
    %8256 = vmatprep.subr.mxu0 0.0
    %8257 = vmatpush1.msra.mxu0 0.0
    %8258 = vmatprep.subr.mxu0 0.0
    %8259 = vmatpush1.msra.mxu0 0.0
    %8260 = vmatprep.subr.mxu0 0.0
    %8261 = vmatpush1.msra.mxu0 0.0
    %8262 = vmatprep.subr.mxu0 0.0
    %8263 = vmatpush1.msra.mxu0 0.0
    %8264 = vmatprep.subr.mxu0 0.0
    %8265 = vmatpush1.msra.mxu0 0.0
    %8266 = vmatprep.subr.mxu0 0.0
    %8267 = vmatpush1.msra.mxu0 0.0
    %8268 = vmatprep.subr.mxu0 0.0
    %8269 = vmatpush1.msra.mxu0 0.0
    %8270 = vmatprep.mubr.f32.mxu0 0.0
    %v8271 = vand.u32 %v872, 4294901760
    %8272 = vmatmul.mubr.f32.gmra.mrb[0].mxu0 %v8271
    %v8273 = vpop.f32.mrb[0].mxu0
    %v8274 = vadd.f32 %v7651, %v8273
    %v8275 = vpop.f32.mrb[0].mxu0
    %8276 = vmatprep.mubr.f32.mxu0 0.0
    %v8277 = vand.u32 %v873, 4294901760
    %8278 = vmatmul.mubr.f32.gmra.mrb[0].mxu0 %v8277
    %v8279 = vpop.f32.mrb[0].mxu0
    %v8280 = vadd.f32 %v7659, %v8279
    %v8281 = vpop.f32.mrb[0].mxu0
    %8282 = vmatprep.mubr.f32.mxu0 0.0
    %v8283 = vand.u32 %v874, 4294901760
    %8284 = vmatmul.mubr.f32.gmra.mrb[0].mxu0 %v8283
    %v8285 = vpop.f32.mrb[0].mxu0
    %v8286 = vadd.f32 %v7667, %v8285
    %v8287 = vpop.f32.mrb[0].mxu0
    %8288 = vmatprep.mubr.f32.mxu0 0.0
    %v8289 = vand.u32 %v875, 4294901760
    %8290 = vmatmul.mubr.f32.gmra.mrb[0].mxu0 %v8289
    %v8291 = vpop.f32.mrb[0].mxu0
    %v8292 = vadd.f32 %v7675, %v8291
    %v8293 = vpop.f32.mrb[0].mxu0
    %8294 = vmatprep.mubr.f32.mxu0 0.0
    %v8295 = vand.u32 %v876, 4294901760
    %8296 = vmatmul.mubr.f32.gmra.mrb[0].mxu0 %v8295
    %v8297 = vpop.f32.mrb[0].mxu0
    %v8298 = vadd.f32 %v7683, %v8297
    %v8299 = vpop.f32.mrb[0].mxu0
    %8300 = vmatprep.mubr.f32.mxu0 0.0
    %v8301 = vand.u32 %v877, 4294901760
    %8302 = vmatmul.mubr.f32.gmra.mrb[0].mxu0 %v8301
    %v8303 = vpop.f32.mrb[0].mxu0
    %v8304 = vadd.f32 %v7691, %v8303
    %v8305 = vpop.f32.mrb[0].mxu0
    %8306 = vmatprep.mubr.f32.mxu0 0.0
    %v8307 = vand.u32 %v878, 4294901760
    %8308 = vmatmul.mubr.f32.gmra.mrb[0].mxu0 %v8307
    %v8309 = vpop.f32.mrb[0].mxu0
    %v8310 = vadd.f32 %v7699, %v8309
    %v8311 = vpop.f32.mrb[0].mxu0
    %8312 = vmatprep.mubr.f32.mxu0 0.0
    %v8313 = vand.u32 %v879, 4294901760
    %8314 = vmatmul.mubr.f32.gmra.mrb[0].mxu0 %v8313
    %v8315 = vpop.f32.mrb[0].mxu0
    %v8316 = vadd.f32 %v7707, %v8315
    %v8317 = vpop.f32.mrb[0].mxu0
    %8318 = vmatprep.mubr.f32.mxu0 0.0
    %v8319 = vand.u32 %v880, 4294901760
    %8320 = vmatmul.mubr.f32.gmra.mrb[0].mxu0 %v8319
    %v8321 = vpop.f32.mrb[0].mxu0
    %v8322 = vadd.f32 %v7715, %v8321
    %v8323 = vpop.f32.mrb[0].mxu0
    %8324 = vmatprep.mubr.f32.mxu0 0.0
    %v8325 = vand.u32 %v881, 4294901760
    %8326 = vmatmul.mubr.f32.gmra.mrb[0].mxu0 %v8325
    %v8327 = vpop.f32.mrb[0].mxu0
    %v8328 = vadd.f32 %v7723, %v8327
    %v8329 = vpop.f32.mrb[0].mxu0
    %8330 = vmatprep.mubr.f32.mxu0 0.0
    %v8331 = vand.u32 %v882, 4294901760
    %8332 = vmatmul.mubr.f32.gmra.mrb[0].mxu0 %v8331
    %v8333 = vpop.f32.mrb[0].mxu0
    %v8334 = vadd.f32 %v7731, %v8333
    %v8335 = vpop.f32.mrb[0].mxu0
    %8336 = vmatprep.mubr.f32.mxu0 0.0
    %v8337 = vand.u32 %v883, 4294901760
    %8338 = vmatmul.mubr.f32.gmra.mrb[0].mxu0 %v8337
    %v8339 = vpop.f32.mrb[0].mxu0
    %v8340 = vadd.f32 %v7739, %v8339
    %v8341 = vpop.f32.mrb[0].mxu0
    %8342 = vmatprep.mubr.f32.mxu0 0.0
    %v8343 = vand.u32 %v884, 4294901760
    %8344 = vmatmul.mubr.f32.gmra.mrb[0].mxu0 %v8343
    %v8345 = vpop.f32.mrb[0].mxu0
    %v8346 = vadd.f32 %v7747, %v8345
    %v8347 = vpop.f32.mrb[0].mxu0
    %8348 = vmatprep.mubr.f32.mxu0 0.0
    %v8349 = vand.u32 %v885, 4294901760
    %8350 = vmatmul.mubr.f32.gmra.mrb[0].mxu0 %v8349
    %v8351 = vpop.f32.mrb[0].mxu0
    %v8352 = vadd.f32 %v7755, %v8351
    %v8353 = vpop.f32.mrb[0].mxu0
    %8354 = vmatprep.mubr.f32.mxu0 0.0
    %v8355 = vand.u32 %v886, 4294901760
    %8356 = vmatmul.mubr.f32.gmra.mrb[0].mxu0 %v8355
    %v8357 = vpop.f32.mrb[0].mxu0
    %v8358 = vadd.f32 %v7763, %v8357
    %v8359 = vpop.f32.mrb[0].mxu0
    %8360 = vmatprep.mubr.f32.mxu0 0.0
    %v8361 = vand.u32 %v887, 4294901760
    %8362 = vmatmul.mubr.f32.gmra.mrb[0].mxu0 %v8361
    %v8363 = vpop.f32.mrb[0].mxu0
    %v8364 = vadd.f32 %v7771, %v8363
    %v8365 = vpop.f32.mrb[0].mxu0
    %8366 = vmatprep.mubr.f32.mxu0 0.0
    %v8367 = vand.u32 %v888, 4294901760
    %8368 = vmatmul.mubr.f32.gmra.mrb[0].mxu0 %v8367
    %v8369 = vpop.f32.mrb[0].mxu0
    %v8370 = vadd.f32 %v7779, %v8369
    %v8371 = vpop.f32.mrb[0].mxu0
    %8372 = vmatprep.mubr.f32.mxu0 0.0
    %v8373 = vand.u32 %v889, 4294901760
    %8374 = vmatmul.mubr.f32.gmra.mrb[0].mxu0 %v8373
    %v8375 = vpop.f32.mrb[0].mxu0
    %v8376 = vadd.f32 %v7787, %v8375
    %v8377 = vpop.f32.mrb[0].mxu0
    %8378 = vmatprep.mubr.f32.mxu0 0.0
    %v8379 = vand.u32 %v890, 4294901760
    %8380 = vmatmul.mubr.f32.gmra.mrb[0].mxu0 %v8379
    %v8381 = vpop.f32.mrb[0].mxu0
    %v8382 = vadd.f32 %v7795, %v8381
    %v8383 = vpop.f32.mrb[0].mxu0
    %8384 = vmatprep.mubr.f32.mxu0 0.0
    %v8385 = vand.u32 %v891, 4294901760
    %8386 = vmatmul.mubr.f32.gmra.mrb[0].mxu0 %v8385
    %v8387 = vpop.f32.mrb[0].mxu0
    %v8388 = vadd.f32 %v7803, %v8387
    %v8389 = vpop.f32.mrb[0].mxu0
    %8390 = vmatprep.mubr.f32.mxu0 0.0
    %v8391 = vand.u32 %v892, 4294901760
    %8392 = vmatmul.mubr.f32.gmra.mrb[0].mxu0 %v8391
    %v8393 = vpop.f32.mrb[0].mxu0
    %v8394 = vadd.f32 %v7811, %v8393
    %v8395 = vpop.f32.mrb[0].mxu0
    %8396 = vmatprep.mubr.f32.mxu0 0.0
    %v8397 = vand.u32 %v893, 4294901760
    %8398 = vmatmul.mubr.f32.gmra.mrb[0].mxu0 %v8397
    %v8399 = vpop.f32.mrb[0].mxu0
    %v8400 = vadd.f32 %v7819, %v8399
    %v8401 = vpop.f32.mrb[0].mxu0
    %8402 = vmatprep.mubr.f32.mxu0 0.0
    %v8403 = vand.u32 %v894, 4294901760
    %8404 = vmatmul.mubr.f32.gmra.mrb[0].mxu0 %v8403
    %v8405 = vpop.f32.mrb[0].mxu0
    %v8406 = vadd.f32 %v7827, %v8405
    %v8407 = vpop.f32.mrb[0].mxu0
    %8408 = vmatprep.mubr.f32.mxu0 0.0
    %v8409 = vand.u32 %v895, 4294901760
    %8410 = vmatmul.mubr.f32.gmra.mrb[0].mxu0 %v8409
    %v8411 = vpop.f32.mrb[0].mxu0
    %v8412 = vadd.f32 %v7835, %v8411
    %v8413 = vpop.f32.mrb[0].mxu0
    %8414 = vmatprep.mubr.f32.mxu0 0.0
    %v8415 = vand.u32 %v896, 4294901760
    %8416 = vmatmul.mubr.f32.gmra.mrb[0].mxu0 %v8415
    %v8417 = vpop.f32.mrb[0].mxu0
    %v8418 = vadd.f32 %v7843, %v8417
    %v8419 = vpop.f32.mrb[0].mxu0
    %8420 = vmatprep.mubr.f32.mxu0 0.0
    %v8421 = vand.u32 %v897, 4294901760
    %8422 = vmatmul.mubr.f32.gmra.mrb[0].mxu0 %v8421
    %v8423 = vpop.f32.mrb[0].mxu0
    %v8424 = vadd.f32 %v7851, %v8423
    %v8425 = vpop.f32.mrb[0].mxu0
    %8426 = vmatprep.mubr.f32.mxu0 0.0
    %v8427 = vand.u32 %v898, 4294901760
    %8428 = vmatmul.mubr.f32.gmra.mrb[0].mxu0 %v8427
    %v8429 = vpop.f32.mrb[0].mxu0
    %v8430 = vadd.f32 %v7859, %v8429
    %v8431 = vpop.f32.mrb[0].mxu0
    %8432 = vmatprep.mubr.f32.mxu0 0.0
    %v8433 = vand.u32 %v899, 4294901760
    %8434 = vmatmul.mubr.f32.gmra.mrb[0].mxu0 %v8433
    %v8435 = vpop.f32.mrb[0].mxu0
    %v8436 = vadd.f32 %v7867, %v8435
    %v8437 = vpop.f32.mrb[0].mxu0
    %8438 = vmatprep.mubr.f32.mxu0 0.0
    %v8439 = vand.u32 %v900, 4294901760
    %8440 = vmatmul.mubr.f32.gmra.mrb[0].mxu0 %v8439
    %v8441 = vpop.f32.mrb[0].mxu0
    %v8442 = vadd.f32 %v7875, %v8441
    %v8443 = vpop.f32.mrb[0].mxu0
    %8444 = vmatprep.mubr.f32.mxu0 0.0
    %v8445 = vand.u32 %v901, 4294901760
    %8446 = vmatmul.mubr.f32.gmra.mrb[0].mxu0 %v8445
    %v8447 = vpop.f32.mrb[0].mxu0
    %v8448 = vadd.f32 %v7883, %v8447
    %v8449 = vpop.f32.mrb[0].mxu0
    %8450 = vmatprep.mubr.f32.mxu0 0.0
    %v8451 = vand.u32 %v902, 4294901760
    %8452 = vmatmul.mubr.f32.gmra.mrb[0].mxu0 %v8451
    %v8453 = vpop.f32.mrb[0].mxu0
    %v8454 = vadd.f32 %v7891, %v8453
    %v8455 = vpop.f32.mrb[0].mxu0
    %8456 = vmatprep.mubr.f32.mxu0 0.0
    %v8457 = vand.u32 %v903, 4294901760
    %8458 = vmatmul.mubr.f32.gmra.mrb[0].mxu0 %v8457
    %v8459 = vpop.f32.mrb[0].mxu0
    %v8460 = vadd.f32 %v7899, %v8459
    %v8461 = vpop.f32.mrb[0].mxu0
    %8462 = vmatprep.mubr.f32.mxu0 0.0
    %v8463 = vand.u32 %v904, 4294901760
    %8464 = vmatmul.mubr.f32.gmra.mrb[0].mxu0 %v8463
    %v8465 = vpop.f32.mrb[0].mxu0
    %v8466 = vadd.f32 %v7907, %v8465
    %v8467 = vpop.f32.mrb[0].mxu0
    %8468 = vmatprep.mubr.f32.mxu0 0.0
    %v8469 = vand.u32 %v905, 4294901760
    %8470 = vmatmul.mubr.f32.gmra.mrb[0].mxu0 %v8469
    %v8471 = vpop.f32.mrb[0].mxu0
    %v8472 = vadd.f32 %v7915, %v8471
    %v8473 = vpop.f32.mrb[0].mxu0
    %8474 = vmatprep.mubr.f32.mxu0 0.0
    %v8475 = vand.u32 %v906, 4294901760
    %8476 = vmatmul.mubr.f32.gmra.mrb[0].mxu0 %v8475
    %v8477 = vpop.f32.mrb[0].mxu0
    %v8478 = vadd.f32 %v7923, %v8477
    %v8479 = vpop.f32.mrb[0].mxu0
    %8480 = vmatprep.mubr.f32.mxu0 0.0
    %v8481 = vand.u32 %v907, 4294901760
    %8482 = vmatmul.mubr.f32.gmra.mrb[0].mxu0 %v8481
    %v8483 = vpop.f32.mrb[0].mxu0
    %v8484 = vadd.f32 %v7931, %v8483
    %v8485 = vpop.f32.mrb[0].mxu0
    %8486 = vmatprep.mubr.f32.mxu0 0.0
    %v8487 = vand.u32 %v908, 4294901760
    %8488 = vmatmul.mubr.f32.gmra.mrb[0].mxu0 %v8487
    %v8489 = vpop.f32.mrb[0].mxu0
    %v8490 = vadd.f32 %v7939, %v8489
    %v8491 = vpop.f32.mrb[0].mxu0
    %8492 = vmatprep.mubr.f32.mxu0 0.0
    %v8493 = vand.u32 %v909, 4294901760
    %8494 = vmatmul.mubr.f32.gmra.mrb[0].mxu0 %v8493
    %v8495 = vpop.f32.mrb[0].mxu0
    %v8496 = vadd.f32 %v7947, %v8495
    %v8497 = vpop.f32.mrb[0].mxu0
    %8498 = vmatprep.mubr.f32.mxu0 0.0
    %v8499 = vand.u32 %v910, 4294901760
    %8500 = vmatmul.mubr.f32.gmra.mrb[0].mxu0 %v8499
    %v8501 = vpop.f32.mrb[0].mxu0
    %v8502 = vadd.f32 %v7955, %v8501
    %v8503 = vpop.f32.mrb[0].mxu0
    %8504 = vmatprep.mubr.f32.mxu0 0.0
    %v8505 = vand.u32 %v911, 4294901760
    %8506 = vmatmul.mubr.f32.gmra.mrb[0].mxu0 %v8505
    %v8507 = vpop.f32.mrb[0].mxu0
    %v8508 = vadd.f32 %v7963, %v8507
    %v8509 = vpop.f32.mrb[0].mxu0
    %8510 = vmatprep.mubr.f32.mxu0 0.0
    %v8511 = vand.u32 %v912, 4294901760
    %8512 = vmatmul.mubr.f32.gmra.mrb[0].mxu0 %v8511
    %v8513 = vpop.f32.mrb[0].mxu0
    %v8514 = vadd.f32 %v7971, %v8513
    %v8515 = vpop.f32.mrb[0].mxu0
    %8516 = vmatprep.mubr.f32.mxu0 0.0
    %v8517 = vand.u32 %v913, 4294901760
    %8518 = vmatmul.mubr.f32.gmra.mrb[0].mxu0 %v8517
    %v8519 = vpop.f32.mrb[0].mxu0
    %v8520 = vadd.f32 %v7979, %v8519
    %v8521 = vpop.f32.mrb[0].mxu0
    %8522 = vmatprep.mubr.f32.mxu0 0.0
    %v8523 = vand.u32 %v914, 4294901760
    %8524 = vmatmul.mubr.f32.gmra.mrb[0].mxu0 %v8523
    %v8525 = vpop.f32.mrb[0].mxu0
    %v8526 = vadd.f32 %v7987, %v8525
    %v8527 = vpop.f32.mrb[0].mxu0
    %8528 = vmatprep.mubr.f32.mxu0 0.0
    %v8529 = vand.u32 %v915, 4294901760
    %8530 = vmatmul.mubr.f32.gmra.mrb[0].mxu0 %v8529
    %v8531 = vpop.f32.mrb[0].mxu0
    %v8532 = vadd.f32 %v7995, %v8531
    %v8533 = vpop.f32.mrb[0].mxu0
    %8534 = vmatprep.mubr.f32.mxu0 0.0
    %v8535 = vand.u32 %v916, 4294901760
    %8536 = vmatmul.mubr.f32.gmra.mrb[0].mxu0 %v8535
    %v8537 = vpop.f32.mrb[0].mxu0
    %v8538 = vadd.f32 %v8003, %v8537
    %v8539 = vpop.f32.mrb[0].mxu0
    %8540 = vmatprep.mubr.f32.mxu0 0.0
    %v8541 = vand.u32 %v917, 4294901760
    %8542 = vmatmul.mubr.f32.gmra.mrb[0].mxu0 %v8541
    %v8543 = vpop.f32.mrb[0].mxu0
    %v8544 = vadd.f32 %v8011, %v8543
    %v8545 = vpop.f32.mrb[0].mxu0
    %8546 = vmatprep.mubr.f32.mxu0 0.0
    %v8547 = vand.u32 %v918, 4294901760
    %8548 = vmatmul.mubr.f32.gmra.mrb[0].mxu0 %v8547
    %v8549 = vpop.f32.mrb[0].mxu0
    %v8550 = vadd.f32 %v8019, %v8549
    %v8551 = vpop.f32.mrb[0].mxu0
    %8552 = vmatprep.mubr.f32.mxu0 0.0
    %v8553 = vand.u32 %v919, 4294901760
    %8554 = vmatmul.mubr.f32.gmra.mrb[0].mxu0 %v8553
    %v8555 = vpop.f32.mrb[0].mxu0
    %v8556 = vadd.f32 %v8027, %v8555
    %v8557 = vpop.f32.mrb[0].mxu0
    %8558 = vmatprep.mubr.f32.mxu0 0.0
    %v8559 = vand.u32 %v920, 4294901760
    %8560 = vmatmul.mubr.f32.gmra.mrb[0].mxu0 %v8559
    %v8561 = vpop.f32.mrb[0].mxu0
    %v8562 = vadd.f32 %v8035, %v8561
    %v8563 = vpop.f32.mrb[0].mxu0
    %8564 = vmatprep.mubr.f32.mxu0 0.0
    %v8565 = vand.u32 %v921, 4294901760
    %8566 = vmatmul.mubr.f32.gmra.mrb[0].mxu0 %v8565
    %v8567 = vpop.f32.mrb[0].mxu0
    %v8568 = vadd.f32 %v8043, %v8567
    %v8569 = vpop.f32.mrb[0].mxu0
    %8570 = vmatprep.mubr.f32.mxu0 0.0
    %v8571 = vand.u32 %v922, 4294901760
    %8572 = vmatmul.mubr.f32.gmra.mrb[0].mxu0 %v8571
    %v8573 = vpop.f32.mrb[0].mxu0
    %v8574 = vadd.f32 %v8051, %v8573
    %v8575 = vpop.f32.mrb[0].mxu0
    %8576 = vmatprep.mubr.f32.mxu0 0.0
    %v8577 = vand.u32 %v923, 4294901760
    %8578 = vmatmul.mubr.f32.gmra.mrb[0].mxu0 %v8577
    %v8579 = vpop.f32.mrb[0].mxu0
    %v8580 = vadd.f32 %v8059, %v8579
    %v8581 = vpop.f32.mrb[0].mxu0
    %8582 = vmatprep.mubr.f32.mxu0 0.0
    %v8583 = vand.u32 %v924, 4294901760
    %8584 = vmatmul.mubr.f32.gmra.mrb[0].mxu0 %v8583
    %v8585 = vpop.f32.mrb[0].mxu0
    %v8586 = vadd.f32 %v8067, %v8585
    %v8587 = vpop.f32.mrb[0].mxu0
    %8588 = vmatprep.mubr.f32.mxu0 0.0
    %v8589 = vand.u32 %v925, 4294901760
    %8590 = vmatmul.mubr.f32.gmra.mrb[0].mxu0 %v8589
    %v8591 = vpop.f32.mrb[0].mxu0
    %v8592 = vadd.f32 %v8075, %v8591
    %v8593 = vpop.f32.mrb[0].mxu0
    %8594 = vmatprep.mubr.f32.mxu0 0.0
    %v8595 = vand.u32 %v926, 4294901760
    %8596 = vmatmul.mubr.f32.gmra.mrb[0].mxu0 %v8595
    %v8597 = vpop.f32.mrb[0].mxu0
    %v8598 = vadd.f32 %v8083, %v8597
    %v8599 = vpop.f32.mrb[0].mxu0
    %8600 = vmatprep.mubr.f32.mxu0 0.0
    %v8601 = vand.u32 %v927, 4294901760
    %8602 = vmatmul.mubr.f32.gmra.mrb[0].mxu0 %v8601
    %v8603 = vpop.f32.mrb[0].mxu0
    %v8604 = vadd.f32 %v8091, %v8603
    %v8605 = vpop.f32.mrb[0].mxu0
    %8606 = vmatprep.mubr.f32.mxu0 0.0
    %v8607 = vand.u32 %v928, 4294901760
    %8608 = vmatmul.mubr.f32.gmra.mrb[0].mxu0 %v8607
    %v8609 = vpop.f32.mrb[0].mxu0
    %v8610 = vadd.f32 %v8099, %v8609
    %v8611 = vpop.f32.mrb[0].mxu0
    %8612 = vmatprep.mubr.f32.mxu0 0.0
    %v8613 = vand.u32 %v929, 4294901760
    %8614 = vmatmul.mubr.f32.gmra.mrb[0].mxu0 %v8613
    %v8615 = vpop.f32.mrb[0].mxu0
    %v8616 = vadd.f32 %v8107, %v8615
    %v8617 = vpop.f32.mrb[0].mxu0
    %8618 = vmatprep.mubr.f32.mxu0 0.0
    %v8619 = vand.u32 %v930, 4294901760
    %8620 = vmatmul.mubr.f32.gmra.mrb[0].mxu0 %v8619
    %v8621 = vpop.f32.mrb[0].mxu0
    %v8622 = vadd.f32 %v8115, %v8621
    %v8623 = vpop.f32.mrb[0].mxu0
    %8624 = vmatprep.mubr.f32.mxu0 0.0
    %v8625 = vand.u32 %v931, 4294901760
    %8626 = vmatmul.mubr.f32.gmra.mrb[0].mxu0 %v8625
    %v8627 = vpop.f32.mrb[0].mxu0
    %v8628 = vadd.f32 %v8123, %v8627
    %v8629 = vpop.f32.mrb[0].mxu0
    %8630 = vmatprep.mubr.f32.mxu0 0.0
    %v8631 = vand.u32 %v932, 4294901760
    %8632 = vmatmul.mubr.f32.gmra.mrb[0].mxu0 %v8631
    %v8633 = vpop.f32.mrb[0].mxu0
    %v8634 = vadd.f32 %v8131, %v8633
    %v8635 = vpop.f32.mrb[0].mxu0
    %8636 = vmatprep.mubr.f32.mxu0 0.0
    %v8637 = vand.u32 %v933, 4294901760
    %8638 = vmatmul.mubr.f32.gmra.mrb[0].mxu0 %v8637
    %v8639 = vpop.f32.mrb[0].mxu0
    %v8640 = vadd.f32 %v8139, %v8639
    %v8641 = vpop.f32.mrb[0].mxu0
    %8642 = vmatprep.mubr.f32.mxu0 0.0
    %v8643 = vand.u32 %v934, 4294901760
    %8644 = vmatmul.mubr.f32.gmra.mrb[0].mxu0 %v8643
    %v8645 = vpop.f32.mrb[0].mxu0
    %v8646 = vadd.f32 %v8147, %v8645
    %v8647 = vpop.f32.mrb[0].mxu0
    %8648 = vmatprep.mubr.f32.mxu0 0.0
    %v8649 = vand.u32 %v935, 4294901760
    %8650 = vmatmul.mubr.f32.gmra.mrb[0].mxu0 %v8649
    %v8651 = vpop.f32.mrb[0].mxu0
    %v8652 = vadd.f32 %v8155, %v8651
    %v8653 = vpop.f32.mrb[0].mxu0
    %8654 = vdwg.mxu0
    %8655 = vmatprep.subr.mxu0 0.0
    %v8656 = vand.u32 %v5677, 4294901760
    %8657 = vmatpush1.msra.mxu0 %v8656
    %8658 = vmatprep.subr.mxu0 0.0
    %v8659 = vand.u32 %v5683, 4294901760
    %8660 = vmatpush1.msra.mxu0 %v8659
    %8661 = vmatprep.subr.mxu0 0.0
    %v8662 = vand.u32 %v5689, 4294901760
    %8663 = vmatpush1.msra.mxu0 %v8662
    %8664 = vmatprep.subr.mxu0 0.0
    %v8665 = vand.u32 %v5695, 4294901760
    %8666 = vmatpush1.msra.mxu0 %v8665
    %8667 = vmatprep.subr.mxu0 0.0
    %v8668 = vand.u32 %v5701, 4294901760
    %8669 = vmatpush1.msra.mxu0 %v8668
    %8670 = vmatprep.subr.mxu0 0.0
    %v8671 = vand.u32 %v5707, 4294901760
    %8672 = vmatpush1.msra.mxu0 %v8671
    %8673 = vmatprep.subr.mxu0 0.0
    %v8674 = vand.u32 %v5713, 4294901760
    %8675 = vmatpush1.msra.mxu0 %v8674
    %8676 = vmatprep.subr.mxu0 0.0
    %v8677 = vand.u32 %v5719, 4294901760
    %8678 = vmatpush1.msra.mxu0 %v8677
    %8679 = vmatprep.subr.mxu0 0.0
    %v8680 = vand.u32 %v5725, 4294901760
    %8681 = vmatpush1.msra.mxu0 %v8680
    %8682 = vmatprep.subr.mxu0 0.0
    %v8683 = vand.u32 %v5731, 4294901760
    %8684 = vmatpush1.msra.mxu0 %v8683
    %8685 = vmatprep.subr.mxu0 0.0
    %v8686 = vand.u32 %v5737, 4294901760
    %8687 = vmatpush1.msra.mxu0 %v8686
    %8688 = vmatprep.subr.mxu0 0.0
    %v8689 = vand.u32 %v5743, 4294901760
    %8690 = vmatpush1.msra.mxu0 %v8689
    %8691 = vmatprep.subr.mxu0 0.0
    %v8692 = vand.u32 %v5749, 4294901760
    %8693 = vmatpush1.msra.mxu0 %v8692
    %8694 = vmatprep.subr.mxu0 0.0
    %v8695 = vand.u32 %v5755, 4294901760
    %8696 = vmatpush1.msra.mxu0 %v8695
    %8697 = vmatprep.subr.mxu0 0.0
    %v8698 = vand.u32 %v5761, 4294901760
    %8699 = vmatpush1.msra.mxu0 %v8698
    %8700 = vmatprep.subr.mxu0 0.0
    %v8701 = vand.u32 %v5767, 4294901760
    %8702 = vmatpush1.msra.mxu0 %v8701
    %8703 = vmatprep.subr.mxu0 0.0
    %8704 = vmatpush1.msra.mxu0 0.0
    %8705 = vmatprep.subr.mxu0 0.0
    %8706 = vmatpush1.msra.mxu0 0.0
    %8707 = vmatprep.subr.mxu0 0.0
    %8708 = vmatpush1.msra.mxu0 0.0
    %8709 = vmatprep.subr.mxu0 0.0
    %8710 = vmatpush1.msra.mxu0 0.0
    %8711 = vmatprep.subr.mxu0 0.0
    %8712 = vmatpush1.msra.mxu0 0.0
    %8713 = vmatprep.subr.mxu0 0.0
    %8714 = vmatpush1.msra.mxu0 0.0
    %8715 = vmatprep.subr.mxu0 0.0
    %8716 = vmatpush1.msra.mxu0 0.0
    %8717 = vmatprep.subr.mxu0 0.0
    %8718 = vmatpush1.msra.mxu0 0.0
    %8719 = vmatprep.subr.mxu0 0.0
    %8720 = vmatpush1.msra.mxu0 0.0
    %8721 = vmatprep.subr.mxu0 0.0
    %8722 = vmatpush1.msra.mxu0 0.0
    %8723 = vmatprep.subr.mxu0 0.0
    %8724 = vmatpush1.msra.mxu0 0.0
    %8725 = vmatprep.subr.mxu0 0.0
    %8726 = vmatpush1.msra.mxu0 0.0
    %8727 = vmatprep.subr.mxu0 0.0
    %8728 = vmatpush1.msra.mxu0 0.0
    %8729 = vmatprep.subr.mxu0 0.0
    %8730 = vmatpush1.msra.mxu0 0.0
    %8731 = vmatprep.subr.mxu0 0.0
    %8732 = vmatpush1.msra.mxu0 0.0
    %8733 = vmatprep.subr.mxu0 0.0
    %8734 = vmatpush1.msra.mxu0 0.0
    %8735 = vmatprep.mubr.f32.mxu0 0.0
    %v8736 = vand.u32 %v872, 4294901760
    %8737 = vmatmul.mubr.f32.gmra.mrb[0].mxu0 %v8736
    %v8738 = vpop.f32.mrb[0].mxu0
    %v8739 = vadd.f32 %v8274, %v8738
    %v8740 = vpop.f32.mrb[0].mxu0
    %8741 = vmatprep.mubr.f32.mxu0 0.0
    %v8742 = vand.u32 %v873, 4294901760
    %8743 = vmatmul.mubr.f32.gmra.mrb[0].mxu0 %v8742
    %v8744 = vpop.f32.mrb[0].mxu0
    %v8745 = vadd.f32 %v8280, %v8744
    %v8746 = vpop.f32.mrb[0].mxu0
    %8747 = vmatprep.mubr.f32.mxu0 0.0
    %v8748 = vand.u32 %v874, 4294901760
    %8749 = vmatmul.mubr.f32.gmra.mrb[0].mxu0 %v8748
    %v8750 = vpop.f32.mrb[0].mxu0
    %v8751 = vadd.f32 %v8286, %v8750
    %v8752 = vpop.f32.mrb[0].mxu0
    %8753 = vmatprep.mubr.f32.mxu0 0.0
    %v8754 = vand.u32 %v875, 4294901760
    %8755 = vmatmul.mubr.f32.gmra.mrb[0].mxu0 %v8754
    %v8756 = vpop.f32.mrb[0].mxu0
    %v8757 = vadd.f32 %v8292, %v8756
    %v8758 = vpop.f32.mrb[0].mxu0
    %8759 = vmatprep.mubr.f32.mxu0 0.0
    %v8760 = vand.u32 %v876, 4294901760
    %8761 = vmatmul.mubr.f32.gmra.mrb[0].mxu0 %v8760
    %v8762 = vpop.f32.mrb[0].mxu0
    %v8763 = vadd.f32 %v8298, %v8762
    %v8764 = vpop.f32.mrb[0].mxu0
    %8765 = vmatprep.mubr.f32.mxu0 0.0
    %v8766 = vand.u32 %v877, 4294901760
    %8767 = vmatmul.mubr.f32.gmra.mrb[0].mxu0 %v8766
    %v8768 = vpop.f32.mrb[0].mxu0
    %v8769 = vadd.f32 %v8304, %v8768
    %v8770 = vpop.f32.mrb[0].mxu0
    %8771 = vmatprep.mubr.f32.mxu0 0.0
    %v8772 = vand.u32 %v878, 4294901760
    %8773 = vmatmul.mubr.f32.gmra.mrb[0].mxu0 %v8772
    %v8774 = vpop.f32.mrb[0].mxu0
    %v8775 = vadd.f32 %v8310, %v8774
    %v8776 = vpop.f32.mrb[0].mxu0
    %8777 = vmatprep.mubr.f32.mxu0 0.0
    %v8778 = vand.u32 %v879, 4294901760
    %8779 = vmatmul.mubr.f32.gmra.mrb[0].mxu0 %v8778
    %v8780 = vpop.f32.mrb[0].mxu0
    %v8781 = vadd.f32 %v8316, %v8780
    %v8782 = vpop.f32.mrb[0].mxu0
    %8783 = vmatprep.mubr.f32.mxu0 0.0
    %v8784 = vand.u32 %v880, 4294901760
    %8785 = vmatmul.mubr.f32.gmra.mrb[0].mxu0 %v8784
    %v8786 = vpop.f32.mrb[0].mxu0
    %v8787 = vadd.f32 %v8322, %v8786
    %v8788 = vpop.f32.mrb[0].mxu0
    %8789 = vmatprep.mubr.f32.mxu0 0.0
    %v8790 = vand.u32 %v881, 4294901760
    %8791 = vmatmul.mubr.f32.gmra.mrb[0].mxu0 %v8790
    %v8792 = vpop.f32.mrb[0].mxu0
    %v8793 = vadd.f32 %v8328, %v8792
    %v8794 = vpop.f32.mrb[0].mxu0
    %8795 = vmatprep.mubr.f32.mxu0 0.0
    %v8796 = vand.u32 %v882, 4294901760
    %8797 = vmatmul.mubr.f32.gmra.mrb[0].mxu0 %v8796
    %v8798 = vpop.f32.mrb[0].mxu0
    %v8799 = vadd.f32 %v8334, %v8798
    %v8800 = vpop.f32.mrb[0].mxu0
    %8801 = vmatprep.mubr.f32.mxu0 0.0
    %v8802 = vand.u32 %v883, 4294901760
    %8803 = vmatmul.mubr.f32.gmra.mrb[0].mxu0 %v8802
    %v8804 = vpop.f32.mrb[0].mxu0
    %v8805 = vadd.f32 %v8340, %v8804
    %v8806 = vpop.f32.mrb[0].mxu0
    %8807 = vmatprep.mubr.f32.mxu0 0.0
    %v8808 = vand.u32 %v884, 4294901760
    %8809 = vmatmul.mubr.f32.gmra.mrb[0].mxu0 %v8808
    %v8810 = vpop.f32.mrb[0].mxu0
    %v8811 = vadd.f32 %v8346, %v8810
    %v8812 = vpop.f32.mrb[0].mxu0
    %8813 = vmatprep.mubr.f32.mxu0 0.0
    %v8814 = vand.u32 %v885, 4294901760
    %8815 = vmatmul.mubr.f32.gmra.mrb[0].mxu0 %v8814
    %v8816 = vpop.f32.mrb[0].mxu0
    %v8817 = vadd.f32 %v8352, %v8816
    %v8818 = vpop.f32.mrb[0].mxu0
    %8819 = vmatprep.mubr.f32.mxu0 0.0
    %v8820 = vand.u32 %v886, 4294901760
    %8821 = vmatmul.mubr.f32.gmra.mrb[0].mxu0 %v8820
    %v8822 = vpop.f32.mrb[0].mxu0
    %v8823 = vadd.f32 %v8358, %v8822
    %v8824 = vpop.f32.mrb[0].mxu0
    %8825 = vmatprep.mubr.f32.mxu0 0.0
    %v8826 = vand.u32 %v887, 4294901760
    %8827 = vmatmul.mubr.f32.gmra.mrb[0].mxu0 %v8826
    %v8828 = vpop.f32.mrb[0].mxu0
    %v8829 = vadd.f32 %v8364, %v8828
    %v8830 = vpop.f32.mrb[0].mxu0
    %8831 = vmatprep.mubr.f32.mxu0 0.0
    %v8832 = vand.u32 %v888, 4294901760
    %8833 = vmatmul.mubr.f32.gmra.mrb[0].mxu0 %v8832
    %v8834 = vpop.f32.mrb[0].mxu0
    %v8835 = vadd.f32 %v8370, %v8834
    %v8836 = vpop.f32.mrb[0].mxu0
    %8837 = vmatprep.mubr.f32.mxu0 0.0
    %v8838 = vand.u32 %v889, 4294901760
    %8839 = vmatmul.mubr.f32.gmra.mrb[0].mxu0 %v8838
    %v8840 = vpop.f32.mrb[0].mxu0
    %v8841 = vadd.f32 %v8376, %v8840
    %v8842 = vpop.f32.mrb[0].mxu0
    %8843 = vmatprep.mubr.f32.mxu0 0.0
    %v8844 = vand.u32 %v890, 4294901760
    %8845 = vmatmul.mubr.f32.gmra.mrb[0].mxu0 %v8844
    %v8846 = vpop.f32.mrb[0].mxu0
    %v8847 = vadd.f32 %v8382, %v8846
    %v8848 = vpop.f32.mrb[0].mxu0
    %8849 = vmatprep.mubr.f32.mxu0 0.0
    %v8850 = vand.u32 %v891, 4294901760
    %8851 = vmatmul.mubr.f32.gmra.mrb[0].mxu0 %v8850
    %v8852 = vpop.f32.mrb[0].mxu0
    %v8853 = vadd.f32 %v8388, %v8852
    %v8854 = vpop.f32.mrb[0].mxu0
    %8855 = vmatprep.mubr.f32.mxu0 0.0
    %v8856 = vand.u32 %v892, 4294901760
    %8857 = vmatmul.mubr.f32.gmra.mrb[0].mxu0 %v8856
    %v8858 = vpop.f32.mrb[0].mxu0
    %v8859 = vadd.f32 %v8394, %v8858
    %v8860 = vpop.f32.mrb[0].mxu0
    %8861 = vmatprep.mubr.f32.mxu0 0.0
    %v8862 = vand.u32 %v893, 4294901760
    %8863 = vmatmul.mubr.f32.gmra.mrb[0].mxu0 %v8862
    %v8864 = vpop.f32.mrb[0].mxu0
    %v8865 = vadd.f32 %v8400, %v8864
    %v8866 = vpop.f32.mrb[0].mxu0
    %8867 = vmatprep.mubr.f32.mxu0 0.0
    %v8868 = vand.u32 %v894, 4294901760
    %8869 = vmatmul.mubr.f32.gmra.mrb[0].mxu0 %v8868
    %v8870 = vpop.f32.mrb[0].mxu0
    %v8871 = vadd.f32 %v8406, %v8870
    %v8872 = vpop.f32.mrb[0].mxu0
    %8873 = vmatprep.mubr.f32.mxu0 0.0
    %v8874 = vand.u32 %v895, 4294901760
    %8875 = vmatmul.mubr.f32.gmra.mrb[0].mxu0 %v8874
    %v8876 = vpop.f32.mrb[0].mxu0
    %v8877 = vadd.f32 %v8412, %v8876
    %v8878 = vpop.f32.mrb[0].mxu0
    %8879 = vmatprep.mubr.f32.mxu0 0.0
    %v8880 = vand.u32 %v896, 4294901760
    %8881 = vmatmul.mubr.f32.gmra.mrb[0].mxu0 %v8880
    %v8882 = vpop.f32.mrb[0].mxu0
    %v8883 = vadd.f32 %v8418, %v8882
    %v8884 = vpop.f32.mrb[0].mxu0
    %8885 = vmatprep.mubr.f32.mxu0 0.0
    %v8886 = vand.u32 %v897, 4294901760
    %8887 = vmatmul.mubr.f32.gmra.mrb[0].mxu0 %v8886
    %v8888 = vpop.f32.mrb[0].mxu0
    %v8889 = vadd.f32 %v8424, %v8888
    %v8890 = vpop.f32.mrb[0].mxu0
    %8891 = vmatprep.mubr.f32.mxu0 0.0
    %v8892 = vand.u32 %v898, 4294901760
    %8893 = vmatmul.mubr.f32.gmra.mrb[0].mxu0 %v8892
    %v8894 = vpop.f32.mrb[0].mxu0
    %v8895 = vadd.f32 %v8430, %v8894
    %v8896 = vpop.f32.mrb[0].mxu0
    %8897 = vmatprep.mubr.f32.mxu0 0.0
    %v8898 = vand.u32 %v899, 4294901760
    %8899 = vmatmul.mubr.f32.gmra.mrb[0].mxu0 %v8898
    %v8900 = vpop.f32.mrb[0].mxu0
    %v8901 = vadd.f32 %v8436, %v8900
    %v8902 = vpop.f32.mrb[0].mxu0
    %8903 = vmatprep.mubr.f32.mxu0 0.0
    %v8904 = vand.u32 %v900, 4294901760
    %8905 = vmatmul.mubr.f32.gmra.mrb[0].mxu0 %v8904
    %v8906 = vpop.f32.mrb[0].mxu0
    %v8907 = vadd.f32 %v8442, %v8906
    %v8908 = vpop.f32.mrb[0].mxu0
    %8909 = vmatprep.mubr.f32.mxu0 0.0
    %v8910 = vand.u32 %v901, 4294901760
    %8911 = vmatmul.mubr.f32.gmra.mrb[0].mxu0 %v8910
    %v8912 = vpop.f32.mrb[0].mxu0
    %v8913 = vadd.f32 %v8448, %v8912
    %v8914 = vpop.f32.mrb[0].mxu0
    %8915 = vmatprep.mubr.f32.mxu0 0.0
    %v8916 = vand.u32 %v902, 4294901760
    %8917 = vmatmul.mubr.f32.gmra.mrb[0].mxu0 %v8916
    %v8918 = vpop.f32.mrb[0].mxu0
    %v8919 = vadd.f32 %v8454, %v8918
    %v8920 = vpop.f32.mrb[0].mxu0
    %8921 = vmatprep.mubr.f32.mxu0 0.0
    %v8922 = vand.u32 %v903, 4294901760
    %8923 = vmatmul.mubr.f32.gmra.mrb[0].mxu0 %v8922
    %v8924 = vpop.f32.mrb[0].mxu0
    %v8925 = vadd.f32 %v8460, %v8924
    %v8926 = vpop.f32.mrb[0].mxu0
    %8927 = vmatprep.mubr.f32.mxu0 0.0
    %v8928 = vand.u32 %v904, 4294901760
    %8929 = vmatmul.mubr.f32.gmra.mrb[0].mxu0 %v8928
    %v8930 = vpop.f32.mrb[0].mxu0
    %v8931 = vadd.f32 %v8466, %v8930
    %v8932 = vpop.f32.mrb[0].mxu0
    %8933 = vmatprep.mubr.f32.mxu0 0.0
    %v8934 = vand.u32 %v905, 4294901760
    %8935 = vmatmul.mubr.f32.gmra.mrb[0].mxu0 %v8934
    %v8936 = vpop.f32.mrb[0].mxu0
    %v8937 = vadd.f32 %v8472, %v8936
    %v8938 = vpop.f32.mrb[0].mxu0
    %8939 = vmatprep.mubr.f32.mxu0 0.0
    %v8940 = vand.u32 %v906, 4294901760
    %8941 = vmatmul.mubr.f32.gmra.mrb[0].mxu0 %v8940
    %v8942 = vpop.f32.mrb[0].mxu0
    %v8943 = vadd.f32 %v8478, %v8942
    %v8944 = vpop.f32.mrb[0].mxu0
    %8945 = vmatprep.mubr.f32.mxu0 0.0
    %v8946 = vand.u32 %v907, 4294901760
    %8947 = vmatmul.mubr.f32.gmra.mrb[0].mxu0 %v8946
    %v8948 = vpop.f32.mrb[0].mxu0
    %v8949 = vadd.f32 %v8484, %v8948
    %v8950 = vpop.f32.mrb[0].mxu0
    %8951 = vmatprep.mubr.f32.mxu0 0.0
    %v8952 = vand.u32 %v908, 4294901760
    %8953 = vmatmul.mubr.f32.gmra.mrb[0].mxu0 %v8952
    %v8954 = vpop.f32.mrb[0].mxu0
    %v8955 = vadd.f32 %v8490, %v8954
    %v8956 = vpop.f32.mrb[0].mxu0
    %8957 = vmatprep.mubr.f32.mxu0 0.0
    %v8958 = vand.u32 %v909, 4294901760
    %8959 = vmatmul.mubr.f32.gmra.mrb[0].mxu0 %v8958
    %v8960 = vpop.f32.mrb[0].mxu0
    %v8961 = vadd.f32 %v8496, %v8960
    %v8962 = vpop.f32.mrb[0].mxu0
    %8963 = vmatprep.mubr.f32.mxu0 0.0
    %v8964 = vand.u32 %v910, 4294901760
    %8965 = vmatmul.mubr.f32.gmra.mrb[0].mxu0 %v8964
    %v8966 = vpop.f32.mrb[0].mxu0
    %v8967 = vadd.f32 %v8502, %v8966
    %v8968 = vpop.f32.mrb[0].mxu0
    %8969 = vmatprep.mubr.f32.mxu0 0.0
    %v8970 = vand.u32 %v911, 4294901760
    %8971 = vmatmul.mubr.f32.gmra.mrb[0].mxu0 %v8970
    %v8972 = vpop.f32.mrb[0].mxu0
    %v8973 = vadd.f32 %v8508, %v8972
    %v8974 = vpop.f32.mrb[0].mxu0
    %8975 = vmatprep.mubr.f32.mxu0 0.0
    %v8976 = vand.u32 %v912, 4294901760
    %8977 = vmatmul.mubr.f32.gmra.mrb[0].mxu0 %v8976
    %v8978 = vpop.f32.mrb[0].mxu0
    %v8979 = vadd.f32 %v8514, %v8978
    %v8980 = vpop.f32.mrb[0].mxu0
    %8981 = vmatprep.mubr.f32.mxu0 0.0
    %v8982 = vand.u32 %v913, 4294901760
    %8983 = vmatmul.mubr.f32.gmra.mrb[0].mxu0 %v8982
    %v8984 = vpop.f32.mrb[0].mxu0
    %v8985 = vadd.f32 %v8520, %v8984
    %v8986 = vpop.f32.mrb[0].mxu0
    %8987 = vmatprep.mubr.f32.mxu0 0.0
    %v8988 = vand.u32 %v914, 4294901760
    %8989 = vmatmul.mubr.f32.gmra.mrb[0].mxu0 %v8988
    %v8990 = vpop.f32.mrb[0].mxu0
    %v8991 = vadd.f32 %v8526, %v8990
    %v8992 = vpop.f32.mrb[0].mxu0
    %8993 = vmatprep.mubr.f32.mxu0 0.0
    %v8994 = vand.u32 %v915, 4294901760
    %8995 = vmatmul.mubr.f32.gmra.mrb[0].mxu0 %v8994
    %v8996 = vpop.f32.mrb[0].mxu0
    %v8997 = vadd.f32 %v8532, %v8996
    %v8998 = vpop.f32.mrb[0].mxu0
    %8999 = vmatprep.mubr.f32.mxu0 0.0
    %v9000 = vand.u32 %v916, 4294901760
    %9001 = vmatmul.mubr.f32.gmra.mrb[0].mxu0 %v9000
    %v9002 = vpop.f32.mrb[0].mxu0
    %v9003 = vadd.f32 %v8538, %v9002
    %v9004 = vpop.f32.mrb[0].mxu0
    %9005 = vmatprep.mubr.f32.mxu0 0.0
    %v9006 = vand.u32 %v917, 4294901760
    %9007 = vmatmul.mubr.f32.gmra.mrb[0].mxu0 %v9006
    %v9008 = vpop.f32.mrb[0].mxu0
    %v9009 = vadd.f32 %v8544, %v9008
    %v9010 = vpop.f32.mrb[0].mxu0
    %9011 = vmatprep.mubr.f32.mxu0 0.0
    %v9012 = vand.u32 %v918, 4294901760
    %9013 = vmatmul.mubr.f32.gmra.mrb[0].mxu0 %v9012
    %v9014 = vpop.f32.mrb[0].mxu0
    %v9015 = vadd.f32 %v8550, %v9014
    %v9016 = vpop.f32.mrb[0].mxu0
    %9017 = vmatprep.mubr.f32.mxu0 0.0
    %v9018 = vand.u32 %v919, 4294901760
    %9019 = vmatmul.mubr.f32.gmra.mrb[0].mxu0 %v9018
    %v9020 = vpop.f32.mrb[0].mxu0
    %v9021 = vadd.f32 %v8556, %v9020
    %v9022 = vpop.f32.mrb[0].mxu0
    %9023 = vmatprep.mubr.f32.mxu0 0.0
    %v9024 = vand.u32 %v920, 4294901760
    %9025 = vmatmul.mubr.f32.gmra.mrb[0].mxu0 %v9024
    %v9026 = vpop.f32.mrb[0].mxu0
    %v9027 = vadd.f32 %v8562, %v9026
    %v9028 = vpop.f32.mrb[0].mxu0
    %9029 = vmatprep.mubr.f32.mxu0 0.0
    %v9030 = vand.u32 %v921, 4294901760
    %9031 = vmatmul.mubr.f32.gmra.mrb[0].mxu0 %v9030
    %v9032 = vpop.f32.mrb[0].mxu0
    %v9033 = vadd.f32 %v8568, %v9032
    %v9034 = vpop.f32.mrb[0].mxu0
    %9035 = vmatprep.mubr.f32.mxu0 0.0
    %v9036 = vand.u32 %v922, 4294901760
    %9037 = vmatmul.mubr.f32.gmra.mrb[0].mxu0 %v9036
    %v9038 = vpop.f32.mrb[0].mxu0
    %v9039 = vadd.f32 %v8574, %v9038
    %v9040 = vpop.f32.mrb[0].mxu0
    %9041 = vmatprep.mubr.f32.mxu0 0.0
    %v9042 = vand.u32 %v923, 4294901760
    %9043 = vmatmul.mubr.f32.gmra.mrb[0].mxu0 %v9042
    %v9044 = vpop.f32.mrb[0].mxu0
    %v9045 = vadd.f32 %v8580, %v9044
    %v9046 = vpop.f32.mrb[0].mxu0
    %9047 = vmatprep.mubr.f32.mxu0 0.0
    %v9048 = vand.u32 %v924, 4294901760
    %9049 = vmatmul.mubr.f32.gmra.mrb[0].mxu0 %v9048
    %v9050 = vpop.f32.mrb[0].mxu0
    %v9051 = vadd.f32 %v8586, %v9050
    %v9052 = vpop.f32.mrb[0].mxu0
    %9053 = vmatprep.mubr.f32.mxu0 0.0
    %v9054 = vand.u32 %v925, 4294901760
    %9055 = vmatmul.mubr.f32.gmra.mrb[0].mxu0 %v9054
    %v9056 = vpop.f32.mrb[0].mxu0
    %v9057 = vadd.f32 %v8592, %v9056
    %v9058 = vpop.f32.mrb[0].mxu0
    %9059 = vmatprep.mubr.f32.mxu0 0.0
    %v9060 = vand.u32 %v926, 4294901760
    %9061 = vmatmul.mubr.f32.gmra.mrb[0].mxu0 %v9060
    %v9062 = vpop.f32.mrb[0].mxu0
    %v9063 = vadd.f32 %v8598, %v9062
    %v9064 = vpop.f32.mrb[0].mxu0
    %9065 = vmatprep.mubr.f32.mxu0 0.0
    %v9066 = vand.u32 %v927, 4294901760
    %9067 = vmatmul.mubr.f32.gmra.mrb[0].mxu0 %v9066
    %v9068 = vpop.f32.mrb[0].mxu0
    %v9069 = vadd.f32 %v8604, %v9068
    %v9070 = vpop.f32.mrb[0].mxu0
    %9071 = vmatprep.mubr.f32.mxu0 0.0
    %v9072 = vand.u32 %v928, 4294901760
    %9073 = vmatmul.mubr.f32.gmra.mrb[0].mxu0 %v9072
    %v9074 = vpop.f32.mrb[0].mxu0
    %v9075 = vadd.f32 %v8610, %v9074
    %v9076 = vpop.f32.mrb[0].mxu0
    %9077 = vmatprep.mubr.f32.mxu0 0.0
    %v9078 = vand.u32 %v929, 4294901760
    %9079 = vmatmul.mubr.f32.gmra.mrb[0].mxu0 %v9078
    %v9080 = vpop.f32.mrb[0].mxu0
    %v9081 = vadd.f32 %v8616, %v9080
    %v9082 = vpop.f32.mrb[0].mxu0
    %9083 = vmatprep.mubr.f32.mxu0 0.0
    %v9084 = vand.u32 %v930, 4294901760
    %9085 = vmatmul.mubr.f32.gmra.mrb[0].mxu0 %v9084
    %v9086 = vpop.f32.mrb[0].mxu0
    %v9087 = vadd.f32 %v8622, %v9086
    %v9088 = vpop.f32.mrb[0].mxu0
    %9089 = vmatprep.mubr.f32.mxu0 0.0
    %v9090 = vand.u32 %v931, 4294901760
    %9091 = vmatmul.mubr.f32.gmra.mrb[0].mxu0 %v9090
    %v9092 = vpop.f32.mrb[0].mxu0
    %v9093 = vadd.f32 %v8628, %v9092
    %v9094 = vpop.f32.mrb[0].mxu0
    %9095 = vmatprep.mubr.f32.mxu0 0.0
    %v9096 = vand.u32 %v932, 4294901760
    %9097 = vmatmul.mubr.f32.gmra.mrb[0].mxu0 %v9096
    %v9098 = vpop.f32.mrb[0].mxu0
    %v9099 = vadd.f32 %v8634, %v9098
    %v9100 = vpop.f32.mrb[0].mxu0
    %9101 = vmatprep.mubr.f32.mxu0 0.0
    %v9102 = vand.u32 %v933, 4294901760
    %9103 = vmatmul.mubr.f32.gmra.mrb[0].mxu0 %v9102
    %v9104 = vpop.f32.mrb[0].mxu0
    %v9105 = vadd.f32 %v8640, %v9104
    %v9106 = vpop.f32.mrb[0].mxu0
    %9107 = vmatprep.mubr.f32.mxu0 0.0
    %v9108 = vand.u32 %v934, 4294901760
    %9109 = vmatmul.mubr.f32.gmra.mrb[0].mxu0 %v9108
    %v9110 = vpop.f32.mrb[0].mxu0
    %v9111 = vadd.f32 %v8646, %v9110
    %v9112 = vpop.f32.mrb[0].mxu0
    %9113 = vmatprep.mubr.f32.mxu0 0.0
    %v9114 = vand.u32 %v935, 4294901760
    %9115 = vmatmul.mubr.f32.gmra.mrb[0].mxu0 %v9114
    %v9116 = vpop.f32.mrb[0].mxu0
    %v9117 = vadd.f32 %v8652, %v9116
    %v9118 = vpop.f32.mrb[0].mxu0
    %9119 = vdwg.mxu0
    %9120 = vst [vmem:[#allocation7] sm:$0xff] %v8739
    %9121 = vst [vmem:[#allocation7 + $0x8] sm:$0xff] %v8745
    %9122 = vst [vmem:[#allocation7 + $0x10] sm:$0xff] %v8751
    %9123 = vst [vmem:[#allocation7 + $0x18] sm:$0xff] %v8757
    %9124 = vst [vmem:[#allocation7 + $0x20] sm:$0xff] %v8763
    %9125 = vst [vmem:[#allocation7 + $0x28] sm:$0xff] %v8769
    %9126 = vst [vmem:[#allocation7 + $0x30] sm:$0xff] %v8775
    %9127 = vst [vmem:[#allocation7 + $0x38] sm:$0xff] %v8781
    %9128 = vst [vmem:[#allocation7 + $0x40] sm:$0xff] %v8787
    %9129 = vst [vmem:[#allocation7 + $0x48] sm:$0xff] %v8793
    %9130 = vst [vmem:[#allocation7 + $0x50] sm:$0xff] %v8799
    %9131 = vst [vmem:[#allocation7 + $0x58] sm:$0xff] %v8805
    %9132 = vst [vmem:[#allocation7 + $0x60] sm:$0xff] %v8811
    %9133 = vst [vmem:[#allocation7 + $0x68] sm:$0xff] %v8817
    %9134 = vst [vmem:[#allocation7 + $0x70] sm:$0xff] %v8823
    %9135 = vst [vmem:[#allocation7 + $0x78] sm:$0xff] %v8829
    %9136 = vst [vmem:[#allocation7 + $0x80] sm:$0xff] %v8835
    %9137 = vst [vmem:[#allocation7 + $0x88] sm:$0xff] %v8841
    %9138 = vst [vmem:[#allocation7 + $0x90] sm:$0xff] %v8847
    %9139 = vst [vmem:[#allocation7 + $0x98] sm:$0xff] %v8853
    %9140 = vst [vmem:[#allocation7 + $0xa0] sm:$0xff] %v8859
    %9141 = vst [vmem:[#allocation7 + $0xa8] sm:$0xff] %v8865
    %9142 = vst [vmem:[#allocation7 + $0xb0] sm:$0xff] %v8871
    %9143 = vst [vmem:[#allocation7 + $0xb8] sm:$0xff] %v8877
    %9144 = vst [vmem:[#allocation7 + $0xc0] sm:$0xff] %v8883
    %9145 = vst [vmem:[#allocation7 + $0xc8] sm:$0xff] %v8889
    %9146 = vst [vmem:[#allocation7 + $0xd0] sm:$0xff] %v8895
    %9147 = vst [vmem:[#allocation7 + $0xd8] sm:$0xff] %v8901
    %9148 = vst [vmem:[#allocation7 + $0xe0] sm:$0xff] %v8907
    %9149 = vst [vmem:[#allocation7 + $0xe8] sm:$0xff] %v8913
    %9150 = vst [vmem:[#allocation7 + $0xf0] sm:$0xff] %v8919
    %9151 = vst [vmem:[#allocation7 + $0xf8] sm:$0xff] %v8925
    %9152 = vst [vmem:[#allocation7 + $0x100] sm:$0xff] %v8931
    %9153 = vst [vmem:[#allocation7 + $0x108] sm:$0xff] %v8937
    %9154 = vst [vmem:[#allocation7 + $0x110] sm:$0xff] %v8943
    %9155 = vst [vmem:[#allocation7 + $0x118] sm:$0xff] %v8949
    %9156 = vst [vmem:[#allocation7 + $0x120] sm:$0xff] %v8955
    %9157 = vst [vmem:[#allocation7 + $0x128] sm:$0xff] %v8961
    %9158 = vst [vmem:[#allocation7 + $0x130] sm:$0xff] %v8967
    %9159 = vst [vmem:[#allocation7 + $0x138] sm:$0xff] %v8973
    %9160 = vst [vmem:[#allocation7 + $0x140] sm:$0xff] %v8979
    %9161 = vst [vmem:[#allocation7 + $0x148] sm:$0xff] %v8985
    %9162 = vst [vmem:[#allocation7 + $0x150] sm:$0xff] %v8991
    %9163 = vst [vmem:[#allocation7 + $0x158] sm:$0xff] %v8997
    %9164 = vst [vmem:[#allocation7 + $0x160] sm:$0xff] %v9003
    %9165 = vst [vmem:[#allocation7 + $0x168] sm:$0xff] %v9009
    %9166 = vst [vmem:[#allocation7 + $0x170] sm:$0xff] %v9015
    %9167 = vst [vmem:[#allocation7 + $0x178] sm:$0xff] %v9021
    %9168 = vst [vmem:[#allocation7 + $0x180] sm:$0xff] %v9027
    %9169 = vst [vmem:[#allocation7 + $0x188] sm:$0xff] %v9033
    %9170 = vst [vmem:[#allocation7 + $0x190] sm:$0xff] %v9039
    %9171 = vst [vmem:[#allocation7 + $0x198] sm:$0xff] %v9045
    %9172 = vst [vmem:[#allocation7 + $0x1a0] sm:$0xff] %v9051
    %9173 = vst [vmem:[#allocation7 + $0x1a8] sm:$0xff] %v9057
    %9174 = vst [vmem:[#allocation7 + $0x1b0] sm:$0xff] %v9063
    %9175 = vst [vmem:[#allocation7 + $0x1b8] sm:$0xff] %v9069
    %9176 = vst [vmem:[#allocation7 + $0x1c0] sm:$0xff] %v9075
    %9177 = vst [vmem:[#allocation7 + $0x1c8] sm:$0xff] %v9081
    %9178 = vst [vmem:[#allocation7 + $0x1d0] sm:$0xff] %v9087
    %9179 = vst [vmem:[#allocation7 + $0x1d8] sm:$0xff] %v9093
    %9180 = vst [vmem:[#allocation7 + $0x1e0] sm:$0xff] %v9099
    %9181 = vst [vmem:[#allocation7 + $0x1e8] sm:$0xff] %v9105
    %9182 = vst [vmem:[#allocation7 + $0x1f0] sm:$0xff] %v9111
    %9183 = vst [vmem:[#allocation7 + $0x1f8] sm:$0xff] %v9117
    // Predicated region
    $region18: #{tpu_custom_call.1} parent=1 // pred_check
      _
    $region19: #{tpu_custom_call.1} parent=1 // pred_check_branch
      %9185 = sbr.rel (0) target = $region21
    $region20: #{tpu_custom_call.1} parent=1 // pred_region
      %s9187 = ssub.s32 8192, 8192
      %9188 = vsyncadd [#allocation4], %s9187
      %s9189 = sshll.u32 [#allocation7], 4
      %s9190 = int_to_ptr.vmem [resolvable:$true] %s9189
      %9195 = dma.vmem_to_hbm [thread:$0]  %s9190, 8192, %s2, [#allocation4], 128, 128, 8
    $region21: #{tpu_custom_call.1} parent=1 // pred_fallthru
      _
    // Predicated region
    $region22: #{tpu_custom_call.1} parent=1 // pred_check
      _
    $region23: #{tpu_custom_call.1} parent=1 // pred_check_branch
      %9197 = sbr.rel (0) target = $region25
    $region24: #{tpu_custom_call.1} parent=1 // pred_region
      %9198 = dma.done [#allocation4], 8192
    $region25: #{tpu_custom_call.1} parent=1 // pred_fallthru
      _
    %9199 = vsyncpa [#allocation3], 1
    %9200 = vsyncpa [#allocation6], 1
    %9201 = vsyncpa [#allocation4], 1

</llo_original>
